<compile_context>
chip_gen: v5e
topology: v5e:2x2
jax: 0.10.0
libtpu: 0.0.40
codegen_flags: <defaults>
</compile_context>

<pallas_src>
import jax
import jax.numpy as jnp
import numpy as np
from jax import lax
from jax.experimental import pallas as pl
from jax.experimental.pallas import tpu as pltpu


# ----------------------------- fused Pallas kernel -------------------------

def net_kernel(x_ref,      # (NB, 784)   f32   input, row-major (h, w) per sample
               w1_ref,     # (140, 256)  bf16  conv1 banded: rows=(ky, j<28),
                           #                   cols=(parity, [W<12, co<10] pad->128)
               b1_ref,     # (1, 256)    f32   conv1 bias tiled over cols (0 on pad)
               w2_ref,     # (640, 256)  bf16  conv2 banded: rows=(ky, [w<12, ci<10] pad->128),
                           #                   cols=(parity, [W<4, co<20] pad->128)
               b2_ref,     # (1, 256)    f32   conv2 bias tiled over cols (0 on pad)
               wf1_ref,    # (512, 50)   bf16  fc1, rows=(h<4, [w<4, c<20] pad->128)
               bf1_ref,    # (1, 50)     f32
               wf2_ref,    # (50, 10)    bf16  fc2
               bf2_ref,    # (1, 10)     f32
               o_ref,      # (NB, 10)    f32   output block
               p1_s,       # (24*NB, 140) bf16 scratch: all conv1 row-pair patches
               y1_s,       # (NB, 1536)   bf16 scratch: pooled conv1 act., row-major
               p2_s,       # (8*NB, 640)  bf16 scratch: all conv2 row-pair patches
               flat_s):    # (NB, 512)    bf16 scratch: pooled conv2 act. (h, w, c)+pad
    nb = o_ref.shape[0]
    bf16 = jnp.bfloat16
    f32 = jnp.float32

    # ---- stage 1: conv1(1->10,k=5) + 2x2 maxpool + bias + ReLU -------------
    # Patch rows ordered [hp (pool row parity), H (pooled row), n].
    for hp in range(2):
        for H in range(12):
            r = 2 * H + hp                      # conv input top row
            blk = (hp * 12 + H) * nb
            p1_s[blk:blk + nb, :] = x_ref[:, r * 28:r * 28 + 140].astype(bf16)
    c1 = jnp.dot(p1_s[...], w1_ref[...],
                 preferred_element_type=f32)                    # (24*NB, 256)
    # pool over H (row halves); per-channel bias + ReLU commute with max
    a1 = jnp.maximum(jnp.maximum(c1[:12 * nb, :], c1[12 * nb:, :])
                     + b1_ref[...], 0.0)                        # (12*NB, 256)
    # pool over W: parity halves are 128-lane aligned
    y1 = jnp.maximum(a1[:, :128], a1[:, 128:])                  # (12*NB, 128)
    for H in range(12):
        y1_s[:, H * 128:(H + 1) * 128] = (
            y1[H * nb:(H + 1) * nb, :].astype(bf16))

    # ---- stage 2: conv2(10->20,k=5) + 2x2 maxpool + bias + ReLU -------------
    for hp in range(2):
        for H in range(4):
            r = 2 * H + hp
            blk = (hp * 4 + H) * nb
            p2_s[blk:blk + nb, :] = y1_s[:, r * 128:r * 128 + 640]
    c2 = jnp.dot(p2_s[...], w2_ref[...],
                 preferred_element_type=f32)                    # (8*NB, 256)
    a2 = jnp.maximum(jnp.maximum(c2[:4 * nb, :], c2[4 * nb:, :])
                     + b2_ref[...], 0.0)                        # (4*NB, 256)
    y2 = jnp.maximum(a2[:, :128], a2[:, 128:])                  # (4*NB, 128)
    for H in range(4):
        flat_s[:, H * 128:(H + 1) * 128] = (
            y2[H * nb:(H + 1) * nb, :].astype(bf16))

    # ---- stage 3: fc1(320->50) + ReLU, fc2(50->10) --------------------------
    h1 = jnp.maximum(
        jnp.dot(flat_s[...], wf1_ref[...],
                preferred_element_type=f32) + bf1_ref[...], 0.0)   # (NB, 50)
    o_ref[...] = (jnp.dot(h1.astype(bf16), wf2_ref[...],
                          preferred_element_type=f32) + bf2_ref[...])


# ----------------------------- parameter re-layout --------------------------

def prep_weights(params):
    """One-time re-layout of the PyTorch parameters for the fused kernel."""
    f32, bf16 = jnp.float32, jnp.bfloat16

    # conv1 banded matrix: rows (ky<5, j<28) -> K=140,
    # cols (parity<2, idx<128) with idx = W*10+co for idx<120, zero padding after.
    w1t = jnp.transpose(params["conv1_w"], (2, 3, 1, 0)).reshape(5, 5, 10)  # (ky,kx,co)
    w1big = jnp.zeros((5, 28, 2, 128), f32)
    for W in range(12):
        for parity in range(2):
            w = 2 * W + parity
            w1big = w1big.at[:, w:w + 5, parity, W * 10:W * 10 + 10].set(w1t)
    w1big = w1big.reshape(140, 256).astype(bf16)
    b1_half = jnp.concatenate([jnp.tile(params["conv1_b"], 12),
                               jnp.zeros((8,), f32)])
    b1t = jnp.tile(b1_half, 2).reshape(1, 256).astype(f32)

    # conv2 banded matrix: rows (ky<5, in_idx<128) with in_idx = w_in*10+ci (<120),
    # cols (parity<2, out_idx<128) with out_idx = W*20+co (<80), zero padding after.
    w2t = jnp.transpose(params["conv2_w"], (2, 3, 1, 0))        # (ky,kx,ci,co)
    w2big = jnp.zeros((5, 128, 2, 128), f32)
    for W in range(4):
        for parity in range(2):
            w = 2 * W + parity
            for kx in range(5):
                w_in = w + kx
                w2big = w2big.at[:, w_in * 10:w_in * 10 + 10, parity,
                                 W * 20:W * 20 + 20].set(w2t[:, kx, :, :])
    w2big = w2big.reshape(640, 256).astype(bf16)
    b2_half = jnp.concatenate([jnp.tile(params["conv2_b"], 4),
                               jnp.zeros((48,), f32)])
    b2t = jnp.tile(b2_half, 2).reshape(1, 256).astype(f32)

    # fc1: permute 320 input cols from PyTorch (c,h,w) flatten order to the
    # kernel's padded (h<4, [w<4, c<20] pad->128) order.
    wf1_t = jnp.transpose(params["fc1_w"].reshape(50, 20, 4, 4),
                          (0, 2, 3, 1)).reshape(50, 4, 80)
    wf1_p = jnp.zeros((50, 4, 128), f32).at[:, :, :80].set(wf1_t)
    wf1 = wf1_p.reshape(50, 512).T.astype(bf16)                 # (512, 50)
    bf1 = params["fc1_b"].reshape(1, 50).astype(f32)
    wf2 = params["fc2_w"].T.astype(bf16)                        # (50, 10)
    bf2 = params["fc2_b"].reshape(1, 10).astype(f32)
    return w1big, b1t, w2big, b2t, wf1, bf1, wf2, bf2


def _whole(shape):
    nd = len(shape)
    return pl.BlockSpec(shape, lambda i, _nd=nd: (0,) * _nd)


# ----------------------------- forward wrapper ------------------------------

def net_forward(x_nchw, params, *, block_n=128):
    n = x_nchw.shape[0]
    # Cap the batch tile so the grid keeps >= 2 steps when possible (v7x has
    # 2 TensorCores sharing the "parallel" axis); keep it a multiple of 8.
    half8 = ((n + 1) // 2 + 7) // 8 * 8
    bn = max(8, min(block_n, half8))
    n_pad = ((n + bn - 1) // bn) * bn

    x = x_nchw.reshape(n, 784)                       # Cin == 1, row-major (h, w)
    if n_pad != n:
        x = jnp.pad(x, ((0, n_pad - n), (0, 0)))

    w1big, b1t, w2big, b2t, wf1, bf1, wf2, bf2 = prep_weights(params)

    flops_per_img = 2 * (24 * 140 * 256 + 8 * 640 * 256 + 512 * 50 + 50 * 10)
    bytes_accessed = (n_pad * (784 + 10) * 4
                      + 2 * (140 * 256 + 640 * 256 + 512 * 50 + 50 * 10)
                      + 4 * (256 + 256 + 50 + 10))

    out = pl.pallas_call(
        net_kernel,
        out_shape=jax.ShapeDtypeStruct((n_pad, 10), jnp.float32),
        grid=(n_pad // bn,),
        in_specs=[
            pl.BlockSpec((bn, 784), lambda i: (i, 0)),
            _whole((140, 256)), _whole((1, 256)),
            _whole((640, 256)), _whole((1, 256)),
            _whole((512, 50)), _whole((1, 50)),
            _whole((50, 10)), _whole((1, 10)),
        ],
        out_specs=pl.BlockSpec((bn, 10), lambda i: (i, 0)),
        scratch_shapes=[
            pltpu.VMEM((24 * bn, 140), jnp.bfloat16),
            pltpu.VMEM((bn, 1536), jnp.bfloat16),
            pltpu.VMEM((8 * bn, 640), jnp.bfloat16),
            pltpu.VMEM((bn, 512), jnp.bfloat16),
        ],
        compiler_params=pltpu.CompilerParams(
            dimension_semantics=("parallel",),
            vmem_limit_bytes=32 * 1024 * 1024),
        cost_estimate=pl.CostEstimate(
            flops=int(n_pad * flops_per_img),
            transcendentals=0,
            bytes_accessed=int(bytes_accessed)),
    )(x, w1big, b1t, w2big, b2t, wf1, bf1, wf2, bf2)
    return out[:n]


# ----------------------------- reference / test ------------------------------

def init_params(key):
    ks = jax.random.split(key, 8)
    s = 0.1
    return {
        "conv1_w": s * jax.random.normal(ks[0], (10, 1, 5, 5), jnp.float32),
        "conv1_b": s * jax.random.normal(ks[1], (10,), jnp.float32),
        "conv2_w": s * jax.random.normal(ks[2], (20, 10, 5, 5), jnp.float32),
        "conv2_b": s * jax.random.normal(ks[3], (20,), jnp.float32),
        "fc1_w": s * jax.random.normal(ks[4], (50, 320), jnp.float32),
        "fc1_b": s * jax.random.normal(ks[5], (50,), jnp.float32),
        "fc2_w": s * jax.random.normal(ks[6], (10, 50), jnp.float32),
        "fc2_b": s * jax.random.normal(ks[7], (10,), jnp.float32),
    }


def ref_forward(x_nchw, params):
    """Plain-JAX f32 reference mirroring the PyTorch forward (for validation)."""
    def conv(x, w, b):
        y = lax.conv_general_dilated(x, w, (1, 1), "VALID",
                                     dimension_numbers=("NCHW", "OIHW", "NCHW"))
        return y + b.reshape(1, -1, 1, 1)

    def pool(x):
        return lax.reduce_window(x, -jnp.inf, lax.max,
                                 (1, 1, 2, 2), (1, 1, 2, 2), "VALID")

    y = jnp.maximum(pool(conv(x_nchw, params["conv1_w"], params["conv1_b"])), 0.0)
    y = jnp.maximum(pool(conv(y, params["conv2_w"], params["conv2_b"])), 0.0)
    y = y.reshape(y.shape[0], -1)
    y = jnp.maximum(y @ params["fc1_w"].T + params["fc1_b"], 0.0)
    return y @ params["fc2_w"].T + params["fc2_b"]


if __name__ == "__main__":
    key = jax.random.PRNGKey(0)
    k_x, k_p = jax.random.split(key)
    x = jax.random.normal(k_x, (64, 1, 28, 28), jnp.float32)   # NCHW like PyTorch
    params = init_params(k_p)

    fwd = jax.jit(net_forward)
    out = jax.block_until_ready(fwd(x, params))
    assert out.shape == (64, 10), out.shape

    # f32 reference; tolerance accounts for bf16 matmul operands.
    ref = jax.block_until_ready(ref_forward(x, params))
    err = float(np.max(np.abs(np.asarray(out) - np.asarray(ref))))
    assert np.allclose(np.asarray(out), np.asarray(ref), rtol=5e-2, atol=1e-1), err

    print("KERNEL_OK")
</pallas_src>

<mosaic_0001>
module attributes {stable_mosaic.version = 11 : i64} {
  func.func @net_kernel(%arg0: i32, %arg1: memref<32x784xf32, #tpu.memory_space<vmem>>, %arg2: memref<140x256xbf16, #tpu.memory_space<vmem>>, %arg3: memref<1x256xf32, #tpu.memory_space<vmem>>, %arg4: memref<640x256xbf16, #tpu.memory_space<vmem>>, %arg5: memref<1x256xf32, #tpu.memory_space<vmem>>, %arg6: memref<512x50xbf16, #tpu.memory_space<vmem>>, %arg7: memref<1x50xf32, #tpu.memory_space<vmem>>, %arg8: memref<50x10xbf16, #tpu.memory_space<vmem>>, %arg9: memref<1x10xf32, #tpu.memory_space<vmem>>, %arg10: memref<32x10xf32, #tpu.memory_space<vmem>>, %arg11: memref<768x140xbf16, #tpu.memory_space<vmem>>, %arg12: memref<32x1536xbf16, #tpu.memory_space<vmem>>, %arg13: memref<256x640xbf16, #tpu.memory_space<vmem>>, %arg14: memref<32x512xbf16, #tpu.memory_space<vmem>>) attributes {dimension_semantics = [#tpu.dimension_semantics<parallel>], iteration_bounds = array<i64: 2>, scalar_prefetch = 0 : i64, scratch_operands = 4 : i64, tpu.core_type = #tpu.core_type<tc>, window_params = [{transform_indices = @transform_0, window_bounds = array<i64: 32, 784>}, {pipeline_mode = #tpu.pipeline_mode<synchronous>, transform_indices = @transform_1, window_bounds = array<i64: 140, 256>}, {pipeline_mode = #tpu.pipeline_mode<synchronous>, transform_indices = @transform_2, window_bounds = array<i64: 1, 256>}, {pipeline_mode = #tpu.pipeline_mode<synchronous>, transform_indices = @transform_3, window_bounds = array<i64: 640, 256>}, {pipeline_mode = #tpu.pipeline_mode<synchronous>, transform_indices = @transform_4, window_bounds = array<i64: 1, 256>}, {pipeline_mode = #tpu.pipeline_mode<synchronous>, transform_indices = @transform_5, window_bounds = array<i64: 512, 50>}, {pipeline_mode = #tpu.pipeline_mode<synchronous>, transform_indices = @transform_6, window_bounds = array<i64: 1, 50>}, {pipeline_mode = #tpu.pipeline_mode<synchronous>, transform_indices = @transform_7, window_bounds = array<i64: 50, 10>}, {pipeline_mode = #tpu.pipeline_mode<synchronous>, transform_indices = @transform_8, window_bounds = array<i64: 1, 10>}, {transform_indices = @transform_9, window_bounds = array<i64: 32, 10>}]} {
    %c0 = arith.constant 0 : index
    %c0_0 = arith.constant 0 : index
    %0 = vector.load %arg1[%c0, %c0_0] : memref<32x784xf32, #tpu.memory_space<vmem>>, vector<32x140xf32>
    %1 = arith.truncf %0 : vector<32x140xf32> to vector<32x140xbf16>
    %c0_1 = arith.constant 0 : index
    %c0_2 = arith.constant 0 : index
    %2 = vector.load %arg11[%c0_1, %c0_2] : memref<768x140xbf16, #tpu.memory_space<vmem>>, vector<32x140xbf16>
    tpu.vector_store %arg11[%c0_1, %c0_2], %1 {strides = array<i32>} : memref<768x140xbf16, #tpu.memory_space<vmem>>, vector<32x140xbf16>,
    %c0_3 = arith.constant 0 : index
    %c56 = arith.constant 56 : index
    %3 = vector.load %arg1[%c0_3, %c56] : memref<32x784xf32, #tpu.memory_space<vmem>>, vector<32x140xf32>
    %4 = arith.truncf %3 : vector<32x140xf32> to vector<32x140xbf16>
    %c32 = arith.constant 32 : index
    %c0_4 = arith.constant 0 : index
    %5 = vector.load %arg11[%c32, %c0_4] : memref<768x140xbf16, #tpu.memory_space<vmem>>, vector<32x140xbf16>
    tpu.vector_store %arg11[%c32, %c0_4], %4 {strides = array<i32>} : memref<768x140xbf16, #tpu.memory_space<vmem>>, vector<32x140xbf16>,
    %c0_5 = arith.constant 0 : index
    %c112 = arith.constant 112 : index
    %6 = vector.load %arg1[%c0_5, %c112] : memref<32x784xf32, #tpu.memory_space<vmem>>, vector<32x140xf32>
    %7 = arith.truncf %6 : vector<32x140xf32> to vector<32x140xbf16>
    %c64 = arith.constant 64 : index
    %c0_6 = arith.constant 0 : index
    %8 = vector.load %arg11[%c64, %c0_6] : memref<768x140xbf16, #tpu.memory_space<vmem>>, vector<32x140xbf16>
    tpu.vector_store %arg11[%c64, %c0_6], %7 {strides = array<i32>} : memref<768x140xbf16, #tpu.memory_space<vmem>>, vector<32x140xbf16>,
    %c0_7 = arith.constant 0 : index
    %c168 = arith.constant 168 : index
    %9 = vector.load %arg1[%c0_7, %c168] : memref<32x784xf32, #tpu.memory_space<vmem>>, vector<32x140xf32>
    %10 = arith.truncf %9 : vector<32x140xf32> to vector<32x140xbf16>
    %c96 = arith.constant 96 : index
    %c0_8 = arith.constant 0 : index
    %11 = vector.load %arg11[%c96, %c0_8] : memref<768x140xbf16, #tpu.memory_space<vmem>>, vector<32x140xbf16>
    tpu.vector_store %arg11[%c96, %c0_8], %10 {strides = array<i32>} : memref<768x140xbf16, #tpu.memory_space<vmem>>, vector<32x140xbf16>,
    %c0_9 = arith.constant 0 : index
    %c224 = arith.constant 224 : index
    %12 = vector.load %arg1[%c0_9, %c224] : memref<32x784xf32, #tpu.memory_space<vmem>>, vector<32x140xf32>
    %13 = arith.truncf %12 : vector<32x140xf32> to vector<32x140xbf16>
    %c128 = arith.constant 128 : index
    %c0_10 = arith.constant 0 : index
    %14 = vector.load %arg11[%c128, %c0_10] : memref<768x140xbf16, #tpu.memory_space<vmem>>, vector<32x140xbf16>
    tpu.vector_store %arg11[%c128, %c0_10], %13 {strides = array<i32>} : memref<768x140xbf16, #tpu.memory_space<vmem>>, vector<32x140xbf16>,
    %c0_11 = arith.constant 0 : index
    %c280 = arith.constant 280 : index
    %15 = vector.load %arg1[%c0_11, %c280] : memref<32x784xf32, #tpu.memory_space<vmem>>, vector<32x140xf32>
    %16 = arith.truncf %15 : vector<32x140xf32> to vector<32x140xbf16>
    %c160 = arith.constant 160 : index
    %c0_12 = arith.constant 0 : index
    %17 = vector.load %arg11[%c160, %c0_12] : memref<768x140xbf16, #tpu.memory_space<vmem>>, vector<32x140xbf16>
    tpu.vector_store %arg11[%c160, %c0_12], %16 {strides = array<i32>} : memref<768x140xbf16, #tpu.memory_space<vmem>>, vector<32x140xbf16>,
    %c0_13 = arith.constant 0 : index
    %c336 = arith.constant 336 : index
    %18 = vector.load %arg1[%c0_13, %c336] : memref<32x784xf32, #tpu.memory_space<vmem>>, vector<32x140xf32>
    %19 = arith.truncf %18 : vector<32x140xf32> to vector<32x140xbf16>
    %c192 = arith.constant 192 : index
    %c0_14 = arith.constant 0 : index
    %20 = vector.load %arg11[%c192, %c0_14] : memref<768x140xbf16, #tpu.memory_space<vmem>>, vector<32x140xbf16>
    tpu.vector_store %arg11[%c192, %c0_14], %19 {strides = array<i32>} : memref<768x140xbf16, #tpu.memory_space<vmem>>, vector<32x140xbf16>,
    %c0_15 = arith.constant 0 : index
    %c392 = arith.constant 392 : index
    %21 = vector.load %arg1[%c0_15, %c392] : memref<32x784xf32, #tpu.memory_space<vmem>>, vector<32x140xf32>
    %22 = arith.truncf %21 : vector<32x140xf32> to vector<32x140xbf16>
    %c224_16 = arith.constant 224 : index
    %c0_17 = arith.constant 0 : index
    %23 = vector.load %arg11[%c224_16, %c0_17] : memref<768x140xbf16, #tpu.memory_space<vmem>>, vector<32x140xbf16>
    tpu.vector_store %arg11[%c224_16, %c0_17], %22 {strides = array<i32>} : memref<768x140xbf16, #tpu.memory_space<vmem>>, vector<32x140xbf16>,
    %c0_18 = arith.constant 0 : index
    %c448 = arith.constant 448 : index
    %24 = vector.load %arg1[%c0_18, %c448] : memref<32x784xf32, #tpu.memory_space<vmem>>, vector<32x140xf32>
    %25 = arith.truncf %24 : vector<32x140xf32> to vector<32x140xbf16>
    %c256 = arith.constant 256 : index
    %c0_19 = arith.constant 0 : index
    %26 = vector.load %arg11[%c256, %c0_19] : memref<768x140xbf16, #tpu.memory_space<vmem>>, vector<32x140xbf16>
    tpu.vector_store %arg11[%c256, %c0_19], %25 {strides = array<i32>} : memref<768x140xbf16, #tpu.memory_space<vmem>>, vector<32x140xbf16>,
    %c0_20 = arith.constant 0 : index
    %c504 = arith.constant 504 : index
    %27 = vector.load %arg1[%c0_20, %c504] : memref<32x784xf32, #tpu.memory_space<vmem>>, vector<32x140xf32>
    %28 = arith.truncf %27 : vector<32x140xf32> to vector<32x140xbf16>
    %c288 = arith.constant 288 : index
    %c0_21 = arith.constant 0 : index
    %29 = vector.load %arg11[%c288, %c0_21] : memref<768x140xbf16, #tpu.memory_space<vmem>>, vector<32x140xbf16>
    tpu.vector_store %arg11[%c288, %c0_21], %28 {strides = array<i32>} : memref<768x140xbf16, #tpu.memory_space<vmem>>, vector<32x140xbf16>,
    %c0_22 = arith.constant 0 : index
    %c560 = arith.constant 560 : index
    %30 = vector.load %arg1[%c0_22, %c560] : memref<32x784xf32, #tpu.memory_space<vmem>>, vector<32x140xf32>
    %31 = arith.truncf %30 : vector<32x140xf32> to vector<32x140xbf16>
    %c320 = arith.constant 320 : index
    %c0_23 = arith.constant 0 : index
    %32 = vector.load %arg11[%c320, %c0_23] : memref<768x140xbf16, #tpu.memory_space<vmem>>, vector<32x140xbf16>
    tpu.vector_store %arg11[%c320, %c0_23], %31 {strides = array<i32>} : memref<768x140xbf16, #tpu.memory_space<vmem>>, vector<32x140xbf16>,
    %c0_24 = arith.constant 0 : index
    %c616 = arith.constant 616 : index
    %33 = vector.load %arg1[%c0_24, %c616] : memref<32x784xf32, #tpu.memory_space<vmem>>, vector<32x140xf32>
    %34 = arith.truncf %33 : vector<32x140xf32> to vector<32x140xbf16>
    %c352 = arith.constant 352 : index
    %c0_25 = arith.constant 0 : index
    %35 = vector.load %arg11[%c352, %c0_25] : memref<768x140xbf16, #tpu.memory_space<vmem>>, vector<32x140xbf16>
    tpu.vector_store %arg11[%c352, %c0_25], %34 {strides = array<i32>} : memref<768x140xbf16, #tpu.memory_space<vmem>>, vector<32x140xbf16>,
    %c0_26 = arith.constant 0 : index
    %c28 = arith.constant 28 : index
    %36 = vector.load %arg1[%c0_26, %c28] : memref<32x784xf32, #tpu.memory_space<vmem>>, vector<32x140xf32>
    %37 = arith.truncf %36 : vector<32x140xf32> to vector<32x140xbf16>
    %c384 = arith.constant 384 : index
    %c0_27 = arith.constant 0 : index
    %38 = vector.load %arg11[%c384, %c0_27] : memref<768x140xbf16, #tpu.memory_space<vmem>>, vector<32x140xbf16>
    tpu.vector_store %arg11[%c384, %c0_27], %37 {strides = array<i32>} : memref<768x140xbf16, #tpu.memory_space<vmem>>, vector<32x140xbf16>,
    %c0_28 = arith.constant 0 : index
    %c84 = arith.constant 84 : index
    %39 = vector.load %arg1[%c0_28, %c84] : memref<32x784xf32, #tpu.memory_space<vmem>>, vector<32x140xf32>
    %40 = arith.truncf %39 : vector<32x140xf32> to vector<32x140xbf16>
    %c416 = arith.constant 416 : index
    %c0_29 = arith.constant 0 : index
    %41 = vector.load %arg11[%c416, %c0_29] : memref<768x140xbf16, #tpu.memory_space<vmem>>, vector<32x140xbf16>
    tpu.vector_store %arg11[%c416, %c0_29], %40 {strides = array<i32>} : memref<768x140xbf16, #tpu.memory_space<vmem>>, vector<32x140xbf16>,
    %c0_30 = arith.constant 0 : index
    %c140 = arith.constant 140 : index
    %42 = vector.load %arg1[%c0_30, %c140] : memref<32x784xf32, #tpu.memory_space<vmem>>, vector<32x140xf32>
    %43 = arith.truncf %42 : vector<32x140xf32> to vector<32x140xbf16>
    %c448_31 = arith.constant 448 : index
    %c0_32 = arith.constant 0 : index
    %44 = vector.load %arg11[%c448_31, %c0_32] : memref<768x140xbf16, #tpu.memory_space<vmem>>, vector<32x140xbf16>
    tpu.vector_store %arg11[%c448_31, %c0_32], %43 {strides = array<i32>} : memref<768x140xbf16, #tpu.memory_space<vmem>>, vector<32x140xbf16>,
    %c0_33 = arith.constant 0 : index
    %c196 = arith.constant 196 : index
    %45 = vector.load %arg1[%c0_33, %c196] : memref<32x784xf32, #tpu.memory_space<vmem>>, vector<32x140xf32>
    %46 = arith.truncf %45 : vector<32x140xf32> to vector<32x140xbf16>
    %c480 = arith.constant 480 : index
    %c0_34 = arith.constant 0 : index
    %47 = vector.load %arg11[%c480, %c0_34] : memref<768x140xbf16, #tpu.memory_space<vmem>>, vector<32x140xbf16>
    tpu.vector_store %arg11[%c480, %c0_34], %46 {strides = array<i32>} : memref<768x140xbf16, #tpu.memory_space<vmem>>, vector<32x140xbf16>,
    %c0_35 = arith.constant 0 : index
    %c252 = arith.constant 252 : index
    %48 = vector.load %arg1[%c0_35, %c252] : memref<32x784xf32, #tpu.memory_space<vmem>>, vector<32x140xf32>
    %49 = arith.truncf %48 : vector<32x140xf32> to vector<32x140xbf16>
    %c512 = arith.constant 512 : index
    %c0_36 = arith.constant 0 : index
    %50 = vector.load %arg11[%c512, %c0_36] : memref<768x140xbf16, #tpu.memory_space<vmem>>, vector<32x140xbf16>
    tpu.vector_store %arg11[%c512, %c0_36], %49 {strides = array<i32>} : memref<768x140xbf16, #tpu.memory_space<vmem>>, vector<32x140xbf16>,
    %c0_37 = arith.constant 0 : index
    %c308 = arith.constant 308 : index
    %51 = vector.load %arg1[%c0_37, %c308] : memref<32x784xf32, #tpu.memory_space<vmem>>, vector<32x140xf32>
    %52 = arith.truncf %51 : vector<32x140xf32> to vector<32x140xbf16>
    %c544 = arith.constant 544 : index
    %c0_38 = arith.constant 0 : index
    %53 = vector.load %arg11[%c544, %c0_38] : memref<768x140xbf16, #tpu.memory_space<vmem>>, vector<32x140xbf16>
    tpu.vector_store %arg11[%c544, %c0_38], %52 {strides = array<i32>} : memref<768x140xbf16, #tpu.memory_space<vmem>>, vector<32x140xbf16>,
    %c0_39 = arith.constant 0 : index
    %c364 = arith.constant 364 : index
    %54 = vector.load %arg1[%c0_39, %c364] : memref<32x784xf32, #tpu.memory_space<vmem>>, vector<32x140xf32>
    %55 = arith.truncf %54 : vector<32x140xf32> to vector<32x140xbf16>
    %c576 = arith.constant 576 : index
    %c0_40 = arith.constant 0 : index
    %56 = vector.load %arg11[%c576, %c0_40] : memref<768x140xbf16, #tpu.memory_space<vmem>>, vector<32x140xbf16>
    tpu.vector_store %arg11[%c576, %c0_40], %55 {strides = array<i32>} : memref<768x140xbf16, #tpu.memory_space<vmem>>, vector<32x140xbf16>,
    %c0_41 = arith.constant 0 : index
    %c420 = arith.constant 420 : index
    %57 = vector.load %arg1[%c0_41, %c420] : memref<32x784xf32, #tpu.memory_space<vmem>>, vector<32x140xf32>
    %58 = arith.truncf %57 : vector<32x140xf32> to vector<32x140xbf16>
    %c608 = arith.constant 608 : index
    %c0_42 = arith.constant 0 : index
    %59 = vector.load %arg11[%c608, %c0_42] : memref<768x140xbf16, #tpu.memory_space<vmem>>, vector<32x140xbf16>
    tpu.vector_store %arg11[%c608, %c0_42], %58 {strides = array<i32>} : memref<768x140xbf16, #tpu.memory_space<vmem>>, vector<32x140xbf16>,
    %c0_43 = arith.constant 0 : index
    %c476 = arith.constant 476 : index
    %60 = vector.load %arg1[%c0_43, %c476] : memref<32x784xf32, #tpu.memory_space<vmem>>, vector<32x140xf32>
    %61 = arith.truncf %60 : vector<32x140xf32> to vector<32x140xbf16>
    %c640 = arith.constant 640 : index
    %c0_44 = arith.constant 0 : index
    %62 = vector.load %arg11[%c640, %c0_44] : memref<768x140xbf16, #tpu.memory_space<vmem>>, vector<32x140xbf16>
    tpu.vector_store %arg11[%c640, %c0_44], %61 {strides = array<i32>} : memref<768x140xbf16, #tpu.memory_space<vmem>>, vector<32x140xbf16>,
    %c0_45 = arith.constant 0 : index
    %c532 = arith.constant 532 : index
    %63 = vector.load %arg1[%c0_45, %c532] : memref<32x784xf32, #tpu.memory_space<vmem>>, vector<32x140xf32>
    %64 = arith.truncf %63 : vector<32x140xf32> to vector<32x140xbf16>
    %c672 = arith.constant 672 : index
    %c0_46 = arith.constant 0 : index
    %65 = vector.load %arg11[%c672, %c0_46] : memref<768x140xbf16, #tpu.memory_space<vmem>>, vector<32x140xbf16>
    tpu.vector_store %arg11[%c672, %c0_46], %64 {strides = array<i32>} : memref<768x140xbf16, #tpu.memory_space<vmem>>, vector<32x140xbf16>,
    %c0_47 = arith.constant 0 : index
    %c588 = arith.constant 588 : index
    %66 = vector.load %arg1[%c0_47, %c588] : memref<32x784xf32, #tpu.memory_space<vmem>>, vector<32x140xf32>
    %67 = arith.truncf %66 : vector<32x140xf32> to vector<32x140xbf16>
    %c704 = arith.constant 704 : index
    %c0_48 = arith.constant 0 : index
    %68 = vector.load %arg11[%c704, %c0_48] : memref<768x140xbf16, #tpu.memory_space<vmem>>, vector<32x140xbf16>
    tpu.vector_store %arg11[%c704, %c0_48], %67 {strides = array<i32>} : memref<768x140xbf16, #tpu.memory_space<vmem>>, vector<32x140xbf16>,
    %c0_49 = arith.constant 0 : index
    %c644 = arith.constant 644 : index
    %69 = vector.load %arg1[%c0_49, %c644] : memref<32x784xf32, #tpu.memory_space<vmem>>, vector<32x140xf32>
    %70 = arith.truncf %69 : vector<32x140xf32> to vector<32x140xbf16>
    %c736 = arith.constant 736 : index
    %c0_50 = arith.constant 0 : index
    %71 = vector.load %arg11[%c736, %c0_50] : memref<768x140xbf16, #tpu.memory_space<vmem>>, vector<32x140xbf16>
    tpu.vector_store %arg11[%c736, %c0_50], %70 {strides = array<i32>} : memref<768x140xbf16, #tpu.memory_space<vmem>>, vector<32x140xbf16>,
    %c0_51 = arith.constant 0 : index
    %c0_52 = arith.constant 0 : index
    %72 = vector.load %arg11[%c0_51, %c0_52] : memref<768x140xbf16, #tpu.memory_space<vmem>>, vector<768x140xbf16>
    %c0_53 = arith.constant 0 : index
    %c0_54 = arith.constant 0 : index
    %73 = vector.load %arg2[%c0_53, %c0_54] : memref<140x256xbf16, #tpu.memory_space<vmem>>, vector<140x256xbf16>
    %cst = arith.constant dense<0.000000e+00> : vector<768x256xf32>
    %74 = tpu.matmul %72, %73, %cst {dimension_numbers = #tpu.dot_dimension_numbers<[1], [0], [0], [1], [0, 0, 1, 1], [], []>} : vector<768x140xbf16>, vector<140x256xbf16>, vector<768x256xf32> -> vector<768x256xf32>
    %75 = vector.extract_strided_slice %74 {offsets = [0, 0], sizes = [384, 256], strides = [1, 1]} : vector<768x256xf32> to vector<384x256xf32>
    %76 = vector.extract_strided_slice %74 {offsets = [384, 0], sizes = [384, 256], strides = [1, 1]} : vector<768x256xf32> to vector<384x256xf32>
    %77 = arith.maximumf %75, %76 : vector<384x256xf32>
    %c0_55 = arith.constant 0 : index
    %c0_56 = arith.constant 0 : index
    %78 = vector.load %arg3[%c0_55, %c0_56] : memref<1x256xf32, #tpu.memory_space<vmem>>, vector<1x256xf32>
    %79 = vector.broadcast %78 : vector<1x256xf32> to vector<384x256xf32>
    %80 = arith.addf %77, %79 : vector<384x256xf32>
    %cst_57 = arith.constant 0.000000e+00 : f32
    %81 = vector.broadcast %cst_57 : f32 to vector<384x256xf32>
    %82 = arith.maximumf %80, %81 : vector<384x256xf32>
    %83 = vector.extract_strided_slice %82 {offsets = [0, 0], sizes = [384, 128], strides = [1, 1]} : vector<384x256xf32> to vector<384x128xf32>
    %84 = vector.extract_strided_slice %82 {offsets = [0, 128], sizes = [384, 128], strides = [1, 1]} : vector<384x256xf32> to vector<384x128xf32>
    %85 = arith.maximumf %83, %84 : vector<384x128xf32>
    %86 = vector.extract_strided_slice %85 {offsets = [0, 0], sizes = [32, 128], strides = [1, 1]} : vector<384x128xf32> to vector<32x128xf32>
    %87 = arith.truncf %86 : vector<32x128xf32> to vector<32x128xbf16>
    %c0_58 = arith.constant 0 : index
    %c0_59 = arith.constant 0 : index
    %88 = vector.load %arg12[%c0_58, %c0_59] : memref<32x1536xbf16, #tpu.memory_space<vmem>>, vector<32x128xbf16>
    tpu.vector_store %arg12[%c0_58, %c0_59], %87 {strides = array<i32>} : memref<32x1536xbf16, #tpu.memory_space<vmem>>, vector<32x128xbf16>,
    %89 = vector.extract_strided_slice %85 {offsets = [32, 0], sizes = [32, 128], strides = [1, 1]} : vector<384x128xf32> to vector<32x128xf32>
    %90 = arith.truncf %89 : vector<32x128xf32> to vector<32x128xbf16>
    %c0_60 = arith.constant 0 : index
    %c128_61 = arith.constant 128 : index
    %91 = vector.load %arg12[%c0_60, %c128_61] : memref<32x1536xbf16, #tpu.memory_space<vmem>>, vector<32x128xbf16>
    tpu.vector_store %arg12[%c0_60, %c128_61], %90 {strides = array<i32>} : memref<32x1536xbf16, #tpu.memory_space<vmem>>, vector<32x128xbf16>,
    %92 = vector.extract_strided_slice %85 {offsets = [64, 0], sizes = [32, 128], strides = [1, 1]} : vector<384x128xf32> to vector<32x128xf32>
    %93 = arith.truncf %92 : vector<32x128xf32> to vector<32x128xbf16>
    %c0_62 = arith.constant 0 : index
    %c256_63 = arith.constant 256 : index
    %94 = vector.load %arg12[%c0_62, %c256_63] : memref<32x1536xbf16, #tpu.memory_space<vmem>>, vector<32x128xbf16>
    tpu.vector_store %arg12[%c0_62, %c256_63], %93 {strides = array<i32>} : memref<32x1536xbf16, #tpu.memory_space<vmem>>, vector<32x128xbf16>,
    %95 = vector.extract_strided_slice %85 {offsets = [96, 0], sizes = [32, 128], strides = [1, 1]} : vector<384x128xf32> to vector<32x128xf32>
    %96 = arith.truncf %95 : vector<32x128xf32> to vector<32x128xbf16>
    %c0_64 = arith.constant 0 : index
    %c384_65 = arith.constant 384 : index
    %97 = vector.load %arg12[%c0_64, %c384_65] : memref<32x1536xbf16, #tpu.memory_space<vmem>>, vector<32x128xbf16>
    tpu.vector_store %arg12[%c0_64, %c384_65], %96 {strides = array<i32>} : memref<32x1536xbf16, #tpu.memory_space<vmem>>, vector<32x128xbf16>,
    %98 = vector.extract_strided_slice %85 {offsets = [128, 0], sizes = [32, 128], strides = [1, 1]} : vector<384x128xf32> to vector<32x128xf32>
    %99 = arith.truncf %98 : vector<32x128xf32> to vector<32x128xbf16>
    %c0_66 = arith.constant 0 : index
    %c512_67 = arith.constant 512 : index
    %100 = vector.load %arg12[%c0_66, %c512_67] : memref<32x1536xbf16, #tpu.memory_space<vmem>>, vector<32x128xbf16>
    tpu.vector_store %arg12[%c0_66, %c512_67], %99 {strides = array<i32>} : memref<32x1536xbf16, #tpu.memory_space<vmem>>, vector<32x128xbf16>,
    %101 = vector.extract_strided_slice %85 {offsets = [160, 0], sizes = [32, 128], strides = [1, 1]} : vector<384x128xf32> to vector<32x128xf32>
    %102 = arith.truncf %101 : vector<32x128xf32> to vector<32x128xbf16>
    %c0_68 = arith.constant 0 : index
    %c640_69 = arith.constant 640 : index
    %103 = vector.load %arg12[%c0_68, %c640_69] : memref<32x1536xbf16, #tpu.memory_space<vmem>>, vector<32x128xbf16>
    tpu.vector_store %arg12[%c0_68, %c640_69], %102 {strides = array<i32>} : memref<32x1536xbf16, #tpu.memory_space<vmem>>, vector<32x128xbf16>,
    %104 = vector.extract_strided_slice %85 {offsets = [192, 0], sizes = [32, 128], strides = [1, 1]} : vector<384x128xf32> to vector<32x128xf32>
    %105 = arith.truncf %104 : vector<32x128xf32> to vector<32x128xbf16>
    %c0_70 = arith.constant 0 : index
    %c768 = arith.constant 768 : index
    %106 = vector.load %arg12[%c0_70, %c768] : memref<32x1536xbf16, #tpu.memory_space<vmem>>, vector<32x128xbf16>
    tpu.vector_store %arg12[%c0_70, %c768], %105 {strides = array<i32>} : memref<32x1536xbf16, #tpu.memory_space<vmem>>, vector<32x128xbf16>,
    %107 = vector.extract_strided_slice %85 {offsets = [224, 0], sizes = [32, 128], strides = [1, 1]} : vector<384x128xf32> to vector<32x128xf32>
    %108 = arith.truncf %107 : vector<32x128xf32> to vector<32x128xbf16>
    %c0_71 = arith.constant 0 : index
    %c896 = arith.constant 896 : index
    %109 = vector.load %arg12[%c0_71, %c896] : memref<32x1536xbf16, #tpu.memory_space<vmem>>, vector<32x128xbf16>
    tpu.vector_store %arg12[%c0_71, %c896], %108 {strides = array<i32>} : memref<32x1536xbf16, #tpu.memory_space<vmem>>, vector<32x128xbf16>,
    %110 = vector.extract_strided_slice %85 {offsets = [256, 0], sizes = [32, 128], strides = [1, 1]} : vector<384x128xf32> to vector<32x128xf32>
    %111 = arith.truncf %110 : vector<32x128xf32> to vector<32x128xbf16>
    %c0_72 = arith.constant 0 : index
    %c1024 = arith.constant 1024 : index
    %112 = vector.load %arg12[%c0_72, %c1024] : memref<32x1536xbf16, #tpu.memory_space<vmem>>, vector<32x128xbf16>
    tpu.vector_store %arg12[%c0_72, %c1024], %111 {strides = array<i32>} : memref<32x1536xbf16, #tpu.memory_space<vmem>>, vector<32x128xbf16>,
    %113 = vector.extract_strided_slice %85 {offsets = [288, 0], sizes = [32, 128], strides = [1, 1]} : vector<384x128xf32> to vector<32x128xf32>
    %114 = arith.truncf %113 : vector<32x128xf32> to vector<32x128xbf16>
    %c0_73 = arith.constant 0 : index
    %c1152 = arith.constant 1152 : index
    %115 = vector.load %arg12[%c0_73, %c1152] : memref<32x1536xbf16, #tpu.memory_space<vmem>>, vector<32x128xbf16>
    tpu.vector_store %arg12[%c0_73, %c1152], %114 {strides = array<i32>} : memref<32x1536xbf16, #tpu.memory_space<vmem>>, vector<32x128xbf16>,
    %116 = vector.extract_strided_slice %85 {offsets = [320, 0], sizes = [32, 128], strides = [1, 1]} : vector<384x128xf32> to vector<32x128xf32>
    %117 = arith.truncf %116 : vector<32x128xf32> to vector<32x128xbf16>
    %c0_74 = arith.constant 0 : index
    %c1280 = arith.constant 1280 : index
    %118 = vector.load %arg12[%c0_74, %c1280] : memref<32x1536xbf16, #tpu.memory_space<vmem>>, vector<32x128xbf16>
    tpu.vector_store %arg12[%c0_74, %c1280], %117 {strides = array<i32>} : memref<32x1536xbf16, #tpu.memory_space<vmem>>, vector<32x128xbf16>,
    %119 = vector.extract_strided_slice %85 {offsets = [352, 0], sizes = [32, 128], strides = [1, 1]} : vector<384x128xf32> to vector<32x128xf32>
    %120 = arith.truncf %119 : vector<32x128xf32> to vector<32x128xbf16>
    %c0_75 = arith.constant 0 : index
    %c1408 = arith.constant 1408 : index
    %121 = vector.load %arg12[%c0_75, %c1408] : memref<32x1536xbf16, #tpu.memory_space<vmem>>, vector<32x128xbf16>
    tpu.vector_store %arg12[%c0_75, %c1408], %120 {strides = array<i32>} : memref<32x1536xbf16, #tpu.memory_space<vmem>>, vector<32x128xbf16>,
    %c0_76 = arith.constant 0 : index
    %c0_77 = arith.constant 0 : index
    %122 = vector.load %arg12[%c0_76, %c0_77] : memref<32x1536xbf16, #tpu.memory_space<vmem>>, vector<32x640xbf16>
    %c0_78 = arith.constant 0 : index
    %c0_79 = arith.constant 0 : index
    %123 = vector.load %arg13[%c0_78, %c0_79] : memref<256x640xbf16, #tpu.memory_space<vmem>>, vector<32x640xbf16>
    tpu.vector_store %arg13[%c0_78, %c0_79], %122 {strides = array<i32>} : memref<256x640xbf16, #tpu.memory_space<vmem>>, vector<32x640xbf16>,
    %c0_80 = arith.constant 0 : index
    %c256_81 = arith.constant 256 : index
    %124 = vector.load %arg12[%c0_80, %c256_81] : memref<32x1536xbf16, #tpu.memory_space<vmem>>, vector<32x640xbf16>
    %c32_82 = arith.constant 32 : index
    %c0_83 = arith.constant 0 : index
    %125 = vector.load %arg13[%c32_82, %c0_83] : memref<256x640xbf16, #tpu.memory_space<vmem>>, vector<32x640xbf16>
    tpu.vector_store %arg13[%c32_82, %c0_83], %124 {strides = array<i32>} : memref<256x640xbf16, #tpu.memory_space<vmem>>, vector<32x640xbf16>,
    %c0_84 = arith.constant 0 : index
    %c512_85 = arith.constant 512 : index
    %126 = vector.load %arg12[%c0_84, %c512_85] : memref<32x1536xbf16, #tpu.memory_space<vmem>>, vector<32x640xbf16>
    %c64_86 = arith.constant 64 : index
    %c0_87 = arith.constant 0 : index
    %127 = vector.load %arg13[%c64_86, %c0_87] : memref<256x640xbf16, #tpu.memory_space<vmem>>, vector<32x640xbf16>
    tpu.vector_store %arg13[%c64_86, %c0_87], %126 {strides = array<i32>} : memref<256x640xbf16, #tpu.memory_space<vmem>>, vector<32x640xbf16>,
    %c0_88 = arith.constant 0 : index
    %c768_89 = arith.constant 768 : index
    %128 = vector.load %arg12[%c0_88, %c768_89] : memref<32x1536xbf16, #tpu.memory_space<vmem>>, vector<32x640xbf16>
    %c96_90 = arith.constant 96 : index
    %c0_91 = arith.constant 0 : index
    %129 = vector.load %arg13[%c96_90, %c0_91] : memref<256x640xbf16, #tpu.memory_space<vmem>>, vector<32x640xbf16>
    tpu.vector_store %arg13[%c96_90, %c0_91], %128 {strides = array<i32>} : memref<256x640xbf16, #tpu.memory_space<vmem>>, vector<32x640xbf16>,
    %c0_92 = arith.constant 0 : index
    %c128_93 = arith.constant 128 : index
    %130 = vector.load %arg12[%c0_92, %c128_93] : memref<32x1536xbf16, #tpu.memory_space<vmem>>, vector<32x640xbf16>
    %c128_94 = arith.constant 128 : index
    %c0_95 = arith.constant 0 : index
    %131 = vector.load %arg13[%c128_94, %c0_95] : memref<256x640xbf16, #tpu.memory_space<vmem>>, vector<32x640xbf16>
    tpu.vector_store %arg13[%c128_94, %c0_95], %130 {strides = array<i32>} : memref<256x640xbf16, #tpu.memory_space<vmem>>, vector<32x640xbf16>,
    %c0_96 = arith.constant 0 : index
    %c384_97 = arith.constant 384 : index
    %132 = vector.load %arg12[%c0_96, %c384_97] : memref<32x1536xbf16, #tpu.memory_space<vmem>>, vector<32x640xbf16>
    %c160_98 = arith.constant 160 : index
    %c0_99 = arith.constant 0 : index
    %133 = vector.load %arg13[%c160_98, %c0_99] : memref<256x640xbf16, #tpu.memory_space<vmem>>, vector<32x640xbf16>
    tpu.vector_store %arg13[%c160_98, %c0_99], %132 {strides = array<i32>} : memref<256x640xbf16, #tpu.memory_space<vmem>>, vector<32x640xbf16>,
    %c0_100 = arith.constant 0 : index
    %c640_101 = arith.constant 640 : index
    %134 = vector.load %arg12[%c0_100, %c640_101] : memref<32x1536xbf16, #tpu.memory_space<vmem>>, vector<32x640xbf16>
    %c192_102 = arith.constant 192 : index
    %c0_103 = arith.constant 0 : index
    %135 = vector.load %arg13[%c192_102, %c0_103] : memref<256x640xbf16, #tpu.memory_space<vmem>>, vector<32x640xbf16>
    tpu.vector_store %arg13[%c192_102, %c0_103], %134 {strides = array<i32>} : memref<256x640xbf16, #tpu.memory_space<vmem>>, vector<32x640xbf16>,
    %c0_104 = arith.constant 0 : index
    %c896_105 = arith.constant 896 : index
    %136 = vector.load %arg12[%c0_104, %c896_105] : memref<32x1536xbf16, #tpu.memory_space<vmem>>, vector<32x640xbf16>
    %c224_106 = arith.constant 224 : index
    %c0_107 = arith.constant 0 : index
    %137 = vector.load %arg13[%c224_106, %c0_107] : memref<256x640xbf16, #tpu.memory_space<vmem>>, vector<32x640xbf16>
    tpu.vector_store %arg13[%c224_106, %c0_107], %136 {strides = array<i32>} : memref<256x640xbf16, #tpu.memory_space<vmem>>, vector<32x640xbf16>,
    %c0_108 = arith.constant 0 : index
    %c0_109 = arith.constant 0 : index
    %138 = vector.load %arg13[%c0_108, %c0_109] : memref<256x640xbf16, #tpu.memory_space<vmem>>, vector<256x640xbf16>
    %c0_110 = arith.constant 0 : index
    %c0_111 = arith.constant 0 : index
    %139 = vector.load %arg4[%c0_110, %c0_111] : memref<640x256xbf16, #tpu.memory_space<vmem>>, vector<640x256xbf16>
    %cst_112 = arith.constant dense<0.000000e+00> : vector<256x256xf32>
    %140 = tpu.matmul %138, %139, %cst_112 {dimension_numbers = #tpu.dot_dimension_numbers<[1], [0], [0], [1], [0, 0, 1, 1], [], []>} : vector<256x640xbf16>, vector<640x256xbf16>, vector<256x256xf32> -> vector<256x256xf32>
    %141 = vector.extract_strided_slice %140 {offsets = [0, 0], sizes = [128, 256], strides = [1, 1]} : vector<256x256xf32> to vector<128x256xf32>
    %142 = vector.extract_strided_slice %140 {offsets = [128, 0], sizes = [128, 256], strides = [1, 1]} : vector<256x256xf32> to vector<128x256xf32>
    %143 = arith.maximumf %141, %142 : vector<128x256xf32>
    %c0_113 = arith.constant 0 : index
    %c0_114 = arith.constant 0 : index
    %144 = vector.load %arg5[%c0_113, %c0_114] : memref<1x256xf32, #tpu.memory_space<vmem>>, vector<1x256xf32>
    %145 = vector.broadcast %144 : vector<1x256xf32> to vector<128x256xf32>
    %146 = arith.addf %143, %145 : vector<128x256xf32>
    %cst_115 = arith.constant 0.000000e+00 : f32
    %147 = vector.broadcast %cst_115 : f32 to vector<128x256xf32>
    %148 = arith.maximumf %146, %147 : vector<128x256xf32>
    %149 = vector.extract_strided_slice %148 {offsets = [0, 0], sizes = [128, 128], strides = [1, 1]} : vector<128x256xf32> to vector<128x128xf32>
    %150 = vector.extract_strided_slice %148 {offsets = [0, 128], sizes = [128, 128], strides = [1, 1]} : vector<128x256xf32> to vector<128x128xf32>
    %151 = arith.maximumf %149, %150 : vector<128x128xf32>
    %152 = vector.extract_strided_slice %151 {offsets = [0, 0], sizes = [32, 128], strides = [1, 1]} : vector<128x128xf32> to vector<32x128xf32>
    %153 = arith.truncf %152 : vector<32x128xf32> to vector<32x128xbf16>
    %c0_116 = arith.constant 0 : index
    %c0_117 = arith.constant 0 : index
    %154 = vector.load %arg14[%c0_116, %c0_117] : memref<32x512xbf16, #tpu.memory_space<vmem>>, vector<32x128xbf16>
    tpu.vector_store %arg14[%c0_116, %c0_117], %153 {strides = array<i32>} : memref<32x512xbf16, #tpu.memory_space<vmem>>, vector<32x128xbf16>,
    %155 = vector.extract_strided_slice %151 {offsets = [32, 0], sizes = [32, 128], strides = [1, 1]} : vector<128x128xf32> to vector<32x128xf32>
    %156 = arith.truncf %155 : vector<32x128xf32> to vector<32x128xbf16>
    %c0_118 = arith.constant 0 : index
    %c128_119 = arith.constant 128 : index
    %157 = vector.load %arg14[%c0_118, %c128_119] : memref<32x512xbf16, #tpu.memory_space<vmem>>, vector<32x128xbf16>
    tpu.vector_store %arg14[%c0_118, %c128_119], %156 {strides = array<i32>} : memref<32x512xbf16, #tpu.memory_space<vmem>>, vector<32x128xbf16>,
    %158 = vector.extract_strided_slice %151 {offsets = [64, 0], sizes = [32, 128], strides = [1, 1]} : vector<128x128xf32> to vector<32x128xf32>
    %159 = arith.truncf %158 : vector<32x128xf32> to vector<32x128xbf16>
    %c0_120 = arith.constant 0 : index
    %c256_121 = arith.constant 256 : index
    %160 = vector.load %arg14[%c0_120, %c256_121] : memref<32x512xbf16, #tpu.memory_space<vmem>>, vector<32x128xbf16>
    tpu.vector_store %arg14[%c0_120, %c256_121], %159 {strides = array<i32>} : memref<32x512xbf16, #tpu.memory_space<vmem>>, vector<32x128xbf16>,
    %161 = vector.extract_strided_slice %151 {offsets = [96, 0], sizes = [32, 128], strides = [1, 1]} : vector<128x128xf32> to vector<32x128xf32>
    %162 = arith.truncf %161 : vector<32x128xf32> to vector<32x128xbf16>
    %c0_122 = arith.constant 0 : index
    %c384_123 = arith.constant 384 : index
    %163 = vector.load %arg14[%c0_122, %c384_123] : memref<32x512xbf16, #tpu.memory_space<vmem>>, vector<32x128xbf16>
    tpu.vector_store %arg14[%c0_122, %c384_123], %162 {strides = array<i32>} : memref<32x512xbf16, #tpu.memory_space<vmem>>, vector<32x128xbf16>,
    %c0_124 = arith.constant 0 : index
    %c0_125 = arith.constant 0 : index
    %164 = vector.load %arg14[%c0_124, %c0_125] : memref<32x512xbf16, #tpu.memory_space<vmem>>, vector<32x512xbf16>
    %c0_126 = arith.constant 0 : index
    %c0_127 = arith.constant 0 : index
    %165 = vector.load %arg6[%c0_126, %c0_127] : memref<512x50xbf16, #tpu.memory_space<vmem>>, vector<512x50xbf16>
    %cst_128 = arith.constant dense<0.000000e+00> : vector<32x50xf32>
    %166 = tpu.matmul %164, %165, %cst_128 {dimension_numbers = #tpu.dot_dimension_numbers<[1], [0], [0], [1], [0, 0, 1, 1], [], []>} : vector<32x512xbf16>, vector<512x50xbf16>, vector<32x50xf32> -> vector<32x50xf32>
    %c0_129 = arith.constant 0 : index
    %c0_130 = arith.constant 0 : index
    %167 = vector.load %arg7[%c0_129, %c0_130] : memref<1x50xf32, #tpu.memory_space<vmem>>, vector<1x50xf32>
    %168 = vector.broadcast %167 : vector<1x50xf32> to vector<32x50xf32>
    %169 = arith.addf %166, %168 : vector<32x50xf32>
    %cst_131 = arith.constant 0.000000e+00 : f32
    %170 = vector.broadcast %cst_131 : f32 to vector<32x50xf32>
    %171 = arith.maximumf %169, %170 : vector<32x50xf32>
    %172 = arith.truncf %171 : vector<32x50xf32> to vector<32x50xbf16>
    %c0_132 = arith.constant 0 : index
    %c0_133 = arith.constant 0 : index
    %173 = vector.load %arg8[%c0_132, %c0_133] : memref<50x10xbf16, #tpu.memory_space<vmem>>, vector<50x10xbf16>
    %cst_134 = arith.constant dense<0.000000e+00> : vector<32x10xf32>
    %174 = tpu.matmul %172, %173, %cst_134 {dimension_numbers = #tpu.dot_dimension_numbers<[1], [0], [0], [1], [0, 0, 1, 1], [], []>} : vector<32x50xbf16>, vector<50x10xbf16>, vector<32x10xf32> -> vector<32x10xf32>
    %c0_135 = arith.constant 0 : index
    %c0_136 = arith.constant 0 : index
    %175 = vector.load %arg9[%c0_135, %c0_136] : memref<1x10xf32, #tpu.memory_space<vmem>>, vector<1x10xf32>
    %176 = vector.broadcast %175 : vector<1x10xf32> to vector<32x10xf32>
    %177 = arith.addf %174, %176 : vector<32x10xf32>
    %c0_137 = arith.constant 0 : index
    %c0_138 = arith.constant 0 : index
    %178 = vector.load %arg10[%c0_137, %c0_138] : memref<32x10xf32, #tpu.memory_space<vmem>>, vector<32x10xf32>
    tpu.vector_store %arg10[%c0_137, %c0_138], %177 {strides = array<i32>} : memref<32x10xf32, #tpu.memory_space<vmem>>, vector<32x10xf32>,
    return
  }
  func.func @transform_0(%arg0: i32) -> (i32, i32) {
    %c0_i32 = arith.constant 0 : i32
    %c0_i32_0 = arith.constant 0 : i32
    return %arg0, %c0_i32 : i32, i32
  }
  func.func @transform_1(%arg0: i32) -> (i32, i32) {
    %c0_i32 = arith.constant 0 : i32
    %c0_i32_0 = arith.constant 0 : i32
    %c0_i32_1 = arith.constant 0 : i32
    return %c0_i32, %c0_i32_0 : i32, i32
  }
  func.func @transform_2(%arg0: i32) -> (i32, i32) {
    %c0_i32 = arith.constant 0 : i32
    %c0_i32_0 = arith.constant 0 : i32
    %c0_i32_1 = arith.constant 0 : i32
    return %c0_i32, %c0_i32_0 : i32, i32
  }
  func.func @transform_3(%arg0: i32) -> (i32, i32) {
    %c0_i32 = arith.constant 0 : i32
    %c0_i32_0 = arith.constant 0 : i32
    %c0_i32_1 = arith.constant 0 : i32
    return %c0_i32, %c0_i32_0 : i32, i32
  }
  func.func @transform_4(%arg0: i32) -> (i32, i32) {
    %c0_i32 = arith.constant 0 : i32
    %c0_i32_0 = arith.constant 0 : i32
    %c0_i32_1 = arith.constant 0 : i32
    return %c0_i32, %c0_i32_0 : i32, i32
  }
  func.func @transform_5(%arg0: i32) -> (i32, i32) {
    %c0_i32 = arith.constant 0 : i32
    %c0_i32_0 = arith.constant 0 : i32
    %c0_i32_1 = arith.constant 0 : i32
    return %c0_i32, %c0_i32_0 : i32, i32
  }
  func.func @transform_6(%arg0: i32) -> (i32, i32) {
    %c0_i32 = arith.constant 0 : i32
    %c0_i32_0 = arith.constant 0 : i32
    %c0_i32_1 = arith.constant 0 : i32
    return %c0_i32, %c0_i32_0 : i32, i32
  }
  func.func @transform_7(%arg0: i32) -> (i32, i32) {
    %c0_i32 = arith.constant 0 : i32
    %c0_i32_0 = arith.constant 0 : i32
    %c0_i32_1 = arith.constant 0 : i32
    return %c0_i32, %c0_i32_0 : i32, i32
  }
  func.func @transform_8(%arg0: i32) -> (i32, i32) {
    %c0_i32 = arith.constant 0 : i32
    %c0_i32_0 = arith.constant 0 : i32
    %c0_i32_1 = arith.constant 0 : i32
    return %c0_i32, %c0_i32_0 : i32, i32
  }
  func.func @transform_9(%arg0: i32) -> (i32, i32) {
    %c0_i32 = arith.constant 0 : i32
    %c0_i32_0 = arith.constant 0 : i32
    return %arg0, %c0_i32 : i32, i32
  }
}

</mosaic_0001>

<llo_original>
// kernel: tile.23
$region0: #{tile.23}
  #allocation0 [shape = 's32[1]{0}', space=sflag, size = 0x4, scoped, tag = 'scoped memory for tile.23']
  %s0 = inlined_call_operand.vmem [shape: f32[10], index: 0, kind: input, shape index: {}]
  %s1 = inlined_call_operand.vmem [shape: f32[12,10], index: 1, kind: output, shape index: {}]
  // Predicated region
  $region2: #{tile.23} parent=0 // pred_check
    _
  $region3: #{tile.23} parent=0 // pred_check_branch
    %3 = sbr.rel (0) target = $region5
  $region4: #{tile.23} parent=0 // pred_region
    _
  $region5: #{tile.23} parent=0 // pred_fallthru
    _
  %v4 = vld [vmem:[%s0] ss:$0 sm:$0xff]
  %5 = vst [vmem:[%s1] sm:$0xff] %v4
  %s6 = scalar_lea.vmem %s1, 8
  %7 = vst [vmem:[%s6] sm:$0xff] %v4

// kernel: tile.24
$region0: #{tile.24}
  %s0 = inlined_call_operand.vmem [shape: f32[12,10], index: 0, kind: input, shape index: {}]
  %s1 = inlined_call_operand.vmem [shape: f32[120], index: 1, kind: output, shape index: {}]
  $region1: #{tile.24} parent=0
    #allocation0 [shape = 'u8[4096]{0}', space=vmem, size = 0x1000, scoped, tag = 'scoped mem for output reshape']
    %v2 = vld [vmem:[%s0] sm:$0x1]
    %vm3 = vcmask 80896
    %4 = vst.msk [vmem:[#allocation0] sm:$0x1] %vm3, %v2
    %s5 = scalar_lea.vmem %s0, 11
    %v6 = vld [vmem:[%s5] sm:$0x1]
    %7 = vrot.lane.b32.xlu0 %v6, 110
    %v8 = vpop.permute.xlu0 %7
    %vm9 = vcmask 982896
    %10 = vst.msk [vmem:[#allocation0] sm:$0x1] %vm9, %v8
    %s11 = scalar_lea.vmem %s0, 10
    %v12 = vld [vmem:[%s11] sm:$0x1]
    %13 = vrot.lane.b32.xlu0 %v12, 100
    %v14 = vpop.permute.xlu0 %13
    %vm15 = vcmask 900896
    %16 = vst.msk [vmem:[#allocation0] sm:$0x1] %vm15, %v14
    %s17 = scalar_lea.vmem %s0, 9
    %v18 = vld [vmem:[%s17] sm:$0x1]
    %19 = vrot.lane.b32.xlu0 %v18, 90
    %v20 = vpop.permute.xlu0 %19
    %vm21 = vcmask 818896
    %22 = vst.msk [vmem:[#allocation0] sm:$0x1] %vm21, %v20
    %s23 = scalar_lea.vmem %s0, 8
    %v24 = vld [vmem:[%s23] sm:$0x1]
    %25 = vrot.lane.b32.xlu0 %v24, 80
    %v26 = vpop.permute.xlu0 %25
    %vm27 = vcmask 736896
    %28 = vst.msk [vmem:[#allocation0] sm:$0x1] %vm27, %v26
    %s29 = scalar_lea.vmem %s0, 7
    %v30 = vld [vmem:[%s29] sm:$0x1]
    %31 = vrot.lane.b32.xlu0 %v30, 70
    %v32 = vpop.permute.xlu0 %31
    %vm33 = vcmask 654896
    %34 = vst.msk [vmem:[#allocation0] sm:$0x1] %vm33, %v32
    %s35 = scalar_lea.vmem %s0, 6
    %v36 = vld [vmem:[%s35] sm:$0x1]
    %37 = vrot.lane.b32.xlu0 %v36, 60
    %v38 = vpop.permute.xlu0 %37
    %vm39 = vcmask 572896
    %40 = vst.msk [vmem:[#allocation0] sm:$0x1] %vm39, %v38
    %s41 = scalar_lea.vmem %s0, 5
    %v42 = vld [vmem:[%s41] sm:$0x1]
    %43 = vrot.lane.b32.xlu0 %v42, 50
    %v44 = vpop.permute.xlu0 %43
    %vm45 = vcmask 490896
    %46 = vst.msk [vmem:[#allocation0] sm:$0x1] %vm45, %v44
    %s47 = scalar_lea.vmem %s0, 4
    %v48 = vld [vmem:[%s47] sm:$0x1]
    %49 = vrot.lane.b32.xlu0 %v48, 40
    %v50 = vpop.permute.xlu0 %49
    %vm51 = vcmask 408896
    %52 = vst.msk [vmem:[#allocation0] sm:$0x1] %vm51, %v50
    %s53 = scalar_lea.vmem %s0, 3
    %v54 = vld [vmem:[%s53] sm:$0x1]
    %55 = vrot.lane.b32.xlu0 %v54, 30
    %v56 = vpop.permute.xlu0 %55
    %vm57 = vcmask 326896
    %58 = vst.msk [vmem:[#allocation0] sm:$0x1] %vm57, %v56
    %s59 = scalar_lea.vmem %s0, 2
    %v60 = vld [vmem:[%s59] sm:$0x1]
    %61 = vrot.lane.b32.xlu0 %v60, 20
    %v62 = vpop.permute.xlu0 %61
    %vm63 = vcmask 244896
    %64 = vst.msk [vmem:[#allocation0] sm:$0x1] %vm63, %v62
    %s65 = scalar_lea.vmem %s0, 1
    %v66 = vld [vmem:[%s65] sm:$0x1]
    %67 = vrot.lane.b32.xlu0 %v66, 10
    %v68 = vpop.permute.xlu0 %67
    %vm69 = vcmask 162896
    %70 = vst.msk [vmem:[#allocation0] sm:$0x1] %vm69, %v68
    %s72 = ssub.s32 2, 1
    %v73 = vld [vmem:[#allocation0] sm:%s72]
    %s75 = ssub.s32 2, 1
    %76 = vst [vmem:[%s1] sm:%s75] %v73

// kernel: tile.28
$region0: #{tile.28}
  #allocation0 [shape = 's32[1]{0}', space=sflag, size = 0x4, scoped, tag = 'scoped memory for tile.28']
  %s0 = inlined_call_operand.vmem [shape: f32[128], index: 0, kind: input, shape index: {}]
  %s1 = inlined_call_operand.vmem [shape: f32[2,128], index: 1, kind: output, shape index: {}]
  // Predicated region
  $region2: #{tile.28} parent=0 // pred_check
    _
  $region3: #{tile.28} parent=0 // pred_check_branch
    %3 = sbr.rel (0) target = $region5
  $region4: #{tile.28} parent=0 // pred_region
    _
  $region5: #{tile.28} parent=0 // pred_fallthru
    _
  %v4 = vld [vmem:[%s0] ss:$0 sm:$0xff]
  %5 = vst [vmem:[%s1] sm:$0x3] %v4

// kernel: tile.33
$region0: #{tile.33}
  #allocation0 [shape = 's32[1]{0}', space=sflag, size = 0x4, scoped, tag = 'scoped memory for tile.33']
  %s0 = inlined_call_operand.vmem [shape: f32[20], index: 0, kind: input, shape index: {}]
  %s1 = inlined_call_operand.vmem [shape: f32[4,20], index: 1, kind: output, shape index: {}]
  // Predicated region
  $region2: #{tile.33} parent=0 // pred_check
    _
  $region3: #{tile.33} parent=0 // pred_check_branch
    %3 = sbr.rel (0) target = $region5
  $region4: #{tile.33} parent=0 // pred_region
    _
  $region5: #{tile.33} parent=0 // pred_fallthru
    _
  %v4 = vld [vmem:[%s0] ss:$0 sm:$0xff]
  %5 = vst [vmem:[%s1] sm:$0xf] %v4

// kernel: tile.34
$region0: #{tile.34}
  %s0 = inlined_call_operand.vmem [shape: f32[4,20], index: 0, kind: input, shape index: {}]
  %s1 = inlined_call_operand.vmem [shape: f32[80], index: 1, kind: output, shape index: {}]
  $region1: #{tile.34} parent=0
    #allocation0 [shape = 'u8[4096]{0}', space=vmem, size = 0x1000, scoped, tag = 'scoped mem for output reshape']
    #allocation1 [shape = 'u8[4096]{0}', space=vmem, size = 0x1000, scoped, tag = 'scoped mem for input reshape']
    %s3 = ssub.s32 16, 1
    %v4 = vld [vmem:[%s0] sm:%s3]
    %5 = vst [vmem:[#allocation1] sm:%s3] %v4
    %v6 = vld [vmem:[#allocation1] sm:$0x1]
    %vm7 = vcmask 162816
    %8 = vst.msk [vmem:[#allocation0] sm:$0x1] %vm7, %v6
    %s9 = scalar_lea.vmem [#allocation1], 3
    %v10 = vld [vmem:[%s9] sm:$0x1]
    %11 = vrot.lane.b32.xlu0 %v10, 60
    %v12 = vpop.permute.xlu0 %11
    %vm13 = vcmask 654816
    %14 = vst.msk [vmem:[#allocation0] sm:$0x1] %vm13, %v12
    %s15 = scalar_lea.vmem [#allocation1], 2
    %v16 = vld [vmem:[%s15] sm:$0x1]
    %17 = vrot.lane.b32.xlu0 %v16, 40
    %v18 = vpop.permute.xlu0 %17
    %vm19 = vcmask 490816
    %20 = vst.msk [vmem:[#allocation0] sm:$0x1] %vm19, %v18
    %s21 = scalar_lea.vmem [#allocation1], 1
    %v22 = vld [vmem:[%s21] sm:$0x1]
    %23 = vrot.lane.b32.xlu0 %v22, 20
    %v24 = vpop.permute.xlu0 %23
    %vm25 = vcmask 326816
    %26 = vst.msk [vmem:[#allocation0] sm:$0x1] %vm25, %v24
    %s28 = ssub.s32 2, 1
    %v29 = vld [vmem:[#allocation0] sm:%s28]
    %s31 = ssub.s32 2, 1
    %32 = vst [vmem:[%s1] sm:%s31] %v29

// kernel: net_forward.1
$region0: #{net_forward.1}
  #allocation0 [shape = 'u32[]', space=smem, size = 0x4, offset = 0x4, fixed_abs, tag = 'smem constant byte address 0x4 - core index']
  #allocation1 [shape = 'u32[72,128]{1,0:T(1,128)}', space=vmem, size = 0x9000, scoped, tag = 'internal scratch']
  #allocation2 [shape = 'bf16[768,140]{1,0:T(8,128)(2,1)}', space=vmem, size = 0x60000, scoped, tag = 'scratch operand']
  #allocation3 [shape = 'bf16[32,1536]{1,0:T(8,128)(2,1)}', space=vmem, size = 0x18000, scoped, tag = 'scratch operand']
  #allocation4 [shape = 'bf16[256,640]{1,0:T(8,128)(2,1)}', space=vmem, size = 0x50000, scoped, tag = 'scratch operand']
  #allocation5 [shape = 'bf16[32,512]{1,0:T(8,128)(2,1)}', space=vmem, size = 0x8000, scoped, tag = 'scratch operand']
  %s0 = inlined_call_operand.vmem [shape: f32[64,784], index: 0, kind: input, shape index: {}]
  %s1 = inlined_call_operand.vmem [shape: bf16[140,256], index: 1, kind: input, shape index: {}]
  %s2 = inlined_call_operand.vmem [shape: f32[1,256], index: 2, kind: input, shape index: {}]
  %s3 = inlined_call_operand.vmem [shape: bf16[640,256], index: 3, kind: input, shape index: {}]
  %s4 = inlined_call_operand.vmem [shape: f32[1,256], index: 4, kind: input, shape index: {}]
  %s5 = inlined_call_operand.vmem [shape: bf16[512,50], index: 5, kind: input, shape index: {}]
  %s6 = inlined_call_operand.vmem [shape: f32[1,50], index: 6, kind: input, shape index: {}]
  %s7 = inlined_call_operand.vmem [shape: bf16[50,10], index: 7, kind: input, shape index: {}]
  %s8 = inlined_call_operand.vmem [shape: f32[1,10], index: 8, kind: input, shape index: {}]
  %s9 = inlined_call_operand.vmem [shape: f32[64,10], index: 9, kind: output, shape index: {}]
  %s10 = sld [smem:[#allocation0]]
  $region69: #{net_forward.1} parent=0
    _
  %s12 = ssub.s32 1, %s10
  %s13 = scalar_select 0, %s12, %s10
  loop: start=0, step=1, limit=4
  $region2: #{net_forward.1} parent=0 // loop_pre_header
    _
  $region3: #{net_forward.1} parent=0 // loop_header
    %s15 = sphi 0, %s19
    %p16 = scmp.ge.s32.totalorder %s15, 4
    %s25 = sphi 0, %s27
    %s28 = sphi 0, %s25
    %s29 = sphi 0, %s28
    %s45 = sphi 0, %s29
    %s49 = sphi 0, %s49
    %s51 = sphi 0, %s49
    %s52 = sphi 0, %s51
    %s66 = sphi 0, %s52
    %s70 = sphi 0, %s70
    %s72 = sphi 0, %s70
    %s73 = sphi 0, %s72
    %s87 = sphi 0, %s73
    %s91 = sphi 0, %s91
    %s93 = sphi 0, %s91
    %s94 = sphi 0, %s93
    %s108 = sphi 0, %s94
    %s112 = sphi 0, %s112
    %s114 = sphi 0, %s112
    %s115 = sphi 0, %s114
    %s129 = sphi 0, %s115
    %s133 = sphi 0, %s133
    %s135 = sphi 0, %s133
    %s136 = sphi 0, %s135
    %s150 = sphi 0, %s136
    %s154 = sphi 0, %s154
    %s156 = sphi 0, %s154
    %s157 = sphi 0, %s156
    %s171 = sphi 0, %s157
    %s175 = sphi 0, %s175
    %s177 = sphi 0, %s175
    %s178 = sphi 0, %s177
    %s192 = sphi 0, %s178
    %s196 = sphi 0, %s196
    %s198 = sphi 0, %s196
    %s199 = sphi 0, %s198
    %s213 = sphi 0, %s199
    %s219 = sphi 0, %s221
    %s222 = sphi 0, %s219
    %s223 = sphi 0, %s222
    %s239 = sphi 0, %s223
  $region4: #{net_forward.1} parent=0 // loop_header_branch
    %18 = sbr.rel (%p16) target = $region8
  $region5: #{net_forward.1} parent=0 // loop_body
    %s20 = ssub.s32 %s15, 1
    %s21 = ssub.s32 %s15, 2
    %s22 = sadd.s32 %s15, 1
    %s23 = ssub.s32 %s15, %s22
    %p24 = scmp.eq.s32.totalorder %s23, 0
    %s26 = sadd.s32 %s25, 1
    %s27 = scalar_select %p24, %s25, %s26
    %p30 = pneg %p24
    %p31 = scmp.eq.s32.totalorder %s15, 1
    %p32 = por %p30, %p31
    %p33 = scmp.ne.s32.totalorder %s25, %s28
    %p34 = scmp.eq.s32.totalorder %s15, 0
    %p35 = por %p33, %p34
    %p36 = scmp.ne.s32.totalorder %s25, %s28
    %p37 = scmp.eq.s32.totalorder %s20, 1
    %p38 = por %p36, %p37
    %p39 = scmp.ne.s32.totalorder %s28, %s29
    %p40 = scmp.eq.s32.totalorder %s20, 0
    %p41 = por %p39, %p40
    %p42 = scmp.ne.s32.totalorder %s28, %s29
    %p43 = scmp.eq.s32.totalorder %s21, 1
    %p44 = por %p42, %p43
    %p46 = scmp.ne.s32.totalorder %s29, %s45
    %p47 = scmp.eq.s32.totalorder %s21, 0
    %p48 = por %p46, %p47
    %s50 = sadd.s32 %s49, 1
    %p53 = scmp.eq.s32.totalorder %s15, 1
    %p54 = scmp.ne.s32.totalorder %s49, %s51
    %p55 = scmp.eq.s32.totalorder %s15, 0
    %p56 = por %p54, %p55
    %p57 = scmp.ne.s32.totalorder %s49, %s51
    %p58 = scmp.eq.s32.totalorder %s20, 1
    %p59 = por %p57, %p58
    %p60 = scmp.ne.s32.totalorder %s51, %s52
    %p61 = scmp.eq.s32.totalorder %s20, 0
    %p62 = por %p60, %p61
    %p63 = scmp.ne.s32.totalorder %s51, %s52
    %p64 = scmp.eq.s32.totalorder %s21, 1
    %p65 = por %p63, %p64
    %p67 = scmp.ne.s32.totalorder %s52, %s66
    %p68 = scmp.eq.s32.totalorder %s21, 0
    %p69 = por %p67, %p68
    %s71 = sadd.s32 %s70, 1
    %p74 = scmp.eq.s32.totalorder %s15, 1
    %p75 = scmp.ne.s32.totalorder %s70, %s72
    %p76 = scmp.eq.s32.totalorder %s15, 0
    %p77 = por %p75, %p76
    %p78 = scmp.ne.s32.totalorder %s70, %s72
    %p79 = scmp.eq.s32.totalorder %s20, 1
    %p80 = por %p78, %p79
    %p81 = scmp.ne.s32.totalorder %s72, %s73
    %p82 = scmp.eq.s32.totalorder %s20, 0
    %p83 = por %p81, %p82
    %p84 = scmp.ne.s32.totalorder %s72, %s73
    %p85 = scmp.eq.s32.totalorder %s21, 1
    %p86 = por %p84, %p85
    %p88 = scmp.ne.s32.totalorder %s73, %s87
    %p89 = scmp.eq.s32.totalorder %s21, 0
    %p90 = por %p88, %p89
    %s92 = sadd.s32 %s91, 1
    %p95 = scmp.eq.s32.totalorder %s15, 1
    %p96 = scmp.ne.s32.totalorder %s91, %s93
    %p97 = scmp.eq.s32.totalorder %s15, 0
    %p98 = por %p96, %p97
    %p99 = scmp.ne.s32.totalorder %s91, %s93
    %p100 = scmp.eq.s32.totalorder %s20, 1
    %p101 = por %p99, %p100
    %p102 = scmp.ne.s32.totalorder %s93, %s94
    %p103 = scmp.eq.s32.totalorder %s20, 0
    %p104 = por %p102, %p103
    %p105 = scmp.ne.s32.totalorder %s93, %s94
    %p106 = scmp.eq.s32.totalorder %s21, 1
    %p107 = por %p105, %p106
    %p109 = scmp.ne.s32.totalorder %s94, %s108
    %p110 = scmp.eq.s32.totalorder %s21, 0
    %p111 = por %p109, %p110
    %s113 = sadd.s32 %s112, 1
    %p116 = scmp.eq.s32.totalorder %s15, 1
    %p117 = scmp.ne.s32.totalorder %s112, %s114
    %p118 = scmp.eq.s32.totalorder %s15, 0
    %p119 = por %p117, %p118
    %p120 = scmp.ne.s32.totalorder %s112, %s114
    %p121 = scmp.eq.s32.totalorder %s20, 1
    %p122 = por %p120, %p121
    %p123 = scmp.ne.s32.totalorder %s114, %s115
    %p124 = scmp.eq.s32.totalorder %s20, 0
    %p125 = por %p123, %p124
    %p126 = scmp.ne.s32.totalorder %s114, %s115
    %p127 = scmp.eq.s32.totalorder %s21, 1
    %p128 = por %p126, %p127
    %p130 = scmp.ne.s32.totalorder %s115, %s129
    %p131 = scmp.eq.s32.totalorder %s21, 0
    %p132 = por %p130, %p131
    %s134 = sadd.s32 %s133, 1
    %p137 = scmp.eq.s32.totalorder %s15, 1
    %p138 = scmp.ne.s32.totalorder %s133, %s135
    %p139 = scmp.eq.s32.totalorder %s15, 0
    %p140 = por %p138, %p139
    %p141 = scmp.ne.s32.totalorder %s133, %s135
    %p142 = scmp.eq.s32.totalorder %s20, 1
    %p143 = por %p141, %p142
    %p144 = scmp.ne.s32.totalorder %s135, %s136
    %p145 = scmp.eq.s32.totalorder %s20, 0
    %p146 = por %p144, %p145
    %p147 = scmp.ne.s32.totalorder %s135, %s136
    %p148 = scmp.eq.s32.totalorder %s21, 1
    %p149 = por %p147, %p148
    %p151 = scmp.ne.s32.totalorder %s136, %s150
    %p152 = scmp.eq.s32.totalorder %s21, 0
    %p153 = por %p151, %p152
    %s155 = sadd.s32 %s154, 1
    %p158 = scmp.eq.s32.totalorder %s15, 1
    %p159 = scmp.ne.s32.totalorder %s154, %s156
    %p160 = scmp.eq.s32.totalorder %s15, 0
    %p161 = por %p159, %p160
    %p162 = scmp.ne.s32.totalorder %s154, %s156
    %p163 = scmp.eq.s32.totalorder %s20, 1
    %p164 = por %p162, %p163
    %p165 = scmp.ne.s32.totalorder %s156, %s157
    %p166 = scmp.eq.s32.totalorder %s20, 0
    %p167 = por %p165, %p166
    %p168 = scmp.ne.s32.totalorder %s156, %s157
    %p169 = scmp.eq.s32.totalorder %s21, 1
    %p170 = por %p168, %p169
    %p172 = scmp.ne.s32.totalorder %s157, %s171
    %p173 = scmp.eq.s32.totalorder %s21, 0
    %p174 = por %p172, %p173
    %s176 = sadd.s32 %s175, 1
    %p179 = scmp.eq.s32.totalorder %s15, 1
    %p180 = scmp.ne.s32.totalorder %s175, %s177
    %p181 = scmp.eq.s32.totalorder %s15, 0
    %p182 = por %p180, %p181
    %p183 = scmp.ne.s32.totalorder %s175, %s177
    %p184 = scmp.eq.s32.totalorder %s20, 1
    %p185 = por %p183, %p184
    %p186 = scmp.ne.s32.totalorder %s177, %s178
    %p187 = scmp.eq.s32.totalorder %s20, 0
    %p188 = por %p186, %p187
    %p189 = scmp.ne.s32.totalorder %s177, %s178
    %p190 = scmp.eq.s32.totalorder %s21, 1
    %p191 = por %p189, %p190
    %p193 = scmp.ne.s32.totalorder %s178, %s192
    %p194 = scmp.eq.s32.totalorder %s21, 0
    %p195 = por %p193, %p194
    %s197 = sadd.s32 %s196, 1
    %p200 = scmp.eq.s32.totalorder %s15, 1
    %p201 = scmp.ne.s32.totalorder %s196, %s198
    %p202 = scmp.eq.s32.totalorder %s15, 0
    %p203 = por %p201, %p202
    %p204 = scmp.ne.s32.totalorder %s196, %s198
    %p205 = scmp.eq.s32.totalorder %s20, 1
    %p206 = por %p204, %p205
    %p207 = scmp.ne.s32.totalorder %s198, %s199
    %p208 = scmp.eq.s32.totalorder %s20, 0
    %p209 = por %p207, %p208
    %p210 = scmp.ne.s32.totalorder %s198, %s199
    %p211 = scmp.eq.s32.totalorder %s21, 1
    %p212 = por %p210, %p211
    %p214 = scmp.ne.s32.totalorder %s199, %s213
    %p215 = scmp.eq.s32.totalorder %s21, 0
    %p216 = por %p214, %p215
    %s217 = ssub.s32 %s15, %s22
    %p218 = scmp.eq.s32.totalorder %s217, 0
    %s220 = sadd.s32 %s219, 1
    %s221 = scalar_select %p218, %s219, %s220
    %p224 = pneg %p218
    %p225 = scmp.eq.s32.totalorder %s15, 1
    %p226 = por %p224, %p225
    %p227 = scmp.ne.s32.totalorder %s219, %s222
    %p228 = scmp.eq.s32.totalorder %s15, 0
    %p229 = por %p227, %p228
    %p230 = scmp.ne.s32.totalorder %s219, %s222
    %p231 = scmp.eq.s32.totalorder %s20, 1
    %p232 = por %p230, %p231
    %p233 = scmp.ne.s32.totalorder %s222, %s223
    %p234 = scmp.eq.s32.totalorder %s20, 0
    %p235 = por %p233, %p234
    %p236 = scmp.ne.s32.totalorder %s222, %s223
    %p237 = scmp.eq.s32.totalorder %s21, 1
    %p238 = por %p236, %p237
    %p240 = scmp.ne.s32.totalorder %s223, %s239
    %p241 = scmp.eq.s32.totalorder %s21, 0
    %p242 = por %p240, %p241
    %p243 = scmp.le.s32.totalorder 1, %s15
    %p244 = scmp.lt.s32.totalorder %s15, 3
    %p245 = pnand %p243, %p244
    %p246 = pneg %p245
    // Predicated region
    $region9: #{net_forward.1} parent=5 // pred_check
      _
    $region10: #{net_forward.1} parent=5 // pred_check_branch
      %248 = sbr.rel (%p245) target = $region12
    $region11: #{net_forward.1} parent=5 // pred_region
      %s249 = ssub.s32 %s15, 1
      // Predicated region
      $region13: #{net_forward.1} parent=11 // pred_check
        %p250 = pneg %p62
      $region14: #{net_forward.1} parent=11 // pred_check_branch
        %252 = sbr.rel (%p250) target = $region16
      $region15: #{net_forward.1} parent=11 // pred_region
        _
      $region16: #{net_forward.1} parent=11 // pred_fallthru
        _
      // Predicated region
      $region17: #{net_forward.1} parent=11 // pred_check
        %p253 = pneg %p83
      $region18: #{net_forward.1} parent=11 // pred_check_branch
        %255 = sbr.rel (%p253) target = $region20
      $region19: #{net_forward.1} parent=11 // pred_region
        _
      $region20: #{net_forward.1} parent=11 // pred_fallthru
        _
      // Predicated region
      $region21: #{net_forward.1} parent=11 // pred_check
        %p256 = pneg %p104
      $region22: #{net_forward.1} parent=11 // pred_check_branch
        %258 = sbr.rel (%p256) target = $region24
      $region23: #{net_forward.1} parent=11 // pred_region
        _
      $region24: #{net_forward.1} parent=11 // pred_fallthru
        _
      // Predicated region
      $region25: #{net_forward.1} parent=11 // pred_check
        %p259 = pneg %p125
      $region26: #{net_forward.1} parent=11 // pred_check_branch
        %261 = sbr.rel (%p259) target = $region28
      $region27: #{net_forward.1} parent=11 // pred_region
        _
      $region28: #{net_forward.1} parent=11 // pred_fallthru
        _
      // Predicated region
      $region29: #{net_forward.1} parent=11 // pred_check
        %p262 = pneg %p146
      $region30: #{net_forward.1} parent=11 // pred_check_branch
        %264 = sbr.rel (%p262) target = $region32
      $region31: #{net_forward.1} parent=11 // pred_region
        _
      $region32: #{net_forward.1} parent=11 // pred_fallthru
        _
      // Predicated region
      $region33: #{net_forward.1} parent=11 // pred_check
        %p265 = pneg %p167
      $region34: #{net_forward.1} parent=11 // pred_check_branch
        %267 = sbr.rel (%p265) target = $region36
      $region35: #{net_forward.1} parent=11 // pred_region
        _
      $region36: #{net_forward.1} parent=11 // pred_fallthru
        _
      // Predicated region
      $region37: #{net_forward.1} parent=11 // pred_check
        %p268 = pneg %p188
      $region38: #{net_forward.1} parent=11 // pred_check_branch
        %270 = sbr.rel (%p268) target = $region40
      $region39: #{net_forward.1} parent=11 // pred_region
        _
      $region40: #{net_forward.1} parent=11 // pred_fallthru
        _
      // Predicated region
      $region41: #{net_forward.1} parent=11 // pred_check
        %p271 = pneg %p209
      $region42: #{net_forward.1} parent=11 // pred_check_branch
        %273 = sbr.rel (%p271) target = $region44
      $region43: #{net_forward.1} parent=11 // pred_region
        _
      $region44: #{net_forward.1} parent=11 // pred_fallthru
        _
    $region12: #{net_forward.1} parent=5 // pred_fallthru
      _
    %p274 = scmp.lt.s32.totalorder %s15, 2
    // Predicated region
    $region45: #{net_forward.1} parent=5 // pred_check
      %p275 = pneg %p274
    $region46: #{net_forward.1} parent=5 // pred_check_branch
      %277 = sbr.rel (%p275) target = $region48
    $region47: #{net_forward.1} parent=5 // pred_region
      // Predicated region
      $region49: #{net_forward.1} parent=47 // pred_check
        %p278 = pneg %p35
      $region50: #{net_forward.1} parent=47 // pred_check_branch
        %280 = sbr.rel (%p278) target = $region52
      $region51: #{net_forward.1} parent=47 // pred_region
        %s281 = smul.u32 4, %s15
        %p282 = scmp.lt.s32.totalorder %s281, 7
        %s283 = scalar_select %p282, %s281, 7
        %s284 = smul.addr %s283, 7
        %s285 = smul.addr %s284, 8
        %s286 = scalar_lea.vmem %s0, %s285
        %s287 = smul.u32 4, %s15
      $region52: #{net_forward.1} parent=47 // pred_fallthru
        _
    $region48: #{net_forward.1} parent=5 // pred_fallthru
      _
    %p288 = scmp.le.s32.totalorder 1, %s15
    %p289 = scmp.lt.s32.totalorder %s15, 3
    %p290 = pnand %p288, %p289
    %p291 = pneg %p290
    // Predicated region
    $region53: #{net_forward.1} parent=5 // pred_check
      _
    $region54: #{net_forward.1} parent=5 // pred_check_branch
      %293 = sbr.rel (%p290) target = $region56
    $region55: #{net_forward.1} parent=5 // pred_region
      %s294 = ssub.s32 %s15, 1
      %s295 = smul.u32 4, %s20
      %p296 = scmp.lt.s32.totalorder %s295, 7
      %s297 = scalar_select %p296, %s295, 7
      %s298 = smul.addr %s297, 7
      %s299 = smul.addr %s298, 8
      %s300 = scalar_lea.vmem %s0, %s299
      %p301 = pneg %p41
      %p302 = pneg %p38
      %p303 = pneg %p62
      %p304 = pneg %p59
      %p305 = pneg %p83
      %p306 = pneg %p80
      %p307 = pneg %p104
      %p308 = pneg %p101
      %p309 = pneg %p125
      %p310 = pneg %p122
      %p311 = pneg %p146
      %p312 = pneg %p143
      %p313 = pneg %p167
      %p314 = pneg %p164
      %p315 = pneg %p188
      %p316 = pneg %p185
      %p317 = pneg %p209
      %p318 = pneg %p206
      %p319 = pneg %p235
      %p320 = pneg %p232
      %s321 = smul.u32 4, %s20
      %p322 = scmp.lt.s32.totalorder %s321, 7
      %s323 = scalar_select %p322, %s321, 7
      %s324 = smul.addr %s323, 8
      %s325 = scalar_lea.vmem %s9, %s324
      %s326 = smul.u32 4, %s20
      %p327 = scmp.lt.s32.totalorder %s326, 7
      %s328 = scalar_select %p327, %s326, 7
      %s329 = smul.addr %s328, 7
      %s330 = smul.addr %s329, 8
      %s331 = scalar_lea.vmem %s0, %s330
      %s332 = smul.u32 4, %s20
      %s333 = smul.u32 4, %s20
      %p334 = scmp.lt.s32.totalorder %s333, 7
      %s335 = scalar_select %p334, %s333, 7
      %s336 = smul.addr %s335, 8
      %s337 = scalar_lea.vmem %s9, %s336
      %s338 = smul.u32 4, %s20
      %v340 = vld [vmem:[%s331] sm:$0xff]
      %v341 = vld [vmem:[%s331 + $0x8] sm:$0xff]
      %v342 = vld [vmem:[%s331 + $0x38] sm:$0xff]
      %v343 = vld [vmem:[%s331 + $0x40] sm:$0xff]
      %v344 = vld [vmem:[%s331 + $0x70] sm:$0xff]
      %v345 = vld [vmem:[%s331 + $0x78] sm:$0xff]
      %v346 = vld [vmem:[%s331 + $0xa8] sm:$0xff]
      %v347 = vld [vmem:[%s331 + $0xb0] sm:$0xff]
      %v348 = vpack.c.bf16 %v341, %v340
      %v349 = vpack.c.bf16 %v343, %v342
      %v350 = vpack.c.bf16 %v345, %v344
      %v351 = vpack.c.bf16 %v347, %v346
      %vm352 = vcmask 1043456
      %vm353 = vcmask 97284
      %vm354 = vmor %vm353, %vm352
      %355 = vst.msk [vmem:[#allocation2] sm:$0xff] %vm354, %v348
      %356 = vst.msk [vmem:[#allocation2 + $0x8] sm:$0xff] %vm354, %v349
      %357 = vst.msk [vmem:[#allocation2 + $0x10] sm:$0xff] %vm354, %v350
      %358 = vst.msk [vmem:[#allocation2 + $0x18] sm:$0xff] %vm354, %v351
      %v359 = vld [vmem:[%s331] sm:$0xff]
      %v360 = vld [vmem:[%s331 + $0x8] sm:$0xff]
      %v361 = vld [vmem:[%s331 + $0x38] sm:$0xff]
      %v362 = vld [vmem:[%s331 + $0x40] sm:$0xff]
      %v363 = vld [vmem:[%s331 + $0x70] sm:$0xff]
      %v364 = vld [vmem:[%s331 + $0x78] sm:$0xff]
      %v365 = vld [vmem:[%s331 + $0xa8] sm:$0xff]
      %v366 = vld [vmem:[%s331 + $0xb0] sm:$0xff]
      %v367 = vpack.c.bf16 %v360, %v359
      %v368 = vpack.c.bf16 %v362, %v361
      %v369 = vpack.c.bf16 %v364, %v363
      %v370 = vpack.c.bf16 %v366, %v365
      %375 = vrot.lane.b32.xlu0 %v367, 72
      %v376 = vpop.permute.xlu0 %375
      %377 = vrot.lane.b32.xlu0 %v368, 72
      %v378 = vpop.permute.xlu0 %377
      %379 = vrot.lane.b32.xlu0 %v369, 72
      %v380 = vpop.permute.xlu0 %379
      %381 = vrot.lane.b32.xlu0 %v370, 72
      %v382 = vpop.permute.xlu0 %381
      %v383 = vrot.slane %v376, 4
      %v384 = vrot.slane %v378, 4
      %v385 = vrot.slane %v380, 4
      %v386 = vrot.slane %v382, 4
      %vm387 = vcmask 588800
      %v388 = vsel %vm387, %v376, %v383
      %v389 = vsel %vm387, %v378, %v384
      %v390 = vsel %vm387, %v380, %v385
      %v391 = vsel %vm387, %v382, %v386
      %396 = vst.msk [vmem:[#allocation2 + $0x20] sm:$0xff] %vm354, %v388
      %397 = vst.msk [vmem:[#allocation2 + $0x28] sm:$0xff] %vm354, %v389
      %398 = vst.msk [vmem:[#allocation2 + $0x30] sm:$0xff] %vm354, %v390
      %399 = vst.msk [vmem:[#allocation2 + $0x38] sm:$0xff] %vm354, %v391
      %v400 = vld [vmem:[%s331] sm:$0xff]
      %v401 = vld [vmem:[%s331 + $0x8] sm:$0xff]
      %v402 = vld [vmem:[%s331 + $0x38] sm:$0xff]
      %v403 = vld [vmem:[%s331 + $0x40] sm:$0xff]
      %v404 = vld [vmem:[%s331 + $0x70] sm:$0xff]
      %v405 = vld [vmem:[%s331 + $0x78] sm:$0xff]
      %v406 = vld [vmem:[%s331 + $0xa8] sm:$0xff]
      %v407 = vld [vmem:[%s331 + $0xb0] sm:$0xff]
      %v408 = vpack.c.bf16 %v401, %v400
      %v409 = vpack.c.bf16 %v403, %v402
      %v410 = vpack.c.bf16 %v405, %v404
      %v411 = vpack.c.bf16 %v407, %v406
      %416 = vrot.lane.b32.xlu0 %v408, 16
      %v417 = vpop.permute.xlu0 %416
      %418 = vrot.lane.b32.xlu0 %v409, 16
      %v419 = vpop.permute.xlu0 %418
      %420 = vrot.lane.b32.xlu0 %v410, 16
      %v421 = vpop.permute.xlu0 %420
      %422 = vrot.lane.b32.xlu0 %v411, 16
      %v423 = vpop.permute.xlu0 %422
      %v424 = vrot.slane %v417, 4
      %v425 = vrot.slane %v419, 4
      %v426 = vrot.slane %v421, 4
      %v427 = vrot.slane %v423, 4
      %vm428 = vcmask 130048
      %v429 = vsel %vm428, %v417, %v424
      %v430 = vsel %vm428, %v419, %v425
      %v431 = vsel %vm428, %v421, %v426
      %v432 = vsel %vm428, %v423, %v427
      %437 = vst.msk [vmem:[#allocation2 + $0x40] sm:$0xff] %vm354, %v429
      %438 = vst.msk [vmem:[#allocation2 + $0x48] sm:$0xff] %vm354, %v430
      %439 = vst.msk [vmem:[#allocation2 + $0x50] sm:$0xff] %vm354, %v431
      %440 = vst.msk [vmem:[#allocation2 + $0x58] sm:$0xff] %vm354, %v432
      %v441 = vld [vmem:[%s331 + $0x8] sm:$0xff]
      %v442 = vld [vmem:[%s331 + $0x10] sm:$0xff]
      %v443 = vld [vmem:[%s331 + $0x40] sm:$0xff]
      %v444 = vld [vmem:[%s331 + $0x48] sm:$0xff]
      %v445 = vld [vmem:[%s331 + $0x78] sm:$0xff]
      %v446 = vld [vmem:[%s331 + $0x80] sm:$0xff]
      %v447 = vld [vmem:[%s331 + $0xb0] sm:$0xff]
      %v448 = vld [vmem:[%s331 + $0xb8] sm:$0xff]
      %v449 = vpack.c.bf16 %v442, %v441
      %v450 = vpack.c.bf16 %v444, %v443
      %v451 = vpack.c.bf16 %v446, %v445
      %v452 = vpack.c.bf16 %v448, %v447
      %457 = vrot.lane.b32.xlu0 %v449, 88
      %v458 = vpop.permute.xlu0 %457
      %459 = vrot.lane.b32.xlu0 %v450, 88
      %v460 = vpop.permute.xlu0 %459
      %461 = vrot.lane.b32.xlu0 %v451, 88
      %v462 = vpop.permute.xlu0 %461
      %463 = vrot.lane.b32.xlu0 %v452, 88
      %v464 = vpop.permute.xlu0 %463
      %v465 = vrot.slane %v458, 4
      %v466 = vrot.slane %v460, 4
      %v467 = vrot.slane %v462, 4
      %v468 = vrot.slane %v464, 4
      %vm469 = vcmask 719872
      %v470 = vsel %vm469, %v458, %v465
      %v471 = vsel %vm469, %v460, %v466
      %v472 = vsel %vm469, %v462, %v467
      %v473 = vsel %vm469, %v464, %v468
      %478 = vst.msk [vmem:[#allocation2 + $0x60] sm:$0xff] %vm354, %v470
      %479 = vst.msk [vmem:[#allocation2 + $0x68] sm:$0xff] %vm354, %v471
      %480 = vst.msk [vmem:[#allocation2 + $0x70] sm:$0xff] %vm354, %v472
      %481 = vst.msk [vmem:[#allocation2 + $0x78] sm:$0xff] %vm354, %v473
      %v482 = vld [vmem:[%s331 + $0x8] sm:$0xff]
      %v483 = vld [vmem:[%s331 + $0x10] sm:$0xff]
      %v484 = vld [vmem:[%s331 + $0x40] sm:$0xff]
      %v485 = vld [vmem:[%s331 + $0x48] sm:$0xff]
      %v486 = vld [vmem:[%s331 + $0x78] sm:$0xff]
      %v487 = vld [vmem:[%s331 + $0x80] sm:$0xff]
      %v488 = vld [vmem:[%s331 + $0xb0] sm:$0xff]
      %v489 = vld [vmem:[%s331 + $0xb8] sm:$0xff]
      %v490 = vpack.c.bf16 %v483, %v482
      %v491 = vpack.c.bf16 %v485, %v484
      %v492 = vpack.c.bf16 %v487, %v486
      %v493 = vpack.c.bf16 %v489, %v488
      %498 = vrot.lane.b32.xlu0 %v490, 32
      %v499 = vpop.permute.xlu0 %498
      %500 = vrot.lane.b32.xlu0 %v491, 32
      %v501 = vpop.permute.xlu0 %500
      %502 = vrot.lane.b32.xlu0 %v492, 32
      %v503 = vpop.permute.xlu0 %502
      %504 = vrot.lane.b32.xlu0 %v493, 32
      %v505 = vpop.permute.xlu0 %504
      %v506 = vrot.slane %v499, 4
      %v507 = vrot.slane %v501, 4
      %v508 = vrot.slane %v503, 4
      %v509 = vrot.slane %v505, 4
      %vm510 = vcmask 261120
      %v511 = vsel %vm510, %v499, %v506
      %v512 = vsel %vm510, %v501, %v507
      %v513 = vsel %vm510, %v503, %v508
      %v514 = vsel %vm510, %v505, %v509
      %519 = vst.msk [vmem:[#allocation2 + $0x80] sm:$0xff] %vm354, %v511
      %520 = vst.msk [vmem:[#allocation2 + $0x88] sm:$0xff] %vm354, %v512
      %521 = vst.msk [vmem:[#allocation2 + $0x90] sm:$0xff] %vm354, %v513
      %522 = vst.msk [vmem:[#allocation2 + $0x98] sm:$0xff] %vm354, %v514
      %v523 = vld [vmem:[%s331 + $0x10] sm:$0xff]
      %v524 = vld [vmem:[%s331 + $0x18] sm:$0xff]
      %v525 = vld [vmem:[%s331 + $0x48] sm:$0xff]
      %v526 = vld [vmem:[%s331 + $0x50] sm:$0xff]
      %v527 = vld [vmem:[%s331 + $0x80] sm:$0xff]
      %v528 = vld [vmem:[%s331 + $0x88] sm:$0xff]
      %v529 = vld [vmem:[%s331 + $0xb8] sm:$0xff]
      %v530 = vld [vmem:[%s331 + $0xc0] sm:$0xff]
      %v531 = vpack.c.bf16 %v524, %v523
      %v532 = vpack.c.bf16 %v526, %v525
      %v533 = vpack.c.bf16 %v528, %v527
      %v534 = vpack.c.bf16 %v530, %v529
      %539 = vrot.lane.b32.xlu0 %v531, 104
      %v540 = vpop.permute.xlu0 %539
      %541 = vrot.lane.b32.xlu0 %v532, 104
      %v542 = vpop.permute.xlu0 %541
      %543 = vrot.lane.b32.xlu0 %v533, 104
      %v544 = vpop.permute.xlu0 %543
      %545 = vrot.lane.b32.xlu0 %v534, 104
      %v546 = vpop.permute.xlu0 %545
      %v547 = vrot.slane %v540, 4
      %v548 = vrot.slane %v542, 4
      %v549 = vrot.slane %v544, 4
      %v550 = vrot.slane %v546, 4
      %vm551 = vcmask 850944
      %v552 = vsel %vm551, %v540, %v547
      %v553 = vsel %vm551, %v542, %v548
      %v554 = vsel %vm551, %v544, %v549
      %v555 = vsel %vm551, %v546, %v550
      %560 = vst.msk [vmem:[#allocation2 + $0xa0] sm:$0xff] %vm354, %v552
      %561 = vst.msk [vmem:[#allocation2 + $0xa8] sm:$0xff] %vm354, %v553
      %562 = vst.msk [vmem:[#allocation2 + $0xb0] sm:$0xff] %vm354, %v554
      %563 = vst.msk [vmem:[#allocation2 + $0xb8] sm:$0xff] %vm354, %v555
      %v564 = vld [vmem:[%s331 + $0x10] sm:$0xff]
      %v565 = vld [vmem:[%s331 + $0x18] sm:$0xff]
      %v566 = vld [vmem:[%s331 + $0x48] sm:$0xff]
      %v567 = vld [vmem:[%s331 + $0x50] sm:$0xff]
      %v568 = vld [vmem:[%s331 + $0x80] sm:$0xff]
      %v569 = vld [vmem:[%s331 + $0x88] sm:$0xff]
      %v570 = vld [vmem:[%s331 + $0xb8] sm:$0xff]
      %v571 = vld [vmem:[%s331 + $0xc0] sm:$0xff]
      %v572 = vpack.c.bf16 %v565, %v564
      %v573 = vpack.c.bf16 %v567, %v566
      %v574 = vpack.c.bf16 %v569, %v568
      %v575 = vpack.c.bf16 %v571, %v570
      %580 = vrot.lane.b32.xlu0 %v572, 48
      %v581 = vpop.permute.xlu0 %580
      %582 = vrot.lane.b32.xlu0 %v573, 48
      %v583 = vpop.permute.xlu0 %582
      %584 = vrot.lane.b32.xlu0 %v574, 48
      %v585 = vpop.permute.xlu0 %584
      %586 = vrot.lane.b32.xlu0 %v575, 48
      %v587 = vpop.permute.xlu0 %586
      %v588 = vrot.slane %v581, 4
      %v589 = vrot.slane %v583, 4
      %v590 = vrot.slane %v585, 4
      %v591 = vrot.slane %v587, 4
      %vm592 = vcmask 392192
      %v593 = vsel %vm592, %v581, %v588
      %v594 = vsel %vm592, %v583, %v589
      %v595 = vsel %vm592, %v585, %v590
      %v596 = vsel %vm592, %v587, %v591
      %601 = vst.msk [vmem:[#allocation2 + $0xc0] sm:$0xff] %vm354, %v593
      %602 = vst.msk [vmem:[#allocation2 + $0xc8] sm:$0xff] %vm354, %v594
      %603 = vst.msk [vmem:[#allocation2 + $0xd0] sm:$0xff] %vm354, %v595
      %604 = vst.msk [vmem:[#allocation2 + $0xd8] sm:$0xff] %vm354, %v596
      %v605 = vld [vmem:[%s331 + $0x18] sm:$0xff]
      %v606 = vld [vmem:[%s331 + $0x20] sm:$0xff]
      %v607 = vld [vmem:[%s331 + $0x50] sm:$0xff]
      %v608 = vld [vmem:[%s331 + $0x58] sm:$0xff]
      %v609 = vld [vmem:[%s331 + $0x88] sm:$0xff]
      %v610 = vld [vmem:[%s331 + $0x90] sm:$0xff]
      %v611 = vld [vmem:[%s331 + $0xc0] sm:$0xff]
      %v612 = vld [vmem:[%s331 + $0xc8] sm:$0xff]
      %v613 = vpack.c.bf16 %v606, %v605
      %v614 = vpack.c.bf16 %v608, %v607
      %v615 = vpack.c.bf16 %v610, %v609
      %v616 = vpack.c.bf16 %v612, %v611
      %621 = vrot.lane.b32.xlu0 %v613, 120
      %v622 = vpop.permute.xlu0 %621
      %623 = vrot.lane.b32.xlu0 %v614, 120
      %v624 = vpop.permute.xlu0 %623
      %625 = vrot.lane.b32.xlu0 %v615, 120
      %v626 = vpop.permute.xlu0 %625
      %627 = vrot.lane.b32.xlu0 %v616, 120
      %v628 = vpop.permute.xlu0 %627
      %v629 = vrot.slane %v622, 4
      %v630 = vrot.slane %v624, 4
      %v631 = vrot.slane %v626, 4
      %v632 = vrot.slane %v628, 4
      %vm633 = vcmask 982016
      %v634 = vsel %vm633, %v622, %v629
      %v635 = vsel %vm633, %v624, %v630
      %v636 = vsel %vm633, %v626, %v631
      %v637 = vsel %vm633, %v628, %v632
      %642 = vst.msk [vmem:[#allocation2 + $0xe0] sm:$0xff] %vm354, %v634
      %643 = vst.msk [vmem:[#allocation2 + $0xe8] sm:$0xff] %vm354, %v635
      %644 = vst.msk [vmem:[#allocation2 + $0xf0] sm:$0xff] %vm354, %v636
      %645 = vst.msk [vmem:[#allocation2 + $0xf8] sm:$0xff] %vm354, %v637
      %v646 = vld [vmem:[%s331 + $0x18] sm:$0xff]
      %v647 = vld [vmem:[%s331 + $0x20] sm:$0xff]
      %v648 = vld [vmem:[%s331 + $0x50] sm:$0xff]
      %v649 = vld [vmem:[%s331 + $0x58] sm:$0xff]
      %v650 = vld [vmem:[%s331 + $0x88] sm:$0xff]
      %v651 = vld [vmem:[%s331 + $0x90] sm:$0xff]
      %v652 = vld [vmem:[%s331 + $0xc0] sm:$0xff]
      %v653 = vld [vmem:[%s331 + $0xc8] sm:$0xff]
      %v654 = vpack.c.bf16 %v647, %v646
      %v655 = vpack.c.bf16 %v649, %v648
      %v656 = vpack.c.bf16 %v651, %v650
      %v657 = vpack.c.bf16 %v653, %v652
      %662 = vrot.lane.b32.xlu0 %v654, 64
      %v663 = vpop.permute.xlu0 %662
      %664 = vrot.lane.b32.xlu0 %v655, 64
      %v665 = vpop.permute.xlu0 %664
      %666 = vrot.lane.b32.xlu0 %v656, 64
      %v667 = vpop.permute.xlu0 %666
      %668 = vrot.lane.b32.xlu0 %v657, 64
      %v669 = vpop.permute.xlu0 %668
      %v670 = vrot.slane %v663, 4
      %v671 = vrot.slane %v665, 4
      %v672 = vrot.slane %v667, 4
      %v673 = vrot.slane %v669, 4
      %vm674 = vcmask 523264
      %v675 = vsel %vm674, %v663, %v670
      %v676 = vsel %vm674, %v665, %v671
      %v677 = vsel %vm674, %v667, %v672
      %v678 = vsel %vm674, %v669, %v673
      %683 = vst.msk [vmem:[#allocation2 + $0x100] sm:$0xff] %vm354, %v675
      %684 = vst.msk [vmem:[#allocation2 + $0x108] sm:$0xff] %vm354, %v676
      %685 = vst.msk [vmem:[#allocation2 + $0x110] sm:$0xff] %vm354, %v677
      %686 = vst.msk [vmem:[#allocation2 + $0x118] sm:$0xff] %vm354, %v678
      %v687 = vld [vmem:[%s331 + $0x18] sm:$0xff]
      %v688 = vld [vmem:[%s331 + $0x20] sm:$0xff]
      %v689 = vld [vmem:[%s331 + $0x28] sm:$0xff]
      %v690 = vld [vmem:[%s331 + $0x50] sm:$0xff]
      %v691 = vld [vmem:[%s331 + $0x58] sm:$0xff]
      %v692 = vld [vmem:[%s331 + $0x60] sm:$0xff]
      %v693 = vld [vmem:[%s331 + $0x88] sm:$0xff]
      %v694 = vld [vmem:[%s331 + $0x90] sm:$0xff]
      %v695 = vld [vmem:[%s331 + $0x98] sm:$0xff]
      %v696 = vld [vmem:[%s331 + $0xc0] sm:$0xff]
      %v697 = vld [vmem:[%s331 + $0xc8] sm:$0xff]
      %v698 = vld [vmem:[%s331 + $0xd0] sm:$0xff]
      %v699 = vpack.c.bf16 %v688, %v687
      %v700 = vpack.c.bf16 %v689, %v689
      %v701 = vpack.c.bf16 %v691, %v690
      %v702 = vpack.c.bf16 %v692, %v692
      %v703 = vpack.c.bf16 %v694, %v693
      %v704 = vpack.c.bf16 %v695, %v695
      %v705 = vpack.c.bf16 %v697, %v696
      %v706 = vpack.c.bf16 %v698, %v698
      %715 = vrot.lane.b32.xlu0 %v699, 8
      %v716 = vpop.permute.xlu0 %715
      %717 = vrot.lane.b32.xlu0 %v700, 8
      %v718 = vpop.permute.xlu0 %717
      %719 = vrot.lane.b32.xlu0 %v701, 8
      %v720 = vpop.permute.xlu0 %719
      %721 = vrot.lane.b32.xlu0 %v702, 8
      %v722 = vpop.permute.xlu0 %721
      %723 = vrot.lane.b32.xlu0 %v703, 8
      %v724 = vpop.permute.xlu0 %723
      %725 = vrot.lane.b32.xlu0 %v704, 8
      %v726 = vpop.permute.xlu0 %725
      %727 = vrot.lane.b32.xlu0 %v705, 8
      %v728 = vpop.permute.xlu0 %727
      %729 = vrot.lane.b32.xlu0 %v706, 8
      %v730 = vpop.permute.xlu0 %729
      %v731 = vrot.slane %v716, 4
      %v732 = vrot.slane %v718, 4
      %v733 = vrot.slane %v720, 4
      %v734 = vrot.slane %v722, 4
      %v735 = vrot.slane %v724, 4
      %v736 = vrot.slane %v726, 4
      %v737 = vrot.slane %v728, 4
      %v738 = vrot.slane %v730, 4
      %vm739 = vcmask 1043456
      %v740 = vsel %vm739, %v731, %v732
      %vm741 = vcmask 64512
      %v742 = vsel %vm741, %v716, %v740
      %v743 = vsel %vm739, %v733, %v734
      %v744 = vsel %vm741, %v720, %v743
      %v745 = vsel %vm739, %v735, %v736
      %v746 = vsel %vm741, %v724, %v745
      %v747 = vsel %vm739, %v737, %v738
      %v748 = vsel %vm741, %v728, %v747
      %753 = vst.msk [vmem:[#allocation2 + $0x120] sm:$0xff] %vm354, %v742
      %754 = vst.msk [vmem:[#allocation2 + $0x128] sm:$0xff] %vm354, %v744
      %755 = vst.msk [vmem:[#allocation2 + $0x130] sm:$0xff] %vm354, %v746
      %756 = vst.msk [vmem:[#allocation2 + $0x138] sm:$0xff] %vm354, %v748
      %v757 = vld [vmem:[%s331 + $0x20] sm:$0xff]
      %v758 = vld [vmem:[%s331 + $0x28] sm:$0xff]
      %v759 = vld [vmem:[%s331 + $0x58] sm:$0xff]
      %v760 = vld [vmem:[%s331 + $0x60] sm:$0xff]
      %v761 = vld [vmem:[%s331 + $0x90] sm:$0xff]
      %v762 = vld [vmem:[%s331 + $0x98] sm:$0xff]
      %v763 = vld [vmem:[%s331 + $0xc8] sm:$0xff]
      %v764 = vld [vmem:[%s331 + $0xd0] sm:$0xff]
      %v765 = vpack.c.bf16 %v758, %v757
      %v766 = vpack.c.bf16 %v760, %v759
      %v767 = vpack.c.bf16 %v762, %v761
      %v768 = vpack.c.bf16 %v764, %v763
      %773 = vrot.lane.b32.xlu0 %v765, 80
      %v774 = vpop.permute.xlu0 %773
      %775 = vrot.lane.b32.xlu0 %v766, 80
      %v776 = vpop.permute.xlu0 %775
      %777 = vrot.lane.b32.xlu0 %v767, 80
      %v778 = vpop.permute.xlu0 %777
      %779 = vrot.lane.b32.xlu0 %v768, 80
      %v780 = vpop.permute.xlu0 %779
      %v781 = vrot.slane %v774, 4
      %v782 = vrot.slane %v776, 4
      %v783 = vrot.slane %v778, 4
      %v784 = vrot.slane %v780, 4
      %vm785 = vcmask 654336
      %v786 = vsel %vm785, %v774, %v781
      %v787 = vsel %vm785, %v776, %v782
      %v788 = vsel %vm785, %v778, %v783
      %v789 = vsel %vm785, %v780, %v784
      %794 = vst.msk [vmem:[#allocation2 + $0x140] sm:$0xff] %vm354, %v786
      %795 = vst.msk [vmem:[#allocation2 + $0x148] sm:$0xff] %vm354, %v787
      %796 = vst.msk [vmem:[#allocation2 + $0x150] sm:$0xff] %vm354, %v788
      %797 = vst.msk [vmem:[#allocation2 + $0x158] sm:$0xff] %vm354, %v789
      %v798 = vld [vmem:[%s331 + $0x20] sm:$0xff]
      %v799 = vld [vmem:[%s331 + $0x28] sm:$0xff]
      %v800 = vld [vmem:[%s331 + $0x58] sm:$0xff]
      %v801 = vld [vmem:[%s331 + $0x60] sm:$0xff]
      %v802 = vld [vmem:[%s331 + $0x90] sm:$0xff]
      %v803 = vld [vmem:[%s331 + $0x98] sm:$0xff]
      %v804 = vld [vmem:[%s331 + $0xc8] sm:$0xff]
      %v805 = vld [vmem:[%s331 + $0xd0] sm:$0xff]
      %v806 = vpack.c.bf16 %v799, %v798
      %v807 = vpack.c.bf16 %v801, %v800
      %v808 = vpack.c.bf16 %v803, %v802
      %v809 = vpack.c.bf16 %v805, %v804
      %814 = vrot.lane.b32.xlu0 %v806, 24
      %v815 = vpop.permute.xlu0 %814
      %816 = vrot.lane.b32.xlu0 %v807, 24
      %v817 = vpop.permute.xlu0 %816
      %818 = vrot.lane.b32.xlu0 %v808, 24
      %v819 = vpop.permute.xlu0 %818
      %820 = vrot.lane.b32.xlu0 %v809, 24
      %v821 = vpop.permute.xlu0 %820
      %v822 = vrot.slane %v815, 4
      %v823 = vrot.slane %v817, 4
      %v824 = vrot.slane %v819, 4
      %v825 = vrot.slane %v821, 4
      %vm826 = vcmask 195584
      %v827 = vsel %vm826, %v815, %v822
      %v828 = vsel %vm826, %v817, %v823
      %v829 = vsel %vm826, %v819, %v824
      %v830 = vsel %vm826, %v821, %v825
      %835 = vst.msk [vmem:[#allocation2 + $0x160] sm:$0xff] %vm354, %v827
      %836 = vst.msk [vmem:[#allocation2 + $0x168] sm:$0xff] %vm354, %v828
      %837 = vst.msk [vmem:[#allocation2 + $0x170] sm:$0xff] %vm354, %v829
      %838 = vst.msk [vmem:[#allocation2 + $0x178] sm:$0xff] %vm354, %v830
      %v839 = vld [vmem:[%s331] sm:$0xff]
      %v840 = vld [vmem:[%s331 + $0x8] sm:$0xff]
      %v841 = vld [vmem:[%s331 + $0x38] sm:$0xff]
      %v842 = vld [vmem:[%s331 + $0x40] sm:$0xff]
      %v843 = vld [vmem:[%s331 + $0x70] sm:$0xff]
      %v844 = vld [vmem:[%s331 + $0x78] sm:$0xff]
      %v845 = vld [vmem:[%s331 + $0xa8] sm:$0xff]
      %v846 = vld [vmem:[%s331 + $0xb0] sm:$0xff]
      %v847 = vpack.c.bf16 %v840, %v839
      %v848 = vpack.c.bf16 %v842, %v841
      %v849 = vpack.c.bf16 %v844, %v843
      %v850 = vpack.c.bf16 %v846, %v845
      %855 = vrot.lane.b32.xlu0 %v847, 100
      %v856 = vpop.permute.xlu0 %855
      %857 = vrot.lane.b32.xlu0 %v848, 100
      %v858 = vpop.permute.xlu0 %857
      %859 = vrot.lane.b32.xlu0 %v849, 100
      %v860 = vpop.permute.xlu0 %859
      %861 = vrot.lane.b32.xlu0 %v850, 100
      %v862 = vpop.permute.xlu0 %861
      %v863 = vrot.slane %v856, 4
      %v864 = vrot.slane %v858, 4
      %v865 = vrot.slane %v860, 4
      %v866 = vrot.slane %v862, 4
      %vm867 = vcmask 818176
      %v868 = vsel %vm867, %v856, %v863
      %v869 = vsel %vm867, %v858, %v864
      %v870 = vsel %vm867, %v860, %v865
      %v871 = vsel %vm867, %v862, %v866
      %876 = vst.msk [vmem:[#allocation2 + $0x180] sm:$0xff] %vm354, %v868
      %877 = vst.msk [vmem:[#allocation2 + $0x188] sm:$0xff] %vm354, %v869
      %878 = vst.msk [vmem:[#allocation2 + $0x190] sm:$0xff] %vm354, %v870
      %879 = vst.msk [vmem:[#allocation2 + $0x198] sm:$0xff] %vm354, %v871
      %v880 = vld [vmem:[%s331] sm:$0xff]
      %v881 = vld [vmem:[%s331 + $0x8] sm:$0xff]
      %v882 = vld [vmem:[%s331 + $0x38] sm:$0xff]
      %v883 = vld [vmem:[%s331 + $0x40] sm:$0xff]
      %v884 = vld [vmem:[%s331 + $0x70] sm:$0xff]
      %v885 = vld [vmem:[%s331 + $0x78] sm:$0xff]
      %v886 = vld [vmem:[%s331 + $0xa8] sm:$0xff]
      %v887 = vld [vmem:[%s331 + $0xb0] sm:$0xff]
      %v888 = vpack.c.bf16 %v881, %v880
      %v889 = vpack.c.bf16 %v883, %v882
      %v890 = vpack.c.bf16 %v885, %v884
      %v891 = vpack.c.bf16 %v887, %v886
      %896 = vrot.lane.b32.xlu0 %v888, 44
      %v897 = vpop.permute.xlu0 %896
      %898 = vrot.lane.b32.xlu0 %v889, 44
      %v899 = vpop.permute.xlu0 %898
      %900 = vrot.lane.b32.xlu0 %v890, 44
      %v901 = vpop.permute.xlu0 %900
      %902 = vrot.lane.b32.xlu0 %v891, 44
      %v903 = vpop.permute.xlu0 %902
      %v904 = vrot.slane %v897, 4
      %v905 = vrot.slane %v899, 4
      %v906 = vrot.slane %v901, 4
      %v907 = vrot.slane %v903, 4
      %vm908 = vcmask 359424
      %v909 = vsel %vm908, %v897, %v904
      %v910 = vsel %vm908, %v899, %v905
      %v911 = vsel %vm908, %v901, %v906
      %v912 = vsel %vm908, %v903, %v907
      %917 = vst.msk [vmem:[#allocation2 + $0x1a0] sm:$0xff] %vm354, %v909
      %918 = vst.msk [vmem:[#allocation2 + $0x1a8] sm:$0xff] %vm354, %v910
      %919 = vst.msk [vmem:[#allocation2 + $0x1b0] sm:$0xff] %vm354, %v911
      %920 = vst.msk [vmem:[#allocation2 + $0x1b8] sm:$0xff] %vm354, %v912
      %v921 = vld [vmem:[%s331 + $0x8] sm:$0xff]
      %v922 = vld [vmem:[%s331 + $0x10] sm:$0xff]
      %v923 = vld [vmem:[%s331 + $0x40] sm:$0xff]
      %v924 = vld [vmem:[%s331 + $0x48] sm:$0xff]
      %v925 = vld [vmem:[%s331 + $0x78] sm:$0xff]
      %v926 = vld [vmem:[%s331 + $0x80] sm:$0xff]
      %v927 = vld [vmem:[%s331 + $0xb0] sm:$0xff]
      %v928 = vld [vmem:[%s331 + $0xb8] sm:$0xff]
      %v929 = vpack.c.bf16 %v922, %v921
      %v930 = vpack.c.bf16 %v924, %v923
      %v931 = vpack.c.bf16 %v926, %v925
      %v932 = vpack.c.bf16 %v928, %v927
      %937 = vrot.lane.b32.xlu0 %v929, 116
      %v938 = vpop.permute.xlu0 %937
      %939 = vrot.lane.b32.xlu0 %v930, 116
      %v940 = vpop.permute.xlu0 %939
      %941 = vrot.lane.b32.xlu0 %v931, 116
      %v942 = vpop.permute.xlu0 %941
      %943 = vrot.lane.b32.xlu0 %v932, 116
      %v944 = vpop.permute.xlu0 %943
      %v945 = vrot.slane %v938, 4
      %v946 = vrot.slane %v940, 4
      %v947 = vrot.slane %v942, 4
      %v948 = vrot.slane %v944, 4
      %vm949 = vcmask 949248
      %v950 = vsel %vm949, %v938, %v945
      %v951 = vsel %vm949, %v940, %v946
      %v952 = vsel %vm949, %v942, %v947
      %v953 = vsel %vm949, %v944, %v948
      %958 = vst.msk [vmem:[#allocation2 + $0x1c0] sm:$0xff] %vm354, %v950
      %959 = vst.msk [vmem:[#allocation2 + $0x1c8] sm:$0xff] %vm354, %v951
      %960 = vst.msk [vmem:[#allocation2 + $0x1d0] sm:$0xff] %vm354, %v952
      %961 = vst.msk [vmem:[#allocation2 + $0x1d8] sm:$0xff] %vm354, %v953
      %v962 = vld [vmem:[%s331 + $0x8] sm:$0xff]
      %v963 = vld [vmem:[%s331 + $0x10] sm:$0xff]
      %v964 = vld [vmem:[%s331 + $0x40] sm:$0xff]
      %v965 = vld [vmem:[%s331 + $0x48] sm:$0xff]
      %v966 = vld [vmem:[%s331 + $0x78] sm:$0xff]
      %v967 = vld [vmem:[%s331 + $0x80] sm:$0xff]
      %v968 = vld [vmem:[%s331 + $0xb0] sm:$0xff]
      %v969 = vld [vmem:[%s331 + $0xb8] sm:$0xff]
      %v970 = vpack.c.bf16 %v963, %v962
      %v971 = vpack.c.bf16 %v965, %v964
      %v972 = vpack.c.bf16 %v967, %v966
      %v973 = vpack.c.bf16 %v969, %v968
      %978 = vrot.lane.b32.xlu0 %v970, 60
      %v979 = vpop.permute.xlu0 %978
      %980 = vrot.lane.b32.xlu0 %v971, 60
      %v981 = vpop.permute.xlu0 %980
      %982 = vrot.lane.b32.xlu0 %v972, 60
      %v983 = vpop.permute.xlu0 %982
      %984 = vrot.lane.b32.xlu0 %v973, 60
      %v985 = vpop.permute.xlu0 %984
      %v986 = vrot.slane %v979, 4
      %v987 = vrot.slane %v981, 4
      %v988 = vrot.slane %v983, 4
      %v989 = vrot.slane %v985, 4
      %vm990 = vcmask 490496
      %v991 = vsel %vm990, %v979, %v986
      %v992 = vsel %vm990, %v981, %v987
      %v993 = vsel %vm990, %v983, %v988
      %v994 = vsel %vm990, %v985, %v989
      %999 = vst.msk [vmem:[#allocation2 + $0x1e0] sm:$0xff] %vm354, %v991
      %1000 = vst.msk [vmem:[#allocation2 + $0x1e8] sm:$0xff] %vm354, %v992
      %1001 = vst.msk [vmem:[#allocation2 + $0x1f0] sm:$0xff] %vm354, %v993
      %1002 = vst.msk [vmem:[#allocation2 + $0x1f8] sm:$0xff] %vm354, %v994
      %v1003 = vld [vmem:[%s331 + $0x8] sm:$0xff]
      %v1004 = vld [vmem:[%s331 + $0x10] sm:$0xff]
      %v1005 = vld [vmem:[%s331 + $0x18] sm:$0xff]
      %v1006 = vld [vmem:[%s331 + $0x40] sm:$0xff]
      %v1007 = vld [vmem:[%s331 + $0x48] sm:$0xff]
      %v1008 = vld [vmem:[%s331 + $0x50] sm:$0xff]
      %v1009 = vld [vmem:[%s331 + $0x78] sm:$0xff]
      %v1010 = vld [vmem:[%s331 + $0x80] sm:$0xff]
      %v1011 = vld [vmem:[%s331 + $0x88] sm:$0xff]
      %v1012 = vld [vmem:[%s331 + $0xb0] sm:$0xff]
      %v1013 = vld [vmem:[%s331 + $0xb8] sm:$0xff]
      %v1014 = vld [vmem:[%s331 + $0xc0] sm:$0xff]
      %v1015 = vpack.c.bf16 %v1004, %v1003
      %v1016 = vpack.c.bf16 %v1005, %v1005
      %v1017 = vpack.c.bf16 %v1007, %v1006
      %v1018 = vpack.c.bf16 %v1008, %v1008
      %v1019 = vpack.c.bf16 %v1010, %v1009
      %v1020 = vpack.c.bf16 %v1011, %v1011
      %v1021 = vpack.c.bf16 %v1013, %v1012
      %v1022 = vpack.c.bf16 %v1014, %v1014
      %1031 = vrot.lane.b32.xlu0 %v1015, 4
      %v1032 = vpop.permute.xlu0 %1031
      %1033 = vrot.lane.b32.xlu0 %v1016, 4
      %v1034 = vpop.permute.xlu0 %1033
      %1035 = vrot.lane.b32.xlu0 %v1017, 4
      %v1036 = vpop.permute.xlu0 %1035
      %1037 = vrot.lane.b32.xlu0 %v1018, 4
      %v1038 = vpop.permute.xlu0 %1037
      %1039 = vrot.lane.b32.xlu0 %v1019, 4
      %v1040 = vpop.permute.xlu0 %1039
      %1041 = vrot.lane.b32.xlu0 %v1020, 4
      %v1042 = vpop.permute.xlu0 %1041
      %1043 = vrot.lane.b32.xlu0 %v1021, 4
      %v1044 = vpop.permute.xlu0 %1043
      %1045 = vrot.lane.b32.xlu0 %v1022, 4
      %v1046 = vpop.permute.xlu0 %1045
      %v1047 = vrot.slane %v1032, 4
      %v1048 = vrot.slane %v1034, 4
      %v1049 = vrot.slane %v1036, 4
      %v1050 = vrot.slane %v1038, 4
      %v1051 = vrot.slane %v1040, 4
      %v1052 = vrot.slane %v1042, 4
      %v1053 = vrot.slane %v1044, 4
      %v1054 = vrot.slane %v1046, 4
      %v1055 = vsel %vm739, %v1047, %v1048
      %vm1056 = vcmask 31744
      %v1057 = vsel %vm1056, %v1032, %v1055
      %v1058 = vsel %vm739, %v1049, %v1050
      %v1059 = vsel %vm1056, %v1036, %v1058
      %v1060 = vsel %vm739, %v1051, %v1052
      %v1061 = vsel %vm1056, %v1040, %v1060
      %v1062 = vsel %vm739, %v1053, %v1054
      %v1063 = vsel %vm1056, %v1044, %v1062
      %1068 = vst.msk [vmem:[#allocation2 + $0x200] sm:$0xff] %vm354, %v1057
      %1069 = vst.msk [vmem:[#allocation2 + $0x208] sm:$0xff] %vm354, %v1059
      %1070 = vst.msk [vmem:[#allocation2 + $0x210] sm:$0xff] %vm354, %v1061
      %1071 = vst.msk [vmem:[#allocation2 + $0x218] sm:$0xff] %vm354, %v1063
      %v1072 = vld [vmem:[%s331 + $0x10] sm:$0xff]
      %v1073 = vld [vmem:[%s331 + $0x18] sm:$0xff]
      %v1074 = vld [vmem:[%s331 + $0x48] sm:$0xff]
      %v1075 = vld [vmem:[%s331 + $0x50] sm:$0xff]
      %v1076 = vld [vmem:[%s331 + $0x80] sm:$0xff]
      %v1077 = vld [vmem:[%s331 + $0x88] sm:$0xff]
      %v1078 = vld [vmem:[%s331 + $0xb8] sm:$0xff]
      %v1079 = vld [vmem:[%s331 + $0xc0] sm:$0xff]
      %v1080 = vpack.c.bf16 %v1073, %v1072
      %v1081 = vpack.c.bf16 %v1075, %v1074
      %v1082 = vpack.c.bf16 %v1077, %v1076
      %v1083 = vpack.c.bf16 %v1079, %v1078
      %1088 = vrot.lane.b32.xlu0 %v1080, 76
      %v1089 = vpop.permute.xlu0 %1088
      %1090 = vrot.lane.b32.xlu0 %v1081, 76
      %v1091 = vpop.permute.xlu0 %1090
      %1092 = vrot.lane.b32.xlu0 %v1082, 76
      %v1093 = vpop.permute.xlu0 %1092
      %1094 = vrot.lane.b32.xlu0 %v1083, 76
      %v1095 = vpop.permute.xlu0 %1094
      %v1096 = vrot.slane %v1089, 4
      %v1097 = vrot.slane %v1091, 4
      %v1098 = vrot.slane %v1093, 4
      %v1099 = vrot.slane %v1095, 4
      %vm1100 = vcmask 621568
      %v1101 = vsel %vm1100, %v1089, %v1096
      %v1102 = vsel %vm1100, %v1091, %v1097
      %v1103 = vsel %vm1100, %v1093, %v1098
      %v1104 = vsel %vm1100, %v1095, %v1099
      %1109 = vst.msk [vmem:[#allocation2 + $0x220] sm:$0xff] %vm354, %v1101
      %1110 = vst.msk [vmem:[#allocation2 + $0x228] sm:$0xff] %vm354, %v1102
      %1111 = vst.msk [vmem:[#allocation2 + $0x230] sm:$0xff] %vm354, %v1103
      %1112 = vst.msk [vmem:[#allocation2 + $0x238] sm:$0xff] %vm354, %v1104
      %v1113 = vld [vmem:[%s331 + $0x10] sm:$0xff]
      %v1114 = vld [vmem:[%s331 + $0x18] sm:$0xff]
      %v1115 = vld [vmem:[%s331 + $0x48] sm:$0xff]
      %v1116 = vld [vmem:[%s331 + $0x50] sm:$0xff]
      %v1117 = vld [vmem:[%s331 + $0x80] sm:$0xff]
      %v1118 = vld [vmem:[%s331 + $0x88] sm:$0xff]
      %v1119 = vld [vmem:[%s331 + $0xb8] sm:$0xff]
      %v1120 = vld [vmem:[%s331 + $0xc0] sm:$0xff]
      %v1121 = vpack.c.bf16 %v1114, %v1113
      %v1122 = vpack.c.bf16 %v1116, %v1115
      %v1123 = vpack.c.bf16 %v1118, %v1117
      %v1124 = vpack.c.bf16 %v1120, %v1119
      %1129 = vrot.lane.b32.xlu0 %v1121, 20
      %v1130 = vpop.permute.xlu0 %1129
      %1131 = vrot.lane.b32.xlu0 %v1122, 20
      %v1132 = vpop.permute.xlu0 %1131
      %1133 = vrot.lane.b32.xlu0 %v1123, 20
      %v1134 = vpop.permute.xlu0 %1133
      %1135 = vrot.lane.b32.xlu0 %v1124, 20
      %v1136 = vpop.permute.xlu0 %1135
      %v1137 = vrot.slane %v1130, 4
      %v1138 = vrot.slane %v1132, 4
      %v1139 = vrot.slane %v1134, 4
      %v1140 = vrot.slane %v1136, 4
      %vm1141 = vcmask 162816
      %v1142 = vsel %vm1141, %v1130, %v1137
      %v1143 = vsel %vm1141, %v1132, %v1138
      %v1144 = vsel %vm1141, %v1134, %v1139
      %v1145 = vsel %vm1141, %v1136, %v1140
      %1150 = vst.msk [vmem:[#allocation2 + $0x240] sm:$0xff] %vm354, %v1142
      %1151 = vst.msk [vmem:[#allocation2 + $0x248] sm:$0xff] %vm354, %v1143
      %1152 = vst.msk [vmem:[#allocation2 + $0x250] sm:$0xff] %vm354, %v1144
      %1153 = vst.msk [vmem:[#allocation2 + $0x258] sm:$0xff] %vm354, %v1145
      %v1154 = vld [vmem:[%s331 + $0x18] sm:$0xff]
      %v1155 = vld [vmem:[%s331 + $0x20] sm:$0xff]
      %v1156 = vld [vmem:[%s331 + $0x50] sm:$0xff]
      %v1157 = vld [vmem:[%s331 + $0x58] sm:$0xff]
      %v1158 = vld [vmem:[%s331 + $0x88] sm:$0xff]
      %v1159 = vld [vmem:[%s331 + $0x90] sm:$0xff]
      %v1160 = vld [vmem:[%s331 + $0xc0] sm:$0xff]
      %v1161 = vld [vmem:[%s331 + $0xc8] sm:$0xff]
      %v1162 = vpack.c.bf16 %v1155, %v1154
      %v1163 = vpack.c.bf16 %v1157, %v1156
      %v1164 = vpack.c.bf16 %v1159, %v1158
      %v1165 = vpack.c.bf16 %v1161, %v1160
      %1170 = vrot.lane.b32.xlu0 %v1162, 92
      %v1171 = vpop.permute.xlu0 %1170
      %1172 = vrot.lane.b32.xlu0 %v1163, 92
      %v1173 = vpop.permute.xlu0 %1172
      %1174 = vrot.lane.b32.xlu0 %v1164, 92
      %v1175 = vpop.permute.xlu0 %1174
      %1176 = vrot.lane.b32.xlu0 %v1165, 92
      %v1177 = vpop.permute.xlu0 %1176
      %v1178 = vrot.slane %v1171, 4
      %v1179 = vrot.slane %v1173, 4
      %v1180 = vrot.slane %v1175, 4
      %v1181 = vrot.slane %v1177, 4
      %vm1182 = vcmask 752640
      %v1183 = vsel %vm1182, %v1171, %v1178
      %v1184 = vsel %vm1182, %v1173, %v1179
      %v1185 = vsel %vm1182, %v1175, %v1180
      %v1186 = vsel %vm1182, %v1177, %v1181
      %1191 = vst.msk [vmem:[#allocation2 + $0x260] sm:$0xff] %vm354, %v1183
      %1192 = vst.msk [vmem:[#allocation2 + $0x268] sm:$0xff] %vm354, %v1184
      %1193 = vst.msk [vmem:[#allocation2 + $0x270] sm:$0xff] %vm354, %v1185
      %1194 = vst.msk [vmem:[#allocation2 + $0x278] sm:$0xff] %vm354, %v1186
      %v1195 = vld [vmem:[%s331 + $0x18] sm:$0xff]
      %v1196 = vld [vmem:[%s331 + $0x20] sm:$0xff]
      %v1197 = vld [vmem:[%s331 + $0x50] sm:$0xff]
      %v1198 = vld [vmem:[%s331 + $0x58] sm:$0xff]
      %v1199 = vld [vmem:[%s331 + $0x88] sm:$0xff]
      %v1200 = vld [vmem:[%s331 + $0x90] sm:$0xff]
      %v1201 = vld [vmem:[%s331 + $0xc0] sm:$0xff]
      %v1202 = vld [vmem:[%s331 + $0xc8] sm:$0xff]
      %v1203 = vpack.c.bf16 %v1196, %v1195
      %v1204 = vpack.c.bf16 %v1198, %v1197
      %v1205 = vpack.c.bf16 %v1200, %v1199
      %v1206 = vpack.c.bf16 %v1202, %v1201
      %1211 = vrot.lane.b32.xlu0 %v1203, 36
      %v1212 = vpop.permute.xlu0 %1211
      %1213 = vrot.lane.b32.xlu0 %v1204, 36
      %v1214 = vpop.permute.xlu0 %1213
      %1215 = vrot.lane.b32.xlu0 %v1205, 36
      %v1216 = vpop.permute.xlu0 %1215
      %1217 = vrot.lane.b32.xlu0 %v1206, 36
      %v1218 = vpop.permute.xlu0 %1217
      %v1219 = vrot.slane %v1212, 4
      %v1220 = vrot.slane %v1214, 4
      %v1221 = vrot.slane %v1216, 4
      %v1222 = vrot.slane %v1218, 4
      %vm1223 = vcmask 293888
      %v1224 = vsel %vm1223, %v1212, %v1219
      %v1225 = vsel %vm1223, %v1214, %v1220
      %v1226 = vsel %vm1223, %v1216, %v1221
      %v1227 = vsel %vm1223, %v1218, %v1222
      %1232 = vst.msk [vmem:[#allocation2 + $0x280] sm:$0xff] %vm354, %v1224
      %1233 = vst.msk [vmem:[#allocation2 + $0x288] sm:$0xff] %vm354, %v1225
      %1234 = vst.msk [vmem:[#allocation2 + $0x290] sm:$0xff] %vm354, %v1226
      %1235 = vst.msk [vmem:[#allocation2 + $0x298] sm:$0xff] %vm354, %v1227
      %v1236 = vld [vmem:[%s331 + $0x20] sm:$0xff]
      %v1237 = vld [vmem:[%s331 + $0x28] sm:$0xff]
      %v1238 = vld [vmem:[%s331 + $0x58] sm:$0xff]
      %v1239 = vld [vmem:[%s331 + $0x60] sm:$0xff]
      %v1240 = vld [vmem:[%s331 + $0x90] sm:$0xff]
      %v1241 = vld [vmem:[%s331 + $0x98] sm:$0xff]
      %v1242 = vld [vmem:[%s331 + $0xc8] sm:$0xff]
      %v1243 = vld [vmem:[%s331 + $0xd0] sm:$0xff]
      %v1244 = vpack.c.bf16 %v1237, %v1236
      %v1245 = vpack.c.bf16 %v1239, %v1238
      %v1246 = vpack.c.bf16 %v1241, %v1240
      %v1247 = vpack.c.bf16 %v1243, %v1242
      %1252 = vrot.lane.b32.xlu0 %v1244, 108
      %v1253 = vpop.permute.xlu0 %1252
      %1254 = vrot.lane.b32.xlu0 %v1245, 108
      %v1255 = vpop.permute.xlu0 %1254
      %1256 = vrot.lane.b32.xlu0 %v1246, 108
      %v1257 = vpop.permute.xlu0 %1256
      %1258 = vrot.lane.b32.xlu0 %v1247, 108
      %v1259 = vpop.permute.xlu0 %1258
      %v1260 = vrot.slane %v1253, 4
      %v1261 = vrot.slane %v1255, 4
      %v1262 = vrot.slane %v1257, 4
      %v1263 = vrot.slane %v1259, 4
      %vm1264 = vcmask 883712
      %v1265 = vsel %vm1264, %v1253, %v1260
      %v1266 = vsel %vm1264, %v1255, %v1261
      %v1267 = vsel %vm1264, %v1257, %v1262
      %v1268 = vsel %vm1264, %v1259, %v1263
      %1273 = vst.msk [vmem:[#allocation2 + $0x2a0] sm:$0xff] %vm354, %v1265
      %1274 = vst.msk [vmem:[#allocation2 + $0x2a8] sm:$0xff] %vm354, %v1266
      %1275 = vst.msk [vmem:[#allocation2 + $0x2b0] sm:$0xff] %vm354, %v1267
      %1276 = vst.msk [vmem:[#allocation2 + $0x2b8] sm:$0xff] %vm354, %v1268
      %v1277 = vld [vmem:[%s331 + $0x20] sm:$0xff]
      %v1278 = vld [vmem:[%s331 + $0x28] sm:$0xff]
      %v1279 = vld [vmem:[%s331 + $0x58] sm:$0xff]
      %v1280 = vld [vmem:[%s331 + $0x60] sm:$0xff]
      %v1281 = vld [vmem:[%s331 + $0x90] sm:$0xff]
      %v1282 = vld [vmem:[%s331 + $0x98] sm:$0xff]
      %v1283 = vld [vmem:[%s331 + $0xc8] sm:$0xff]
      %v1284 = vld [vmem:[%s331 + $0xd0] sm:$0xff]
      %v1285 = vpack.c.bf16 %v1278, %v1277
      %v1286 = vpack.c.bf16 %v1280, %v1279
      %v1287 = vpack.c.bf16 %v1282, %v1281
      %v1288 = vpack.c.bf16 %v1284, %v1283
      %1293 = vrot.lane.b32.xlu0 %v1285, 52
      %v1294 = vpop.permute.xlu0 %1293
      %1295 = vrot.lane.b32.xlu0 %v1286, 52
      %v1296 = vpop.permute.xlu0 %1295
      %1297 = vrot.lane.b32.xlu0 %v1287, 52
      %v1298 = vpop.permute.xlu0 %1297
      %1299 = vrot.lane.b32.xlu0 %v1288, 52
      %v1300 = vpop.permute.xlu0 %1299
      %v1301 = vrot.slane %v1294, 4
      %v1302 = vrot.slane %v1296, 4
      %v1303 = vrot.slane %v1298, 4
      %v1304 = vrot.slane %v1300, 4
      %vm1305 = vcmask 424960
      %v1306 = vsel %vm1305, %v1294, %v1301
      %v1307 = vsel %vm1305, %v1296, %v1302
      %v1308 = vsel %vm1305, %v1298, %v1303
      %v1309 = vsel %vm1305, %v1300, %v1304
      %1314 = vst.msk [vmem:[#allocation2 + $0x2c0] sm:$0xff] %vm354, %v1306
      %1315 = vst.msk [vmem:[#allocation2 + $0x2c8] sm:$0xff] %vm354, %v1307
      %1316 = vst.msk [vmem:[#allocation2 + $0x2d0] sm:$0xff] %vm354, %v1308
      %1317 = vst.msk [vmem:[#allocation2 + $0x2d8] sm:$0xff] %vm354, %v1309
      %v1318 = vld [vmem:[%s331 + $0x28] sm:$0xff]
      %v1319 = vld [vmem:[%s331 + $0x30] sm:$0xff]
      %v1320 = vld [vmem:[%s331 + $0x60] sm:$0xff]
      %v1321 = vld [vmem:[%s331 + $0x68] sm:$0xff]
      %v1322 = vld [vmem:[%s331 + $0x98] sm:$0xff]
      %v1323 = vld [vmem:[%s331 + $0xa0] sm:$0xff]
      %v1324 = vld [vmem:[%s331 + $0xd0] sm:$0xff]
      %v1325 = vld [vmem:[%s331 + $0xd8] sm:$0xff]
      %v1326 = vpack.c.bf16 %v1319, %v1318
      %v1327 = vpack.c.bf16 %v1321, %v1320
      %v1328 = vpack.c.bf16 %v1323, %v1322
      %v1329 = vpack.c.bf16 %v1325, %v1324
      %1334 = vrot.lane.b32.xlu0 %v1326, 124
      %v1335 = vpop.permute.xlu0 %1334
      %1336 = vrot.lane.b32.xlu0 %v1327, 124
      %v1337 = vpop.permute.xlu0 %1336
      %1338 = vrot.lane.b32.xlu0 %v1328, 124
      %v1339 = vpop.permute.xlu0 %1338
      %1340 = vrot.lane.b32.xlu0 %v1329, 124
      %v1341 = vpop.permute.xlu0 %1340
      %v1342 = vrot.slane %v1335, 4
      %v1343 = vrot.slane %v1337, 4
      %v1344 = vrot.slane %v1339, 4
      %v1345 = vrot.slane %v1341, 4
      %vm1346 = vcmask 1014784
      %v1347 = vsel %vm1346, %v1335, %v1342
      %v1348 = vsel %vm1346, %v1337, %v1343
      %v1349 = vsel %vm1346, %v1339, %v1344
      %v1350 = vsel %vm1346, %v1341, %v1345
      %1355 = vst.msk [vmem:[#allocation2 + $0x2e0] sm:$0xff] %vm354, %v1347
      %1356 = vst.msk [vmem:[#allocation2 + $0x2e8] sm:$0xff] %vm354, %v1348
      %1357 = vst.msk [vmem:[#allocation2 + $0x2f0] sm:$0xff] %vm354, %v1349
      %1358 = vst.msk [vmem:[#allocation2 + $0x2f8] sm:$0xff] %vm354, %v1350
      %v1359 = vld [vmem:[#allocation2] sm:$0xff]
      %v1360 = vld [vmem:[#allocation2 + $0x8] sm:$0xff]
      %v1361 = vld [vmem:[#allocation2 + $0x10] sm:$0xff]
      %v1362 = vld [vmem:[#allocation2 + $0x18] sm:$0xff]
      %v1363 = vld [vmem:[#allocation2 + $0x20] sm:$0xff]
      %v1364 = vld [vmem:[#allocation2 + $0x28] sm:$0xff]
      %v1365 = vld [vmem:[#allocation2 + $0x30] sm:$0xff]
      %v1366 = vld [vmem:[#allocation2 + $0x38] sm:$0xff]
      %v1367 = vld [vmem:[#allocation2 + $0x40] sm:$0xff]
      %v1368 = vld [vmem:[#allocation2 + $0x48] sm:$0xff]
      %v1369 = vld [vmem:[#allocation2 + $0x50] sm:$0xff]
      %v1370 = vld [vmem:[#allocation2 + $0x58] sm:$0xff]
      %v1371 = vld [vmem:[#allocation2 + $0x60] sm:$0xff]
      %v1372 = vld [vmem:[#allocation2 + $0x68] sm:$0xff]
      %v1373 = vld [vmem:[#allocation2 + $0x70] sm:$0xff]
      %v1374 = vld [vmem:[#allocation2 + $0x78] sm:$0xff]
      %v1375 = vld [vmem:[#allocation2 + $0x80] sm:$0xff]
      %v1376 = vld [vmem:[#allocation2 + $0x88] sm:$0xff]
      %v1377 = vld [vmem:[#allocation2 + $0x90] sm:$0xff]
      %v1378 = vld [vmem:[#allocation2 + $0x98] sm:$0xff]
      %v1379 = vld [vmem:[#allocation2 + $0xa0] sm:$0xff]
      %v1380 = vld [vmem:[#allocation2 + $0xa8] sm:$0xff]
      %v1381 = vld [vmem:[#allocation2 + $0xb0] sm:$0xff]
      %v1382 = vld [vmem:[#allocation2 + $0xb8] sm:$0xff]
      %v1383 = vld [vmem:[#allocation2 + $0xc0] sm:$0xff]
      %v1384 = vld [vmem:[#allocation2 + $0xc8] sm:$0xff]
      %v1385 = vld [vmem:[#allocation2 + $0xd0] sm:$0xff]
      %v1386 = vld [vmem:[#allocation2 + $0xd8] sm:$0xff]
      %v1387 = vld [vmem:[#allocation2 + $0xe0] sm:$0xff]
      %v1388 = vld [vmem:[#allocation2 + $0xe8] sm:$0xff]
      %v1389 = vld [vmem:[#allocation2 + $0xf0] sm:$0xff]
      %v1390 = vld [vmem:[#allocation2 + $0xf8] sm:$0xff]
      %v1391 = vld [vmem:[#allocation2 + $0x100] sm:$0xff]
      %v1392 = vld [vmem:[#allocation2 + $0x108] sm:$0xff]
      %v1393 = vld [vmem:[#allocation2 + $0x110] sm:$0xff]
      %v1394 = vld [vmem:[#allocation2 + $0x118] sm:$0xff]
      %v1395 = vld [vmem:[#allocation2 + $0x120] sm:$0xff]
      %v1396 = vld [vmem:[#allocation2 + $0x128] sm:$0xff]
      %v1397 = vld [vmem:[#allocation2 + $0x130] sm:$0xff]
      %v1398 = vld [vmem:[#allocation2 + $0x138] sm:$0xff]
      %v1399 = vld [vmem:[#allocation2 + $0x140] sm:$0xff]
      %v1400 = vld [vmem:[#allocation2 + $0x148] sm:$0xff]
      %v1401 = vld [vmem:[#allocation2 + $0x150] sm:$0xff]
      %v1402 = vld [vmem:[#allocation2 + $0x158] sm:$0xff]
      %v1403 = vld [vmem:[#allocation2 + $0x160] sm:$0xff]
      %v1404 = vld [vmem:[#allocation2 + $0x168] sm:$0xff]
      %v1405 = vld [vmem:[#allocation2 + $0x170] sm:$0xff]
      %v1406 = vld [vmem:[#allocation2 + $0x178] sm:$0xff]
      %v1407 = vld [vmem:[#allocation2 + $0x180] sm:$0xff]
      %v1408 = vld [vmem:[#allocation2 + $0x188] sm:$0xff]
      %v1409 = vld [vmem:[#allocation2 + $0x190] sm:$0xff]
      %v1410 = vld [vmem:[#allocation2 + $0x198] sm:$0xff]
      %v1411 = vld [vmem:[#allocation2 + $0x1a0] sm:$0xff]
      %v1412 = vld [vmem:[#allocation2 + $0x1a8] sm:$0xff]
      %v1413 = vld [vmem:[#allocation2 + $0x1b0] sm:$0xff]
      %v1414 = vld [vmem:[#allocation2 + $0x1b8] sm:$0xff]
      %v1415 = vld [vmem:[#allocation2 + $0x1c0] sm:$0xff]
      %v1416 = vld [vmem:[#allocation2 + $0x1c8] sm:$0xff]
      %v1417 = vld [vmem:[#allocation2 + $0x1d0] sm:$0xff]
      %v1418 = vld [vmem:[#allocation2 + $0x1d8] sm:$0xff]
      %v1419 = vld [vmem:[#allocation2 + $0x1e0] sm:$0xff]
      %v1420 = vld [vmem:[#allocation2 + $0x1e8] sm:$0xff]
      %v1421 = vld [vmem:[#allocation2 + $0x1f0] sm:$0xff]
      %v1422 = vld [vmem:[#allocation2 + $0x1f8] sm:$0xff]
      %v1423 = vld [vmem:[#allocation2 + $0x200] sm:$0xff]
      %v1424 = vld [vmem:[#allocation2 + $0x208] sm:$0xff]
      %v1425 = vld [vmem:[#allocation2 + $0x210] sm:$0xff]
      %v1426 = vld [vmem:[#allocation2 + $0x218] sm:$0xff]
      %v1427 = vld [vmem:[#allocation2 + $0x220] sm:$0xff]
      %v1428 = vld [vmem:[#allocation2 + $0x228] sm:$0xff]
      %v1429 = vld [vmem:[#allocation2 + $0x230] sm:$0xff]
      %v1430 = vld [vmem:[#allocation2 + $0x238] sm:$0xff]
      %v1431 = vld [vmem:[#allocation2 + $0x240] sm:$0xff]
      %v1432 = vld [vmem:[#allocation2 + $0x248] sm:$0xff]
      %v1433 = vld [vmem:[#allocation2 + $0x250] sm:$0xff]
      %v1434 = vld [vmem:[#allocation2 + $0x258] sm:$0xff]
      %v1435 = vld [vmem:[#allocation2 + $0x260] sm:$0xff]
      %v1436 = vld [vmem:[#allocation2 + $0x268] sm:$0xff]
      %v1437 = vld [vmem:[#allocation2 + $0x270] sm:$0xff]
      %v1438 = vld [vmem:[#allocation2 + $0x278] sm:$0xff]
      %v1439 = vld [vmem:[#allocation2 + $0x280] sm:$0xff]
      %v1440 = vld [vmem:[#allocation2 + $0x288] sm:$0xff]
      %v1441 = vld [vmem:[#allocation2 + $0x290] sm:$0xff]
      %v1442 = vld [vmem:[#allocation2 + $0x298] sm:$0xff]
      %v1443 = vld [vmem:[#allocation2 + $0x2a0] sm:$0xff]
      %v1444 = vld [vmem:[#allocation2 + $0x2a8] sm:$0xff]
      %v1445 = vld [vmem:[#allocation2 + $0x2b0] sm:$0xff]
      %v1446 = vld [vmem:[#allocation2 + $0x2b8] sm:$0xff]
      %v1447 = vld [vmem:[#allocation2 + $0x2c0] sm:$0xff]
      %v1448 = vld [vmem:[#allocation2 + $0x2c8] sm:$0xff]
      %v1449 = vld [vmem:[#allocation2 + $0x2d0] sm:$0xff]
      %v1450 = vld [vmem:[#allocation2 + $0x2d8] sm:$0xff]
      %v1451 = vld [vmem:[#allocation2 + $0x2e0] sm:$0xff]
      %v1452 = vld [vmem:[#allocation2 + $0x2e8] sm:$0xff]
      %v1453 = vld [vmem:[#allocation2 + $0x2f0] sm:$0xff]
      %v1454 = vld [vmem:[#allocation2 + $0x2f8] sm:$0xff]
      %v1455 = vld [vmem:[%s1] sm:$0xff]
      %v1456 = vld [vmem:[%s1 + $0x8] sm:$0xff]
      %v1457 = vld [vmem:[%s1 + $0x10] sm:$0xff]
      %v1458 = vld [vmem:[%s1 + $0x18] sm:$0xff]
      %v1459 = vld [vmem:[%s1 + $0x20] sm:$0xff]
      %v1460 = vld [vmem:[%s1 + $0x28] sm:$0xff]
      %v1461 = vld [vmem:[%s1 + $0x30] sm:$0xff]
      %v1462 = vld [vmem:[%s1 + $0x38] sm:$0xff]
      %v1463 = vld [vmem:[%s1 + $0x40] sm:$0xff]
      %v1464 = vld [vmem:[%s1 + $0x48] sm:$0xff]
      %v1465 = vld [vmem:[%s1 + $0x50] sm:$0xff]
      %v1466 = vld [vmem:[%s1 + $0x58] sm:$0xff]
      %v1467 = vld [vmem:[%s1 + $0x60] sm:$0xff]
      %v1468 = vld [vmem:[%s1 + $0x68] sm:$0xff]
      %v1469 = vld [vmem:[%s1 + $0x70] sm:$0xff]
      %v1470 = vld [vmem:[%s1 + $0x78] sm:$0xff]
      %v1471 = vld [vmem:[%s1 + $0x80] sm:$0xff]
      %v1472 = vld [vmem:[%s1 + $0x88] sm:$0x33]
      %v1569 = vunpack.c.l.b16 %v1359
      %v1570 = vunpack.c.h.b16 %v1359
      %v1571 = vunpack.c.l.b16 %v1360
      %v1572 = vunpack.c.h.b16 %v1360
      %v1573 = vunpack.c.l.b16 %v1361
      %v1574 = vunpack.c.h.b16 %v1361
      %v1575 = vunpack.c.l.b16 %v1362
      %v1576 = vunpack.c.h.b16 %v1362
      %v1577 = vunpack.c.l.b16 %v1363
      %v1578 = vunpack.c.h.b16 %v1363
      %v1579 = vunpack.c.l.b16 %v1364
      %v1580 = vunpack.c.h.b16 %v1364
      %v1581 = vunpack.c.l.b16 %v1365
      %v1582 = vunpack.c.h.b16 %v1365
      %v1583 = vunpack.c.l.b16 %v1366
      %v1584 = vunpack.c.h.b16 %v1366
      %v1585 = vunpack.c.l.b16 %v1367
      %v1586 = vunpack.c.h.b16 %v1367
      %v1587 = vunpack.c.l.b16 %v1368
      %v1588 = vunpack.c.h.b16 %v1368
      %v1589 = vunpack.c.l.b16 %v1369
      %v1590 = vunpack.c.h.b16 %v1369
      %v1591 = vunpack.c.l.b16 %v1370
      %v1592 = vunpack.c.h.b16 %v1370
      %v1593 = vunpack.c.l.b16 %v1371
      %v1594 = vunpack.c.h.b16 %v1371
      %v1595 = vunpack.c.l.b16 %v1372
      %v1596 = vunpack.c.h.b16 %v1372
      %v1597 = vunpack.c.l.b16 %v1373
      %v1598 = vunpack.c.h.b16 %v1373
      %v1599 = vunpack.c.l.b16 %v1374
      %v1600 = vunpack.c.h.b16 %v1374
      %v1601 = vunpack.c.l.b16 %v1375
      %v1602 = vunpack.c.h.b16 %v1375
      %v1603 = vunpack.c.l.b16 %v1376
      %v1604 = vunpack.c.h.b16 %v1376
      %v1605 = vunpack.c.l.b16 %v1377
      %v1606 = vunpack.c.h.b16 %v1377
      %v1607 = vunpack.c.l.b16 %v1378
      %v1608 = vunpack.c.h.b16 %v1378
      %v1609 = vunpack.c.l.b16 %v1379
      %v1610 = vunpack.c.h.b16 %v1379
      %v1611 = vunpack.c.l.b16 %v1380
      %v1612 = vunpack.c.h.b16 %v1380
      %v1613 = vunpack.c.l.b16 %v1381
      %v1614 = vunpack.c.h.b16 %v1381
      %v1615 = vunpack.c.l.b16 %v1382
      %v1616 = vunpack.c.h.b16 %v1382
      %v1617 = vunpack.c.l.b16 %v1383
      %v1618 = vunpack.c.h.b16 %v1383
      %v1619 = vunpack.c.l.b16 %v1384
      %v1620 = vunpack.c.h.b16 %v1384
      %v1621 = vunpack.c.l.b16 %v1385
      %v1622 = vunpack.c.h.b16 %v1385
      %v1623 = vunpack.c.l.b16 %v1386
      %v1624 = vunpack.c.h.b16 %v1386
      %v1625 = vunpack.c.l.b16 %v1387
      %v1626 = vunpack.c.h.b16 %v1387
      %v1627 = vunpack.c.l.b16 %v1388
      %v1628 = vunpack.c.h.b16 %v1388
      %v1629 = vunpack.c.l.b16 %v1389
      %v1630 = vunpack.c.h.b16 %v1389
      %v1631 = vunpack.c.l.b16 %v1390
      %v1632 = vunpack.c.h.b16 %v1390
      %v1633 = vunpack.c.l.b16 %v1391
      %v1634 = vunpack.c.h.b16 %v1391
      %v1635 = vunpack.c.l.b16 %v1392
      %v1636 = vunpack.c.h.b16 %v1392
      %v1637 = vunpack.c.l.b16 %v1393
      %v1638 = vunpack.c.h.b16 %v1393
      %v1639 = vunpack.c.l.b16 %v1394
      %v1640 = vunpack.c.h.b16 %v1394
      %v1641 = vunpack.c.l.b16 %v1395
      %v1642 = vunpack.c.h.b16 %v1395
      %v1643 = vunpack.c.l.b16 %v1396
      %v1644 = vunpack.c.h.b16 %v1396
      %v1645 = vunpack.c.l.b16 %v1397
      %v1646 = vunpack.c.h.b16 %v1397
      %v1647 = vunpack.c.l.b16 %v1398
      %v1648 = vunpack.c.h.b16 %v1398
      %v1649 = vunpack.c.l.b16 %v1399
      %v1650 = vunpack.c.h.b16 %v1399
      %v1651 = vunpack.c.l.b16 %v1400
      %v1652 = vunpack.c.h.b16 %v1400
      %v1653 = vunpack.c.l.b16 %v1401
      %v1654 = vunpack.c.h.b16 %v1401
      %v1655 = vunpack.c.l.b16 %v1402
      %v1656 = vunpack.c.h.b16 %v1402
      %v1657 = vunpack.c.l.b16 %v1403
      %v1658 = vunpack.c.h.b16 %v1403
      %v1659 = vunpack.c.l.b16 %v1404
      %v1660 = vunpack.c.h.b16 %v1404
      %v1661 = vunpack.c.l.b16 %v1405
      %v1662 = vunpack.c.h.b16 %v1405
      %v1663 = vunpack.c.l.b16 %v1406
      %v1664 = vunpack.c.h.b16 %v1406
      %v1665 = vunpack.c.l.b16 %v1407
      %v1666 = vunpack.c.h.b16 %v1407
      %v1667 = vunpack.c.l.b16 %v1408
      %v1668 = vunpack.c.h.b16 %v1408
      %v1669 = vunpack.c.l.b16 %v1409
      %v1670 = vunpack.c.h.b16 %v1409
      %v1671 = vunpack.c.l.b16 %v1410
      %v1672 = vunpack.c.h.b16 %v1410
      %v1673 = vunpack.c.l.b16 %v1411
      %v1674 = vunpack.c.h.b16 %v1411
      %v1675 = vunpack.c.l.b16 %v1412
      %v1676 = vunpack.c.h.b16 %v1412
      %v1677 = vunpack.c.l.b16 %v1413
      %v1678 = vunpack.c.h.b16 %v1413
      %v1679 = vunpack.c.l.b16 %v1414
      %v1680 = vunpack.c.h.b16 %v1414
      %v1681 = vunpack.c.l.b16 %v1415
      %v1682 = vunpack.c.h.b16 %v1415
      %v1683 = vunpack.c.l.b16 %v1416
      %v1684 = vunpack.c.h.b16 %v1416
      %v1685 = vunpack.c.l.b16 %v1417
      %v1686 = vunpack.c.h.b16 %v1417
      %v1687 = vunpack.c.l.b16 %v1418
      %v1688 = vunpack.c.h.b16 %v1418
      %v1689 = vunpack.c.l.b16 %v1419
      %v1690 = vunpack.c.h.b16 %v1419
      %v1691 = vunpack.c.l.b16 %v1420
      %v1692 = vunpack.c.h.b16 %v1420
      %v1693 = vunpack.c.l.b16 %v1421
      %v1694 = vunpack.c.h.b16 %v1421
      %v1695 = vunpack.c.l.b16 %v1422
      %v1696 = vunpack.c.h.b16 %v1422
      %v1697 = vunpack.c.l.b16 %v1423
      %v1698 = vunpack.c.h.b16 %v1423
      %v1699 = vunpack.c.l.b16 %v1424
      %v1700 = vunpack.c.h.b16 %v1424
      %v1701 = vunpack.c.l.b16 %v1425
      %v1702 = vunpack.c.h.b16 %v1425
      %v1703 = vunpack.c.l.b16 %v1426
      %v1704 = vunpack.c.h.b16 %v1426
      %v1705 = vunpack.c.l.b16 %v1427
      %v1706 = vunpack.c.h.b16 %v1427
      %v1707 = vunpack.c.l.b16 %v1428
      %v1708 = vunpack.c.h.b16 %v1428
      %v1709 = vunpack.c.l.b16 %v1429
      %v1710 = vunpack.c.h.b16 %v1429
      %v1711 = vunpack.c.l.b16 %v1430
      %v1712 = vunpack.c.h.b16 %v1430
      %v1713 = vunpack.c.l.b16 %v1431
      %v1714 = vunpack.c.h.b16 %v1431
      %v1715 = vunpack.c.l.b16 %v1432
      %v1716 = vunpack.c.h.b16 %v1432
      %v1717 = vunpack.c.l.b16 %v1433
      %v1718 = vunpack.c.h.b16 %v1433
      %v1719 = vunpack.c.l.b16 %v1434
      %v1720 = vunpack.c.h.b16 %v1434
      %v1721 = vunpack.c.l.b16 %v1435
      %v1722 = vunpack.c.h.b16 %v1435
      %v1723 = vunpack.c.l.b16 %v1436
      %v1724 = vunpack.c.h.b16 %v1436
      %v1725 = vunpack.c.l.b16 %v1437
      %v1726 = vunpack.c.h.b16 %v1437
      %v1727 = vunpack.c.l.b16 %v1438
      %v1728 = vunpack.c.h.b16 %v1438
      %v1729 = vunpack.c.l.b16 %v1439
      %v1730 = vunpack.c.h.b16 %v1439
      %v1731 = vunpack.c.l.b16 %v1440
      %v1732 = vunpack.c.h.b16 %v1440
      %v1733 = vunpack.c.l.b16 %v1441
      %v1734 = vunpack.c.h.b16 %v1441
      %v1735 = vunpack.c.l.b16 %v1442
      %v1736 = vunpack.c.h.b16 %v1442
      %v1737 = vunpack.c.l.b16 %v1443
      %v1738 = vunpack.c.h.b16 %v1443
      %v1739 = vunpack.c.l.b16 %v1444
      %v1740 = vunpack.c.h.b16 %v1444
      %v1741 = vunpack.c.l.b16 %v1445
      %v1742 = vunpack.c.h.b16 %v1445
      %v1743 = vunpack.c.l.b16 %v1446
      %v1744 = vunpack.c.h.b16 %v1446
      %v1745 = vunpack.c.l.b16 %v1447
      %v1746 = vunpack.c.h.b16 %v1447
      %v1747 = vunpack.c.l.b16 %v1448
      %v1748 = vunpack.c.h.b16 %v1448
      %v1749 = vunpack.c.l.b16 %v1449
      %v1750 = vunpack.c.h.b16 %v1449
      %v1751 = vunpack.c.l.b16 %v1450
      %v1752 = vunpack.c.h.b16 %v1450
      %v1753 = vunpack.c.l.b16 %v1451
      %v1754 = vunpack.c.h.b16 %v1451
      %v1755 = vunpack.c.l.b16 %v1452
      %v1756 = vunpack.c.h.b16 %v1452
      %v1757 = vunpack.c.l.b16 %v1453
      %v1758 = vunpack.c.h.b16 %v1453
      %v1759 = vunpack.c.l.b16 %v1454
      %v1760 = vunpack.c.h.b16 %v1454
      %v1761 = vpack.c.b16 %v1571, %v1569
      %v1762 = vpack.c.b16 %v1572, %v1570
      %v1763 = vpack.c.b16 %v1575, %v1573
      %v1764 = vpack.c.b16 %v1576, %v1574
      %v1765 = vpack.c.b16 %v1579, %v1577
      %v1766 = vpack.c.b16 %v1580, %v1578
      %v1767 = vpack.c.b16 %v1583, %v1581
      %v1768 = vpack.c.b16 %v1584, %v1582
      %v1769 = vpack.c.b16 %v1587, %v1585
      %v1770 = vpack.c.b16 %v1588, %v1586
      %v1771 = vpack.c.b16 %v1591, %v1589
      %v1772 = vpack.c.b16 %v1592, %v1590
      %v1773 = vpack.c.b16 %v1595, %v1593
      %v1774 = vpack.c.b16 %v1596, %v1594
      %v1775 = vpack.c.b16 %v1599, %v1597
      %v1776 = vpack.c.b16 %v1600, %v1598
      %v1777 = vpack.c.b16 %v1603, %v1601
      %v1778 = vpack.c.b16 %v1604, %v1602
      %v1779 = vpack.c.b16 %v1607, %v1605
      %v1780 = vpack.c.b16 %v1608, %v1606
      %v1781 = vpack.c.b16 %v1611, %v1609
      %v1782 = vpack.c.b16 %v1612, %v1610
      %v1783 = vpack.c.b16 %v1615, %v1613
      %v1784 = vpack.c.b16 %v1616, %v1614
      %v1785 = vpack.c.b16 %v1619, %v1617
      %v1786 = vpack.c.b16 %v1620, %v1618
      %v1787 = vpack.c.b16 %v1623, %v1621
      %v1788 = vpack.c.b16 %v1624, %v1622
      %v1789 = vpack.c.b16 %v1627, %v1625
      %v1790 = vpack.c.b16 %v1628, %v1626
      %v1791 = vpack.c.b16 %v1631, %v1629
      %v1792 = vpack.c.b16 %v1632, %v1630
      %v1793 = vpack.c.b16 %v1635, %v1633
      %v1794 = vpack.c.b16 %v1636, %v1634
      %v1795 = vpack.c.b16 %v1639, %v1637
      %v1796 = vpack.c.b16 %v1640, %v1638
      %v1797 = vpack.c.b16 %v1643, %v1641
      %v1798 = vpack.c.b16 %v1644, %v1642
      %v1799 = vpack.c.b16 %v1647, %v1645
      %v1800 = vpack.c.b16 %v1648, %v1646
      %v1801 = vpack.c.b16 %v1651, %v1649
      %v1802 = vpack.c.b16 %v1652, %v1650
      %v1803 = vpack.c.b16 %v1655, %v1653
      %v1804 = vpack.c.b16 %v1656, %v1654
      %v1805 = vpack.c.b16 %v1659, %v1657
      %v1806 = vpack.c.b16 %v1660, %v1658
      %v1807 = vpack.c.b16 %v1663, %v1661
      %v1808 = vpack.c.b16 %v1664, %v1662
      %v1809 = vpack.c.b16 %v1667, %v1665
      %v1810 = vpack.c.b16 %v1668, %v1666
      %v1811 = vpack.c.b16 %v1671, %v1669
      %v1812 = vpack.c.b16 %v1672, %v1670
      %v1813 = vpack.c.b16 %v1675, %v1673
      %v1814 = vpack.c.b16 %v1676, %v1674
      %v1815 = vpack.c.b16 %v1679, %v1677
      %v1816 = vpack.c.b16 %v1680, %v1678
      %v1817 = vpack.c.b16 %v1683, %v1681
      %v1818 = vpack.c.b16 %v1684, %v1682
      %v1819 = vpack.c.b16 %v1687, %v1685
      %v1820 = vpack.c.b16 %v1688, %v1686
      %v1821 = vpack.c.b16 %v1691, %v1689
      %v1822 = vpack.c.b16 %v1692, %v1690
      %v1823 = vpack.c.b16 %v1695, %v1693
      %v1824 = vpack.c.b16 %v1696, %v1694
      %v1825 = vpack.c.b16 %v1699, %v1697
      %v1826 = vpack.c.b16 %v1700, %v1698
      %v1827 = vpack.c.b16 %v1703, %v1701
      %v1828 = vpack.c.b16 %v1704, %v1702
      %v1829 = vpack.c.b16 %v1707, %v1705
      %v1830 = vpack.c.b16 %v1708, %v1706
      %v1831 = vpack.c.b16 %v1711, %v1709
      %v1832 = vpack.c.b16 %v1712, %v1710
      %v1833 = vpack.c.b16 %v1715, %v1713
      %v1834 = vpack.c.b16 %v1716, %v1714
      %v1835 = vpack.c.b16 %v1719, %v1717
      %v1836 = vpack.c.b16 %v1720, %v1718
      %v1837 = vpack.c.b16 %v1723, %v1721
      %v1838 = vpack.c.b16 %v1724, %v1722
      %v1839 = vpack.c.b16 %v1727, %v1725
      %v1840 = vpack.c.b16 %v1728, %v1726
      %v1841 = vpack.c.b16 %v1731, %v1729
      %v1842 = vpack.c.b16 %v1732, %v1730
      %v1843 = vpack.c.b16 %v1735, %v1733
      %v1844 = vpack.c.b16 %v1736, %v1734
      %v1845 = vpack.c.b16 %v1739, %v1737
      %v1846 = vpack.c.b16 %v1740, %v1738
      %v1847 = vpack.c.b16 %v1743, %v1741
      %v1848 = vpack.c.b16 %v1744, %v1742
      %v1849 = vpack.c.b16 %v1747, %v1745
      %v1850 = vpack.c.b16 %v1748, %v1746
      %v1851 = vpack.c.b16 %v1751, %v1749
      %v1852 = vpack.c.b16 %v1752, %v1750
      %v1853 = vpack.c.b16 %v1755, %v1753
      %v1854 = vpack.c.b16 %v1756, %v1754
      %v1855 = vpack.c.b16 %v1759, %v1757
      %v1856 = vpack.c.b16 %v1760, %v1758
      %v1923 = vunpack.c.l.b16 %v1455
      %v1924 = vunpack.c.h.b16 %v1455
      %v1925 = vunpack.c.l.b16 %v1456
      %v1926 = vunpack.c.h.b16 %v1456
      %v1927 = vunpack.c.l.b16 %v1457
      %v1928 = vunpack.c.h.b16 %v1457
      %v1929 = vunpack.c.l.b16 %v1458
      %v1930 = vunpack.c.h.b16 %v1458
      %v1931 = vunpack.c.l.b16 %v1459
      %v1932 = vunpack.c.h.b16 %v1459
      %v1933 = vunpack.c.l.b16 %v1460
      %v1934 = vunpack.c.h.b16 %v1460
      %v1935 = vunpack.c.l.b16 %v1461
      %v1936 = vunpack.c.h.b16 %v1461
      %v1937 = vunpack.c.l.b16 %v1462
      %v1938 = vunpack.c.h.b16 %v1462
      %v1939 = vunpack.c.l.b16 %v1463
      %v1940 = vunpack.c.h.b16 %v1463
      %v1941 = vunpack.c.l.b16 %v1464
      %v1942 = vunpack.c.h.b16 %v1464
      %v1943 = vunpack.c.l.b16 %v1465
      %v1944 = vunpack.c.h.b16 %v1465
      %v1945 = vunpack.c.l.b16 %v1466
      %v1946 = vunpack.c.h.b16 %v1466
      %v1947 = vunpack.c.l.b16 %v1467
      %v1948 = vunpack.c.h.b16 %v1467
      %v1949 = vunpack.c.l.b16 %v1468
      %v1950 = vunpack.c.h.b16 %v1468
      %v1951 = vunpack.c.l.b16 %v1469
      %v1952 = vunpack.c.h.b16 %v1469
      %v1953 = vunpack.c.l.b16 %v1470
      %v1954 = vunpack.c.h.b16 %v1470
      %v1955 = vunpack.c.l.b16 %v1471
      %v1956 = vunpack.c.h.b16 %v1471
      %v1957 = vunpack.c.l.b16 %v1472
      %v1958 = vunpack.c.h.b16 %v1472
      %v1959 = vpack.c.b16 %v1925, %v1923
      %v1960 = vpack.c.b16 %v1926, %v1924
      %v1961 = vpack.c.b16 %v1929, %v1927
      %v1962 = vpack.c.b16 %v1930, %v1928
      %v1963 = vpack.c.b16 %v1933, %v1931
      %v1964 = vpack.c.b16 %v1934, %v1932
      %v1965 = vpack.c.b16 %v1937, %v1935
      %v1966 = vpack.c.b16 %v1938, %v1936
      %v1967 = vpack.c.b16 %v1941, %v1939
      %v1968 = vpack.c.b16 %v1942, %v1940
      %v1969 = vpack.c.b16 %v1945, %v1943
      %v1970 = vpack.c.b16 %v1946, %v1944
      %v1971 = vpack.c.b16 %v1949, %v1947
      %v1972 = vpack.c.b16 %v1950, %v1948
      %v1973 = vpack.c.b16 %v1953, %v1951
      %v1974 = vpack.c.b16 %v1954, %v1952
      %v1975 = vpack.c.b16 %v1957, %v1955
      %v1976 = vpack.c.b16 %v1958, %v1956
      %vm1993 = vcmask 97280
      %v1995 = vsel %vm1993, %v1762, 0
      %v1998 = vsel %vm1993, %v1764, 0
      %v2001 = vsel %vm1993, %v1766, 0
      %v2004 = vsel %vm1993, %v1768, 0
      %v2007 = vsel %vm1993, %v1770, 0
      %v2010 = vsel %vm1993, %v1772, 0
      %v2013 = vsel %vm1993, %v1774, 0
      %v2016 = vsel %vm1993, %v1776, 0
      %v2019 = vsel %vm1993, %v1778, 0
      %v2022 = vsel %vm1993, %v1780, 0
      %v2025 = vsel %vm1993, %v1782, 0
      %v2028 = vsel %vm1993, %v1784, 0
      %v2031 = vsel %vm1993, %v1786, 0
      %v2034 = vsel %vm1993, %v1788, 0
      %v2037 = vsel %vm1993, %v1790, 0
      %v2040 = vsel %vm1993, %v1792, 0
      %v2043 = vsel %vm1993, %v1794, 0
      %v2046 = vsel %vm1993, %v1796, 0
      %v2049 = vsel %vm1993, %v1798, 0
      %v2052 = vsel %vm1993, %v1800, 0
      %v2055 = vsel %vm1993, %v1802, 0
      %v2058 = vsel %vm1993, %v1804, 0
      %v2061 = vsel %vm1993, %v1806, 0
      %v2064 = vsel %vm1993, %v1808, 0
      %v2067 = vsel %vm1993, %v1810, 0
      %v2070 = vsel %vm1993, %v1812, 0
      %v2073 = vsel %vm1993, %v1814, 0
      %v2076 = vsel %vm1993, %v1816, 0
      %v2079 = vsel %vm1993, %v1818, 0
      %v2082 = vsel %vm1993, %v1820, 0
      %v2085 = vsel %vm1993, %v1822, 0
      %v2088 = vsel %vm1993, %v1824, 0
      %v2091 = vsel %vm1993, %v1826, 0
      %v2094 = vsel %vm1993, %v1828, 0
      %v2097 = vsel %vm1993, %v1830, 0
      %v2100 = vsel %vm1993, %v1832, 0
      %v2103 = vsel %vm1993, %v1834, 0
      %v2106 = vsel %vm1993, %v1836, 0
      %v2109 = vsel %vm1993, %v1838, 0
      %v2112 = vsel %vm1993, %v1840, 0
      %v2115 = vsel %vm1993, %v1842, 0
      %v2118 = vsel %vm1993, %v1844, 0
      %v2121 = vsel %vm1993, %v1846, 0
      %v2124 = vsel %vm1993, %v1848, 0
      %v2127 = vsel %vm1993, %v1850, 0
      %v2130 = vsel %vm1993, %v1852, 0
      %v2133 = vsel %vm1993, %v1854, 0
      %v2136 = vsel %vm1993, %v1856, 0
      %vm2138 = vcmask 1045504
      %v2140 = vsel %vm2138, %v1975, 0
      %v2143 = vsel %vm2138, %v1976, 0
      %2145 = vmatpush.bf16.msra.mxu0 %v1973
      %2146 = vmatpush.bf16.msra.mxu0 %v1971
      %2147 = vmatpush.bf16.msra.mxu0 %v1969
      %2148 = vmatpush.bf16.msra.mxu0 %v1967
      %2149 = vmatpush.bf16.msra.mxu0 %v1965
      %2150 = vmatpush.bf16.msra.mxu0 %v1963
      %2151 = vmatpush.bf16.msra.mxu0 %v1961
      %2152 = vmatpush.bf16.msra.mxu0 %v1959
      %2153 = vmatmul.bf16.gmra.mxu0 %v1761
      %v2154 = vpop.f32.mrf.mxu0
      %v2155 = vadd.f32 0.0, %v2154
      %v2156 = vpop.f32.mrf.mxu0
      %v2157 = vadd.f32 0.0, %v2156
      %2158 = vmatmul.bf16.gmra.mxu0 %v1763
      %v2159 = vpop.f32.mrf.mxu0
      %v2160 = vadd.f32 0.0, %v2159
      %v2161 = vpop.f32.mrf.mxu0
      %v2162 = vadd.f32 0.0, %v2161
      %2163 = vmatmul.bf16.gmra.mxu0 %v1765
      %v2164 = vpop.f32.mrf.mxu0
      %v2165 = vadd.f32 0.0, %v2164
      %v2166 = vpop.f32.mrf.mxu0
      %v2167 = vadd.f32 0.0, %v2166
      %2168 = vmatmul.bf16.gmra.mxu0 %v1767
      %v2169 = vpop.f32.mrf.mxu0
      %v2170 = vadd.f32 0.0, %v2169
      %v2171 = vpop.f32.mrf.mxu0
      %v2172 = vadd.f32 0.0, %v2171
      %2173 = vmatmul.bf16.gmra.mxu0 %v1769
      %v2174 = vpop.f32.mrf.mxu0
      %v2175 = vadd.f32 0.0, %v2174
      %v2176 = vpop.f32.mrf.mxu0
      %v2177 = vadd.f32 0.0, %v2176
      %2178 = vmatmul.bf16.gmra.mxu0 %v1771
      %v2179 = vpop.f32.mrf.mxu0
      %v2180 = vadd.f32 0.0, %v2179
      %v2181 = vpop.f32.mrf.mxu0
      %v2182 = vadd.f32 0.0, %v2181
      %2183 = vmatmul.bf16.gmra.mxu0 %v1773
      %v2184 = vpop.f32.mrf.mxu0
      %v2185 = vadd.f32 0.0, %v2184
      %v2186 = vpop.f32.mrf.mxu0
      %v2187 = vadd.f32 0.0, %v2186
      %2188 = vmatmul.bf16.gmra.mxu0 %v1775
      %v2189 = vpop.f32.mrf.mxu0
      %v2190 = vadd.f32 0.0, %v2189
      %v2191 = vpop.f32.mrf.mxu0
      %v2192 = vadd.f32 0.0, %v2191
      %2193 = vmatmul.bf16.gmra.mxu0 %v1777
      %v2194 = vpop.f32.mrf.mxu0
      %v2195 = vadd.f32 0.0, %v2194
      %v2196 = vpop.f32.mrf.mxu0
      %v2197 = vadd.f32 0.0, %v2196
      %2198 = vmatmul.bf16.gmra.mxu0 %v1779
      %v2199 = vpop.f32.mrf.mxu0
      %v2200 = vadd.f32 0.0, %v2199
      %v2201 = vpop.f32.mrf.mxu0
      %v2202 = vadd.f32 0.0, %v2201
      %2203 = vmatmul.bf16.gmra.mxu0 %v1781
      %v2204 = vpop.f32.mrf.mxu0
      %v2205 = vadd.f32 0.0, %v2204
      %v2206 = vpop.f32.mrf.mxu0
      %v2207 = vadd.f32 0.0, %v2206
      %2208 = vmatmul.bf16.gmra.mxu0 %v1783
      %v2209 = vpop.f32.mrf.mxu0
      %v2210 = vadd.f32 0.0, %v2209
      %v2211 = vpop.f32.mrf.mxu0
      %v2212 = vadd.f32 0.0, %v2211
      %2213 = vmatmul.bf16.gmra.mxu0 %v1785
      %v2214 = vpop.f32.mrf.mxu0
      %v2215 = vadd.f32 0.0, %v2214
      %v2216 = vpop.f32.mrf.mxu0
      %v2217 = vadd.f32 0.0, %v2216
      %2218 = vmatmul.bf16.gmra.mxu0 %v1787
      %v2219 = vpop.f32.mrf.mxu0
      %v2220 = vadd.f32 0.0, %v2219
      %v2221 = vpop.f32.mrf.mxu0
      %v2222 = vadd.f32 0.0, %v2221
      %2223 = vmatmul.bf16.gmra.mxu0 %v1789
      %v2224 = vpop.f32.mrf.mxu0
      %v2225 = vadd.f32 0.0, %v2224
      %v2226 = vpop.f32.mrf.mxu0
      %v2227 = vadd.f32 0.0, %v2226
      %2228 = vmatmul.bf16.gmra.mxu0 %v1791
      %v2229 = vpop.f32.mrf.mxu0
      %v2230 = vadd.f32 0.0, %v2229
      %v2231 = vpop.f32.mrf.mxu0
      %v2232 = vadd.f32 0.0, %v2231
      %2233 = vmatmul.bf16.gmra.mxu0 %v1793
      %v2234 = vpop.f32.mrf.mxu0
      %v2235 = vadd.f32 0.0, %v2234
      %v2236 = vpop.f32.mrf.mxu0
      %v2237 = vadd.f32 0.0, %v2236
      %2238 = vmatmul.bf16.gmra.mxu0 %v1795
      %v2239 = vpop.f32.mrf.mxu0
      %v2240 = vadd.f32 0.0, %v2239
      %v2241 = vpop.f32.mrf.mxu0
      %v2242 = vadd.f32 0.0, %v2241
      %2243 = vmatmul.bf16.gmra.mxu0 %v1797
      %v2244 = vpop.f32.mrf.mxu0
      %v2245 = vadd.f32 0.0, %v2244
      %v2246 = vpop.f32.mrf.mxu0
      %v2247 = vadd.f32 0.0, %v2246
      %2248 = vmatmul.bf16.gmra.mxu0 %v1799
      %v2249 = vpop.f32.mrf.mxu0
      %v2250 = vadd.f32 0.0, %v2249
      %v2251 = vpop.f32.mrf.mxu0
      %v2252 = vadd.f32 0.0, %v2251
      %2253 = vmatmul.bf16.gmra.mxu0 %v1801
      %v2254 = vpop.f32.mrf.mxu0
      %v2255 = vadd.f32 0.0, %v2254
      %v2256 = vpop.f32.mrf.mxu0
      %v2257 = vadd.f32 0.0, %v2256
      %2258 = vmatmul.bf16.gmra.mxu0 %v1803
      %v2259 = vpop.f32.mrf.mxu0
      %v2260 = vadd.f32 0.0, %v2259
      %v2261 = vpop.f32.mrf.mxu0
      %v2262 = vadd.f32 0.0, %v2261
      %2263 = vmatmul.bf16.gmra.mxu0 %v1805
      %v2264 = vpop.f32.mrf.mxu0
      %v2265 = vadd.f32 0.0, %v2264
      %v2266 = vpop.f32.mrf.mxu0
      %v2267 = vadd.f32 0.0, %v2266
      %2268 = vmatmul.bf16.gmra.mxu0 %v1807
      %v2269 = vpop.f32.mrf.mxu0
      %v2270 = vadd.f32 0.0, %v2269
      %v2271 = vpop.f32.mrf.mxu0
      %v2272 = vadd.f32 0.0, %v2271
      %2273 = vmatmul.bf16.gmra.mxu0 %v1809
      %v2274 = vpop.f32.mrf.mxu0
      %v2275 = vadd.f32 0.0, %v2274
      %v2276 = vpop.f32.mrf.mxu0
      %v2277 = vadd.f32 0.0, %v2276
      %2278 = vmatmul.bf16.gmra.mxu0 %v1811
      %v2279 = vpop.f32.mrf.mxu0
      %v2280 = vadd.f32 0.0, %v2279
      %v2281 = vpop.f32.mrf.mxu0
      %v2282 = vadd.f32 0.0, %v2281
      %2283 = vmatmul.bf16.gmra.mxu0 %v1813
      %v2284 = vpop.f32.mrf.mxu0
      %v2285 = vadd.f32 0.0, %v2284
      %v2286 = vpop.f32.mrf.mxu0
      %v2287 = vadd.f32 0.0, %v2286
      %2288 = vmatmul.bf16.gmra.mxu0 %v1815
      %v2289 = vpop.f32.mrf.mxu0
      %v2290 = vadd.f32 0.0, %v2289
      %v2291 = vpop.f32.mrf.mxu0
      %v2292 = vadd.f32 0.0, %v2291
      %2293 = vmatmul.bf16.gmra.mxu0 %v1817
      %v2294 = vpop.f32.mrf.mxu0
      %v2295 = vadd.f32 0.0, %v2294
      %v2296 = vpop.f32.mrf.mxu0
      %v2297 = vadd.f32 0.0, %v2296
      %2298 = vmatmul.bf16.gmra.mxu0 %v1819
      %v2299 = vpop.f32.mrf.mxu0
      %v2300 = vadd.f32 0.0, %v2299
      %v2301 = vpop.f32.mrf.mxu0
      %v2302 = vadd.f32 0.0, %v2301
      %2303 = vmatmul.bf16.gmra.mxu0 %v1821
      %v2304 = vpop.f32.mrf.mxu0
      %v2305 = vadd.f32 0.0, %v2304
      %v2306 = vpop.f32.mrf.mxu0
      %v2307 = vadd.f32 0.0, %v2306
      %2308 = vmatmul.bf16.gmra.mxu0 %v1823
      %v2309 = vpop.f32.mrf.mxu0
      %v2310 = vadd.f32 0.0, %v2309
      %v2311 = vpop.f32.mrf.mxu0
      %v2312 = vadd.f32 0.0, %v2311
      %2313 = vmatmul.bf16.gmra.mxu0 %v1825
      %v2314 = vpop.f32.mrf.mxu0
      %v2315 = vadd.f32 0.0, %v2314
      %v2316 = vpop.f32.mrf.mxu0
      %v2317 = vadd.f32 0.0, %v2316
      %2318 = vmatmul.bf16.gmra.mxu0 %v1827
      %v2319 = vpop.f32.mrf.mxu0
      %v2320 = vadd.f32 0.0, %v2319
      %v2321 = vpop.f32.mrf.mxu0
      %v2322 = vadd.f32 0.0, %v2321
      %2323 = vmatmul.bf16.gmra.mxu0 %v1829
      %v2324 = vpop.f32.mrf.mxu0
      %v2325 = vadd.f32 0.0, %v2324
      %v2326 = vpop.f32.mrf.mxu0
      %v2327 = vadd.f32 0.0, %v2326
      %2328 = vmatmul.bf16.gmra.mxu0 %v1831
      %v2329 = vpop.f32.mrf.mxu0
      %v2330 = vadd.f32 0.0, %v2329
      %v2331 = vpop.f32.mrf.mxu0
      %v2332 = vadd.f32 0.0, %v2331
      %2333 = vmatmul.bf16.gmra.mxu0 %v1833
      %v2334 = vpop.f32.mrf.mxu0
      %v2335 = vadd.f32 0.0, %v2334
      %v2336 = vpop.f32.mrf.mxu0
      %v2337 = vadd.f32 0.0, %v2336
      %2338 = vmatmul.bf16.gmra.mxu0 %v1835
      %v2339 = vpop.f32.mrf.mxu0
      %v2340 = vadd.f32 0.0, %v2339
      %v2341 = vpop.f32.mrf.mxu0
      %v2342 = vadd.f32 0.0, %v2341
      %2343 = vmatmul.bf16.gmra.mxu0 %v1837
      %v2344 = vpop.f32.mrf.mxu0
      %v2345 = vadd.f32 0.0, %v2344
      %v2346 = vpop.f32.mrf.mxu0
      %v2347 = vadd.f32 0.0, %v2346
      %2348 = vmatmul.bf16.gmra.mxu0 %v1839
      %v2349 = vpop.f32.mrf.mxu0
      %v2350 = vadd.f32 0.0, %v2349
      %v2351 = vpop.f32.mrf.mxu0
      %v2352 = vadd.f32 0.0, %v2351
      %2353 = vmatmul.bf16.gmra.mxu0 %v1841
      %v2354 = vpop.f32.mrf.mxu0
      %v2355 = vadd.f32 0.0, %v2354
      %v2356 = vpop.f32.mrf.mxu0
      %v2357 = vadd.f32 0.0, %v2356
      %2358 = vmatmul.bf16.gmra.mxu0 %v1843
      %v2359 = vpop.f32.mrf.mxu0
      %v2360 = vadd.f32 0.0, %v2359
      %v2361 = vpop.f32.mrf.mxu0
      %v2362 = vadd.f32 0.0, %v2361
      %2363 = vmatmul.bf16.gmra.mxu0 %v1845
      %v2364 = vpop.f32.mrf.mxu0
      %v2365 = vadd.f32 0.0, %v2364
      %v2366 = vpop.f32.mrf.mxu0
      %v2367 = vadd.f32 0.0, %v2366
      %2368 = vmatmul.bf16.gmra.mxu0 %v1847
      %v2369 = vpop.f32.mrf.mxu0
      %v2370 = vadd.f32 0.0, %v2369
      %v2371 = vpop.f32.mrf.mxu0
      %v2372 = vadd.f32 0.0, %v2371
      %2373 = vmatmul.bf16.gmra.mxu0 %v1849
      %v2374 = vpop.f32.mrf.mxu0
      %v2375 = vadd.f32 0.0, %v2374
      %v2376 = vpop.f32.mrf.mxu0
      %v2377 = vadd.f32 0.0, %v2376
      %2378 = vmatmul.bf16.gmra.mxu0 %v1851
      %v2379 = vpop.f32.mrf.mxu0
      %v2380 = vadd.f32 0.0, %v2379
      %v2381 = vpop.f32.mrf.mxu0
      %v2382 = vadd.f32 0.0, %v2381
      %2383 = vmatmul.bf16.gmra.mxu0 %v1853
      %v2384 = vpop.f32.mrf.mxu0
      %v2385 = vadd.f32 0.0, %v2384
      %v2386 = vpop.f32.mrf.mxu0
      %v2387 = vadd.f32 0.0, %v2386
      %2388 = vmatmul.bf16.gmra.mxu0 %v1855
      %v2389 = vpop.f32.mrf.mxu0
      %v2390 = vadd.f32 0.0, %v2389
      %v2391 = vpop.f32.mrf.mxu0
      %v2392 = vadd.f32 0.0, %v2391
      %2393 = vdwg.mxu0
      %2394 = vmatpush.bf16.msra.mxu0 0
      %2395 = vmatpush.bf16.msra.mxu0 0
      %2396 = vmatpush.bf16.msra.mxu0 0
      %2397 = vmatpush.bf16.msra.mxu0 0
      %2398 = vmatpush.bf16.msra.mxu0 0
      %2399 = vmatpush.bf16.msra.mxu0 0
      %2400 = vmatpush.bf16.msra.mxu0 0
      %2401 = vmatpush.bf16.msra.mxu0 %v2140
      %2402 = vmatmul.bf16.gmra.mxu0 %v1995
      %v2403 = vpop.f32.mrf.mxu0
      %v2404 = vadd.f32 %v2155, %v2403
      %v2405 = vpop.f32.mrf.mxu0
      %v2406 = vadd.f32 %v2157, %v2405
      %2407 = vmatmul.bf16.gmra.mxu0 %v1998
      %v2408 = vpop.f32.mrf.mxu0
      %v2409 = vadd.f32 %v2160, %v2408
      %v2410 = vpop.f32.mrf.mxu0
      %v2411 = vadd.f32 %v2162, %v2410
      %2412 = vmatmul.bf16.gmra.mxu0 %v2001
      %v2413 = vpop.f32.mrf.mxu0
      %v2414 = vadd.f32 %v2165, %v2413
      %v2415 = vpop.f32.mrf.mxu0
      %v2416 = vadd.f32 %v2167, %v2415
      %2417 = vmatmul.bf16.gmra.mxu0 %v2004
      %v2418 = vpop.f32.mrf.mxu0
      %v2419 = vadd.f32 %v2170, %v2418
      %v2420 = vpop.f32.mrf.mxu0
      %v2421 = vadd.f32 %v2172, %v2420
      %2422 = vmatmul.bf16.gmra.mxu0 %v2007
      %v2423 = vpop.f32.mrf.mxu0
      %v2424 = vadd.f32 %v2175, %v2423
      %v2425 = vpop.f32.mrf.mxu0
      %v2426 = vadd.f32 %v2177, %v2425
      %2427 = vmatmul.bf16.gmra.mxu0 %v2010
      %v2428 = vpop.f32.mrf.mxu0
      %v2429 = vadd.f32 %v2180, %v2428
      %v2430 = vpop.f32.mrf.mxu0
      %v2431 = vadd.f32 %v2182, %v2430
      %2432 = vmatmul.bf16.gmra.mxu0 %v2013
      %v2433 = vpop.f32.mrf.mxu0
      %v2434 = vadd.f32 %v2185, %v2433
      %v2435 = vpop.f32.mrf.mxu0
      %v2436 = vadd.f32 %v2187, %v2435
      %2437 = vmatmul.bf16.gmra.mxu0 %v2016
      %v2438 = vpop.f32.mrf.mxu0
      %v2439 = vadd.f32 %v2190, %v2438
      %v2440 = vpop.f32.mrf.mxu0
      %v2441 = vadd.f32 %v2192, %v2440
      %2442 = vmatmul.bf16.gmra.mxu0 %v2019
      %v2443 = vpop.f32.mrf.mxu0
      %v2444 = vadd.f32 %v2195, %v2443
      %v2445 = vpop.f32.mrf.mxu0
      %v2446 = vadd.f32 %v2197, %v2445
      %2447 = vmatmul.bf16.gmra.mxu0 %v2022
      %v2448 = vpop.f32.mrf.mxu0
      %v2449 = vadd.f32 %v2200, %v2448
      %v2450 = vpop.f32.mrf.mxu0
      %v2451 = vadd.f32 %v2202, %v2450
      %2452 = vmatmul.bf16.gmra.mxu0 %v2025
      %v2453 = vpop.f32.mrf.mxu0
      %v2454 = vadd.f32 %v2205, %v2453
      %v2455 = vpop.f32.mrf.mxu0
      %v2456 = vadd.f32 %v2207, %v2455
      %2457 = vmatmul.bf16.gmra.mxu0 %v2028
      %v2458 = vpop.f32.mrf.mxu0
      %v2459 = vadd.f32 %v2210, %v2458
      %v2460 = vpop.f32.mrf.mxu0
      %v2461 = vadd.f32 %v2212, %v2460
      %2462 = vmatmul.bf16.gmra.mxu0 %v2031
      %v2463 = vpop.f32.mrf.mxu0
      %v2464 = vadd.f32 %v2215, %v2463
      %v2465 = vpop.f32.mrf.mxu0
      %v2466 = vadd.f32 %v2217, %v2465
      %2467 = vmatmul.bf16.gmra.mxu0 %v2034
      %v2468 = vpop.f32.mrf.mxu0
      %v2469 = vadd.f32 %v2220, %v2468
      %v2470 = vpop.f32.mrf.mxu0
      %v2471 = vadd.f32 %v2222, %v2470
      %2472 = vmatmul.bf16.gmra.mxu0 %v2037
      %v2473 = vpop.f32.mrf.mxu0
      %v2474 = vadd.f32 %v2225, %v2473
      %v2475 = vpop.f32.mrf.mxu0
      %v2476 = vadd.f32 %v2227, %v2475
      %2477 = vmatmul.bf16.gmra.mxu0 %v2040
      %v2478 = vpop.f32.mrf.mxu0
      %v2479 = vadd.f32 %v2230, %v2478
      %v2480 = vpop.f32.mrf.mxu0
      %v2481 = vadd.f32 %v2232, %v2480
      %2482 = vmatmul.bf16.gmra.mxu0 %v2043
      %v2483 = vpop.f32.mrf.mxu0
      %v2484 = vadd.f32 %v2235, %v2483
      %v2485 = vpop.f32.mrf.mxu0
      %v2486 = vadd.f32 %v2237, %v2485
      %2487 = vmatmul.bf16.gmra.mxu0 %v2046
      %v2488 = vpop.f32.mrf.mxu0
      %v2489 = vadd.f32 %v2240, %v2488
      %v2490 = vpop.f32.mrf.mxu0
      %v2491 = vadd.f32 %v2242, %v2490
      %2492 = vmatmul.bf16.gmra.mxu0 %v2049
      %v2493 = vpop.f32.mrf.mxu0
      %v2494 = vadd.f32 %v2245, %v2493
      %v2495 = vpop.f32.mrf.mxu0
      %v2496 = vadd.f32 %v2247, %v2495
      %2497 = vmatmul.bf16.gmra.mxu0 %v2052
      %v2498 = vpop.f32.mrf.mxu0
      %v2499 = vadd.f32 %v2250, %v2498
      %v2500 = vpop.f32.mrf.mxu0
      %v2501 = vadd.f32 %v2252, %v2500
      %2502 = vmatmul.bf16.gmra.mxu0 %v2055
      %v2503 = vpop.f32.mrf.mxu0
      %v2504 = vadd.f32 %v2255, %v2503
      %v2505 = vpop.f32.mrf.mxu0
      %v2506 = vadd.f32 %v2257, %v2505
      %2507 = vmatmul.bf16.gmra.mxu0 %v2058
      %v2508 = vpop.f32.mrf.mxu0
      %v2509 = vadd.f32 %v2260, %v2508
      %v2510 = vpop.f32.mrf.mxu0
      %v2511 = vadd.f32 %v2262, %v2510
      %2512 = vmatmul.bf16.gmra.mxu0 %v2061
      %v2513 = vpop.f32.mrf.mxu0
      %v2514 = vadd.f32 %v2265, %v2513
      %v2515 = vpop.f32.mrf.mxu0
      %v2516 = vadd.f32 %v2267, %v2515
      %2517 = vmatmul.bf16.gmra.mxu0 %v2064
      %v2518 = vpop.f32.mrf.mxu0
      %v2519 = vadd.f32 %v2270, %v2518
      %v2520 = vpop.f32.mrf.mxu0
      %v2521 = vadd.f32 %v2272, %v2520
      %2522 = vmatmul.bf16.gmra.mxu0 %v2067
      %v2523 = vpop.f32.mrf.mxu0
      %v2524 = vadd.f32 %v2275, %v2523
      %v2525 = vpop.f32.mrf.mxu0
      %v2526 = vadd.f32 %v2277, %v2525
      %2527 = vmatmul.bf16.gmra.mxu0 %v2070
      %v2528 = vpop.f32.mrf.mxu0
      %v2529 = vadd.f32 %v2280, %v2528
      %v2530 = vpop.f32.mrf.mxu0
      %v2531 = vadd.f32 %v2282, %v2530
      %2532 = vmatmul.bf16.gmra.mxu0 %v2073
      %v2533 = vpop.f32.mrf.mxu0
      %v2534 = vadd.f32 %v2285, %v2533
      %v2535 = vpop.f32.mrf.mxu0
      %v2536 = vadd.f32 %v2287, %v2535
      %2537 = vmatmul.bf16.gmra.mxu0 %v2076
      %v2538 = vpop.f32.mrf.mxu0
      %v2539 = vadd.f32 %v2290, %v2538
      %v2540 = vpop.f32.mrf.mxu0
      %v2541 = vadd.f32 %v2292, %v2540
      %2542 = vmatmul.bf16.gmra.mxu0 %v2079
      %v2543 = vpop.f32.mrf.mxu0
      %v2544 = vadd.f32 %v2295, %v2543
      %v2545 = vpop.f32.mrf.mxu0
      %v2546 = vadd.f32 %v2297, %v2545
      %2547 = vmatmul.bf16.gmra.mxu0 %v2082
      %v2548 = vpop.f32.mrf.mxu0
      %v2549 = vadd.f32 %v2300, %v2548
      %v2550 = vpop.f32.mrf.mxu0
      %v2551 = vadd.f32 %v2302, %v2550
      %2552 = vmatmul.bf16.gmra.mxu0 %v2085
      %v2553 = vpop.f32.mrf.mxu0
      %v2554 = vadd.f32 %v2305, %v2553
      %v2555 = vpop.f32.mrf.mxu0
      %v2556 = vadd.f32 %v2307, %v2555
      %2557 = vmatmul.bf16.gmra.mxu0 %v2088
      %v2558 = vpop.f32.mrf.mxu0
      %v2559 = vadd.f32 %v2310, %v2558
      %v2560 = vpop.f32.mrf.mxu0
      %v2561 = vadd.f32 %v2312, %v2560
      %2562 = vmatmul.bf16.gmra.mxu0 %v2091
      %v2563 = vpop.f32.mrf.mxu0
      %v2564 = vadd.f32 %v2315, %v2563
      %v2565 = vpop.f32.mrf.mxu0
      %v2566 = vadd.f32 %v2317, %v2565
      %2567 = vmatmul.bf16.gmra.mxu0 %v2094
      %v2568 = vpop.f32.mrf.mxu0
      %v2569 = vadd.f32 %v2320, %v2568
      %v2570 = vpop.f32.mrf.mxu0
      %v2571 = vadd.f32 %v2322, %v2570
      %2572 = vmatmul.bf16.gmra.mxu0 %v2097
      %v2573 = vpop.f32.mrf.mxu0
      %v2574 = vadd.f32 %v2325, %v2573
      %v2575 = vpop.f32.mrf.mxu0
      %v2576 = vadd.f32 %v2327, %v2575
      %2577 = vmatmul.bf16.gmra.mxu0 %v2100
      %v2578 = vpop.f32.mrf.mxu0
      %v2579 = vadd.f32 %v2330, %v2578
      %v2580 = vpop.f32.mrf.mxu0
      %v2581 = vadd.f32 %v2332, %v2580
      %2582 = vmatmul.bf16.gmra.mxu0 %v2103
      %v2583 = vpop.f32.mrf.mxu0
      %v2584 = vadd.f32 %v2335, %v2583
      %v2585 = vpop.f32.mrf.mxu0
      %v2586 = vadd.f32 %v2337, %v2585
      %2587 = vmatmul.bf16.gmra.mxu0 %v2106
      %v2588 = vpop.f32.mrf.mxu0
      %v2589 = vadd.f32 %v2340, %v2588
      %v2590 = vpop.f32.mrf.mxu0
      %v2591 = vadd.f32 %v2342, %v2590
      %2592 = vmatmul.bf16.gmra.mxu0 %v2109
      %v2593 = vpop.f32.mrf.mxu0
      %v2594 = vadd.f32 %v2345, %v2593
      %v2595 = vpop.f32.mrf.mxu0
      %v2596 = vadd.f32 %v2347, %v2595
      %2597 = vmatmul.bf16.gmra.mxu0 %v2112
      %v2598 = vpop.f32.mrf.mxu0
      %v2599 = vadd.f32 %v2350, %v2598
      %v2600 = vpop.f32.mrf.mxu0
      %v2601 = vadd.f32 %v2352, %v2600
      %2602 = vmatmul.bf16.gmra.mxu0 %v2115
      %v2603 = vpop.f32.mrf.mxu0
      %v2604 = vadd.f32 %v2355, %v2603
      %v2605 = vpop.f32.mrf.mxu0
      %v2606 = vadd.f32 %v2357, %v2605
      %2607 = vmatmul.bf16.gmra.mxu0 %v2118
      %v2608 = vpop.f32.mrf.mxu0
      %v2609 = vadd.f32 %v2360, %v2608
      %v2610 = vpop.f32.mrf.mxu0
      %v2611 = vadd.f32 %v2362, %v2610
      %2612 = vmatmul.bf16.gmra.mxu0 %v2121
      %v2613 = vpop.f32.mrf.mxu0
      %v2614 = vadd.f32 %v2365, %v2613
      %v2615 = vpop.f32.mrf.mxu0
      %v2616 = vadd.f32 %v2367, %v2615
      %2617 = vmatmul.bf16.gmra.mxu0 %v2124
      %v2618 = vpop.f32.mrf.mxu0
      %v2619 = vadd.f32 %v2370, %v2618
      %v2620 = vpop.f32.mrf.mxu0
      %v2621 = vadd.f32 %v2372, %v2620
      %2622 = vmatmul.bf16.gmra.mxu0 %v2127
      %v2623 = vpop.f32.mrf.mxu0
      %v2624 = vadd.f32 %v2375, %v2623
      %v2625 = vpop.f32.mrf.mxu0
      %v2626 = vadd.f32 %v2377, %v2625
      %2627 = vmatmul.bf16.gmra.mxu0 %v2130
      %v2628 = vpop.f32.mrf.mxu0
      %v2629 = vadd.f32 %v2380, %v2628
      %v2630 = vpop.f32.mrf.mxu0
      %v2631 = vadd.f32 %v2382, %v2630
      %2632 = vmatmul.bf16.gmra.mxu0 %v2133
      %v2633 = vpop.f32.mrf.mxu0
      %v2634 = vadd.f32 %v2385, %v2633
      %v2635 = vpop.f32.mrf.mxu0
      %v2636 = vadd.f32 %v2387, %v2635
      %2637 = vmatmul.bf16.gmra.mxu0 %v2136
      %v2638 = vpop.f32.mrf.mxu0
      %v2639 = vadd.f32 %v2390, %v2638
      %v2640 = vpop.f32.mrf.mxu0
      %v2641 = vadd.f32 %v2392, %v2640
      %2642 = vdwg.mxu0
      %2643 = vmatpush.bf16.msra.mxu0 %v1974
      %2644 = vmatpush.bf16.msra.mxu0 %v1972
      %2645 = vmatpush.bf16.msra.mxu0 %v1970
      %2646 = vmatpush.bf16.msra.mxu0 %v1968
      %2647 = vmatpush.bf16.msra.mxu0 %v1966
      %2648 = vmatpush.bf16.msra.mxu0 %v1964
      %2649 = vmatpush.bf16.msra.mxu0 %v1962
      %2650 = vmatpush.bf16.msra.mxu0 %v1960
      %2651 = vmatmul.bf16.gmra.mxu0 %v1761
      %v2652 = vpop.f32.mrf.mxu0
      %v2653 = vadd.f32 0.0, %v2652
      %v2654 = vpop.f32.mrf.mxu0
      %v2655 = vadd.f32 0.0, %v2654
      %2656 = vmatmul.bf16.gmra.mxu0 %v1763
      %v2657 = vpop.f32.mrf.mxu0
      %v2658 = vadd.f32 0.0, %v2657
      %v2659 = vpop.f32.mrf.mxu0
      %v2660 = vadd.f32 0.0, %v2659
      %2661 = vmatmul.bf16.gmra.mxu0 %v1765
      %v2662 = vpop.f32.mrf.mxu0
      %v2663 = vadd.f32 0.0, %v2662
      %v2664 = vpop.f32.mrf.mxu0
      %v2665 = vadd.f32 0.0, %v2664
      %2666 = vmatmul.bf16.gmra.mxu0 %v1767
      %v2667 = vpop.f32.mrf.mxu0
      %v2668 = vadd.f32 0.0, %v2667
      %v2669 = vpop.f32.mrf.mxu0
      %v2670 = vadd.f32 0.0, %v2669
      %2671 = vmatmul.bf16.gmra.mxu0 %v1769
      %v2672 = vpop.f32.mrf.mxu0
      %v2673 = vadd.f32 0.0, %v2672
      %v2674 = vpop.f32.mrf.mxu0
      %v2675 = vadd.f32 0.0, %v2674
      %2676 = vmatmul.bf16.gmra.mxu0 %v1771
      %v2677 = vpop.f32.mrf.mxu0
      %v2678 = vadd.f32 0.0, %v2677
      %v2679 = vpop.f32.mrf.mxu0
      %v2680 = vadd.f32 0.0, %v2679
      %2681 = vmatmul.bf16.gmra.mxu0 %v1773
      %v2682 = vpop.f32.mrf.mxu0
      %v2683 = vadd.f32 0.0, %v2682
      %v2684 = vpop.f32.mrf.mxu0
      %v2685 = vadd.f32 0.0, %v2684
      %2686 = vmatmul.bf16.gmra.mxu0 %v1775
      %v2687 = vpop.f32.mrf.mxu0
      %v2688 = vadd.f32 0.0, %v2687
      %v2689 = vpop.f32.mrf.mxu0
      %v2690 = vadd.f32 0.0, %v2689
      %2691 = vmatmul.bf16.gmra.mxu0 %v1777
      %v2692 = vpop.f32.mrf.mxu0
      %v2693 = vadd.f32 0.0, %v2692
      %v2694 = vpop.f32.mrf.mxu0
      %v2695 = vadd.f32 0.0, %v2694
      %2696 = vmatmul.bf16.gmra.mxu0 %v1779
      %v2697 = vpop.f32.mrf.mxu0
      %v2698 = vadd.f32 0.0, %v2697
      %v2699 = vpop.f32.mrf.mxu0
      %v2700 = vadd.f32 0.0, %v2699
      %2701 = vmatmul.bf16.gmra.mxu0 %v1781
      %v2702 = vpop.f32.mrf.mxu0
      %v2703 = vadd.f32 0.0, %v2702
      %v2704 = vpop.f32.mrf.mxu0
      %v2705 = vadd.f32 0.0, %v2704
      %2706 = vmatmul.bf16.gmra.mxu0 %v1783
      %v2707 = vpop.f32.mrf.mxu0
      %v2708 = vadd.f32 0.0, %v2707
      %v2709 = vpop.f32.mrf.mxu0
      %v2710 = vadd.f32 0.0, %v2709
      %2711 = vmatmul.bf16.gmra.mxu0 %v1785
      %v2712 = vpop.f32.mrf.mxu0
      %v2713 = vadd.f32 0.0, %v2712
      %v2714 = vpop.f32.mrf.mxu0
      %v2715 = vadd.f32 0.0, %v2714
      %2716 = vmatmul.bf16.gmra.mxu0 %v1787
      %v2717 = vpop.f32.mrf.mxu0
      %v2718 = vadd.f32 0.0, %v2717
      %v2719 = vpop.f32.mrf.mxu0
      %v2720 = vadd.f32 0.0, %v2719
      %2721 = vmatmul.bf16.gmra.mxu0 %v1789
      %v2722 = vpop.f32.mrf.mxu0
      %v2723 = vadd.f32 0.0, %v2722
      %v2724 = vpop.f32.mrf.mxu0
      %v2725 = vadd.f32 0.0, %v2724
      %2726 = vmatmul.bf16.gmra.mxu0 %v1791
      %v2727 = vpop.f32.mrf.mxu0
      %v2728 = vadd.f32 0.0, %v2727
      %v2729 = vpop.f32.mrf.mxu0
      %v2730 = vadd.f32 0.0, %v2729
      %2731 = vmatmul.bf16.gmra.mxu0 %v1793
      %v2732 = vpop.f32.mrf.mxu0
      %v2733 = vadd.f32 0.0, %v2732
      %v2734 = vpop.f32.mrf.mxu0
      %v2735 = vadd.f32 0.0, %v2734
      %2736 = vmatmul.bf16.gmra.mxu0 %v1795
      %v2737 = vpop.f32.mrf.mxu0
      %v2738 = vadd.f32 0.0, %v2737
      %v2739 = vpop.f32.mrf.mxu0
      %v2740 = vadd.f32 0.0, %v2739
      %2741 = vmatmul.bf16.gmra.mxu0 %v1797
      %v2742 = vpop.f32.mrf.mxu0
      %v2743 = vadd.f32 0.0, %v2742
      %v2744 = vpop.f32.mrf.mxu0
      %v2745 = vadd.f32 0.0, %v2744
      %2746 = vmatmul.bf16.gmra.mxu0 %v1799
      %v2747 = vpop.f32.mrf.mxu0
      %v2748 = vadd.f32 0.0, %v2747
      %v2749 = vpop.f32.mrf.mxu0
      %v2750 = vadd.f32 0.0, %v2749
      %2751 = vmatmul.bf16.gmra.mxu0 %v1801
      %v2752 = vpop.f32.mrf.mxu0
      %v2753 = vadd.f32 0.0, %v2752
      %v2754 = vpop.f32.mrf.mxu0
      %v2755 = vadd.f32 0.0, %v2754
      %2756 = vmatmul.bf16.gmra.mxu0 %v1803
      %v2757 = vpop.f32.mrf.mxu0
      %v2758 = vadd.f32 0.0, %v2757
      %v2759 = vpop.f32.mrf.mxu0
      %v2760 = vadd.f32 0.0, %v2759
      %2761 = vmatmul.bf16.gmra.mxu0 %v1805
      %v2762 = vpop.f32.mrf.mxu0
      %v2763 = vadd.f32 0.0, %v2762
      %v2764 = vpop.f32.mrf.mxu0
      %v2765 = vadd.f32 0.0, %v2764
      %2766 = vmatmul.bf16.gmra.mxu0 %v1807
      %v2767 = vpop.f32.mrf.mxu0
      %v2768 = vadd.f32 0.0, %v2767
      %v2769 = vpop.f32.mrf.mxu0
      %v2770 = vadd.f32 0.0, %v2769
      %2771 = vmatmul.bf16.gmra.mxu0 %v1809
      %v2772 = vpop.f32.mrf.mxu0
      %v2773 = vadd.f32 0.0, %v2772
      %v2774 = vpop.f32.mrf.mxu0
      %v2775 = vadd.f32 0.0, %v2774
      %2776 = vmatmul.bf16.gmra.mxu0 %v1811
      %v2777 = vpop.f32.mrf.mxu0
      %v2778 = vadd.f32 0.0, %v2777
      %v2779 = vpop.f32.mrf.mxu0
      %v2780 = vadd.f32 0.0, %v2779
      %2781 = vmatmul.bf16.gmra.mxu0 %v1813
      %v2782 = vpop.f32.mrf.mxu0
      %v2783 = vadd.f32 0.0, %v2782
      %v2784 = vpop.f32.mrf.mxu0
      %v2785 = vadd.f32 0.0, %v2784
      %2786 = vmatmul.bf16.gmra.mxu0 %v1815
      %v2787 = vpop.f32.mrf.mxu0
      %v2788 = vadd.f32 0.0, %v2787
      %v2789 = vpop.f32.mrf.mxu0
      %v2790 = vadd.f32 0.0, %v2789
      %2791 = vmatmul.bf16.gmra.mxu0 %v1817
      %v2792 = vpop.f32.mrf.mxu0
      %v2793 = vadd.f32 0.0, %v2792
      %v2794 = vpop.f32.mrf.mxu0
      %v2795 = vadd.f32 0.0, %v2794
      %2796 = vmatmul.bf16.gmra.mxu0 %v1819
      %v2797 = vpop.f32.mrf.mxu0
      %v2798 = vadd.f32 0.0, %v2797
      %v2799 = vpop.f32.mrf.mxu0
      %v2800 = vadd.f32 0.0, %v2799
      %2801 = vmatmul.bf16.gmra.mxu0 %v1821
      %v2802 = vpop.f32.mrf.mxu0
      %v2803 = vadd.f32 0.0, %v2802
      %v2804 = vpop.f32.mrf.mxu0
      %v2805 = vadd.f32 0.0, %v2804
      %2806 = vmatmul.bf16.gmra.mxu0 %v1823
      %v2807 = vpop.f32.mrf.mxu0
      %v2808 = vadd.f32 0.0, %v2807
      %v2809 = vpop.f32.mrf.mxu0
      %v2810 = vadd.f32 0.0, %v2809
      %2811 = vmatmul.bf16.gmra.mxu0 %v1825
      %v2812 = vpop.f32.mrf.mxu0
      %v2813 = vadd.f32 0.0, %v2812
      %v2814 = vpop.f32.mrf.mxu0
      %v2815 = vadd.f32 0.0, %v2814
      %2816 = vmatmul.bf16.gmra.mxu0 %v1827
      %v2817 = vpop.f32.mrf.mxu0
      %v2818 = vadd.f32 0.0, %v2817
      %v2819 = vpop.f32.mrf.mxu0
      %v2820 = vadd.f32 0.0, %v2819
      %2821 = vmatmul.bf16.gmra.mxu0 %v1829
      %v2822 = vpop.f32.mrf.mxu0
      %v2823 = vadd.f32 0.0, %v2822
      %v2824 = vpop.f32.mrf.mxu0
      %v2825 = vadd.f32 0.0, %v2824
      %2826 = vmatmul.bf16.gmra.mxu0 %v1831
      %v2827 = vpop.f32.mrf.mxu0
      %v2828 = vadd.f32 0.0, %v2827
      %v2829 = vpop.f32.mrf.mxu0
      %v2830 = vadd.f32 0.0, %v2829
      %2831 = vmatmul.bf16.gmra.mxu0 %v1833
      %v2832 = vpop.f32.mrf.mxu0
      %v2833 = vadd.f32 0.0, %v2832
      %v2834 = vpop.f32.mrf.mxu0
      %v2835 = vadd.f32 0.0, %v2834
      %2836 = vmatmul.bf16.gmra.mxu0 %v1835
      %v2837 = vpop.f32.mrf.mxu0
      %v2838 = vadd.f32 0.0, %v2837
      %v2839 = vpop.f32.mrf.mxu0
      %v2840 = vadd.f32 0.0, %v2839
      %2841 = vmatmul.bf16.gmra.mxu0 %v1837
      %v2842 = vpop.f32.mrf.mxu0
      %v2843 = vadd.f32 0.0, %v2842
      %v2844 = vpop.f32.mrf.mxu0
      %v2845 = vadd.f32 0.0, %v2844
      %2846 = vmatmul.bf16.gmra.mxu0 %v1839
      %v2847 = vpop.f32.mrf.mxu0
      %v2848 = vadd.f32 0.0, %v2847
      %v2849 = vpop.f32.mrf.mxu0
      %v2850 = vadd.f32 0.0, %v2849
      %2851 = vmatmul.bf16.gmra.mxu0 %v1841
      %v2852 = vpop.f32.mrf.mxu0
      %v2853 = vadd.f32 0.0, %v2852
      %v2854 = vpop.f32.mrf.mxu0
      %v2855 = vadd.f32 0.0, %v2854
      %2856 = vmatmul.bf16.gmra.mxu0 %v1843
      %v2857 = vpop.f32.mrf.mxu0
      %v2858 = vadd.f32 0.0, %v2857
      %v2859 = vpop.f32.mrf.mxu0
      %v2860 = vadd.f32 0.0, %v2859
      %2861 = vmatmul.bf16.gmra.mxu0 %v1845
      %v2862 = vpop.f32.mrf.mxu0
      %v2863 = vadd.f32 0.0, %v2862
      %v2864 = vpop.f32.mrf.mxu0
      %v2865 = vadd.f32 0.0, %v2864
      %2866 = vmatmul.bf16.gmra.mxu0 %v1847
      %v2867 = vpop.f32.mrf.mxu0
      %v2868 = vadd.f32 0.0, %v2867
      %v2869 = vpop.f32.mrf.mxu0
      %v2870 = vadd.f32 0.0, %v2869
      %2871 = vmatmul.bf16.gmra.mxu0 %v1849
      %v2872 = vpop.f32.mrf.mxu0
      %v2873 = vadd.f32 0.0, %v2872
      %v2874 = vpop.f32.mrf.mxu0
      %v2875 = vadd.f32 0.0, %v2874
      %2876 = vmatmul.bf16.gmra.mxu0 %v1851
      %v2877 = vpop.f32.mrf.mxu0
      %v2878 = vadd.f32 0.0, %v2877
      %v2879 = vpop.f32.mrf.mxu0
      %v2880 = vadd.f32 0.0, %v2879
      %2881 = vmatmul.bf16.gmra.mxu0 %v1853
      %v2882 = vpop.f32.mrf.mxu0
      %v2883 = vadd.f32 0.0, %v2882
      %v2884 = vpop.f32.mrf.mxu0
      %v2885 = vadd.f32 0.0, %v2884
      %2886 = vmatmul.bf16.gmra.mxu0 %v1855
      %v2887 = vpop.f32.mrf.mxu0
      %v2888 = vadd.f32 0.0, %v2887
      %v2889 = vpop.f32.mrf.mxu0
      %v2890 = vadd.f32 0.0, %v2889
      %2891 = vdwg.mxu0
      %2892 = vmatpush.bf16.msra.mxu0 0
      %2893 = vmatpush.bf16.msra.mxu0 0
      %2894 = vmatpush.bf16.msra.mxu0 0
      %2895 = vmatpush.bf16.msra.mxu0 0
      %2896 = vmatpush.bf16.msra.mxu0 0
      %2897 = vmatpush.bf16.msra.mxu0 0
      %2898 = vmatpush.bf16.msra.mxu0 0
      %2899 = vmatpush.bf16.msra.mxu0 %v2143
      %2900 = vmatmul.bf16.gmra.mxu0 %v1995
      %v2901 = vpop.f32.mrf.mxu0
      %v2902 = vadd.f32 %v2653, %v2901
      %v2903 = vpop.f32.mrf.mxu0
      %v2904 = vadd.f32 %v2655, %v2903
      %2905 = vmatmul.bf16.gmra.mxu0 %v1998
      %v2906 = vpop.f32.mrf.mxu0
      %v2907 = vadd.f32 %v2658, %v2906
      %v2908 = vpop.f32.mrf.mxu0
      %v2909 = vadd.f32 %v2660, %v2908
      %2910 = vmatmul.bf16.gmra.mxu0 %v2001
      %v2911 = vpop.f32.mrf.mxu0
      %v2912 = vadd.f32 %v2663, %v2911
      %v2913 = vpop.f32.mrf.mxu0
      %v2914 = vadd.f32 %v2665, %v2913
      %2915 = vmatmul.bf16.gmra.mxu0 %v2004
      %v2916 = vpop.f32.mrf.mxu0
      %v2917 = vadd.f32 %v2668, %v2916
      %v2918 = vpop.f32.mrf.mxu0
      %v2919 = vadd.f32 %v2670, %v2918
      %2920 = vmatmul.bf16.gmra.mxu0 %v2007
      %v2921 = vpop.f32.mrf.mxu0
      %v2922 = vadd.f32 %v2673, %v2921
      %v2923 = vpop.f32.mrf.mxu0
      %v2924 = vadd.f32 %v2675, %v2923
      %2925 = vmatmul.bf16.gmra.mxu0 %v2010
      %v2926 = vpop.f32.mrf.mxu0
      %v2927 = vadd.f32 %v2678, %v2926
      %v2928 = vpop.f32.mrf.mxu0
      %v2929 = vadd.f32 %v2680, %v2928
      %2930 = vmatmul.bf16.gmra.mxu0 %v2013
      %v2931 = vpop.f32.mrf.mxu0
      %v2932 = vadd.f32 %v2683, %v2931
      %v2933 = vpop.f32.mrf.mxu0
      %v2934 = vadd.f32 %v2685, %v2933
      %2935 = vmatmul.bf16.gmra.mxu0 %v2016
      %v2936 = vpop.f32.mrf.mxu0
      %v2937 = vadd.f32 %v2688, %v2936
      %v2938 = vpop.f32.mrf.mxu0
      %v2939 = vadd.f32 %v2690, %v2938
      %2940 = vmatmul.bf16.gmra.mxu0 %v2019
      %v2941 = vpop.f32.mrf.mxu0
      %v2942 = vadd.f32 %v2693, %v2941
      %v2943 = vpop.f32.mrf.mxu0
      %v2944 = vadd.f32 %v2695, %v2943
      %2945 = vmatmul.bf16.gmra.mxu0 %v2022
      %v2946 = vpop.f32.mrf.mxu0
      %v2947 = vadd.f32 %v2698, %v2946
      %v2948 = vpop.f32.mrf.mxu0
      %v2949 = vadd.f32 %v2700, %v2948
      %2950 = vmatmul.bf16.gmra.mxu0 %v2025
      %v2951 = vpop.f32.mrf.mxu0
      %v2952 = vadd.f32 %v2703, %v2951
      %v2953 = vpop.f32.mrf.mxu0
      %v2954 = vadd.f32 %v2705, %v2953
      %2955 = vmatmul.bf16.gmra.mxu0 %v2028
      %v2956 = vpop.f32.mrf.mxu0
      %v2957 = vadd.f32 %v2708, %v2956
      %v2958 = vpop.f32.mrf.mxu0
      %v2959 = vadd.f32 %v2710, %v2958
      %2960 = vmatmul.bf16.gmra.mxu0 %v2031
      %v2961 = vpop.f32.mrf.mxu0
      %v2962 = vadd.f32 %v2713, %v2961
      %v2963 = vpop.f32.mrf.mxu0
      %v2964 = vadd.f32 %v2715, %v2963
      %2965 = vmatmul.bf16.gmra.mxu0 %v2034
      %v2966 = vpop.f32.mrf.mxu0
      %v2967 = vadd.f32 %v2718, %v2966
      %v2968 = vpop.f32.mrf.mxu0
      %v2969 = vadd.f32 %v2720, %v2968
      %2970 = vmatmul.bf16.gmra.mxu0 %v2037
      %v2971 = vpop.f32.mrf.mxu0
      %v2972 = vadd.f32 %v2723, %v2971
      %v2973 = vpop.f32.mrf.mxu0
      %v2974 = vadd.f32 %v2725, %v2973
      %2975 = vmatmul.bf16.gmra.mxu0 %v2040
      %v2976 = vpop.f32.mrf.mxu0
      %v2977 = vadd.f32 %v2728, %v2976
      %v2978 = vpop.f32.mrf.mxu0
      %v2979 = vadd.f32 %v2730, %v2978
      %2980 = vmatmul.bf16.gmra.mxu0 %v2043
      %v2981 = vpop.f32.mrf.mxu0
      %v2982 = vadd.f32 %v2733, %v2981
      %v2983 = vpop.f32.mrf.mxu0
      %v2984 = vadd.f32 %v2735, %v2983
      %2985 = vmatmul.bf16.gmra.mxu0 %v2046
      %v2986 = vpop.f32.mrf.mxu0
      %v2987 = vadd.f32 %v2738, %v2986
      %v2988 = vpop.f32.mrf.mxu0
      %v2989 = vadd.f32 %v2740, %v2988
      %2990 = vmatmul.bf16.gmra.mxu0 %v2049
      %v2991 = vpop.f32.mrf.mxu0
      %v2992 = vadd.f32 %v2743, %v2991
      %v2993 = vpop.f32.mrf.mxu0
      %v2994 = vadd.f32 %v2745, %v2993
      %2995 = vmatmul.bf16.gmra.mxu0 %v2052
      %v2996 = vpop.f32.mrf.mxu0
      %v2997 = vadd.f32 %v2748, %v2996
      %v2998 = vpop.f32.mrf.mxu0
      %v2999 = vadd.f32 %v2750, %v2998
      %3000 = vmatmul.bf16.gmra.mxu0 %v2055
      %v3001 = vpop.f32.mrf.mxu0
      %v3002 = vadd.f32 %v2753, %v3001
      %v3003 = vpop.f32.mrf.mxu0
      %v3004 = vadd.f32 %v2755, %v3003
      %3005 = vmatmul.bf16.gmra.mxu0 %v2058
      %v3006 = vpop.f32.mrf.mxu0
      %v3007 = vadd.f32 %v2758, %v3006
      %v3008 = vpop.f32.mrf.mxu0
      %v3009 = vadd.f32 %v2760, %v3008
      %3010 = vmatmul.bf16.gmra.mxu0 %v2061
      %v3011 = vpop.f32.mrf.mxu0
      %v3012 = vadd.f32 %v2763, %v3011
      %v3013 = vpop.f32.mrf.mxu0
      %v3014 = vadd.f32 %v2765, %v3013
      %3015 = vmatmul.bf16.gmra.mxu0 %v2064
      %v3016 = vpop.f32.mrf.mxu0
      %v3017 = vadd.f32 %v2768, %v3016
      %v3018 = vpop.f32.mrf.mxu0
      %v3019 = vadd.f32 %v2770, %v3018
      %3020 = vmatmul.bf16.gmra.mxu0 %v2067
      %v3021 = vpop.f32.mrf.mxu0
      %v3022 = vadd.f32 %v2773, %v3021
      %v3023 = vpop.f32.mrf.mxu0
      %v3024 = vadd.f32 %v2775, %v3023
      %3025 = vmatmul.bf16.gmra.mxu0 %v2070
      %v3026 = vpop.f32.mrf.mxu0
      %v3027 = vadd.f32 %v2778, %v3026
      %v3028 = vpop.f32.mrf.mxu0
      %v3029 = vadd.f32 %v2780, %v3028
      %3030 = vmatmul.bf16.gmra.mxu0 %v2073
      %v3031 = vpop.f32.mrf.mxu0
      %v3032 = vadd.f32 %v2783, %v3031
      %v3033 = vpop.f32.mrf.mxu0
      %v3034 = vadd.f32 %v2785, %v3033
      %3035 = vmatmul.bf16.gmra.mxu0 %v2076
      %v3036 = vpop.f32.mrf.mxu0
      %v3037 = vadd.f32 %v2788, %v3036
      %v3038 = vpop.f32.mrf.mxu0
      %v3039 = vadd.f32 %v2790, %v3038
      %3040 = vmatmul.bf16.gmra.mxu0 %v2079
      %v3041 = vpop.f32.mrf.mxu0
      %v3042 = vadd.f32 %v2793, %v3041
      %v3043 = vpop.f32.mrf.mxu0
      %v3044 = vadd.f32 %v2795, %v3043
      %3045 = vmatmul.bf16.gmra.mxu0 %v2082
      %v3046 = vpop.f32.mrf.mxu0
      %v3047 = vadd.f32 %v2798, %v3046
      %v3048 = vpop.f32.mrf.mxu0
      %v3049 = vadd.f32 %v2800, %v3048
      %3050 = vmatmul.bf16.gmra.mxu0 %v2085
      %v3051 = vpop.f32.mrf.mxu0
      %v3052 = vadd.f32 %v2803, %v3051
      %v3053 = vpop.f32.mrf.mxu0
      %v3054 = vadd.f32 %v2805, %v3053
      %3055 = vmatmul.bf16.gmra.mxu0 %v2088
      %v3056 = vpop.f32.mrf.mxu0
      %v3057 = vadd.f32 %v2808, %v3056
      %v3058 = vpop.f32.mrf.mxu0
      %v3059 = vadd.f32 %v2810, %v3058
      %3060 = vmatmul.bf16.gmra.mxu0 %v2091
      %v3061 = vpop.f32.mrf.mxu0
      %v3062 = vadd.f32 %v2813, %v3061
      %v3063 = vpop.f32.mrf.mxu0
      %v3064 = vadd.f32 %v2815, %v3063
      %3065 = vmatmul.bf16.gmra.mxu0 %v2094
      %v3066 = vpop.f32.mrf.mxu0
      %v3067 = vadd.f32 %v2818, %v3066
      %v3068 = vpop.f32.mrf.mxu0
      %v3069 = vadd.f32 %v2820, %v3068
      %3070 = vmatmul.bf16.gmra.mxu0 %v2097
      %v3071 = vpop.f32.mrf.mxu0
      %v3072 = vadd.f32 %v2823, %v3071
      %v3073 = vpop.f32.mrf.mxu0
      %v3074 = vadd.f32 %v2825, %v3073
      %3075 = vmatmul.bf16.gmra.mxu0 %v2100
      %v3076 = vpop.f32.mrf.mxu0
      %v3077 = vadd.f32 %v2828, %v3076
      %v3078 = vpop.f32.mrf.mxu0
      %v3079 = vadd.f32 %v2830, %v3078
      %3080 = vmatmul.bf16.gmra.mxu0 %v2103
      %v3081 = vpop.f32.mrf.mxu0
      %v3082 = vadd.f32 %v2833, %v3081
      %v3083 = vpop.f32.mrf.mxu0
      %v3084 = vadd.f32 %v2835, %v3083
      %3085 = vmatmul.bf16.gmra.mxu0 %v2106
      %v3086 = vpop.f32.mrf.mxu0
      %v3087 = vadd.f32 %v2838, %v3086
      %v3088 = vpop.f32.mrf.mxu0
      %v3089 = vadd.f32 %v2840, %v3088
      %3090 = vmatmul.bf16.gmra.mxu0 %v2109
      %v3091 = vpop.f32.mrf.mxu0
      %v3092 = vadd.f32 %v2843, %v3091
      %v3093 = vpop.f32.mrf.mxu0
      %v3094 = vadd.f32 %v2845, %v3093
      %3095 = vmatmul.bf16.gmra.mxu0 %v2112
      %v3096 = vpop.f32.mrf.mxu0
      %v3097 = vadd.f32 %v2848, %v3096
      %v3098 = vpop.f32.mrf.mxu0
      %v3099 = vadd.f32 %v2850, %v3098
      %3100 = vmatmul.bf16.gmra.mxu0 %v2115
      %v3101 = vpop.f32.mrf.mxu0
      %v3102 = vadd.f32 %v2853, %v3101
      %v3103 = vpop.f32.mrf.mxu0
      %v3104 = vadd.f32 %v2855, %v3103
      %3105 = vmatmul.bf16.gmra.mxu0 %v2118
      %v3106 = vpop.f32.mrf.mxu0
      %v3107 = vadd.f32 %v2858, %v3106
      %v3108 = vpop.f32.mrf.mxu0
      %v3109 = vadd.f32 %v2860, %v3108
      %3110 = vmatmul.bf16.gmra.mxu0 %v2121
      %v3111 = vpop.f32.mrf.mxu0
      %v3112 = vadd.f32 %v2863, %v3111
      %v3113 = vpop.f32.mrf.mxu0
      %v3114 = vadd.f32 %v2865, %v3113
      %3115 = vmatmul.bf16.gmra.mxu0 %v2124
      %v3116 = vpop.f32.mrf.mxu0
      %v3117 = vadd.f32 %v2868, %v3116
      %v3118 = vpop.f32.mrf.mxu0
      %v3119 = vadd.f32 %v2870, %v3118
      %3120 = vmatmul.bf16.gmra.mxu0 %v2127
      %v3121 = vpop.f32.mrf.mxu0
      %v3122 = vadd.f32 %v2873, %v3121
      %v3123 = vpop.f32.mrf.mxu0
      %v3124 = vadd.f32 %v2875, %v3123
      %3125 = vmatmul.bf16.gmra.mxu0 %v2130
      %v3126 = vpop.f32.mrf.mxu0
      %v3127 = vadd.f32 %v2878, %v3126
      %v3128 = vpop.f32.mrf.mxu0
      %v3129 = vadd.f32 %v2880, %v3128
      %3130 = vmatmul.bf16.gmra.mxu0 %v2133
      %v3131 = vpop.f32.mrf.mxu0
      %v3132 = vadd.f32 %v2883, %v3131
      %v3133 = vpop.f32.mrf.mxu0
      %v3134 = vadd.f32 %v2885, %v3133
      %3135 = vmatmul.bf16.gmra.mxu0 %v2136
      %v3136 = vpop.f32.mrf.mxu0
      %v3137 = vadd.f32 %v2888, %v3136
      %v3138 = vpop.f32.mrf.mxu0
      %v3139 = vadd.f32 %v2890, %v3138
      %3140 = vdwg.mxu0
      %v3141 = vmax.f32 %v2404, %v2524
      %v3142 = vmax.f32 %v2902, %v3022
      %v3143 = vmax.f32 %v2406, %v2526
      %v3144 = vmax.f32 %v2904, %v3024
      %v3145 = vmax.f32 %v2409, %v2529
      %v3146 = vmax.f32 %v2907, %v3027
      %v3147 = vmax.f32 %v2411, %v2531
      %v3148 = vmax.f32 %v2909, %v3029
      %v3149 = vmax.f32 %v2414, %v2534
      %v3150 = vmax.f32 %v2912, %v3032
      %v3151 = vmax.f32 %v2416, %v2536
      %v3152 = vmax.f32 %v2914, %v3034
      %v3153 = vmax.f32 %v2419, %v2539
      %v3154 = vmax.f32 %v2917, %v3037
      %v3155 = vmax.f32 %v2421, %v2541
      %v3156 = vmax.f32 %v2919, %v3039
      %v3157 = vmax.f32 %v2424, %v2544
      %v3158 = vmax.f32 %v2922, %v3042
      %v3159 = vmax.f32 %v2426, %v2546
      %v3160 = vmax.f32 %v2924, %v3044
      %v3161 = vmax.f32 %v2429, %v2549
      %v3162 = vmax.f32 %v2927, %v3047
      %v3163 = vmax.f32 %v2431, %v2551
      %v3164 = vmax.f32 %v2929, %v3049
      %v3165 = vmax.f32 %v2434, %v2554
      %v3166 = vmax.f32 %v2932, %v3052
      %v3167 = vmax.f32 %v2436, %v2556
      %v3168 = vmax.f32 %v2934, %v3054
      %v3169 = vmax.f32 %v2439, %v2559
      %v3170 = vmax.f32 %v2937, %v3057
      %v3171 = vmax.f32 %v2441, %v2561
      %v3172 = vmax.f32 %v2939, %v3059
      %v3173 = vmax.f32 %v2444, %v2564
      %v3174 = vmax.f32 %v2942, %v3062
      %v3175 = vmax.f32 %v2446, %v2566
      %v3176 = vmax.f32 %v2944, %v3064
      %v3177 = vmax.f32 %v2449, %v2569
      %v3178 = vmax.f32 %v2947, %v3067
      %v3179 = vmax.f32 %v2451, %v2571
      %v3180 = vmax.f32 %v2949, %v3069
      %v3181 = vmax.f32 %v2454, %v2574
      %v3182 = vmax.f32 %v2952, %v3072
      %v3183 = vmax.f32 %v2456, %v2576
      %v3184 = vmax.f32 %v2954, %v3074
      %v3185 = vmax.f32 %v2459, %v2579
      %v3186 = vmax.f32 %v2957, %v3077
      %v3187 = vmax.f32 %v2461, %v2581
      %v3188 = vmax.f32 %v2959, %v3079
      %v3189 = vmax.f32 %v2464, %v2584
      %v3190 = vmax.f32 %v2962, %v3082
      %v3191 = vmax.f32 %v2466, %v2586
      %v3192 = vmax.f32 %v2964, %v3084
      %v3193 = vmax.f32 %v2469, %v2589
      %v3194 = vmax.f32 %v2967, %v3087
      %v3195 = vmax.f32 %v2471, %v2591
      %v3196 = vmax.f32 %v2969, %v3089
      %v3197 = vmax.f32 %v2474, %v2594
      %v3198 = vmax.f32 %v2972, %v3092
      %v3199 = vmax.f32 %v2476, %v2596
      %v3200 = vmax.f32 %v2974, %v3094
      %v3201 = vmax.f32 %v2479, %v2599
      %v3202 = vmax.f32 %v2977, %v3097
      %v3203 = vmax.f32 %v2481, %v2601
      %v3204 = vmax.f32 %v2979, %v3099
      %v3205 = vmax.f32 %v2484, %v2604
      %v3206 = vmax.f32 %v2982, %v3102
      %v3207 = vmax.f32 %v2486, %v2606
      %v3208 = vmax.f32 %v2984, %v3104
      %v3209 = vmax.f32 %v2489, %v2609
      %v3210 = vmax.f32 %v2987, %v3107
      %v3211 = vmax.f32 %v2491, %v2611
      %v3212 = vmax.f32 %v2989, %v3109
      %v3213 = vmax.f32 %v2494, %v2614
      %v3214 = vmax.f32 %v2992, %v3112
      %v3215 = vmax.f32 %v2496, %v2616
      %v3216 = vmax.f32 %v2994, %v3114
      %v3217 = vmax.f32 %v2499, %v2619
      %v3218 = vmax.f32 %v2997, %v3117
      %v3219 = vmax.f32 %v2501, %v2621
      %v3220 = vmax.f32 %v2999, %v3119
      %v3221 = vmax.f32 %v2504, %v2624
      %v3222 = vmax.f32 %v3002, %v3122
      %v3223 = vmax.f32 %v2506, %v2626
      %v3224 = vmax.f32 %v3004, %v3124
      %v3225 = vmax.f32 %v2509, %v2629
      %v3226 = vmax.f32 %v3007, %v3127
      %v3227 = vmax.f32 %v2511, %v2631
      %v3228 = vmax.f32 %v3009, %v3129
      %v3229 = vmax.f32 %v2514, %v2634
      %v3230 = vmax.f32 %v3012, %v3132
      %v3231 = vmax.f32 %v2516, %v2636
      %v3232 = vmax.f32 %v3014, %v3134
      %v3233 = vmax.f32 %v2519, %v2639
      %v3234 = vmax.f32 %v3017, %v3137
      %v3235 = vmax.f32 %v2521, %v2641
      %v3236 = vmax.f32 %v3019, %v3139
      %v3237 = vld [vmem:[%s2] sm:$0x3]
      %v3239 = vperm.slane %v3237, 0
      %v3240 = vperm.slane %v3237, 1
      %v3243 = vadd.f32 %v3141, %v3239
      %v3244 = vadd.f32 %v3142, %v3240
      %v3245 = vadd.f32 %v3143, %v3239
      %v3246 = vadd.f32 %v3144, %v3240
      %v3247 = vadd.f32 %v3145, %v3239
      %v3248 = vadd.f32 %v3146, %v3240
      %v3249 = vadd.f32 %v3147, %v3239
      %v3250 = vadd.f32 %v3148, %v3240
      %v3251 = vadd.f32 %v3149, %v3239
      %v3252 = vadd.f32 %v3150, %v3240
      %v3253 = vadd.f32 %v3151, %v3239
      %v3254 = vadd.f32 %v3152, %v3240
      %v3255 = vadd.f32 %v3153, %v3239
      %v3256 = vadd.f32 %v3154, %v3240
      %v3257 = vadd.f32 %v3155, %v3239
      %v3258 = vadd.f32 %v3156, %v3240
      %v3259 = vadd.f32 %v3157, %v3239
      %v3260 = vadd.f32 %v3158, %v3240
      %v3261 = vadd.f32 %v3159, %v3239
      %v3262 = vadd.f32 %v3160, %v3240
      %v3263 = vadd.f32 %v3161, %v3239
      %v3264 = vadd.f32 %v3162, %v3240
      %v3265 = vadd.f32 %v3163, %v3239
      %v3266 = vadd.f32 %v3164, %v3240
      %v3267 = vadd.f32 %v3165, %v3239
      %v3268 = vadd.f32 %v3166, %v3240
      %v3269 = vadd.f32 %v3167, %v3239
      %v3270 = vadd.f32 %v3168, %v3240
      %v3271 = vadd.f32 %v3169, %v3239
      %v3272 = vadd.f32 %v3170, %v3240
      %v3273 = vadd.f32 %v3171, %v3239
      %v3274 = vadd.f32 %v3172, %v3240
      %v3275 = vadd.f32 %v3173, %v3239
      %v3276 = vadd.f32 %v3174, %v3240
      %v3277 = vadd.f32 %v3175, %v3239
      %v3278 = vadd.f32 %v3176, %v3240
      %v3279 = vadd.f32 %v3177, %v3239
      %v3280 = vadd.f32 %v3178, %v3240
      %v3281 = vadd.f32 %v3179, %v3239
      %v3282 = vadd.f32 %v3180, %v3240
      %v3283 = vadd.f32 %v3181, %v3239
      %v3284 = vadd.f32 %v3182, %v3240
      %v3285 = vadd.f32 %v3183, %v3239
      %v3286 = vadd.f32 %v3184, %v3240
      %v3287 = vadd.f32 %v3185, %v3239
      %v3288 = vadd.f32 %v3186, %v3240
      %v3289 = vadd.f32 %v3187, %v3239
      %v3290 = vadd.f32 %v3188, %v3240
      %v3291 = vadd.f32 %v3189, %v3239
      %v3292 = vadd.f32 %v3190, %v3240
      %v3293 = vadd.f32 %v3191, %v3239
      %v3294 = vadd.f32 %v3192, %v3240
      %v3295 = vadd.f32 %v3193, %v3239
      %v3296 = vadd.f32 %v3194, %v3240
      %v3297 = vadd.f32 %v3195, %v3239
      %v3298 = vadd.f32 %v3196, %v3240
      %v3299 = vadd.f32 %v3197, %v3239
      %v3300 = vadd.f32 %v3198, %v3240
      %v3301 = vadd.f32 %v3199, %v3239
      %v3302 = vadd.f32 %v3200, %v3240
      %v3303 = vadd.f32 %v3201, %v3239
      %v3304 = vadd.f32 %v3202, %v3240
      %v3305 = vadd.f32 %v3203, %v3239
      %v3306 = vadd.f32 %v3204, %v3240
      %v3307 = vadd.f32 %v3205, %v3239
      %v3308 = vadd.f32 %v3206, %v3240
      %v3309 = vadd.f32 %v3207, %v3239
      %v3310 = vadd.f32 %v3208, %v3240
      %v3311 = vadd.f32 %v3209, %v3239
      %v3312 = vadd.f32 %v3210, %v3240
      %v3313 = vadd.f32 %v3211, %v3239
      %v3314 = vadd.f32 %v3212, %v3240
      %v3315 = vadd.f32 %v3213, %v3239
      %v3316 = vadd.f32 %v3214, %v3240
      %v3317 = vadd.f32 %v3215, %v3239
      %v3318 = vadd.f32 %v3216, %v3240
      %v3319 = vadd.f32 %v3217, %v3239
      %v3320 = vadd.f32 %v3218, %v3240
      %v3321 = vadd.f32 %v3219, %v3239
      %v3322 = vadd.f32 %v3220, %v3240
      %v3323 = vadd.f32 %v3221, %v3239
      %v3324 = vadd.f32 %v3222, %v3240
      %v3325 = vadd.f32 %v3223, %v3239
      %v3326 = vadd.f32 %v3224, %v3240
      %v3327 = vadd.f32 %v3225, %v3239
      %v3328 = vadd.f32 %v3226, %v3240
      %v3329 = vadd.f32 %v3227, %v3239
      %v3330 = vadd.f32 %v3228, %v3240
      %v3331 = vadd.f32 %v3229, %v3239
      %v3332 = vadd.f32 %v3230, %v3240
      %v3333 = vadd.f32 %v3231, %v3239
      %v3334 = vadd.f32 %v3232, %v3240
      %v3335 = vadd.f32 %v3233, %v3239
      %v3336 = vadd.f32 %v3234, %v3240
      %v3337 = vadd.f32 %v3235, %v3239
      %v3338 = vadd.f32 %v3236, %v3240
      %v3339 = vmax.f32 %v3243, 0.0
      %v3340 = vmax.f32 %v3244, 0.0
      %v3341 = vmax.f32 %v3245, 0.0
      %v3342 = vmax.f32 %v3246, 0.0
      %v3343 = vmax.f32 %v3247, 0.0
      %v3344 = vmax.f32 %v3248, 0.0
      %v3345 = vmax.f32 %v3249, 0.0
      %v3346 = vmax.f32 %v3250, 0.0
      %v3347 = vmax.f32 %v3251, 0.0
      %v3348 = vmax.f32 %v3252, 0.0
      %v3349 = vmax.f32 %v3253, 0.0
      %v3350 = vmax.f32 %v3254, 0.0
      %v3351 = vmax.f32 %v3255, 0.0
      %v3352 = vmax.f32 %v3256, 0.0
      %v3353 = vmax.f32 %v3257, 0.0
      %v3354 = vmax.f32 %v3258, 0.0
      %v3355 = vmax.f32 %v3259, 0.0
      %v3356 = vmax.f32 %v3260, 0.0
      %v3357 = vmax.f32 %v3261, 0.0
      %v3358 = vmax.f32 %v3262, 0.0
      %v3359 = vmax.f32 %v3263, 0.0
      %v3360 = vmax.f32 %v3264, 0.0
      %v3361 = vmax.f32 %v3265, 0.0
      %v3362 = vmax.f32 %v3266, 0.0
      %v3363 = vmax.f32 %v3267, 0.0
      %v3364 = vmax.f32 %v3268, 0.0
      %v3365 = vmax.f32 %v3269, 0.0
      %v3366 = vmax.f32 %v3270, 0.0
      %v3367 = vmax.f32 %v3271, 0.0
      %v3368 = vmax.f32 %v3272, 0.0
      %v3369 = vmax.f32 %v3273, 0.0
      %v3370 = vmax.f32 %v3274, 0.0
      %v3371 = vmax.f32 %v3275, 0.0
      %v3372 = vmax.f32 %v3276, 0.0
      %v3373 = vmax.f32 %v3277, 0.0
      %v3374 = vmax.f32 %v3278, 0.0
      %v3375 = vmax.f32 %v3279, 0.0
      %v3376 = vmax.f32 %v3280, 0.0
      %v3377 = vmax.f32 %v3281, 0.0
      %v3378 = vmax.f32 %v3282, 0.0
      %v3379 = vmax.f32 %v3283, 0.0
      %v3380 = vmax.f32 %v3284, 0.0
      %v3381 = vmax.f32 %v3285, 0.0
      %v3382 = vmax.f32 %v3286, 0.0
      %v3383 = vmax.f32 %v3287, 0.0
      %v3384 = vmax.f32 %v3288, 0.0
      %v3385 = vmax.f32 %v3289, 0.0
      %v3386 = vmax.f32 %v3290, 0.0
      %v3387 = vmax.f32 %v3291, 0.0
      %v3388 = vmax.f32 %v3292, 0.0
      %v3389 = vmax.f32 %v3293, 0.0
      %v3390 = vmax.f32 %v3294, 0.0
      %v3391 = vmax.f32 %v3295, 0.0
      %v3392 = vmax.f32 %v3296, 0.0
      %v3393 = vmax.f32 %v3297, 0.0
      %v3394 = vmax.f32 %v3298, 0.0
      %v3395 = vmax.f32 %v3299, 0.0
      %v3396 = vmax.f32 %v3300, 0.0
      %v3397 = vmax.f32 %v3301, 0.0
      %v3398 = vmax.f32 %v3302, 0.0
      %v3399 = vmax.f32 %v3303, 0.0
      %v3400 = vmax.f32 %v3304, 0.0
      %v3401 = vmax.f32 %v3305, 0.0
      %v3402 = vmax.f32 %v3306, 0.0
      %v3403 = vmax.f32 %v3307, 0.0
      %v3404 = vmax.f32 %v3308, 0.0
      %v3405 = vmax.f32 %v3309, 0.0
      %v3406 = vmax.f32 %v3310, 0.0
      %v3407 = vmax.f32 %v3311, 0.0
      %v3408 = vmax.f32 %v3312, 0.0
      %v3409 = vmax.f32 %v3313, 0.0
      %v3410 = vmax.f32 %v3314, 0.0
      %v3411 = vmax.f32 %v3315, 0.0
      %v3412 = vmax.f32 %v3316, 0.0
      %v3413 = vmax.f32 %v3317, 0.0
      %v3414 = vmax.f32 %v3318, 0.0
      %v3415 = vmax.f32 %v3319, 0.0
      %v3416 = vmax.f32 %v3320, 0.0
      %v3417 = vmax.f32 %v3321, 0.0
      %v3418 = vmax.f32 %v3322, 0.0
      %v3419 = vmax.f32 %v3323, 0.0
      %v3420 = vmax.f32 %v3324, 0.0
      %v3421 = vmax.f32 %v3325, 0.0
      %v3422 = vmax.f32 %v3326, 0.0
      %v3423 = vmax.f32 %v3327, 0.0
      %v3424 = vmax.f32 %v3328, 0.0
      %v3425 = vmax.f32 %v3329, 0.0
      %v3426 = vmax.f32 %v3330, 0.0
      %v3427 = vmax.f32 %v3331, 0.0
      %v3428 = vmax.f32 %v3332, 0.0
      %v3429 = vmax.f32 %v3333, 0.0
      %v3430 = vmax.f32 %v3334, 0.0
      %v3431 = vmax.f32 %v3335, 0.0
      %v3432 = vmax.f32 %v3336, 0.0
      %v3433 = vmax.f32 %v3337, 0.0
      %v3434 = vmax.f32 %v3338, 0.0
      %v3435 = vmax.f32 %v3339, %v3340
      %v3436 = vmax.f32 %v3341, %v3342
      %v3437 = vmax.f32 %v3343, %v3344
      %v3438 = vmax.f32 %v3345, %v3346
      %v3439 = vmax.f32 %v3347, %v3348
      %v3440 = vmax.f32 %v3349, %v3350
      %v3441 = vmax.f32 %v3351, %v3352
      %v3442 = vmax.f32 %v3353, %v3354
      %v3443 = vmax.f32 %v3355, %v3356
      %v3444 = vmax.f32 %v3357, %v3358
      %v3445 = vmax.f32 %v3359, %v3360
      %v3446 = vmax.f32 %v3361, %v3362
      %v3447 = vmax.f32 %v3363, %v3364
      %v3448 = vmax.f32 %v3365, %v3366
      %v3449 = vmax.f32 %v3367, %v3368
      %v3450 = vmax.f32 %v3369, %v3370
      %v3451 = vmax.f32 %v3371, %v3372
      %v3452 = vmax.f32 %v3373, %v3374
      %v3453 = vmax.f32 %v3375, %v3376
      %v3454 = vmax.f32 %v3377, %v3378
      %v3455 = vmax.f32 %v3379, %v3380
      %v3456 = vmax.f32 %v3381, %v3382
      %v3457 = vmax.f32 %v3383, %v3384
      %v3458 = vmax.f32 %v3385, %v3386
      %v3459 = vmax.f32 %v3387, %v3388
      %v3460 = vmax.f32 %v3389, %v3390
      %v3461 = vmax.f32 %v3391, %v3392
      %v3462 = vmax.f32 %v3393, %v3394
      %v3463 = vmax.f32 %v3395, %v3396
      %v3464 = vmax.f32 %v3397, %v3398
      %v3465 = vmax.f32 %v3399, %v3400
      %v3466 = vmax.f32 %v3401, %v3402
      %v3467 = vmax.f32 %v3403, %v3404
      %v3468 = vmax.f32 %v3405, %v3406
      %v3469 = vmax.f32 %v3407, %v3408
      %v3470 = vmax.f32 %v3409, %v3410
      %v3471 = vmax.f32 %v3411, %v3412
      %v3472 = vmax.f32 %v3413, %v3414
      %v3473 = vmax.f32 %v3415, %v3416
      %v3474 = vmax.f32 %v3417, %v3418
      %v3475 = vmax.f32 %v3419, %v3420
      %v3476 = vmax.f32 %v3421, %v3422
      %v3477 = vmax.f32 %v3423, %v3424
      %v3478 = vmax.f32 %v3425, %v3426
      %v3479 = vmax.f32 %v3427, %v3428
      %v3480 = vmax.f32 %v3429, %v3430
      %v3481 = vmax.f32 %v3431, %v3432
      %v3482 = vmax.f32 %v3433, %v3434
      %v3483 = vpack.c.bf16 %v3435, %v3435
      %v3484 = vpack.c.bf16 %v3436, %v3436
      %v3485 = vpack.c.bf16 %v3437, %v3437
      %v3486 = vpack.c.bf16 %v3438, %v3438
      %3487 = vst [vmem:[#allocation3] sm:$0xf] %v3483
      %3488 = vst [vmem:[#allocation3 + $0x30] sm:$0xf] %v3484
      %3489 = vst [vmem:[#allocation3 + $0x60] sm:$0xf] %v3485
      %3490 = vst [vmem:[#allocation3 + $0x90] sm:$0xf] %v3486
      %v3491 = vpack.c.bf16 %v3439, %v3439
      %v3492 = vpack.c.bf16 %v3440, %v3440
      %v3493 = vpack.c.bf16 %v3441, %v3441
      %v3494 = vpack.c.bf16 %v3442, %v3442
      %3495 = vst [vmem:[#allocation3 + $0x4] sm:$0xf] %v3491
      %3496 = vst [vmem:[#allocation3 + $0x34] sm:$0xf] %v3492
      %3497 = vst [vmem:[#allocation3 + $0x64] sm:$0xf] %v3493
      %3498 = vst [vmem:[#allocation3 + $0x94] sm:$0xf] %v3494
      %v3499 = vpack.c.bf16 %v3443, %v3443
      %v3500 = vpack.c.bf16 %v3444, %v3444
      %v3501 = vpack.c.bf16 %v3445, %v3445
      %v3502 = vpack.c.bf16 %v3446, %v3446
      %3503 = vst [vmem:[#allocation3 + $0x8] sm:$0xf] %v3499
      %3504 = vst [vmem:[#allocation3 + $0x38] sm:$0xf] %v3500
      %3505 = vst [vmem:[#allocation3 + $0x68] sm:$0xf] %v3501
      %3506 = vst [vmem:[#allocation3 + $0x98] sm:$0xf] %v3502
      %v3507 = vpack.c.bf16 %v3447, %v3447
      %v3508 = vpack.c.bf16 %v3448, %v3448
      %v3509 = vpack.c.bf16 %v3449, %v3449
      %v3510 = vpack.c.bf16 %v3450, %v3450
      %3511 = vst [vmem:[#allocation3 + $0xc] sm:$0xf] %v3507
      %3512 = vst [vmem:[#allocation3 + $0x3c] sm:$0xf] %v3508
      %3513 = vst [vmem:[#allocation3 + $0x6c] sm:$0xf] %v3509
      %3514 = vst [vmem:[#allocation3 + $0x9c] sm:$0xf] %v3510
      %v3515 = vpack.c.bf16 %v3451, %v3451
      %v3516 = vpack.c.bf16 %v3452, %v3452
      %v3517 = vpack.c.bf16 %v3453, %v3453
      %v3518 = vpack.c.bf16 %v3454, %v3454
      %3519 = vst [vmem:[#allocation3 + $0x10] sm:$0xf] %v3515
      %3520 = vst [vmem:[#allocation3 + $0x40] sm:$0xf] %v3516
      %3521 = vst [vmem:[#allocation3 + $0x70] sm:$0xf] %v3517
      %3522 = vst [vmem:[#allocation3 + $0xa0] sm:$0xf] %v3518
      %v3523 = vpack.c.bf16 %v3455, %v3455
      %v3524 = vpack.c.bf16 %v3456, %v3456
      %v3525 = vpack.c.bf16 %v3457, %v3457
      %v3526 = vpack.c.bf16 %v3458, %v3458
      %3527 = vst [vmem:[#allocation3 + $0x14] sm:$0xf] %v3523
      %3528 = vst [vmem:[#allocation3 + $0x44] sm:$0xf] %v3524
      %3529 = vst [vmem:[#allocation3 + $0x74] sm:$0xf] %v3525
      %3530 = vst [vmem:[#allocation3 + $0xa4] sm:$0xf] %v3526
      %v3531 = vpack.c.bf16 %v3459, %v3459
      %v3532 = vpack.c.bf16 %v3460, %v3460
      %v3533 = vpack.c.bf16 %v3461, %v3461
      %v3534 = vpack.c.bf16 %v3462, %v3462
      %3535 = vst [vmem:[#allocation3 + $0x18] sm:$0xf] %v3531
      %3536 = vst [vmem:[#allocation3 + $0x48] sm:$0xf] %v3532
      %3537 = vst [vmem:[#allocation3 + $0x78] sm:$0xf] %v3533
      %3538 = vst [vmem:[#allocation3 + $0xa8] sm:$0xf] %v3534
      %v3539 = vpack.c.bf16 %v3463, %v3463
      %v3540 = vpack.c.bf16 %v3464, %v3464
      %v3541 = vpack.c.bf16 %v3465, %v3465
      %v3542 = vpack.c.bf16 %v3466, %v3466
      %3543 = vst [vmem:[#allocation3 + $0x1c] sm:$0xf] %v3539
      %3544 = vst [vmem:[#allocation3 + $0x4c] sm:$0xf] %v3540
      %3545 = vst [vmem:[#allocation3 + $0x7c] sm:$0xf] %v3541
      %3546 = vst [vmem:[#allocation3 + $0xac] sm:$0xf] %v3542
      %v3547 = vpack.c.bf16 %v3467, %v3467
      %v3548 = vpack.c.bf16 %v3468, %v3468
      %v3549 = vpack.c.bf16 %v3469, %v3469
      %v3550 = vpack.c.bf16 %v3470, %v3470
      %3551 = vst [vmem:[#allocation3 + $0x20] sm:$0xf] %v3547
      %3552 = vst [vmem:[#allocation3 + $0x50] sm:$0xf] %v3548
      %3553 = vst [vmem:[#allocation3 + $0x80] sm:$0xf] %v3549
      %3554 = vst [vmem:[#allocation3 + $0xb0] sm:$0xf] %v3550
      %v3555 = vpack.c.bf16 %v3471, %v3471
      %v3556 = vpack.c.bf16 %v3472, %v3472
      %v3557 = vpack.c.bf16 %v3473, %v3473
      %v3558 = vpack.c.bf16 %v3474, %v3474
      %3559 = vst [vmem:[#allocation3 + $0x24] sm:$0xf] %v3555
      %3560 = vst [vmem:[#allocation3 + $0x54] sm:$0xf] %v3556
      %3561 = vst [vmem:[#allocation3 + $0x84] sm:$0xf] %v3557
      %3562 = vst [vmem:[#allocation3 + $0xb4] sm:$0xf] %v3558
      %v3563 = vpack.c.bf16 %v3475, %v3475
      %v3564 = vpack.c.bf16 %v3476, %v3476
      %v3565 = vpack.c.bf16 %v3477, %v3477
      %v3566 = vpack.c.bf16 %v3478, %v3478
      %3567 = vst [vmem:[#allocation3 + $0x28] sm:$0xf] %v3563
      %3568 = vst [vmem:[#allocation3 + $0x58] sm:$0xf] %v3564
      %3569 = vst [vmem:[#allocation3 + $0x88] sm:$0xf] %v3565
      %3570 = vst [vmem:[#allocation3 + $0xb8] sm:$0xf] %v3566
      %v3571 = vpack.c.bf16 %v3479, %v3479
      %v3572 = vpack.c.bf16 %v3480, %v3480
      %v3573 = vpack.c.bf16 %v3481, %v3481
      %v3574 = vpack.c.bf16 %v3482, %v3482
      %3575 = vst [vmem:[#allocation3 + $0x2c] sm:$0xf] %v3571
      %3576 = vst [vmem:[#allocation3 + $0x5c] sm:$0xf] %v3572
      %3577 = vst [vmem:[#allocation3 + $0x8c] sm:$0xf] %v3573
      %3578 = vst [vmem:[#allocation3 + $0xbc] sm:$0xf] %v3574
      %v3579 = vld [vmem:[#allocation3] sm:$0xff]
      %v3580 = vld [vmem:[#allocation3 + $0x8] sm:$0xff]
      %v3581 = vld [vmem:[#allocation3 + $0x10] sm:$0xf]
      %v3582 = vld [vmem:[#allocation3 + $0x30] sm:$0xff]
      %v3583 = vld [vmem:[#allocation3 + $0x38] sm:$0xff]
      %v3584 = vld [vmem:[#allocation3 + $0x40] sm:$0xf]
      %v3585 = vld [vmem:[#allocation3 + $0x60] sm:$0xff]
      %v3586 = vld [vmem:[#allocation3 + $0x68] sm:$0xff]
      %v3587 = vld [vmem:[#allocation3 + $0x70] sm:$0xf]
      %v3588 = vld [vmem:[#allocation3 + $0x90] sm:$0xff]
      %v3589 = vld [vmem:[#allocation3 + $0x98] sm:$0xff]
      %v3590 = vld [vmem:[#allocation3 + $0xa0] sm:$0xf]
      %3591 = vst [vmem:[#allocation4] sm:$0xff] %v3579
      %3592 = vst [vmem:[#allocation4 + $0x8] sm:$0xff] %v3580
      %3593 = vst [vmem:[#allocation4 + $0x10] sm:$0xf] %v3581
      %3594 = vst [vmem:[#allocation4 + $0x14] sm:$0xff] %v3582
      %3595 = vst [vmem:[#allocation4 + $0x1c] sm:$0xff] %v3583
      %3596 = vst [vmem:[#allocation4 + $0x24] sm:$0xf] %v3584
      %3597 = vst [vmem:[#allocation4 + $0x28] sm:$0xff] %v3585
      %3598 = vst [vmem:[#allocation4 + $0x30] sm:$0xff] %v3586
      %3599 = vst [vmem:[#allocation4 + $0x38] sm:$0xf] %v3587
      %3600 = vst [vmem:[#allocation4 + $0x3c] sm:$0xff] %v3588
      %3601 = vst [vmem:[#allocation4 + $0x44] sm:$0xff] %v3589
      %3602 = vst [vmem:[#allocation4 + $0x4c] sm:$0xf] %v3590
      %v3603 = vld [vmem:[#allocation3 + $0x8] sm:$0xff]
      %v3604 = vld [vmem:[#allocation3 + $0x10] sm:$0xff]
      %v3605 = vld [vmem:[#allocation3 + $0x18] sm:$0xf]
      %v3606 = vld [vmem:[#allocation3 + $0x38] sm:$0xff]
      %v3607 = vld [vmem:[#allocation3 + $0x40] sm:$0xff]
      %v3608 = vld [vmem:[#allocation3 + $0x48] sm:$0xf]
      %v3609 = vld [vmem:[#allocation3 + $0x68] sm:$0xff]
      %v3610 = vld [vmem:[#allocation3 + $0x70] sm:$0xff]
      %v3611 = vld [vmem:[#allocation3 + $0x78] sm:$0xf]
      %v3612 = vld [vmem:[#allocation3 + $0x98] sm:$0xff]
      %v3613 = vld [vmem:[#allocation3 + $0xa0] sm:$0xff]
      %v3614 = vld [vmem:[#allocation3 + $0xa8] sm:$0xf]
      %3615 = vst [vmem:[#allocation4 + $0x50] sm:$0xff] %v3603
      %3616 = vst [vmem:[#allocation4 + $0x58] sm:$0xff] %v3604
      %3617 = vst [vmem:[#allocation4 + $0x60] sm:$0xf] %v3605
      %3618 = vst [vmem:[#allocation4 + $0x64] sm:$0xff] %v3606
      %3619 = vst [vmem:[#allocation4 + $0x6c] sm:$0xff] %v3607
      %3620 = vst [vmem:[#allocation4 + $0x74] sm:$0xf] %v3608
      %3621 = vst [vmem:[#allocation4 + $0x78] sm:$0xff] %v3609
      %3622 = vst [vmem:[#allocation4 + $0x80] sm:$0xff] %v3610
      %3623 = vst [vmem:[#allocation4 + $0x88] sm:$0xf] %v3611
      %3624 = vst [vmem:[#allocation4 + $0x8c] sm:$0xff] %v3612
      %3625 = vst [vmem:[#allocation4 + $0x94] sm:$0xff] %v3613
      %3626 = vst [vmem:[#allocation4 + $0x9c] sm:$0xf] %v3614
      %v3627 = vld [vmem:[#allocation3 + $0x10] sm:$0xff]
      %v3628 = vld [vmem:[#allocation3 + $0x18] sm:$0xff]
      %v3629 = vld [vmem:[#allocation3 + $0x20] sm:$0xf]
      %v3630 = vld [vmem:[#allocation3 + $0x40] sm:$0xff]
      %v3631 = vld [vmem:[#allocation3 + $0x48] sm:$0xff]
      %v3632 = vld [vmem:[#allocation3 + $0x50] sm:$0xf]
      %v3633 = vld [vmem:[#allocation3 + $0x70] sm:$0xff]
      %v3634 = vld [vmem:[#allocation3 + $0x78] sm:$0xff]
      %v3635 = vld [vmem:[#allocation3 + $0x80] sm:$0xf]
      %v3636 = vld [vmem:[#allocation3 + $0xa0] sm:$0xff]
      %v3637 = vld [vmem:[#allocation3 + $0xa8] sm:$0xff]
      %v3638 = vld [vmem:[#allocation3 + $0xb0] sm:$0xf]
      %3639 = vst [vmem:[#allocation4 + $0xa0] sm:$0xff] %v3627
      %3640 = vst [vmem:[#allocation4 + $0xa8] sm:$0xff] %v3628
      %3641 = vst [vmem:[#allocation4 + $0xb0] sm:$0xf] %v3629
      %3642 = vst [vmem:[#allocation4 + $0xb4] sm:$0xff] %v3630
      %3643 = vst [vmem:[#allocation4 + $0xbc] sm:$0xff] %v3631
      %3644 = vst [vmem:[#allocation4 + $0xc4] sm:$0xf] %v3632
      %3645 = vst [vmem:[#allocation4 + $0xc8] sm:$0xff] %v3633
      %3646 = vst [vmem:[#allocation4 + $0xd0] sm:$0xff] %v3634
      %3647 = vst [vmem:[#allocation4 + $0xd8] sm:$0xf] %v3635
      %3648 = vst [vmem:[#allocation4 + $0xdc] sm:$0xff] %v3636
      %3649 = vst [vmem:[#allocation4 + $0xe4] sm:$0xff] %v3637
      %3650 = vst [vmem:[#allocation4 + $0xec] sm:$0xf] %v3638
      %v3651 = vld [vmem:[#allocation3 + $0x18] sm:$0xff]
      %v3652 = vld [vmem:[#allocation3 + $0x20] sm:$0xff]
      %v3653 = vld [vmem:[#allocation3 + $0x28] sm:$0xf]
      %v3654 = vld [vmem:[#allocation3 + $0x48] sm:$0xff]
      %v3655 = vld [vmem:[#allocation3 + $0x50] sm:$0xff]
      %v3656 = vld [vmem:[#allocation3 + $0x58] sm:$0xf]
      %v3657 = vld [vmem:[#allocation3 + $0x78] sm:$0xff]
      %v3658 = vld [vmem:[#allocation3 + $0x80] sm:$0xff]
      %v3659 = vld [vmem:[#allocation3 + $0x88] sm:$0xf]
      %v3660 = vld [vmem:[#allocation3 + $0xa8] sm:$0xff]
      %v3661 = vld [vmem:[#allocation3 + $0xb0] sm:$0xff]
      %v3662 = vld [vmem:[#allocation3 + $0xb8] sm:$0xf]
      %3663 = vst [vmem:[#allocation4 + $0xf0] sm:$0xff] %v3651
      %3664 = vst [vmem:[#allocation4 + $0xf8] sm:$0xff] %v3652
      %3665 = vst [vmem:[#allocation4 + $0x100] sm:$0xf] %v3653
      %3666 = vst [vmem:[#allocation4 + $0x104] sm:$0xff] %v3654
      %3667 = vst [vmem:[#allocation4 + $0x10c] sm:$0xff] %v3655
      %3668 = vst [vmem:[#allocation4 + $0x114] sm:$0xf] %v3656
      %3669 = vst [vmem:[#allocation4 + $0x118] sm:$0xff] %v3657
      %3670 = vst [vmem:[#allocation4 + $0x120] sm:$0xff] %v3658
      %3671 = vst [vmem:[#allocation4 + $0x128] sm:$0xf] %v3659
      %3672 = vst [vmem:[#allocation4 + $0x12c] sm:$0xff] %v3660
      %3673 = vst [vmem:[#allocation4 + $0x134] sm:$0xff] %v3661
      %3674 = vst [vmem:[#allocation4 + $0x13c] sm:$0xf] %v3662
      %v3675 = vld [vmem:[#allocation3 + $0x4] sm:$0xff]
      %v3676 = vld [vmem:[#allocation3 + $0xc] sm:$0xff]
      %v3677 = vld [vmem:[#allocation3 + $0x14] sm:$0xf]
      %v3678 = vld [vmem:[#allocation3 + $0x34] sm:$0xff]
      %v3679 = vld [vmem:[#allocation3 + $0x3c] sm:$0xff]
      %v3680 = vld [vmem:[#allocation3 + $0x44] sm:$0xf]
      %v3681 = vld [vmem:[#allocation3 + $0x64] sm:$0xff]
      %v3682 = vld [vmem:[#allocation3 + $0x6c] sm:$0xff]
      %v3683 = vld [vmem:[#allocation3 + $0x74] sm:$0xf]
      %v3684 = vld [vmem:[#allocation3 + $0x94] sm:$0xff]
      %v3685 = vld [vmem:[#allocation3 + $0x9c] sm:$0xff]
      %v3686 = vld [vmem:[#allocation3 + $0xa4] sm:$0xf]
      %3687 = vst [vmem:[#allocation4 + $0x140] sm:$0xff] %v3675
      %3688 = vst [vmem:[#allocation4 + $0x148] sm:$0xff] %v3676
      %3689 = vst [vmem:[#allocation4 + $0x150] sm:$0xf] %v3677
      %3690 = vst [vmem:[#allocation4 + $0x154] sm:$0xff] %v3678
      %3691 = vst [vmem:[#allocation4 + $0x15c] sm:$0xff] %v3679
      %3692 = vst [vmem:[#allocation4 + $0x164] sm:$0xf] %v3680
      %3693 = vst [vmem:[#allocation4 + $0x168] sm:$0xff] %v3681
      %3694 = vst [vmem:[#allocation4 + $0x170] sm:$0xff] %v3682
      %3695 = vst [vmem:[#allocation4 + $0x178] sm:$0xf] %v3683
      %3696 = vst [vmem:[#allocation4 + $0x17c] sm:$0xff] %v3684
      %3697 = vst [vmem:[#allocation4 + $0x184] sm:$0xff] %v3685
      %3698 = vst [vmem:[#allocation4 + $0x18c] sm:$0xf] %v3686
      %v3699 = vld [vmem:[#allocation3 + $0xc] sm:$0xff]
      %v3700 = vld [vmem:[#allocation3 + $0x14] sm:$0xff]
      %v3701 = vld [vmem:[#allocation3 + $0x1c] sm:$0xf]
      %v3702 = vld [vmem:[#allocation3 + $0x3c] sm:$0xff]
      %v3703 = vld [vmem:[#allocation3 + $0x44] sm:$0xff]
      %v3704 = vld [vmem:[#allocation3 + $0x4c] sm:$0xf]
      %v3705 = vld [vmem:[#allocation3 + $0x6c] sm:$0xff]
      %v3706 = vld [vmem:[#allocation3 + $0x74] sm:$0xff]
      %v3707 = vld [vmem:[#allocation3 + $0x7c] sm:$0xf]
      %v3708 = vld [vmem:[#allocation3 + $0x9c] sm:$0xff]
      %v3709 = vld [vmem:[#allocation3 + $0xa4] sm:$0xff]
      %v3710 = vld [vmem:[#allocation3 + $0xac] sm:$0xf]
      %3711 = vst [vmem:[#allocation4 + $0x190] sm:$0xff] %v3699
      %3712 = vst [vmem:[#allocation4 + $0x198] sm:$0xff] %v3700
      %3713 = vst [vmem:[#allocation4 + $0x1a0] sm:$0xf] %v3701
      %3714 = vst [vmem:[#allocation4 + $0x1a4] sm:$0xff] %v3702
      %3715 = vst [vmem:[#allocation4 + $0x1ac] sm:$0xff] %v3703
      %3716 = vst [vmem:[#allocation4 + $0x1b4] sm:$0xf] %v3704
      %3717 = vst [vmem:[#allocation4 + $0x1b8] sm:$0xff] %v3705
      %3718 = vst [vmem:[#allocation4 + $0x1c0] sm:$0xff] %v3706
      %3719 = vst [vmem:[#allocation4 + $0x1c8] sm:$0xf] %v3707
      %3720 = vst [vmem:[#allocation4 + $0x1cc] sm:$0xff] %v3708
      %3721 = vst [vmem:[#allocation4 + $0x1d4] sm:$0xff] %v3709
      %3722 = vst [vmem:[#allocation4 + $0x1dc] sm:$0xf] %v3710
      %v3723 = vld [vmem:[#allocation3 + $0x14] sm:$0xff]
      %v3724 = vld [vmem:[#allocation3 + $0x1c] sm:$0xff]
      %v3725 = vld [vmem:[#allocation3 + $0x24] sm:$0xf]
      %v3726 = vld [vmem:[#allocation3 + $0x44] sm:$0xff]
      %v3727 = vld [vmem:[#allocation3 + $0x4c] sm:$0xff]
      %v3728 = vld [vmem:[#allocation3 + $0x54] sm:$0xf]
      %v3729 = vld [vmem:[#allocation3 + $0x74] sm:$0xff]
      %v3730 = vld [vmem:[#allocation3 + $0x7c] sm:$0xff]
      %v3731 = vld [vmem:[#allocation3 + $0x84] sm:$0xf]
      %v3732 = vld [vmem:[#allocation3 + $0xa4] sm:$0xff]
      %v3733 = vld [vmem:[#allocation3 + $0xac] sm:$0xff]
      %v3734 = vld [vmem:[#allocation3 + $0xb4] sm:$0xf]
      %3735 = vst [vmem:[#allocation4 + $0x1e0] sm:$0xff] %v3723
      %3736 = vst [vmem:[#allocation4 + $0x1e8] sm:$0xff] %v3724
      %3737 = vst [vmem:[#allocation4 + $0x1f0] sm:$0xf] %v3725
      %3738 = vst [vmem:[#allocation4 + $0x1f4] sm:$0xff] %v3726
      %3739 = vst [vmem:[#allocation4 + $0x1fc] sm:$0xff] %v3727
      %3740 = vst [vmem:[#allocation4 + $0x204] sm:$0xf] %v3728
      %3741 = vst [vmem:[#allocation4 + $0x208] sm:$0xff] %v3729
      %3742 = vst [vmem:[#allocation4 + $0x210] sm:$0xff] %v3730
      %3743 = vst [vmem:[#allocation4 + $0x218] sm:$0xf] %v3731
      %3744 = vst [vmem:[#allocation4 + $0x21c] sm:$0xff] %v3732
      %3745 = vst [vmem:[#allocation4 + $0x224] sm:$0xff] %v3733
      %3746 = vst [vmem:[#allocation4 + $0x22c] sm:$0xf] %v3734
      %v3747 = vld [vmem:[#allocation3 + $0x1c] sm:$0xff]
      %v3748 = vld [vmem:[#allocation3 + $0x24] sm:$0xff]
      %v3749 = vld [vmem:[#allocation3 + $0x2c] sm:$0xf]
      %v3750 = vld [vmem:[#allocation3 + $0x4c] sm:$0xff]
      %v3751 = vld [vmem:[#allocation3 + $0x54] sm:$0xff]
      %v3752 = vld [vmem:[#allocation3 + $0x5c] sm:$0xf]
      %v3753 = vld [vmem:[#allocation3 + $0x7c] sm:$0xff]
      %v3754 = vld [vmem:[#allocation3 + $0x84] sm:$0xff]
      %v3755 = vld [vmem:[#allocation3 + $0x8c] sm:$0xf]
      %v3756 = vld [vmem:[#allocation3 + $0xac] sm:$0xff]
      %v3757 = vld [vmem:[#allocation3 + $0xb4] sm:$0xff]
      %v3758 = vld [vmem:[#allocation3 + $0xbc] sm:$0xf]
      %3759 = vst [vmem:[#allocation4 + $0x230] sm:$0xff] %v3747
      %3760 = vst [vmem:[#allocation4 + $0x238] sm:$0xff] %v3748
      %3761 = vst [vmem:[#allocation4 + $0x240] sm:$0xf] %v3749
      %3762 = vst [vmem:[#allocation4 + $0x244] sm:$0xff] %v3750
      %3763 = vst [vmem:[#allocation4 + $0x24c] sm:$0xff] %v3751
      %3764 = vst [vmem:[#allocation4 + $0x254] sm:$0xf] %v3752
      %3765 = vst [vmem:[#allocation4 + $0x258] sm:$0xff] %v3753
      %3766 = vst [vmem:[#allocation4 + $0x260] sm:$0xff] %v3754
      %3767 = vst [vmem:[#allocation4 + $0x268] sm:$0xf] %v3755
      %3768 = vst [vmem:[#allocation4 + $0x26c] sm:$0xff] %v3756
      %3769 = vst [vmem:[#allocation4 + $0x274] sm:$0xff] %v3757
      %3770 = vst [vmem:[#allocation4 + $0x27c] sm:$0xf] %v3758
      %v3771 = vld [vmem:[#allocation4] sm:$0xff]
      %v3772 = vld [vmem:[#allocation4 + $0x8] sm:$0xff]
      %v3773 = vld [vmem:[#allocation4 + $0x10] sm:$0xf]
      %v3774 = vld [vmem:[#allocation4 + $0x14] sm:$0xff]
      %v3775 = vld [vmem:[#allocation4 + $0x1c] sm:$0xff]
      %v3776 = vld [vmem:[#allocation4 + $0x24] sm:$0xf]
      %v3777 = vld [vmem:[#allocation4 + $0x28] sm:$0xff]
      %v3778 = vld [vmem:[#allocation4 + $0x30] sm:$0xff]
      %v3779 = vld [vmem:[#allocation4 + $0x38] sm:$0xf]
      %v3780 = vld [vmem:[#allocation4 + $0x3c] sm:$0xff]
      %v3781 = vld [vmem:[#allocation4 + $0x44] sm:$0xff]
      %v3782 = vld [vmem:[#allocation4 + $0x4c] sm:$0xf]
      %v3783 = vld [vmem:[#allocation4 + $0x50] sm:$0xff]
      %v3784 = vld [vmem:[#allocation4 + $0x58] sm:$0xff]
      %v3785 = vld [vmem:[#allocation4 + $0x60] sm:$0xf]
      %v3786 = vld [vmem:[#allocation4 + $0x64] sm:$0xff]
      %v3787 = vld [vmem:[#allocation4 + $0x6c] sm:$0xff]
      %v3788 = vld [vmem:[#allocation4 + $0x74] sm:$0xf]
      %v3789 = vld [vmem:[#allocation4 + $0x78] sm:$0xff]
      %v3790 = vld [vmem:[#allocation4 + $0x80] sm:$0xff]
      %v3791 = vld [vmem:[#allocation4 + $0x88] sm:$0xf]
      %v3792 = vld [vmem:[#allocation4 + $0x8c] sm:$0xff]
      %v3793 = vld [vmem:[#allocation4 + $0x94] sm:$0xff]
      %v3794 = vld [vmem:[#allocation4 + $0x9c] sm:$0xf]
      %v3795 = vld [vmem:[#allocation4 + $0xa0] sm:$0xff]
      %v3796 = vld [vmem:[#allocation4 + $0xa8] sm:$0xff]
      %v3797 = vld [vmem:[#allocation4 + $0xb0] sm:$0xf]
      %v3798 = vld [vmem:[#allocation4 + $0xb4] sm:$0xff]
      %v3799 = vld [vmem:[#allocation4 + $0xbc] sm:$0xff]
      %v3800 = vld [vmem:[#allocation4 + $0xc4] sm:$0xf]
      %v3801 = vld [vmem:[#allocation4 + $0xc8] sm:$0xff]
      %v3802 = vld [vmem:[#allocation4 + $0xd0] sm:$0xff]
      %v3803 = vld [vmem:[#allocation4 + $0xd8] sm:$0xf]
      %v3804 = vld [vmem:[#allocation4 + $0xdc] sm:$0xff]
      %v3805 = vld [vmem:[#allocation4 + $0xe4] sm:$0xff]
      %v3806 = vld [vmem:[#allocation4 + $0xec] sm:$0xf]
      %v3807 = vld [vmem:[#allocation4 + $0xf0] sm:$0xff]
      %v3808 = vld [vmem:[#allocation4 + $0xf8] sm:$0xff]
      %v3809 = vld [vmem:[#allocation4 + $0x100] sm:$0xf]
      %v3810 = vld [vmem:[#allocation4 + $0x104] sm:$0xff]
      %v3811 = vld [vmem:[#allocation4 + $0x10c] sm:$0xff]
      %v3812 = vld [vmem:[#allocation4 + $0x114] sm:$0xf]
      %v3813 = vld [vmem:[#allocation4 + $0x118] sm:$0xff]
      %v3814 = vld [vmem:[#allocation4 + $0x120] sm:$0xff]
      %v3815 = vld [vmem:[#allocation4 + $0x128] sm:$0xf]
      %v3816 = vld [vmem:[#allocation4 + $0x12c] sm:$0xff]
      %v3817 = vld [vmem:[#allocation4 + $0x134] sm:$0xff]
      %v3818 = vld [vmem:[#allocation4 + $0x13c] sm:$0xf]
      %v3819 = vld [vmem:[#allocation4 + $0x140] sm:$0xff]
      %v3820 = vld [vmem:[#allocation4 + $0x148] sm:$0xff]
      %v3821 = vld [vmem:[#allocation4 + $0x150] sm:$0xf]
      %v3822 = vld [vmem:[#allocation4 + $0x154] sm:$0xff]
      %v3823 = vld [vmem:[#allocation4 + $0x15c] sm:$0xff]
      %v3824 = vld [vmem:[#allocation4 + $0x164] sm:$0xf]
      %v3825 = vld [vmem:[#allocation4 + $0x168] sm:$0xff]
      %v3826 = vld [vmem:[#allocation4 + $0x170] sm:$0xff]
      %v3827 = vld [vmem:[#allocation4 + $0x178] sm:$0xf]
      %v3828 = vld [vmem:[#allocation4 + $0x17c] sm:$0xff]
      %v3829 = vld [vmem:[#allocation4 + $0x184] sm:$0xff]
      %v3830 = vld [vmem:[#allocation4 + $0x18c] sm:$0xf]
      %v3831 = vld [vmem:[#allocation4 + $0x190] sm:$0xff]
      %v3832 = vld [vmem:[#allocation4 + $0x198] sm:$0xff]
      %v3833 = vld [vmem:[#allocation4 + $0x1a0] sm:$0xf]
      %v3834 = vld [vmem:[#allocation4 + $0x1a4] sm:$0xff]
      %v3835 = vld [vmem:[#allocation4 + $0x1ac] sm:$0xff]
      %v3836 = vld [vmem:[#allocation4 + $0x1b4] sm:$0xf]
      %v3837 = vld [vmem:[#allocation4 + $0x1b8] sm:$0xff]
      %v3838 = vld [vmem:[#allocation4 + $0x1c0] sm:$0xff]
      %v3839 = vld [vmem:[#allocation4 + $0x1c8] sm:$0xf]
      %v3840 = vld [vmem:[#allocation4 + $0x1cc] sm:$0xff]
      %v3841 = vld [vmem:[#allocation4 + $0x1d4] sm:$0xff]
      %v3842 = vld [vmem:[#allocation4 + $0x1dc] sm:$0xf]
      %v3843 = vld [vmem:[#allocation4 + $0x1e0] sm:$0xff]
      %v3844 = vld [vmem:[#allocation4 + $0x1e8] sm:$0xff]
      %v3845 = vld [vmem:[#allocation4 + $0x1f0] sm:$0xf]
      %v3846 = vld [vmem:[#allocation4 + $0x1f4] sm:$0xff]
      %v3847 = vld [vmem:[#allocation4 + $0x1fc] sm:$0xff]
      %v3848 = vld [vmem:[#allocation4 + $0x204] sm:$0xf]
      %v3849 = vld [vmem:[#allocation4 + $0x208] sm:$0xff]
      %v3850 = vld [vmem:[#allocation4 + $0x210] sm:$0xff]
      %v3851 = vld [vmem:[#allocation4 + $0x218] sm:$0xf]
      %v3852 = vld [vmem:[#allocation4 + $0x21c] sm:$0xff]
      %v3853 = vld [vmem:[#allocation4 + $0x224] sm:$0xff]
      %v3854 = vld [vmem:[#allocation4 + $0x22c] sm:$0xf]
      %v3855 = vld [vmem:[#allocation4 + $0x230] sm:$0xff]
      %v3856 = vld [vmem:[#allocation4 + $0x238] sm:$0xff]
      %v3857 = vld [vmem:[#allocation4 + $0x240] sm:$0xf]
      %v3858 = vld [vmem:[#allocation4 + $0x244] sm:$0xff]
      %v3859 = vld [vmem:[#allocation4 + $0x24c] sm:$0xff]
      %v3860 = vld [vmem:[#allocation4 + $0x254] sm:$0xf]
      %v3861 = vld [vmem:[#allocation4 + $0x258] sm:$0xff]
      %v3862 = vld [vmem:[#allocation4 + $0x260] sm:$0xff]
      %v3863 = vld [vmem:[#allocation4 + $0x268] sm:$0xf]
      %v3864 = vld [vmem:[#allocation4 + $0x26c] sm:$0xff]
      %v3865 = vld [vmem:[#allocation4 + $0x274] sm:$0xff]
      %v3866 = vld [vmem:[#allocation4 + $0x27c] sm:$0xf]
      %v3867 = vld [vmem:[%s3] sm:$0xff]
      %v3868 = vld [vmem:[%s3 + $0x8] sm:$0xff]
      %v3869 = vld [vmem:[%s3 + $0x10] sm:$0xff]
      %v3870 = vld [vmem:[%s3 + $0x18] sm:$0xff]
      %v3871 = vld [vmem:[%s3 + $0x20] sm:$0xff]
      %v3872 = vld [vmem:[%s3 + $0x28] sm:$0xff]
      %v3873 = vld [vmem:[%s3 + $0x30] sm:$0xff]
      %v3874 = vld [vmem:[%s3 + $0x38] sm:$0xff]
      %v3875 = vld [vmem:[%s3 + $0x40] sm:$0xff]
      %v3876 = vld [vmem:[%s3 + $0x48] sm:$0xff]
      %v3877 = vld [vmem:[%s3 + $0x50] sm:$0xff]
      %v3878 = vld [vmem:[%s3 + $0x58] sm:$0xff]
      %v3879 = vld [vmem:[%s3 + $0x60] sm:$0xff]
      %v3880 = vld [vmem:[%s3 + $0x68] sm:$0xff]
      %v3881 = vld [vmem:[%s3 + $0x70] sm:$0xff]
      %v3882 = vld [vmem:[%s3 + $0x78] sm:$0xff]
      %v3883 = vld [vmem:[%s3 + $0x80] sm:$0xff]
      %v3884 = vld [vmem:[%s3 + $0x88] sm:$0xff]
      %v3885 = vld [vmem:[%s3 + $0x90] sm:$0xff]
      %v3886 = vld [vmem:[%s3 + $0x98] sm:$0xff]
      %v3887 = vld [vmem:[%s3 + $0xa0] sm:$0xff]
      %v3888 = vld [vmem:[%s3 + $0xa8] sm:$0xff]
      %v3889 = vld [vmem:[%s3 + $0xb0] sm:$0xff]
      %v3890 = vld [vmem:[%s3 + $0xb8] sm:$0xff]
      %v3891 = vld [vmem:[%s3 + $0xc0] sm:$0xff]
      %v3892 = vld [vmem:[%s3 + $0xc8] sm:$0xff]
      %v3893 = vld [vmem:[%s3 + $0xd0] sm:$0xff]
      %v3894 = vld [vmem:[%s3 + $0xd8] sm:$0xff]
      %v3895 = vld [vmem:[%s3 + $0xe0] sm:$0xff]
      %v3896 = vld [vmem:[%s3 + $0xe8] sm:$0xff]
      %v3897 = vld [vmem:[%s3 + $0xf0] sm:$0xff]
      %v3898 = vld [vmem:[%s3 + $0xf8] sm:$0xff]
      %v3899 = vld [vmem:[%s3 + $0x100] sm:$0xff]
      %v3900 = vld [vmem:[%s3 + $0x108] sm:$0xff]
      %v3901 = vld [vmem:[%s3 + $0x110] sm:$0xff]
      %v3902 = vld [vmem:[%s3 + $0x118] sm:$0xff]
      %v3903 = vld [vmem:[%s3 + $0x120] sm:$0xff]
      %v3904 = vld [vmem:[%s3 + $0x128] sm:$0xff]
      %v3905 = vld [vmem:[%s3 + $0x130] sm:$0xff]
      %v3906 = vld [vmem:[%s3 + $0x138] sm:$0xff]
      %v3907 = vld [vmem:[%s3 + $0x140] sm:$0xff]
      %v3908 = vld [vmem:[%s3 + $0x148] sm:$0xff]
      %v3909 = vld [vmem:[%s3 + $0x150] sm:$0xff]
      %v3910 = vld [vmem:[%s3 + $0x158] sm:$0xff]
      %v3911 = vld [vmem:[%s3 + $0x160] sm:$0xff]
      %v3912 = vld [vmem:[%s3 + $0x168] sm:$0xff]
      %v3913 = vld [vmem:[%s3 + $0x170] sm:$0xff]
      %v3914 = vld [vmem:[%s3 + $0x178] sm:$0xff]
      %v3915 = vld [vmem:[%s3 + $0x180] sm:$0xff]
      %v3916 = vld [vmem:[%s3 + $0x188] sm:$0xff]
      %v3917 = vld [vmem:[%s3 + $0x190] sm:$0xff]
      %v3918 = vld [vmem:[%s3 + $0x198] sm:$0xff]
      %v3919 = vld [vmem:[%s3 + $0x1a0] sm:$0xff]
      %v3920 = vld [vmem:[%s3 + $0x1a8] sm:$0xff]
      %v3921 = vld [vmem:[%s3 + $0x1b0] sm:$0xff]
      %v3922 = vld [vmem:[%s3 + $0x1b8] sm:$0xff]
      %v3923 = vld [vmem:[%s3 + $0x1c0] sm:$0xff]
      %v3924 = vld [vmem:[%s3 + $0x1c8] sm:$0xff]
      %v3925 = vld [vmem:[%s3 + $0x1d0] sm:$0xff]
      %v3926 = vld [vmem:[%s3 + $0x1d8] sm:$0xff]
      %v3927 = vld [vmem:[%s3 + $0x1e0] sm:$0xff]
      %v3928 = vld [vmem:[%s3 + $0x1e8] sm:$0xff]
      %v3929 = vld [vmem:[%s3 + $0x1f0] sm:$0xff]
      %v3930 = vld [vmem:[%s3 + $0x1f8] sm:$0xff]
      %v3931 = vld [vmem:[%s3 + $0x200] sm:$0xff]
      %v3932 = vld [vmem:[%s3 + $0x208] sm:$0xff]
      %v3933 = vld [vmem:[%s3 + $0x210] sm:$0xff]
      %v3934 = vld [vmem:[%s3 + $0x218] sm:$0xff]
      %v3935 = vld [vmem:[%s3 + $0x220] sm:$0xff]
      %v3936 = vld [vmem:[%s3 + $0x228] sm:$0xff]
      %v3937 = vld [vmem:[%s3 + $0x230] sm:$0xff]
      %v3938 = vld [vmem:[%s3 + $0x238] sm:$0xff]
      %v3939 = vld [vmem:[%s3 + $0x240] sm:$0xff]
      %v3940 = vld [vmem:[%s3 + $0x248] sm:$0xff]
      %v3941 = vld [vmem:[%s3 + $0x250] sm:$0xff]
      %v3942 = vld [vmem:[%s3 + $0x258] sm:$0xff]
      %v3943 = vld [vmem:[%s3 + $0x260] sm:$0xff]
      %v3944 = vld [vmem:[%s3 + $0x268] sm:$0xff]
      %v3945 = vld [vmem:[%s3 + $0x270] sm:$0xff]
      %v3946 = vld [vmem:[%s3 + $0x278] sm:$0xff]
      %v4043 = vunpack.c.l.b16 %v3771
      %v4044 = vunpack.c.h.b16 %v3771
      %v4045 = vunpack.c.l.b16 %v3772
      %v4046 = vunpack.c.h.b16 %v3772
      %v4047 = vunpack.c.l.b16 %v3773
      %v4048 = vunpack.c.l.b16 %v3774
      %v4049 = vunpack.c.h.b16 %v3774
      %v4050 = vunpack.c.l.b16 %v3775
      %v4051 = vunpack.c.h.b16 %v3775
      %v4052 = vunpack.c.l.b16 %v3776
      %v4053 = vunpack.c.l.b16 %v3777
      %v4054 = vunpack.c.h.b16 %v3777
      %v4055 = vunpack.c.l.b16 %v3778
      %v4056 = vunpack.c.h.b16 %v3778
      %v4057 = vunpack.c.l.b16 %v3779
      %v4058 = vunpack.c.l.b16 %v3780
      %v4059 = vunpack.c.h.b16 %v3780
      %v4060 = vunpack.c.l.b16 %v3781
      %v4061 = vunpack.c.h.b16 %v3781
      %v4062 = vunpack.c.l.b16 %v3782
      %v4063 = vunpack.c.l.b16 %v3783
      %v4064 = vunpack.c.h.b16 %v3783
      %v4065 = vunpack.c.l.b16 %v3784
      %v4066 = vunpack.c.h.b16 %v3784
      %v4067 = vunpack.c.l.b16 %v3785
      %v4068 = vunpack.c.l.b16 %v3786
      %v4069 = vunpack.c.h.b16 %v3786
      %v4070 = vunpack.c.l.b16 %v3787
      %v4071 = vunpack.c.h.b16 %v3787
      %v4072 = vunpack.c.l.b16 %v3788
      %v4073 = vunpack.c.l.b16 %v3789
      %v4074 = vunpack.c.h.b16 %v3789
      %v4075 = vunpack.c.l.b16 %v3790
      %v4076 = vunpack.c.h.b16 %v3790
      %v4077 = vunpack.c.l.b16 %v3791
      %v4078 = vunpack.c.l.b16 %v3792
      %v4079 = vunpack.c.h.b16 %v3792
      %v4080 = vunpack.c.l.b16 %v3793
      %v4081 = vunpack.c.h.b16 %v3793
      %v4082 = vunpack.c.l.b16 %v3794
      %v4083 = vunpack.c.l.b16 %v3795
      %v4084 = vunpack.c.h.b16 %v3795
      %v4085 = vunpack.c.l.b16 %v3796
      %v4086 = vunpack.c.h.b16 %v3796
      %v4087 = vunpack.c.l.b16 %v3797
      %v4088 = vunpack.c.l.b16 %v3798
      %v4089 = vunpack.c.h.b16 %v3798
      %v4090 = vunpack.c.l.b16 %v3799
      %v4091 = vunpack.c.h.b16 %v3799
      %v4092 = vunpack.c.l.b16 %v3800
      %v4093 = vunpack.c.l.b16 %v3801
      %v4094 = vunpack.c.h.b16 %v3801
      %v4095 = vunpack.c.l.b16 %v3802
      %v4096 = vunpack.c.h.b16 %v3802
      %v4097 = vunpack.c.l.b16 %v3803
      %v4098 = vunpack.c.l.b16 %v3804
      %v4099 = vunpack.c.h.b16 %v3804
      %v4100 = vunpack.c.l.b16 %v3805
      %v4101 = vunpack.c.h.b16 %v3805
      %v4102 = vunpack.c.l.b16 %v3806
      %v4103 = vunpack.c.l.b16 %v3807
      %v4104 = vunpack.c.h.b16 %v3807
      %v4105 = vunpack.c.l.b16 %v3808
      %v4106 = vunpack.c.h.b16 %v3808
      %v4107 = vunpack.c.l.b16 %v3809
      %v4108 = vunpack.c.l.b16 %v3810
      %v4109 = vunpack.c.h.b16 %v3810
      %v4110 = vunpack.c.l.b16 %v3811
      %v4111 = vunpack.c.h.b16 %v3811
      %v4112 = vunpack.c.l.b16 %v3812
      %v4113 = vunpack.c.l.b16 %v3813
      %v4114 = vunpack.c.h.b16 %v3813
      %v4115 = vunpack.c.l.b16 %v3814
      %v4116 = vunpack.c.h.b16 %v3814
      %v4117 = vunpack.c.l.b16 %v3815
      %v4118 = vunpack.c.l.b16 %v3816
      %v4119 = vunpack.c.h.b16 %v3816
      %v4120 = vunpack.c.l.b16 %v3817
      %v4121 = vunpack.c.h.b16 %v3817
      %v4122 = vunpack.c.l.b16 %v3818
      %v4123 = vunpack.c.l.b16 %v3819
      %v4124 = vunpack.c.h.b16 %v3819
      %v4125 = vunpack.c.l.b16 %v3820
      %v4126 = vunpack.c.h.b16 %v3820
      %v4127 = vunpack.c.l.b16 %v3821
      %v4128 = vunpack.c.l.b16 %v3822
      %v4129 = vunpack.c.h.b16 %v3822
      %v4130 = vunpack.c.l.b16 %v3823
      %v4131 = vunpack.c.h.b16 %v3823
      %v4132 = vunpack.c.l.b16 %v3824
      %v4133 = vunpack.c.l.b16 %v3825
      %v4134 = vunpack.c.h.b16 %v3825
      %v4135 = vunpack.c.l.b16 %v3826
      %v4136 = vunpack.c.h.b16 %v3826
      %v4137 = vunpack.c.l.b16 %v3827
      %v4138 = vunpack.c.l.b16 %v3828
      %v4139 = vunpack.c.h.b16 %v3828
      %v4140 = vunpack.c.l.b16 %v3829
      %v4141 = vunpack.c.h.b16 %v3829
      %v4142 = vunpack.c.l.b16 %v3830
      %v4143 = vunpack.c.l.b16 %v3831
      %v4144 = vunpack.c.h.b16 %v3831
      %v4145 = vunpack.c.l.b16 %v3832
      %v4146 = vunpack.c.h.b16 %v3832
      %v4147 = vunpack.c.l.b16 %v3833
      %v4148 = vunpack.c.l.b16 %v3834
      %v4149 = vunpack.c.h.b16 %v3834
      %v4150 = vunpack.c.l.b16 %v3835
      %v4151 = vunpack.c.h.b16 %v3835
      %v4152 = vunpack.c.l.b16 %v3836
      %v4153 = vunpack.c.l.b16 %v3837
      %v4154 = vunpack.c.h.b16 %v3837
      %v4155 = vunpack.c.l.b16 %v3838
      %v4156 = vunpack.c.h.b16 %v3838
      %v4157 = vunpack.c.l.b16 %v3839
      %v4158 = vunpack.c.l.b16 %v3840
      %v4159 = vunpack.c.h.b16 %v3840
      %v4160 = vunpack.c.l.b16 %v3841
      %v4161 = vunpack.c.h.b16 %v3841
      %v4162 = vunpack.c.l.b16 %v3842
      %v4163 = vunpack.c.l.b16 %v3843
      %v4164 = vunpack.c.h.b16 %v3843
      %v4165 = vunpack.c.l.b16 %v3844
      %v4166 = vunpack.c.h.b16 %v3844
      %v4167 = vunpack.c.l.b16 %v3845
      %v4168 = vunpack.c.l.b16 %v3846
      %v4169 = vunpack.c.h.b16 %v3846
      %v4170 = vunpack.c.l.b16 %v3847
      %v4171 = vunpack.c.h.b16 %v3847
      %v4172 = vunpack.c.l.b16 %v3848
      %v4173 = vunpack.c.l.b16 %v3849
      %v4174 = vunpack.c.h.b16 %v3849
      %v4175 = vunpack.c.l.b16 %v3850
      %v4176 = vunpack.c.h.b16 %v3850
      %v4177 = vunpack.c.l.b16 %v3851
      %v4178 = vunpack.c.l.b16 %v3852
      %v4179 = vunpack.c.h.b16 %v3852
      %v4180 = vunpack.c.l.b16 %v3853
      %v4181 = vunpack.c.h.b16 %v3853
      %v4182 = vunpack.c.l.b16 %v3854
      %v4183 = vunpack.c.l.b16 %v3855
      %v4184 = vunpack.c.h.b16 %v3855
      %v4185 = vunpack.c.l.b16 %v3856
      %v4186 = vunpack.c.h.b16 %v3856
      %v4187 = vunpack.c.l.b16 %v3857
      %v4188 = vunpack.c.l.b16 %v3858
      %v4189 = vunpack.c.h.b16 %v3858
      %v4190 = vunpack.c.l.b16 %v3859
      %v4191 = vunpack.c.h.b16 %v3859
      %v4192 = vunpack.c.l.b16 %v3860
      %v4193 = vunpack.c.l.b16 %v3861
      %v4194 = vunpack.c.h.b16 %v3861
      %v4195 = vunpack.c.l.b16 %v3862
      %v4196 = vunpack.c.h.b16 %v3862
      %v4197 = vunpack.c.l.b16 %v3863
      %v4198 = vunpack.c.l.b16 %v3864
      %v4199 = vunpack.c.h.b16 %v3864
      %v4200 = vunpack.c.l.b16 %v3865
      %v4201 = vunpack.c.h.b16 %v3865
      %v4202 = vunpack.c.l.b16 %v3866
      %v4203 = vpack.c.b16 %v4048, %v4043
      %v4204 = vpack.c.b16 %v4049, %v4044
      %v4205 = vpack.c.b16 %v4050, %v4045
      %v4206 = vpack.c.b16 %v4051, %v4046
      %v4207 = vpack.c.b16 %v4052, %v4047
      %v4208 = vpack.c.b16 %v4058, %v4053
      %v4209 = vpack.c.b16 %v4059, %v4054
      %v4210 = vpack.c.b16 %v4060, %v4055
      %v4211 = vpack.c.b16 %v4061, %v4056
      %v4212 = vpack.c.b16 %v4062, %v4057
      %v4213 = vpack.c.b16 %v4068, %v4063
      %v4214 = vpack.c.b16 %v4069, %v4064
      %v4215 = vpack.c.b16 %v4070, %v4065
      %v4216 = vpack.c.b16 %v4071, %v4066
      %v4217 = vpack.c.b16 %v4072, %v4067
      %v4218 = vpack.c.b16 %v4078, %v4073
      %v4219 = vpack.c.b16 %v4079, %v4074
      %v4220 = vpack.c.b16 %v4080, %v4075
      %v4221 = vpack.c.b16 %v4081, %v4076
      %v4222 = vpack.c.b16 %v4082, %v4077
      %v4223 = vpack.c.b16 %v4088, %v4083
      %v4224 = vpack.c.b16 %v4089, %v4084
      %v4225 = vpack.c.b16 %v4090, %v4085
      %v4226 = vpack.c.b16 %v4091, %v4086
      %v4227 = vpack.c.b16 %v4092, %v4087
      %v4228 = vpack.c.b16 %v4098, %v4093
      %v4229 = vpack.c.b16 %v4099, %v4094
      %v4230 = vpack.c.b16 %v4100, %v4095
      %v4231 = vpack.c.b16 %v4101, %v4096
      %v4232 = vpack.c.b16 %v4102, %v4097
      %v4233 = vpack.c.b16 %v4108, %v4103
      %v4234 = vpack.c.b16 %v4109, %v4104
      %v4235 = vpack.c.b16 %v4110, %v4105
      %v4236 = vpack.c.b16 %v4111, %v4106
      %v4237 = vpack.c.b16 %v4112, %v4107
      %v4238 = vpack.c.b16 %v4118, %v4113
      %v4239 = vpack.c.b16 %v4119, %v4114
      %v4240 = vpack.c.b16 %v4120, %v4115
      %v4241 = vpack.c.b16 %v4121, %v4116
      %v4242 = vpack.c.b16 %v4122, %v4117
      %v4243 = vpack.c.b16 %v4128, %v4123
      %v4244 = vpack.c.b16 %v4129, %v4124
      %v4245 = vpack.c.b16 %v4130, %v4125
      %v4246 = vpack.c.b16 %v4131, %v4126
      %v4247 = vpack.c.b16 %v4132, %v4127
      %v4248 = vpack.c.b16 %v4138, %v4133
      %v4249 = vpack.c.b16 %v4139, %v4134
      %v4250 = vpack.c.b16 %v4140, %v4135
      %v4251 = vpack.c.b16 %v4141, %v4136
      %v4252 = vpack.c.b16 %v4142, %v4137
      %v4253 = vpack.c.b16 %v4148, %v4143
      %v4254 = vpack.c.b16 %v4149, %v4144
      %v4255 = vpack.c.b16 %v4150, %v4145
      %v4256 = vpack.c.b16 %v4151, %v4146
      %v4257 = vpack.c.b16 %v4152, %v4147
      %v4258 = vpack.c.b16 %v4158, %v4153
      %v4259 = vpack.c.b16 %v4159, %v4154
      %v4260 = vpack.c.b16 %v4160, %v4155
      %v4261 = vpack.c.b16 %v4161, %v4156
      %v4262 = vpack.c.b16 %v4162, %v4157
      %v4263 = vpack.c.b16 %v4168, %v4163
      %v4264 = vpack.c.b16 %v4169, %v4164
      %v4265 = vpack.c.b16 %v4170, %v4165
      %v4266 = vpack.c.b16 %v4171, %v4166
      %v4267 = vpack.c.b16 %v4172, %v4167
      %v4268 = vpack.c.b16 %v4178, %v4173
      %v4269 = vpack.c.b16 %v4179, %v4174
      %v4270 = vpack.c.b16 %v4180, %v4175
      %v4271 = vpack.c.b16 %v4181, %v4176
      %v4272 = vpack.c.b16 %v4182, %v4177
      %v4273 = vpack.c.b16 %v4188, %v4183
      %v4274 = vpack.c.b16 %v4189, %v4184
      %v4275 = vpack.c.b16 %v4190, %v4185
      %v4276 = vpack.c.b16 %v4191, %v4186
      %v4277 = vpack.c.b16 %v4192, %v4187
      %v4278 = vpack.c.b16 %v4198, %v4193
      %v4279 = vpack.c.b16 %v4199, %v4194
      %v4280 = vpack.c.b16 %v4200, %v4195
      %v4281 = vpack.c.b16 %v4201, %v4196
      %v4282 = vpack.c.b16 %v4202, %v4197
      %v4443 = vunpack.c.l.b16 %v3867
      %v4444 = vunpack.c.h.b16 %v3867
      %v4445 = vunpack.c.l.b16 %v3868
      %v4446 = vunpack.c.h.b16 %v3868
      %v4447 = vunpack.c.l.b16 %v3869
      %v4448 = vunpack.c.h.b16 %v3869
      %v4449 = vunpack.c.l.b16 %v3870
      %v4450 = vunpack.c.h.b16 %v3870
      %v4451 = vunpack.c.l.b16 %v3871
      %v4452 = vunpack.c.h.b16 %v3871
      %v4453 = vunpack.c.l.b16 %v3872
      %v4454 = vunpack.c.h.b16 %v3872
      %v4455 = vunpack.c.l.b16 %v3873
      %v4456 = vunpack.c.h.b16 %v3873
      %v4457 = vunpack.c.l.b16 %v3874
      %v4458 = vunpack.c.h.b16 %v3874
      %v4459 = vunpack.c.l.b16 %v3875
      %v4460 = vunpack.c.h.b16 %v3875
      %v4461 = vunpack.c.l.b16 %v3876
      %v4462 = vunpack.c.h.b16 %v3876
      %v4463 = vunpack.c.l.b16 %v3877
      %v4464 = vunpack.c.h.b16 %v3877
      %v4465 = vunpack.c.l.b16 %v3878
      %v4466 = vunpack.c.h.b16 %v3878
      %v4467 = vunpack.c.l.b16 %v3879
      %v4468 = vunpack.c.h.b16 %v3879
      %v4469 = vunpack.c.l.b16 %v3880
      %v4470 = vunpack.c.h.b16 %v3880
      %v4471 = vunpack.c.l.b16 %v3881
      %v4472 = vunpack.c.h.b16 %v3881
      %v4473 = vunpack.c.l.b16 %v3882
      %v4474 = vunpack.c.h.b16 %v3882
      %v4475 = vunpack.c.l.b16 %v3883
      %v4476 = vunpack.c.h.b16 %v3883
      %v4477 = vunpack.c.l.b16 %v3884
      %v4478 = vunpack.c.h.b16 %v3884
      %v4479 = vunpack.c.l.b16 %v3885
      %v4480 = vunpack.c.h.b16 %v3885
      %v4481 = vunpack.c.l.b16 %v3886
      %v4482 = vunpack.c.h.b16 %v3886
      %v4483 = vunpack.c.l.b16 %v3887
      %v4484 = vunpack.c.h.b16 %v3887
      %v4485 = vunpack.c.l.b16 %v3888
      %v4486 = vunpack.c.h.b16 %v3888
      %v4487 = vunpack.c.l.b16 %v3889
      %v4488 = vunpack.c.h.b16 %v3889
      %v4489 = vunpack.c.l.b16 %v3890
      %v4490 = vunpack.c.h.b16 %v3890
      %v4491 = vunpack.c.l.b16 %v3891
      %v4492 = vunpack.c.h.b16 %v3891
      %v4493 = vunpack.c.l.b16 %v3892
      %v4494 = vunpack.c.h.b16 %v3892
      %v4495 = vunpack.c.l.b16 %v3893
      %v4496 = vunpack.c.h.b16 %v3893
      %v4497 = vunpack.c.l.b16 %v3894
      %v4498 = vunpack.c.h.b16 %v3894
      %v4499 = vunpack.c.l.b16 %v3895
      %v4500 = vunpack.c.h.b16 %v3895
      %v4501 = vunpack.c.l.b16 %v3896
      %v4502 = vunpack.c.h.b16 %v3896
      %v4503 = vunpack.c.l.b16 %v3897
      %v4504 = vunpack.c.h.b16 %v3897
      %v4505 = vunpack.c.l.b16 %v3898
      %v4506 = vunpack.c.h.b16 %v3898
      %v4507 = vunpack.c.l.b16 %v3899
      %v4508 = vunpack.c.h.b16 %v3899
      %v4509 = vunpack.c.l.b16 %v3900
      %v4510 = vunpack.c.h.b16 %v3900
      %v4511 = vunpack.c.l.b16 %v3901
      %v4512 = vunpack.c.h.b16 %v3901
      %v4513 = vunpack.c.l.b16 %v3902
      %v4514 = vunpack.c.h.b16 %v3902
      %v4515 = vunpack.c.l.b16 %v3903
      %v4516 = vunpack.c.h.b16 %v3903
      %v4517 = vunpack.c.l.b16 %v3904
      %v4518 = vunpack.c.h.b16 %v3904
      %v4519 = vunpack.c.l.b16 %v3905
      %v4520 = vunpack.c.h.b16 %v3905
      %v4521 = vunpack.c.l.b16 %v3906
      %v4522 = vunpack.c.h.b16 %v3906
      %v4523 = vunpack.c.l.b16 %v3907
      %v4524 = vunpack.c.h.b16 %v3907
      %v4525 = vunpack.c.l.b16 %v3908
      %v4526 = vunpack.c.h.b16 %v3908
      %v4527 = vunpack.c.l.b16 %v3909
      %v4528 = vunpack.c.h.b16 %v3909
      %v4529 = vunpack.c.l.b16 %v3910
      %v4530 = vunpack.c.h.b16 %v3910
      %v4531 = vunpack.c.l.b16 %v3911
      %v4532 = vunpack.c.h.b16 %v3911
      %v4533 = vunpack.c.l.b16 %v3912
      %v4534 = vunpack.c.h.b16 %v3912
      %v4535 = vunpack.c.l.b16 %v3913
      %v4536 = vunpack.c.h.b16 %v3913
      %v4537 = vunpack.c.l.b16 %v3914
      %v4538 = vunpack.c.h.b16 %v3914
      %v4539 = vunpack.c.l.b16 %v3915
      %v4540 = vunpack.c.h.b16 %v3915
      %v4541 = vunpack.c.l.b16 %v3916
      %v4542 = vunpack.c.h.b16 %v3916
      %v4543 = vunpack.c.l.b16 %v3917
      %v4544 = vunpack.c.h.b16 %v3917
      %v4545 = vunpack.c.l.b16 %v3918
      %v4546 = vunpack.c.h.b16 %v3918
      %v4547 = vunpack.c.l.b16 %v3919
      %v4548 = vunpack.c.h.b16 %v3919
      %v4549 = vunpack.c.l.b16 %v3920
      %v4550 = vunpack.c.h.b16 %v3920
      %v4551 = vunpack.c.l.b16 %v3921
      %v4552 = vunpack.c.h.b16 %v3921
      %v4553 = vunpack.c.l.b16 %v3922
      %v4554 = vunpack.c.h.b16 %v3922
      %v4555 = vunpack.c.l.b16 %v3923
      %v4556 = vunpack.c.h.b16 %v3923
      %v4557 = vunpack.c.l.b16 %v3924
      %v4558 = vunpack.c.h.b16 %v3924
      %v4559 = vunpack.c.l.b16 %v3925
      %v4560 = vunpack.c.h.b16 %v3925
      %v4561 = vunpack.c.l.b16 %v3926
      %v4562 = vunpack.c.h.b16 %v3926
      %v4563 = vunpack.c.l.b16 %v3927
      %v4564 = vunpack.c.h.b16 %v3927
      %v4565 = vunpack.c.l.b16 %v3928
      %v4566 = vunpack.c.h.b16 %v3928
      %v4567 = vunpack.c.l.b16 %v3929
      %v4568 = vunpack.c.h.b16 %v3929
      %v4569 = vunpack.c.l.b16 %v3930
      %v4570 = vunpack.c.h.b16 %v3930
      %v4571 = vunpack.c.l.b16 %v3931
      %v4572 = vunpack.c.h.b16 %v3931
      %v4573 = vunpack.c.l.b16 %v3932
      %v4574 = vunpack.c.h.b16 %v3932
      %v4575 = vunpack.c.l.b16 %v3933
      %v4576 = vunpack.c.h.b16 %v3933
      %v4577 = vunpack.c.l.b16 %v3934
      %v4578 = vunpack.c.h.b16 %v3934
      %v4579 = vunpack.c.l.b16 %v3935
      %v4580 = vunpack.c.h.b16 %v3935
      %v4581 = vunpack.c.l.b16 %v3936
      %v4582 = vunpack.c.h.b16 %v3936
      %v4583 = vunpack.c.l.b16 %v3937
      %v4584 = vunpack.c.h.b16 %v3937
      %v4585 = vunpack.c.l.b16 %v3938
      %v4586 = vunpack.c.h.b16 %v3938
      %v4587 = vunpack.c.l.b16 %v3939
      %v4588 = vunpack.c.h.b16 %v3939
      %v4589 = vunpack.c.l.b16 %v3940
      %v4590 = vunpack.c.h.b16 %v3940
      %v4591 = vunpack.c.l.b16 %v3941
      %v4592 = vunpack.c.h.b16 %v3941
      %v4593 = vunpack.c.l.b16 %v3942
      %v4594 = vunpack.c.h.b16 %v3942
      %v4595 = vunpack.c.l.b16 %v3943
      %v4596 = vunpack.c.h.b16 %v3943
      %v4597 = vunpack.c.l.b16 %v3944
      %v4598 = vunpack.c.h.b16 %v3944
      %v4599 = vunpack.c.l.b16 %v3945
      %v4600 = vunpack.c.h.b16 %v3945
      %v4601 = vunpack.c.l.b16 %v3946
      %v4602 = vunpack.c.h.b16 %v3946
      %v4603 = vpack.c.b16 %v4445, %v4443
      %v4604 = vpack.c.b16 %v4446, %v4444
      %v4605 = vpack.c.b16 %v4449, %v4447
      %v4606 = vpack.c.b16 %v4450, %v4448
      %v4607 = vpack.c.b16 %v4453, %v4451
      %v4608 = vpack.c.b16 %v4454, %v4452
      %v4609 = vpack.c.b16 %v4457, %v4455
      %v4610 = vpack.c.b16 %v4458, %v4456
      %v4611 = vpack.c.b16 %v4461, %v4459
      %v4612 = vpack.c.b16 %v4462, %v4460
      %v4613 = vpack.c.b16 %v4465, %v4463
      %v4614 = vpack.c.b16 %v4466, %v4464
      %v4615 = vpack.c.b16 %v4469, %v4467
      %v4616 = vpack.c.b16 %v4470, %v4468
      %v4617 = vpack.c.b16 %v4473, %v4471
      %v4618 = vpack.c.b16 %v4474, %v4472
      %v4619 = vpack.c.b16 %v4477, %v4475
      %v4620 = vpack.c.b16 %v4478, %v4476
      %v4621 = vpack.c.b16 %v4481, %v4479
      %v4622 = vpack.c.b16 %v4482, %v4480
      %v4623 = vpack.c.b16 %v4485, %v4483
      %v4624 = vpack.c.b16 %v4486, %v4484
      %v4625 = vpack.c.b16 %v4489, %v4487
      %v4626 = vpack.c.b16 %v4490, %v4488
      %v4627 = vpack.c.b16 %v4493, %v4491
      %v4628 = vpack.c.b16 %v4494, %v4492
      %v4629 = vpack.c.b16 %v4497, %v4495
      %v4630 = vpack.c.b16 %v4498, %v4496
      %v4631 = vpack.c.b16 %v4501, %v4499
      %v4632 = vpack.c.b16 %v4502, %v4500
      %v4633 = vpack.c.b16 %v4505, %v4503
      %v4634 = vpack.c.b16 %v4506, %v4504
      %v4635 = vpack.c.b16 %v4509, %v4507
      %v4636 = vpack.c.b16 %v4510, %v4508
      %v4637 = vpack.c.b16 %v4513, %v4511
      %v4638 = vpack.c.b16 %v4514, %v4512
      %v4639 = vpack.c.b16 %v4517, %v4515
      %v4640 = vpack.c.b16 %v4518, %v4516
      %v4641 = vpack.c.b16 %v4521, %v4519
      %v4642 = vpack.c.b16 %v4522, %v4520
      %v4643 = vpack.c.b16 %v4525, %v4523
      %v4644 = vpack.c.b16 %v4526, %v4524
      %v4645 = vpack.c.b16 %v4529, %v4527
      %v4646 = vpack.c.b16 %v4530, %v4528
      %v4647 = vpack.c.b16 %v4533, %v4531
      %v4648 = vpack.c.b16 %v4534, %v4532
      %v4649 = vpack.c.b16 %v4537, %v4535
      %v4650 = vpack.c.b16 %v4538, %v4536
      %v4651 = vpack.c.b16 %v4541, %v4539
      %v4652 = vpack.c.b16 %v4542, %v4540
      %v4653 = vpack.c.b16 %v4545, %v4543
      %v4654 = vpack.c.b16 %v4546, %v4544
      %v4655 = vpack.c.b16 %v4549, %v4547
      %v4656 = vpack.c.b16 %v4550, %v4548
      %v4657 = vpack.c.b16 %v4553, %v4551
      %v4658 = vpack.c.b16 %v4554, %v4552
      %v4659 = vpack.c.b16 %v4557, %v4555
      %v4660 = vpack.c.b16 %v4558, %v4556
      %v4661 = vpack.c.b16 %v4561, %v4559
      %v4662 = vpack.c.b16 %v4562, %v4560
      %v4663 = vpack.c.b16 %v4565, %v4563
      %v4664 = vpack.c.b16 %v4566, %v4564
      %v4665 = vpack.c.b16 %v4569, %v4567
      %v4666 = vpack.c.b16 %v4570, %v4568
      %v4667 = vpack.c.b16 %v4573, %v4571
      %v4668 = vpack.c.b16 %v4574, %v4572
      %v4669 = vpack.c.b16 %v4577, %v4575
      %v4670 = vpack.c.b16 %v4578, %v4576
      %v4671 = vpack.c.b16 %v4581, %v4579
      %v4672 = vpack.c.b16 %v4582, %v4580
      %v4673 = vpack.c.b16 %v4585, %v4583
      %v4674 = vpack.c.b16 %v4586, %v4584
      %v4675 = vpack.c.b16 %v4589, %v4587
      %v4676 = vpack.c.b16 %v4590, %v4588
      %v4677 = vpack.c.b16 %v4593, %v4591
      %v4678 = vpack.c.b16 %v4594, %v4592
      %v4679 = vpack.c.b16 %v4597, %v4595
      %v4680 = vpack.c.b16 %v4598, %v4596
      %v4681 = vpack.c.b16 %v4601, %v4599
      %v4682 = vpack.c.b16 %v4602, %v4600
      %4763 = vmatpush.bf16.msra.mxu0 %v4617
      %4764 = vmatpush.bf16.msra.mxu0 %v4615
      %4765 = vmatpush.bf16.msra.mxu0 %v4613
      %4766 = vmatpush.bf16.msra.mxu0 %v4611
      %4767 = vmatpush.bf16.msra.mxu0 %v4609
      %4768 = vmatpush.bf16.msra.mxu0 %v4607
      %4769 = vmatpush.bf16.msra.mxu0 %v4605
      %4770 = vmatpush.bf16.msra.mxu0 %v4603
      %4771 = vmatmul.bf16.gmra.mxu0 %v4203
      %v4772 = vpop.f32.mrf.mxu0
      %v4773 = vadd.f32 0.0, %v4772
      %v4774 = vpop.f32.mrf.mxu0
      %v4775 = vadd.f32 0.0, %v4774
      %4776 = vmatmul.bf16.gmra.mxu0 %v4208
      %v4777 = vpop.f32.mrf.mxu0
      %v4778 = vadd.f32 0.0, %v4777
      %v4779 = vpop.f32.mrf.mxu0
      %v4780 = vadd.f32 0.0, %v4779
      %4781 = vmatmul.bf16.gmra.mxu0 %v4213
      %v4782 = vpop.f32.mrf.mxu0
      %v4783 = vadd.f32 0.0, %v4782
      %v4784 = vpop.f32.mrf.mxu0
      %v4785 = vadd.f32 0.0, %v4784
      %4786 = vmatmul.bf16.gmra.mxu0 %v4218
      %v4787 = vpop.f32.mrf.mxu0
      %v4788 = vadd.f32 0.0, %v4787
      %v4789 = vpop.f32.mrf.mxu0
      %v4790 = vadd.f32 0.0, %v4789
      %4791 = vmatmul.bf16.gmra.mxu0 %v4223
      %v4792 = vpop.f32.mrf.mxu0
      %v4793 = vadd.f32 0.0, %v4792
      %v4794 = vpop.f32.mrf.mxu0
      %v4795 = vadd.f32 0.0, %v4794
      %4796 = vmatmul.bf16.gmra.mxu0 %v4228
      %v4797 = vpop.f32.mrf.mxu0
      %v4798 = vadd.f32 0.0, %v4797
      %v4799 = vpop.f32.mrf.mxu0
      %v4800 = vadd.f32 0.0, %v4799
      %4801 = vmatmul.bf16.gmra.mxu0 %v4233
      %v4802 = vpop.f32.mrf.mxu0
      %v4803 = vadd.f32 0.0, %v4802
      %v4804 = vpop.f32.mrf.mxu0
      %v4805 = vadd.f32 0.0, %v4804
      %4806 = vmatmul.bf16.gmra.mxu0 %v4238
      %v4807 = vpop.f32.mrf.mxu0
      %v4808 = vadd.f32 0.0, %v4807
      %v4809 = vpop.f32.mrf.mxu0
      %v4810 = vadd.f32 0.0, %v4809
      %4811 = vmatmul.bf16.gmra.mxu0 %v4243
      %v4812 = vpop.f32.mrf.mxu0
      %v4813 = vadd.f32 0.0, %v4812
      %v4814 = vpop.f32.mrf.mxu0
      %v4815 = vadd.f32 0.0, %v4814
      %4816 = vmatmul.bf16.gmra.mxu0 %v4248
      %v4817 = vpop.f32.mrf.mxu0
      %v4818 = vadd.f32 0.0, %v4817
      %v4819 = vpop.f32.mrf.mxu0
      %v4820 = vadd.f32 0.0, %v4819
      %4821 = vmatmul.bf16.gmra.mxu0 %v4253
      %v4822 = vpop.f32.mrf.mxu0
      %v4823 = vadd.f32 0.0, %v4822
      %v4824 = vpop.f32.mrf.mxu0
      %v4825 = vadd.f32 0.0, %v4824
      %4826 = vmatmul.bf16.gmra.mxu0 %v4258
      %v4827 = vpop.f32.mrf.mxu0
      %v4828 = vadd.f32 0.0, %v4827
      %v4829 = vpop.f32.mrf.mxu0
      %v4830 = vadd.f32 0.0, %v4829
      %4831 = vmatmul.bf16.gmra.mxu0 %v4263
      %v4832 = vpop.f32.mrf.mxu0
      %v4833 = vadd.f32 0.0, %v4832
      %v4834 = vpop.f32.mrf.mxu0
      %v4835 = vadd.f32 0.0, %v4834
      %4836 = vmatmul.bf16.gmra.mxu0 %v4268
      %v4837 = vpop.f32.mrf.mxu0
      %v4838 = vadd.f32 0.0, %v4837
      %v4839 = vpop.f32.mrf.mxu0
      %v4840 = vadd.f32 0.0, %v4839
      %4841 = vmatmul.bf16.gmra.mxu0 %v4273
      %v4842 = vpop.f32.mrf.mxu0
      %v4843 = vadd.f32 0.0, %v4842
      %v4844 = vpop.f32.mrf.mxu0
      %v4845 = vadd.f32 0.0, %v4844
      %4846 = vmatmul.bf16.gmra.mxu0 %v4278
      %v4847 = vpop.f32.mrf.mxu0
      %v4848 = vadd.f32 0.0, %v4847
      %v4849 = vpop.f32.mrf.mxu0
      %v4850 = vadd.f32 0.0, %v4849
      %4851 = vdwg.mxu0
      %4852 = vmatpush.bf16.msra.mxu0 %v4633
      %4853 = vmatpush.bf16.msra.mxu0 %v4631
      %4854 = vmatpush.bf16.msra.mxu0 %v4629
      %4855 = vmatpush.bf16.msra.mxu0 %v4627
      %4856 = vmatpush.bf16.msra.mxu0 %v4625
      %4857 = vmatpush.bf16.msra.mxu0 %v4623
      %4858 = vmatpush.bf16.msra.mxu0 %v4621
      %4859 = vmatpush.bf16.msra.mxu0 %v4619
      %4860 = vmatmul.bf16.gmra.mxu0 %v4204
      %v4861 = vpop.f32.mrf.mxu0
      %v4862 = vadd.f32 %v4773, %v4861
      %v4863 = vpop.f32.mrf.mxu0
      %v4864 = vadd.f32 %v4775, %v4863
      %4865 = vmatmul.bf16.gmra.mxu0 %v4209
      %v4866 = vpop.f32.mrf.mxu0
      %v4867 = vadd.f32 %v4778, %v4866
      %v4868 = vpop.f32.mrf.mxu0
      %v4869 = vadd.f32 %v4780, %v4868
      %4870 = vmatmul.bf16.gmra.mxu0 %v4214
      %v4871 = vpop.f32.mrf.mxu0
      %v4872 = vadd.f32 %v4783, %v4871
      %v4873 = vpop.f32.mrf.mxu0
      %v4874 = vadd.f32 %v4785, %v4873
      %4875 = vmatmul.bf16.gmra.mxu0 %v4219
      %v4876 = vpop.f32.mrf.mxu0
      %v4877 = vadd.f32 %v4788, %v4876
      %v4878 = vpop.f32.mrf.mxu0
      %v4879 = vadd.f32 %v4790, %v4878
      %4880 = vmatmul.bf16.gmra.mxu0 %v4224
      %v4881 = vpop.f32.mrf.mxu0
      %v4882 = vadd.f32 %v4793, %v4881
      %v4883 = vpop.f32.mrf.mxu0
      %v4884 = vadd.f32 %v4795, %v4883
      %4885 = vmatmul.bf16.gmra.mxu0 %v4229
      %v4886 = vpop.f32.mrf.mxu0
      %v4887 = vadd.f32 %v4798, %v4886
      %v4888 = vpop.f32.mrf.mxu0
      %v4889 = vadd.f32 %v4800, %v4888
      %4890 = vmatmul.bf16.gmra.mxu0 %v4234
      %v4891 = vpop.f32.mrf.mxu0
      %v4892 = vadd.f32 %v4803, %v4891
      %v4893 = vpop.f32.mrf.mxu0
      %v4894 = vadd.f32 %v4805, %v4893
      %4895 = vmatmul.bf16.gmra.mxu0 %v4239
      %v4896 = vpop.f32.mrf.mxu0
      %v4897 = vadd.f32 %v4808, %v4896
      %v4898 = vpop.f32.mrf.mxu0
      %v4899 = vadd.f32 %v4810, %v4898
      %4900 = vmatmul.bf16.gmra.mxu0 %v4244
      %v4901 = vpop.f32.mrf.mxu0
      %v4902 = vadd.f32 %v4813, %v4901
      %v4903 = vpop.f32.mrf.mxu0
      %v4904 = vadd.f32 %v4815, %v4903
      %4905 = vmatmul.bf16.gmra.mxu0 %v4249
      %v4906 = vpop.f32.mrf.mxu0
      %v4907 = vadd.f32 %v4818, %v4906
      %v4908 = vpop.f32.mrf.mxu0
      %v4909 = vadd.f32 %v4820, %v4908
      %4910 = vmatmul.bf16.gmra.mxu0 %v4254
      %v4911 = vpop.f32.mrf.mxu0
      %v4912 = vadd.f32 %v4823, %v4911
      %v4913 = vpop.f32.mrf.mxu0
      %v4914 = vadd.f32 %v4825, %v4913
      %4915 = vmatmul.bf16.gmra.mxu0 %v4259
      %v4916 = vpop.f32.mrf.mxu0
      %v4917 = vadd.f32 %v4828, %v4916
      %v4918 = vpop.f32.mrf.mxu0
      %v4919 = vadd.f32 %v4830, %v4918
      %4920 = vmatmul.bf16.gmra.mxu0 %v4264
      %v4921 = vpop.f32.mrf.mxu0
      %v4922 = vadd.f32 %v4833, %v4921
      %v4923 = vpop.f32.mrf.mxu0
      %v4924 = vadd.f32 %v4835, %v4923
      %4925 = vmatmul.bf16.gmra.mxu0 %v4269
      %v4926 = vpop.f32.mrf.mxu0
      %v4927 = vadd.f32 %v4838, %v4926
      %v4928 = vpop.f32.mrf.mxu0
      %v4929 = vadd.f32 %v4840, %v4928
      %4930 = vmatmul.bf16.gmra.mxu0 %v4274
      %v4931 = vpop.f32.mrf.mxu0
      %v4932 = vadd.f32 %v4843, %v4931
      %v4933 = vpop.f32.mrf.mxu0
      %v4934 = vadd.f32 %v4845, %v4933
      %4935 = vmatmul.bf16.gmra.mxu0 %v4279
      %v4936 = vpop.f32.mrf.mxu0
      %v4937 = vadd.f32 %v4848, %v4936
      %v4938 = vpop.f32.mrf.mxu0
      %v4939 = vadd.f32 %v4850, %v4938
      %4940 = vdwg.mxu0
      %4941 = vmatpush.bf16.msra.mxu0 %v4649
      %4942 = vmatpush.bf16.msra.mxu0 %v4647
      %4943 = vmatpush.bf16.msra.mxu0 %v4645
      %4944 = vmatpush.bf16.msra.mxu0 %v4643
      %4945 = vmatpush.bf16.msra.mxu0 %v4641
      %4946 = vmatpush.bf16.msra.mxu0 %v4639
      %4947 = vmatpush.bf16.msra.mxu0 %v4637
      %4948 = vmatpush.bf16.msra.mxu0 %v4635
      %4949 = vmatmul.bf16.gmra.mxu0 %v4205
      %v4950 = vpop.f32.mrf.mxu0
      %v4951 = vadd.f32 %v4862, %v4950
      %v4952 = vpop.f32.mrf.mxu0
      %v4953 = vadd.f32 %v4864, %v4952
      %4954 = vmatmul.bf16.gmra.mxu0 %v4210
      %v4955 = vpop.f32.mrf.mxu0
      %v4956 = vadd.f32 %v4867, %v4955
      %v4957 = vpop.f32.mrf.mxu0
      %v4958 = vadd.f32 %v4869, %v4957
      %4959 = vmatmul.bf16.gmra.mxu0 %v4215
      %v4960 = vpop.f32.mrf.mxu0
      %v4961 = vadd.f32 %v4872, %v4960
      %v4962 = vpop.f32.mrf.mxu0
      %v4963 = vadd.f32 %v4874, %v4962
      %4964 = vmatmul.bf16.gmra.mxu0 %v4220
      %v4965 = vpop.f32.mrf.mxu0
      %v4966 = vadd.f32 %v4877, %v4965
      %v4967 = vpop.f32.mrf.mxu0
      %v4968 = vadd.f32 %v4879, %v4967
      %4969 = vmatmul.bf16.gmra.mxu0 %v4225
      %v4970 = vpop.f32.mrf.mxu0
      %v4971 = vadd.f32 %v4882, %v4970
      %v4972 = vpop.f32.mrf.mxu0
      %v4973 = vadd.f32 %v4884, %v4972
      %4974 = vmatmul.bf16.gmra.mxu0 %v4230
      %v4975 = vpop.f32.mrf.mxu0
      %v4976 = vadd.f32 %v4887, %v4975
      %v4977 = vpop.f32.mrf.mxu0
      %v4978 = vadd.f32 %v4889, %v4977
      %4979 = vmatmul.bf16.gmra.mxu0 %v4235
      %v4980 = vpop.f32.mrf.mxu0
      %v4981 = vadd.f32 %v4892, %v4980
      %v4982 = vpop.f32.mrf.mxu0
      %v4983 = vadd.f32 %v4894, %v4982
      %4984 = vmatmul.bf16.gmra.mxu0 %v4240
      %v4985 = vpop.f32.mrf.mxu0
      %v4986 = vadd.f32 %v4897, %v4985
      %v4987 = vpop.f32.mrf.mxu0
      %v4988 = vadd.f32 %v4899, %v4987
      %4989 = vmatmul.bf16.gmra.mxu0 %v4245
      %v4990 = vpop.f32.mrf.mxu0
      %v4991 = vadd.f32 %v4902, %v4990
      %v4992 = vpop.f32.mrf.mxu0
      %v4993 = vadd.f32 %v4904, %v4992
      %4994 = vmatmul.bf16.gmra.mxu0 %v4250
      %v4995 = vpop.f32.mrf.mxu0
      %v4996 = vadd.f32 %v4907, %v4995
      %v4997 = vpop.f32.mrf.mxu0
      %v4998 = vadd.f32 %v4909, %v4997
      %4999 = vmatmul.bf16.gmra.mxu0 %v4255
      %v5000 = vpop.f32.mrf.mxu0
      %v5001 = vadd.f32 %v4912, %v5000
      %v5002 = vpop.f32.mrf.mxu0
      %v5003 = vadd.f32 %v4914, %v5002
      %5004 = vmatmul.bf16.gmra.mxu0 %v4260
      %v5005 = vpop.f32.mrf.mxu0
      %v5006 = vadd.f32 %v4917, %v5005
      %v5007 = vpop.f32.mrf.mxu0
      %v5008 = vadd.f32 %v4919, %v5007
      %5009 = vmatmul.bf16.gmra.mxu0 %v4265
      %v5010 = vpop.f32.mrf.mxu0
      %v5011 = vadd.f32 %v4922, %v5010
      %v5012 = vpop.f32.mrf.mxu0
      %v5013 = vadd.f32 %v4924, %v5012
      %5014 = vmatmul.bf16.gmra.mxu0 %v4270
      %v5015 = vpop.f32.mrf.mxu0
      %v5016 = vadd.f32 %v4927, %v5015
      %v5017 = vpop.f32.mrf.mxu0
      %v5018 = vadd.f32 %v4929, %v5017
      %5019 = vmatmul.bf16.gmra.mxu0 %v4275
      %v5020 = vpop.f32.mrf.mxu0
      %v5021 = vadd.f32 %v4932, %v5020
      %v5022 = vpop.f32.mrf.mxu0
      %v5023 = vadd.f32 %v4934, %v5022
      %5024 = vmatmul.bf16.gmra.mxu0 %v4280
      %v5025 = vpop.f32.mrf.mxu0
      %v5026 = vadd.f32 %v4937, %v5025
      %v5027 = vpop.f32.mrf.mxu0
      %v5028 = vadd.f32 %v4939, %v5027
      %5029 = vdwg.mxu0
      %5030 = vmatpush.bf16.msra.mxu0 %v4665
      %5031 = vmatpush.bf16.msra.mxu0 %v4663
      %5032 = vmatpush.bf16.msra.mxu0 %v4661
      %5033 = vmatpush.bf16.msra.mxu0 %v4659
      %5034 = vmatpush.bf16.msra.mxu0 %v4657
      %5035 = vmatpush.bf16.msra.mxu0 %v4655
      %5036 = vmatpush.bf16.msra.mxu0 %v4653
      %5037 = vmatpush.bf16.msra.mxu0 %v4651
      %5038 = vmatmul.bf16.gmra.mxu0 %v4206
      %v5039 = vpop.f32.mrf.mxu0
      %v5040 = vadd.f32 %v4951, %v5039
      %v5041 = vpop.f32.mrf.mxu0
      %v5042 = vadd.f32 %v4953, %v5041
      %5043 = vmatmul.bf16.gmra.mxu0 %v4211
      %v5044 = vpop.f32.mrf.mxu0
      %v5045 = vadd.f32 %v4956, %v5044
      %v5046 = vpop.f32.mrf.mxu0
      %v5047 = vadd.f32 %v4958, %v5046
      %5048 = vmatmul.bf16.gmra.mxu0 %v4216
      %v5049 = vpop.f32.mrf.mxu0
      %v5050 = vadd.f32 %v4961, %v5049
      %v5051 = vpop.f32.mrf.mxu0
      %v5052 = vadd.f32 %v4963, %v5051
      %5053 = vmatmul.bf16.gmra.mxu0 %v4221
      %v5054 = vpop.f32.mrf.mxu0
      %v5055 = vadd.f32 %v4966, %v5054
      %v5056 = vpop.f32.mrf.mxu0
      %v5057 = vadd.f32 %v4968, %v5056
      %5058 = vmatmul.bf16.gmra.mxu0 %v4226
      %v5059 = vpop.f32.mrf.mxu0
      %v5060 = vadd.f32 %v4971, %v5059
      %v5061 = vpop.f32.mrf.mxu0
      %v5062 = vadd.f32 %v4973, %v5061
      %5063 = vmatmul.bf16.gmra.mxu0 %v4231
      %v5064 = vpop.f32.mrf.mxu0
      %v5065 = vadd.f32 %v4976, %v5064
      %v5066 = vpop.f32.mrf.mxu0
      %v5067 = vadd.f32 %v4978, %v5066
      %5068 = vmatmul.bf16.gmra.mxu0 %v4236
      %v5069 = vpop.f32.mrf.mxu0
      %v5070 = vadd.f32 %v4981, %v5069
      %v5071 = vpop.f32.mrf.mxu0
      %v5072 = vadd.f32 %v4983, %v5071
      %5073 = vmatmul.bf16.gmra.mxu0 %v4241
      %v5074 = vpop.f32.mrf.mxu0
      %v5075 = vadd.f32 %v4986, %v5074
      %v5076 = vpop.f32.mrf.mxu0
      %v5077 = vadd.f32 %v4988, %v5076
      %5078 = vmatmul.bf16.gmra.mxu0 %v4246
      %v5079 = vpop.f32.mrf.mxu0
      %v5080 = vadd.f32 %v4991, %v5079
      %v5081 = vpop.f32.mrf.mxu0
      %v5082 = vadd.f32 %v4993, %v5081
      %5083 = vmatmul.bf16.gmra.mxu0 %v4251
      %v5084 = vpop.f32.mrf.mxu0
      %v5085 = vadd.f32 %v4996, %v5084
      %v5086 = vpop.f32.mrf.mxu0
      %v5087 = vadd.f32 %v4998, %v5086
      %5088 = vmatmul.bf16.gmra.mxu0 %v4256
      %v5089 = vpop.f32.mrf.mxu0
      %v5090 = vadd.f32 %v5001, %v5089
      %v5091 = vpop.f32.mrf.mxu0
      %v5092 = vadd.f32 %v5003, %v5091
      %5093 = vmatmul.bf16.gmra.mxu0 %v4261
      %v5094 = vpop.f32.mrf.mxu0
      %v5095 = vadd.f32 %v5006, %v5094
      %v5096 = vpop.f32.mrf.mxu0
      %v5097 = vadd.f32 %v5008, %v5096
      %5098 = vmatmul.bf16.gmra.mxu0 %v4266
      %v5099 = vpop.f32.mrf.mxu0
      %v5100 = vadd.f32 %v5011, %v5099
      %v5101 = vpop.f32.mrf.mxu0
      %v5102 = vadd.f32 %v5013, %v5101
      %5103 = vmatmul.bf16.gmra.mxu0 %v4271
      %v5104 = vpop.f32.mrf.mxu0
      %v5105 = vadd.f32 %v5016, %v5104
      %v5106 = vpop.f32.mrf.mxu0
      %v5107 = vadd.f32 %v5018, %v5106
      %5108 = vmatmul.bf16.gmra.mxu0 %v4276
      %v5109 = vpop.f32.mrf.mxu0
      %v5110 = vadd.f32 %v5021, %v5109
      %v5111 = vpop.f32.mrf.mxu0
      %v5112 = vadd.f32 %v5023, %v5111
      %5113 = vmatmul.bf16.gmra.mxu0 %v4281
      %v5114 = vpop.f32.mrf.mxu0
      %v5115 = vadd.f32 %v5026, %v5114
      %v5116 = vpop.f32.mrf.mxu0
      %v5117 = vadd.f32 %v5028, %v5116
      %5118 = vdwg.mxu0
      %5119 = vmatpush.bf16.msra.mxu0 %v4681
      %5120 = vmatpush.bf16.msra.mxu0 %v4679
      %5121 = vmatpush.bf16.msra.mxu0 %v4677
      %5122 = vmatpush.bf16.msra.mxu0 %v4675
      %5123 = vmatpush.bf16.msra.mxu0 %v4673
      %5124 = vmatpush.bf16.msra.mxu0 %v4671
      %5125 = vmatpush.bf16.msra.mxu0 %v4669
      %5126 = vmatpush.bf16.msra.mxu0 %v4667
      %5127 = vmatmul.bf16.gmra.mxu0 %v4207
      %v5128 = vpop.f32.mrf.mxu0
      %v5129 = vadd.f32 %v5040, %v5128
      %v5130 = vpop.f32.mrf.mxu0
      %v5131 = vadd.f32 %v5042, %v5130
      %5132 = vmatmul.bf16.gmra.mxu0 %v4212
      %v5133 = vpop.f32.mrf.mxu0
      %v5134 = vadd.f32 %v5045, %v5133
      %v5135 = vpop.f32.mrf.mxu0
      %v5136 = vadd.f32 %v5047, %v5135
      %5137 = vmatmul.bf16.gmra.mxu0 %v4217
      %v5138 = vpop.f32.mrf.mxu0
      %v5139 = vadd.f32 %v5050, %v5138
      %v5140 = vpop.f32.mrf.mxu0
      %v5141 = vadd.f32 %v5052, %v5140
      %5142 = vmatmul.bf16.gmra.mxu0 %v4222
      %v5143 = vpop.f32.mrf.mxu0
      %v5144 = vadd.f32 %v5055, %v5143
      %v5145 = vpop.f32.mrf.mxu0
      %v5146 = vadd.f32 %v5057, %v5145
      %5147 = vmatmul.bf16.gmra.mxu0 %v4227
      %v5148 = vpop.f32.mrf.mxu0
      %v5149 = vadd.f32 %v5060, %v5148
      %v5150 = vpop.f32.mrf.mxu0
      %v5151 = vadd.f32 %v5062, %v5150
      %5152 = vmatmul.bf16.gmra.mxu0 %v4232
      %v5153 = vpop.f32.mrf.mxu0
      %v5154 = vadd.f32 %v5065, %v5153
      %v5155 = vpop.f32.mrf.mxu0
      %v5156 = vadd.f32 %v5067, %v5155
      %5157 = vmatmul.bf16.gmra.mxu0 %v4237
      %v5158 = vpop.f32.mrf.mxu0
      %v5159 = vadd.f32 %v5070, %v5158
      %v5160 = vpop.f32.mrf.mxu0
      %v5161 = vadd.f32 %v5072, %v5160
      %5162 = vmatmul.bf16.gmra.mxu0 %v4242
      %v5163 = vpop.f32.mrf.mxu0
      %v5164 = vadd.f32 %v5075, %v5163
      %v5165 = vpop.f32.mrf.mxu0
      %v5166 = vadd.f32 %v5077, %v5165
      %5167 = vmatmul.bf16.gmra.mxu0 %v4247
      %v5168 = vpop.f32.mrf.mxu0
      %v5169 = vadd.f32 %v5080, %v5168
      %v5170 = vpop.f32.mrf.mxu0
      %v5171 = vadd.f32 %v5082, %v5170
      %5172 = vmatmul.bf16.gmra.mxu0 %v4252
      %v5173 = vpop.f32.mrf.mxu0
      %v5174 = vadd.f32 %v5085, %v5173
      %v5175 = vpop.f32.mrf.mxu0
      %v5176 = vadd.f32 %v5087, %v5175
      %5177 = vmatmul.bf16.gmra.mxu0 %v4257
      %v5178 = vpop.f32.mrf.mxu0
      %v5179 = vadd.f32 %v5090, %v5178
      %v5180 = vpop.f32.mrf.mxu0
      %v5181 = vadd.f32 %v5092, %v5180
      %5182 = vmatmul.bf16.gmra.mxu0 %v4262
      %v5183 = vpop.f32.mrf.mxu0
      %v5184 = vadd.f32 %v5095, %v5183
      %v5185 = vpop.f32.mrf.mxu0
      %v5186 = vadd.f32 %v5097, %v5185
      %5187 = vmatmul.bf16.gmra.mxu0 %v4267
      %v5188 = vpop.f32.mrf.mxu0
      %v5189 = vadd.f32 %v5100, %v5188
      %v5190 = vpop.f32.mrf.mxu0
      %v5191 = vadd.f32 %v5102, %v5190
      %5192 = vmatmul.bf16.gmra.mxu0 %v4272
      %v5193 = vpop.f32.mrf.mxu0
      %v5194 = vadd.f32 %v5105, %v5193
      %v5195 = vpop.f32.mrf.mxu0
      %v5196 = vadd.f32 %v5107, %v5195
      %5197 = vmatmul.bf16.gmra.mxu0 %v4277
      %v5198 = vpop.f32.mrf.mxu0
      %v5199 = vadd.f32 %v5110, %v5198
      %v5200 = vpop.f32.mrf.mxu0
      %v5201 = vadd.f32 %v5112, %v5200
      %5202 = vmatmul.bf16.gmra.mxu0 %v4282
      %v5203 = vpop.f32.mrf.mxu0
      %v5204 = vadd.f32 %v5115, %v5203
      %v5205 = vpop.f32.mrf.mxu0
      %v5206 = vadd.f32 %v5117, %v5205
      %5207 = vdwg.mxu0
      %5208 = vmatpush.bf16.msra.mxu0 %v4618
      %5209 = vmatpush.bf16.msra.mxu0 %v4616
      %5210 = vmatpush.bf16.msra.mxu0 %v4614
      %5211 = vmatpush.bf16.msra.mxu0 %v4612
      %5212 = vmatpush.bf16.msra.mxu0 %v4610
      %5213 = vmatpush.bf16.msra.mxu0 %v4608
      %5214 = vmatpush.bf16.msra.mxu0 %v4606
      %5215 = vmatpush.bf16.msra.mxu0 %v4604
      %5216 = vmatmul.bf16.gmra.mxu0 %v4203
      %v5217 = vpop.f32.mrf.mxu0
      %v5218 = vadd.f32 0.0, %v5217
      %v5219 = vpop.f32.mrf.mxu0
      %v5220 = vadd.f32 0.0, %v5219
      %5221 = vmatmul.bf16.gmra.mxu0 %v4208
      %v5222 = vpop.f32.mrf.mxu0
      %v5223 = vadd.f32 0.0, %v5222
      %v5224 = vpop.f32.mrf.mxu0
      %v5225 = vadd.f32 0.0, %v5224
      %5226 = vmatmul.bf16.gmra.mxu0 %v4213
      %v5227 = vpop.f32.mrf.mxu0
      %v5228 = vadd.f32 0.0, %v5227
      %v5229 = vpop.f32.mrf.mxu0
      %v5230 = vadd.f32 0.0, %v5229
      %5231 = vmatmul.bf16.gmra.mxu0 %v4218
      %v5232 = vpop.f32.mrf.mxu0
      %v5233 = vadd.f32 0.0, %v5232
      %v5234 = vpop.f32.mrf.mxu0
      %v5235 = vadd.f32 0.0, %v5234
      %5236 = vmatmul.bf16.gmra.mxu0 %v4223
      %v5237 = vpop.f32.mrf.mxu0
      %v5238 = vadd.f32 0.0, %v5237
      %v5239 = vpop.f32.mrf.mxu0
      %v5240 = vadd.f32 0.0, %v5239
      %5241 = vmatmul.bf16.gmra.mxu0 %v4228
      %v5242 = vpop.f32.mrf.mxu0
      %v5243 = vadd.f32 0.0, %v5242
      %v5244 = vpop.f32.mrf.mxu0
      %v5245 = vadd.f32 0.0, %v5244
      %5246 = vmatmul.bf16.gmra.mxu0 %v4233
      %v5247 = vpop.f32.mrf.mxu0
      %v5248 = vadd.f32 0.0, %v5247
      %v5249 = vpop.f32.mrf.mxu0
      %v5250 = vadd.f32 0.0, %v5249
      %5251 = vmatmul.bf16.gmra.mxu0 %v4238
      %v5252 = vpop.f32.mrf.mxu0
      %v5253 = vadd.f32 0.0, %v5252
      %v5254 = vpop.f32.mrf.mxu0
      %v5255 = vadd.f32 0.0, %v5254
      %5256 = vmatmul.bf16.gmra.mxu0 %v4243
      %v5257 = vpop.f32.mrf.mxu0
      %v5258 = vadd.f32 0.0, %v5257
      %v5259 = vpop.f32.mrf.mxu0
      %v5260 = vadd.f32 0.0, %v5259
      %5261 = vmatmul.bf16.gmra.mxu0 %v4248
      %v5262 = vpop.f32.mrf.mxu0
      %v5263 = vadd.f32 0.0, %v5262
      %v5264 = vpop.f32.mrf.mxu0
      %v5265 = vadd.f32 0.0, %v5264
      %5266 = vmatmul.bf16.gmra.mxu0 %v4253
      %v5267 = vpop.f32.mrf.mxu0
      %v5268 = vadd.f32 0.0, %v5267
      %v5269 = vpop.f32.mrf.mxu0
      %v5270 = vadd.f32 0.0, %v5269
      %5271 = vmatmul.bf16.gmra.mxu0 %v4258
      %v5272 = vpop.f32.mrf.mxu0
      %v5273 = vadd.f32 0.0, %v5272
      %v5274 = vpop.f32.mrf.mxu0
      %v5275 = vadd.f32 0.0, %v5274
      %5276 = vmatmul.bf16.gmra.mxu0 %v4263
      %v5277 = vpop.f32.mrf.mxu0
      %v5278 = vadd.f32 0.0, %v5277
      %v5279 = vpop.f32.mrf.mxu0
      %v5280 = vadd.f32 0.0, %v5279
      %5281 = vmatmul.bf16.gmra.mxu0 %v4268
      %v5282 = vpop.f32.mrf.mxu0
      %v5283 = vadd.f32 0.0, %v5282
      %v5284 = vpop.f32.mrf.mxu0
      %v5285 = vadd.f32 0.0, %v5284
      %5286 = vmatmul.bf16.gmra.mxu0 %v4273
      %v5287 = vpop.f32.mrf.mxu0
      %v5288 = vadd.f32 0.0, %v5287
      %v5289 = vpop.f32.mrf.mxu0
      %v5290 = vadd.f32 0.0, %v5289
      %5291 = vmatmul.bf16.gmra.mxu0 %v4278
      %v5292 = vpop.f32.mrf.mxu0
      %v5293 = vadd.f32 0.0, %v5292
      %v5294 = vpop.f32.mrf.mxu0
      %v5295 = vadd.f32 0.0, %v5294
      %5296 = vdwg.mxu0
      %5297 = vmatpush.bf16.msra.mxu0 %v4634
      %5298 = vmatpush.bf16.msra.mxu0 %v4632
      %5299 = vmatpush.bf16.msra.mxu0 %v4630
      %5300 = vmatpush.bf16.msra.mxu0 %v4628
      %5301 = vmatpush.bf16.msra.mxu0 %v4626
      %5302 = vmatpush.bf16.msra.mxu0 %v4624
      %5303 = vmatpush.bf16.msra.mxu0 %v4622
      %5304 = vmatpush.bf16.msra.mxu0 %v4620
      %5305 = vmatmul.bf16.gmra.mxu0 %v4204
      %v5306 = vpop.f32.mrf.mxu0
      %v5307 = vadd.f32 %v5218, %v5306
      %v5308 = vpop.f32.mrf.mxu0
      %v5309 = vadd.f32 %v5220, %v5308
      %5310 = vmatmul.bf16.gmra.mxu0 %v4209
      %v5311 = vpop.f32.mrf.mxu0
      %v5312 = vadd.f32 %v5223, %v5311
      %v5313 = vpop.f32.mrf.mxu0
      %v5314 = vadd.f32 %v5225, %v5313
      %5315 = vmatmul.bf16.gmra.mxu0 %v4214
      %v5316 = vpop.f32.mrf.mxu0
      %v5317 = vadd.f32 %v5228, %v5316
      %v5318 = vpop.f32.mrf.mxu0
      %v5319 = vadd.f32 %v5230, %v5318
      %5320 = vmatmul.bf16.gmra.mxu0 %v4219
      %v5321 = vpop.f32.mrf.mxu0
      %v5322 = vadd.f32 %v5233, %v5321
      %v5323 = vpop.f32.mrf.mxu0
      %v5324 = vadd.f32 %v5235, %v5323
      %5325 = vmatmul.bf16.gmra.mxu0 %v4224
      %v5326 = vpop.f32.mrf.mxu0
      %v5327 = vadd.f32 %v5238, %v5326
      %v5328 = vpop.f32.mrf.mxu0
      %v5329 = vadd.f32 %v5240, %v5328
      %5330 = vmatmul.bf16.gmra.mxu0 %v4229
      %v5331 = vpop.f32.mrf.mxu0
      %v5332 = vadd.f32 %v5243, %v5331
      %v5333 = vpop.f32.mrf.mxu0
      %v5334 = vadd.f32 %v5245, %v5333
      %5335 = vmatmul.bf16.gmra.mxu0 %v4234
      %v5336 = vpop.f32.mrf.mxu0
      %v5337 = vadd.f32 %v5248, %v5336
      %v5338 = vpop.f32.mrf.mxu0
      %v5339 = vadd.f32 %v5250, %v5338
      %5340 = vmatmul.bf16.gmra.mxu0 %v4239
      %v5341 = vpop.f32.mrf.mxu0
      %v5342 = vadd.f32 %v5253, %v5341
      %v5343 = vpop.f32.mrf.mxu0
      %v5344 = vadd.f32 %v5255, %v5343
      %5345 = vmatmul.bf16.gmra.mxu0 %v4244
      %v5346 = vpop.f32.mrf.mxu0
      %v5347 = vadd.f32 %v5258, %v5346
      %v5348 = vpop.f32.mrf.mxu0
      %v5349 = vadd.f32 %v5260, %v5348
      %5350 = vmatmul.bf16.gmra.mxu0 %v4249
      %v5351 = vpop.f32.mrf.mxu0
      %v5352 = vadd.f32 %v5263, %v5351
      %v5353 = vpop.f32.mrf.mxu0
      %v5354 = vadd.f32 %v5265, %v5353
      %5355 = vmatmul.bf16.gmra.mxu0 %v4254
      %v5356 = vpop.f32.mrf.mxu0
      %v5357 = vadd.f32 %v5268, %v5356
      %v5358 = vpop.f32.mrf.mxu0
      %v5359 = vadd.f32 %v5270, %v5358
      %5360 = vmatmul.bf16.gmra.mxu0 %v4259
      %v5361 = vpop.f32.mrf.mxu0
      %v5362 = vadd.f32 %v5273, %v5361
      %v5363 = vpop.f32.mrf.mxu0
      %v5364 = vadd.f32 %v5275, %v5363
      %5365 = vmatmul.bf16.gmra.mxu0 %v4264
      %v5366 = vpop.f32.mrf.mxu0
      %v5367 = vadd.f32 %v5278, %v5366
      %v5368 = vpop.f32.mrf.mxu0
      %v5369 = vadd.f32 %v5280, %v5368
      %5370 = vmatmul.bf16.gmra.mxu0 %v4269
      %v5371 = vpop.f32.mrf.mxu0
      %v5372 = vadd.f32 %v5283, %v5371
      %v5373 = vpop.f32.mrf.mxu0
      %v5374 = vadd.f32 %v5285, %v5373
      %5375 = vmatmul.bf16.gmra.mxu0 %v4274
      %v5376 = vpop.f32.mrf.mxu0
      %v5377 = vadd.f32 %v5288, %v5376
      %v5378 = vpop.f32.mrf.mxu0
      %v5379 = vadd.f32 %v5290, %v5378
      %5380 = vmatmul.bf16.gmra.mxu0 %v4279
      %v5381 = vpop.f32.mrf.mxu0
      %v5382 = vadd.f32 %v5293, %v5381
      %v5383 = vpop.f32.mrf.mxu0
      %v5384 = vadd.f32 %v5295, %v5383
      %5385 = vdwg.mxu0
      %5386 = vmatpush.bf16.msra.mxu0 %v4650
      %5387 = vmatpush.bf16.msra.mxu0 %v4648
      %5388 = vmatpush.bf16.msra.mxu0 %v4646
      %5389 = vmatpush.bf16.msra.mxu0 %v4644
      %5390 = vmatpush.bf16.msra.mxu0 %v4642
      %5391 = vmatpush.bf16.msra.mxu0 %v4640
      %5392 = vmatpush.bf16.msra.mxu0 %v4638
      %5393 = vmatpush.bf16.msra.mxu0 %v4636
      %5394 = vmatmul.bf16.gmra.mxu0 %v4205
      %v5395 = vpop.f32.mrf.mxu0
      %v5396 = vadd.f32 %v5307, %v5395
      %v5397 = vpop.f32.mrf.mxu0
      %v5398 = vadd.f32 %v5309, %v5397
      %5399 = vmatmul.bf16.gmra.mxu0 %v4210
      %v5400 = vpop.f32.mrf.mxu0
      %v5401 = vadd.f32 %v5312, %v5400
      %v5402 = vpop.f32.mrf.mxu0
      %v5403 = vadd.f32 %v5314, %v5402
      %5404 = vmatmul.bf16.gmra.mxu0 %v4215
      %v5405 = vpop.f32.mrf.mxu0
      %v5406 = vadd.f32 %v5317, %v5405
      %v5407 = vpop.f32.mrf.mxu0
      %v5408 = vadd.f32 %v5319, %v5407
      %5409 = vmatmul.bf16.gmra.mxu0 %v4220
      %v5410 = vpop.f32.mrf.mxu0
      %v5411 = vadd.f32 %v5322, %v5410
      %v5412 = vpop.f32.mrf.mxu0
      %v5413 = vadd.f32 %v5324, %v5412
      %5414 = vmatmul.bf16.gmra.mxu0 %v4225
      %v5415 = vpop.f32.mrf.mxu0
      %v5416 = vadd.f32 %v5327, %v5415
      %v5417 = vpop.f32.mrf.mxu0
      %v5418 = vadd.f32 %v5329, %v5417
      %5419 = vmatmul.bf16.gmra.mxu0 %v4230
      %v5420 = vpop.f32.mrf.mxu0
      %v5421 = vadd.f32 %v5332, %v5420
      %v5422 = vpop.f32.mrf.mxu0
      %v5423 = vadd.f32 %v5334, %v5422
      %5424 = vmatmul.bf16.gmra.mxu0 %v4235
      %v5425 = vpop.f32.mrf.mxu0
      %v5426 = vadd.f32 %v5337, %v5425
      %v5427 = vpop.f32.mrf.mxu0
      %v5428 = vadd.f32 %v5339, %v5427
      %5429 = vmatmul.bf16.gmra.mxu0 %v4240
      %v5430 = vpop.f32.mrf.mxu0
      %v5431 = vadd.f32 %v5342, %v5430
      %v5432 = vpop.f32.mrf.mxu0
      %v5433 = vadd.f32 %v5344, %v5432
      %5434 = vmatmul.bf16.gmra.mxu0 %v4245
      %v5435 = vpop.f32.mrf.mxu0
      %v5436 = vadd.f32 %v5347, %v5435
      %v5437 = vpop.f32.mrf.mxu0
      %v5438 = vadd.f32 %v5349, %v5437
      %5439 = vmatmul.bf16.gmra.mxu0 %v4250
      %v5440 = vpop.f32.mrf.mxu0
      %v5441 = vadd.f32 %v5352, %v5440
      %v5442 = vpop.f32.mrf.mxu0
      %v5443 = vadd.f32 %v5354, %v5442
      %5444 = vmatmul.bf16.gmra.mxu0 %v4255
      %v5445 = vpop.f32.mrf.mxu0
      %v5446 = vadd.f32 %v5357, %v5445
      %v5447 = vpop.f32.mrf.mxu0
      %v5448 = vadd.f32 %v5359, %v5447
      %5449 = vmatmul.bf16.gmra.mxu0 %v4260
      %v5450 = vpop.f32.mrf.mxu0
      %v5451 = vadd.f32 %v5362, %v5450
      %v5452 = vpop.f32.mrf.mxu0
      %v5453 = vadd.f32 %v5364, %v5452
      %5454 = vmatmul.bf16.gmra.mxu0 %v4265
      %v5455 = vpop.f32.mrf.mxu0
      %v5456 = vadd.f32 %v5367, %v5455
      %v5457 = vpop.f32.mrf.mxu0
      %v5458 = vadd.f32 %v5369, %v5457
      %5459 = vmatmul.bf16.gmra.mxu0 %v4270
      %v5460 = vpop.f32.mrf.mxu0
      %v5461 = vadd.f32 %v5372, %v5460
      %v5462 = vpop.f32.mrf.mxu0
      %v5463 = vadd.f32 %v5374, %v5462
      %5464 = vmatmul.bf16.gmra.mxu0 %v4275
      %v5465 = vpop.f32.mrf.mxu0
      %v5466 = vadd.f32 %v5377, %v5465
      %v5467 = vpop.f32.mrf.mxu0
      %v5468 = vadd.f32 %v5379, %v5467
      %5469 = vmatmul.bf16.gmra.mxu0 %v4280
      %v5470 = vpop.f32.mrf.mxu0
      %v5471 = vadd.f32 %v5382, %v5470
      %v5472 = vpop.f32.mrf.mxu0
      %v5473 = vadd.f32 %v5384, %v5472
      %5474 = vdwg.mxu0
      %5475 = vmatpush.bf16.msra.mxu0 %v4666
      %5476 = vmatpush.bf16.msra.mxu0 %v4664
      %5477 = vmatpush.bf16.msra.mxu0 %v4662
      %5478 = vmatpush.bf16.msra.mxu0 %v4660
      %5479 = vmatpush.bf16.msra.mxu0 %v4658
      %5480 = vmatpush.bf16.msra.mxu0 %v4656
      %5481 = vmatpush.bf16.msra.mxu0 %v4654
      %5482 = vmatpush.bf16.msra.mxu0 %v4652
      %5483 = vmatmul.bf16.gmra.mxu0 %v4206
      %v5484 = vpop.f32.mrf.mxu0
      %v5485 = vadd.f32 %v5396, %v5484
      %v5486 = vpop.f32.mrf.mxu0
      %v5487 = vadd.f32 %v5398, %v5486
      %5488 = vmatmul.bf16.gmra.mxu0 %v4211
      %v5489 = vpop.f32.mrf.mxu0
      %v5490 = vadd.f32 %v5401, %v5489
      %v5491 = vpop.f32.mrf.mxu0
      %v5492 = vadd.f32 %v5403, %v5491
      %5493 = vmatmul.bf16.gmra.mxu0 %v4216
      %v5494 = vpop.f32.mrf.mxu0
      %v5495 = vadd.f32 %v5406, %v5494
      %v5496 = vpop.f32.mrf.mxu0
      %v5497 = vadd.f32 %v5408, %v5496
      %5498 = vmatmul.bf16.gmra.mxu0 %v4221
      %v5499 = vpop.f32.mrf.mxu0
      %v5500 = vadd.f32 %v5411, %v5499
      %v5501 = vpop.f32.mrf.mxu0
      %v5502 = vadd.f32 %v5413, %v5501
      %5503 = vmatmul.bf16.gmra.mxu0 %v4226
      %v5504 = vpop.f32.mrf.mxu0
      %v5505 = vadd.f32 %v5416, %v5504
      %v5506 = vpop.f32.mrf.mxu0
      %v5507 = vadd.f32 %v5418, %v5506
      %5508 = vmatmul.bf16.gmra.mxu0 %v4231
      %v5509 = vpop.f32.mrf.mxu0
      %v5510 = vadd.f32 %v5421, %v5509
      %v5511 = vpop.f32.mrf.mxu0
      %v5512 = vadd.f32 %v5423, %v5511
      %5513 = vmatmul.bf16.gmra.mxu0 %v4236
      %v5514 = vpop.f32.mrf.mxu0
      %v5515 = vadd.f32 %v5426, %v5514
      %v5516 = vpop.f32.mrf.mxu0
      %v5517 = vadd.f32 %v5428, %v5516
      %5518 = vmatmul.bf16.gmra.mxu0 %v4241
      %v5519 = vpop.f32.mrf.mxu0
      %v5520 = vadd.f32 %v5431, %v5519
      %v5521 = vpop.f32.mrf.mxu0
      %v5522 = vadd.f32 %v5433, %v5521
      %5523 = vmatmul.bf16.gmra.mxu0 %v4246
      %v5524 = vpop.f32.mrf.mxu0
      %v5525 = vadd.f32 %v5436, %v5524
      %v5526 = vpop.f32.mrf.mxu0
      %v5527 = vadd.f32 %v5438, %v5526
      %5528 = vmatmul.bf16.gmra.mxu0 %v4251
      %v5529 = vpop.f32.mrf.mxu0
      %v5530 = vadd.f32 %v5441, %v5529
      %v5531 = vpop.f32.mrf.mxu0
      %v5532 = vadd.f32 %v5443, %v5531
      %5533 = vmatmul.bf16.gmra.mxu0 %v4256
      %v5534 = vpop.f32.mrf.mxu0
      %v5535 = vadd.f32 %v5446, %v5534
      %v5536 = vpop.f32.mrf.mxu0
      %v5537 = vadd.f32 %v5448, %v5536
      %5538 = vmatmul.bf16.gmra.mxu0 %v4261
      %v5539 = vpop.f32.mrf.mxu0
      %v5540 = vadd.f32 %v5451, %v5539
      %v5541 = vpop.f32.mrf.mxu0
      %v5542 = vadd.f32 %v5453, %v5541
      %5543 = vmatmul.bf16.gmra.mxu0 %v4266
      %v5544 = vpop.f32.mrf.mxu0
      %v5545 = vadd.f32 %v5456, %v5544
      %v5546 = vpop.f32.mrf.mxu0
      %v5547 = vadd.f32 %v5458, %v5546
      %5548 = vmatmul.bf16.gmra.mxu0 %v4271
      %v5549 = vpop.f32.mrf.mxu0
      %v5550 = vadd.f32 %v5461, %v5549
      %v5551 = vpop.f32.mrf.mxu0
      %v5552 = vadd.f32 %v5463, %v5551
      %5553 = vmatmul.bf16.gmra.mxu0 %v4276
      %v5554 = vpop.f32.mrf.mxu0
      %v5555 = vadd.f32 %v5466, %v5554
      %v5556 = vpop.f32.mrf.mxu0
      %v5557 = vadd.f32 %v5468, %v5556
      %5558 = vmatmul.bf16.gmra.mxu0 %v4281
      %v5559 = vpop.f32.mrf.mxu0
      %v5560 = vadd.f32 %v5471, %v5559
      %v5561 = vpop.f32.mrf.mxu0
      %v5562 = vadd.f32 %v5473, %v5561
      %5563 = vdwg.mxu0
      %5564 = vmatpush.bf16.msra.mxu0 %v4682
      %5565 = vmatpush.bf16.msra.mxu0 %v4680
      %5566 = vmatpush.bf16.msra.mxu0 %v4678
      %5567 = vmatpush.bf16.msra.mxu0 %v4676
      %5568 = vmatpush.bf16.msra.mxu0 %v4674
      %5569 = vmatpush.bf16.msra.mxu0 %v4672
      %5570 = vmatpush.bf16.msra.mxu0 %v4670
      %5571 = vmatpush.bf16.msra.mxu0 %v4668
      %5572 = vmatmul.bf16.gmra.mxu0 %v4207
      %v5573 = vpop.f32.mrf.mxu0
      %v5574 = vadd.f32 %v5485, %v5573
      %v5575 = vpop.f32.mrf.mxu0
      %v5576 = vadd.f32 %v5487, %v5575
      %5577 = vmatmul.bf16.gmra.mxu0 %v4212
      %v5578 = vpop.f32.mrf.mxu0
      %v5579 = vadd.f32 %v5490, %v5578
      %v5580 = vpop.f32.mrf.mxu0
      %v5581 = vadd.f32 %v5492, %v5580
      %5582 = vmatmul.bf16.gmra.mxu0 %v4217
      %v5583 = vpop.f32.mrf.mxu0
      %v5584 = vadd.f32 %v5495, %v5583
      %v5585 = vpop.f32.mrf.mxu0
      %v5586 = vadd.f32 %v5497, %v5585
      %5587 = vmatmul.bf16.gmra.mxu0 %v4222
      %v5588 = vpop.f32.mrf.mxu0
      %v5589 = vadd.f32 %v5500, %v5588
      %v5590 = vpop.f32.mrf.mxu0
      %v5591 = vadd.f32 %v5502, %v5590
      %5592 = vmatmul.bf16.gmra.mxu0 %v4227
      %v5593 = vpop.f32.mrf.mxu0
      %v5594 = vadd.f32 %v5505, %v5593
      %v5595 = vpop.f32.mrf.mxu0
      %v5596 = vadd.f32 %v5507, %v5595
      %5597 = vmatmul.bf16.gmra.mxu0 %v4232
      %v5598 = vpop.f32.mrf.mxu0
      %v5599 = vadd.f32 %v5510, %v5598
      %v5600 = vpop.f32.mrf.mxu0
      %v5601 = vadd.f32 %v5512, %v5600
      %5602 = vmatmul.bf16.gmra.mxu0 %v4237
      %v5603 = vpop.f32.mrf.mxu0
      %v5604 = vadd.f32 %v5515, %v5603
      %v5605 = vpop.f32.mrf.mxu0
      %v5606 = vadd.f32 %v5517, %v5605
      %5607 = vmatmul.bf16.gmra.mxu0 %v4242
      %v5608 = vpop.f32.mrf.mxu0
      %v5609 = vadd.f32 %v5520, %v5608
      %v5610 = vpop.f32.mrf.mxu0
      %v5611 = vadd.f32 %v5522, %v5610
      %5612 = vmatmul.bf16.gmra.mxu0 %v4247
      %v5613 = vpop.f32.mrf.mxu0
      %v5614 = vadd.f32 %v5525, %v5613
      %v5615 = vpop.f32.mrf.mxu0
      %v5616 = vadd.f32 %v5527, %v5615
      %5617 = vmatmul.bf16.gmra.mxu0 %v4252
      %v5618 = vpop.f32.mrf.mxu0
      %v5619 = vadd.f32 %v5530, %v5618
      %v5620 = vpop.f32.mrf.mxu0
      %v5621 = vadd.f32 %v5532, %v5620
      %5622 = vmatmul.bf16.gmra.mxu0 %v4257
      %v5623 = vpop.f32.mrf.mxu0
      %v5624 = vadd.f32 %v5535, %v5623
      %v5625 = vpop.f32.mrf.mxu0
      %v5626 = vadd.f32 %v5537, %v5625
      %5627 = vmatmul.bf16.gmra.mxu0 %v4262
      %v5628 = vpop.f32.mrf.mxu0
      %v5629 = vadd.f32 %v5540, %v5628
      %v5630 = vpop.f32.mrf.mxu0
      %v5631 = vadd.f32 %v5542, %v5630
      %5632 = vmatmul.bf16.gmra.mxu0 %v4267
      %v5633 = vpop.f32.mrf.mxu0
      %v5634 = vadd.f32 %v5545, %v5633
      %v5635 = vpop.f32.mrf.mxu0
      %v5636 = vadd.f32 %v5547, %v5635
      %5637 = vmatmul.bf16.gmra.mxu0 %v4272
      %v5638 = vpop.f32.mrf.mxu0
      %v5639 = vadd.f32 %v5550, %v5638
      %v5640 = vpop.f32.mrf.mxu0
      %v5641 = vadd.f32 %v5552, %v5640
      %5642 = vmatmul.bf16.gmra.mxu0 %v4277
      %v5643 = vpop.f32.mrf.mxu0
      %v5644 = vadd.f32 %v5555, %v5643
      %v5645 = vpop.f32.mrf.mxu0
      %v5646 = vadd.f32 %v5557, %v5645
      %5647 = vmatmul.bf16.gmra.mxu0 %v4282
      %v5648 = vpop.f32.mrf.mxu0
      %v5649 = vadd.f32 %v5560, %v5648
      %v5650 = vpop.f32.mrf.mxu0
      %v5651 = vadd.f32 %v5562, %v5650
      %5652 = vdwg.mxu0
      %v5653 = vmax.f32 %v5129, %v5169
      %v5654 = vmax.f32 %v5574, %v5614
      %v5655 = vmax.f32 %v5131, %v5171
      %v5656 = vmax.f32 %v5576, %v5616
      %v5657 = vmax.f32 %v5134, %v5174
      %v5658 = vmax.f32 %v5579, %v5619
      %v5659 = vmax.f32 %v5136, %v5176
      %v5660 = vmax.f32 %v5581, %v5621
      %v5661 = vmax.f32 %v5139, %v5179
      %v5662 = vmax.f32 %v5584, %v5624
      %v5663 = vmax.f32 %v5141, %v5181
      %v5664 = vmax.f32 %v5586, %v5626
      %v5665 = vmax.f32 %v5144, %v5184
      %v5666 = vmax.f32 %v5589, %v5629
      %v5667 = vmax.f32 %v5146, %v5186
      %v5668 = vmax.f32 %v5591, %v5631
      %v5669 = vmax.f32 %v5149, %v5189
      %v5670 = vmax.f32 %v5594, %v5634
      %v5671 = vmax.f32 %v5151, %v5191
      %v5672 = vmax.f32 %v5596, %v5636
      %v5673 = vmax.f32 %v5154, %v5194
      %v5674 = vmax.f32 %v5599, %v5639
      %v5675 = vmax.f32 %v5156, %v5196
      %v5676 = vmax.f32 %v5601, %v5641
      %v5677 = vmax.f32 %v5159, %v5199
      %v5678 = vmax.f32 %v5604, %v5644
      %v5679 = vmax.f32 %v5161, %v5201
      %v5680 = vmax.f32 %v5606, %v5646
      %v5681 = vmax.f32 %v5164, %v5204
      %v5682 = vmax.f32 %v5609, %v5649
      %v5683 = vmax.f32 %v5166, %v5206
      %v5684 = vmax.f32 %v5611, %v5651
      %v5685 = vld [vmem:[%s4] sm:$0x3]
      %v5687 = vperm.slane %v5685, 0
      %v5688 = vperm.slane %v5685, 1
      %v5691 = vadd.f32 %v5653, %v5687
      %v5692 = vadd.f32 %v5654, %v5688
      %v5693 = vadd.f32 %v5655, %v5687
      %v5694 = vadd.f32 %v5656, %v5688
      %v5695 = vadd.f32 %v5657, %v5687
      %v5696 = vadd.f32 %v5658, %v5688
      %v5697 = vadd.f32 %v5659, %v5687
      %v5698 = vadd.f32 %v5660, %v5688
      %v5699 = vadd.f32 %v5661, %v5687
      %v5700 = vadd.f32 %v5662, %v5688
      %v5701 = vadd.f32 %v5663, %v5687
      %v5702 = vadd.f32 %v5664, %v5688
      %v5703 = vadd.f32 %v5665, %v5687
      %v5704 = vadd.f32 %v5666, %v5688
      %v5705 = vadd.f32 %v5667, %v5687
      %v5706 = vadd.f32 %v5668, %v5688
      %v5707 = vadd.f32 %v5669, %v5687
      %v5708 = vadd.f32 %v5670, %v5688
      %v5709 = vadd.f32 %v5671, %v5687
      %v5710 = vadd.f32 %v5672, %v5688
      %v5711 = vadd.f32 %v5673, %v5687
      %v5712 = vadd.f32 %v5674, %v5688
      %v5713 = vadd.f32 %v5675, %v5687
      %v5714 = vadd.f32 %v5676, %v5688
      %v5715 = vadd.f32 %v5677, %v5687
      %v5716 = vadd.f32 %v5678, %v5688
      %v5717 = vadd.f32 %v5679, %v5687
      %v5718 = vadd.f32 %v5680, %v5688
      %v5719 = vadd.f32 %v5681, %v5687
      %v5720 = vadd.f32 %v5682, %v5688
      %v5721 = vadd.f32 %v5683, %v5687
      %v5722 = vadd.f32 %v5684, %v5688
      %v5723 = vmax.f32 %v5691, 0.0
      %v5724 = vmax.f32 %v5692, 0.0
      %v5725 = vmax.f32 %v5693, 0.0
      %v5726 = vmax.f32 %v5694, 0.0
      %v5727 = vmax.f32 %v5695, 0.0
      %v5728 = vmax.f32 %v5696, 0.0
      %v5729 = vmax.f32 %v5697, 0.0
      %v5730 = vmax.f32 %v5698, 0.0
      %v5731 = vmax.f32 %v5699, 0.0
      %v5732 = vmax.f32 %v5700, 0.0
      %v5733 = vmax.f32 %v5701, 0.0
      %v5734 = vmax.f32 %v5702, 0.0
      %v5735 = vmax.f32 %v5703, 0.0
      %v5736 = vmax.f32 %v5704, 0.0
      %v5737 = vmax.f32 %v5705, 0.0
      %v5738 = vmax.f32 %v5706, 0.0
      %v5739 = vmax.f32 %v5707, 0.0
      %v5740 = vmax.f32 %v5708, 0.0
      %v5741 = vmax.f32 %v5709, 0.0
      %v5742 = vmax.f32 %v5710, 0.0
      %v5743 = vmax.f32 %v5711, 0.0
      %v5744 = vmax.f32 %v5712, 0.0
      %v5745 = vmax.f32 %v5713, 0.0
      %v5746 = vmax.f32 %v5714, 0.0
      %v5747 = vmax.f32 %v5715, 0.0
      %v5748 = vmax.f32 %v5716, 0.0
      %v5749 = vmax.f32 %v5717, 0.0
      %v5750 = vmax.f32 %v5718, 0.0
      %v5751 = vmax.f32 %v5719, 0.0
      %v5752 = vmax.f32 %v5720, 0.0
      %v5753 = vmax.f32 %v5721, 0.0
      %v5754 = vmax.f32 %v5722, 0.0
      %v5755 = vmax.f32 %v5723, %v5724
      %v5756 = vmax.f32 %v5725, %v5726
      %v5757 = vmax.f32 %v5727, %v5728
      %v5758 = vmax.f32 %v5729, %v5730
      %v5759 = vmax.f32 %v5731, %v5732
      %v5760 = vmax.f32 %v5733, %v5734
      %v5761 = vmax.f32 %v5735, %v5736
      %v5762 = vmax.f32 %v5737, %v5738
      %v5763 = vmax.f32 %v5739, %v5740
      %v5764 = vmax.f32 %v5741, %v5742
      %v5765 = vmax.f32 %v5743, %v5744
      %v5766 = vmax.f32 %v5745, %v5746
      %v5767 = vmax.f32 %v5747, %v5748
      %v5768 = vmax.f32 %v5749, %v5750
      %v5769 = vmax.f32 %v5751, %v5752
      %v5770 = vmax.f32 %v5753, %v5754
      %v5771 = vpack.c.bf16 %v5755, %v5755
      %v5772 = vpack.c.bf16 %v5756, %v5756
      %v5773 = vpack.c.bf16 %v5757, %v5757
      %v5774 = vpack.c.bf16 %v5758, %v5758
      %5775 = vst [vmem:[#allocation5] sm:$0xf] %v5771
      %5776 = vst [vmem:[#allocation5 + $0x10] sm:$0xf] %v5772
      %5777 = vst [vmem:[#allocation5 + $0x20] sm:$0xf] %v5773
      %5778 = vst [vmem:[#allocation5 + $0x30] sm:$0xf] %v5774
      %v5779 = vpack.c.bf16 %v5759, %v5759
      %v5780 = vpack.c.bf16 %v5760, %v5760
      %v5781 = vpack.c.bf16 %v5761, %v5761
      %v5782 = vpack.c.bf16 %v5762, %v5762
      %5783 = vst [vmem:[#allocation5 + $0x4] sm:$0xf] %v5779
      %5784 = vst [vmem:[#allocation5 + $0x14] sm:$0xf] %v5780
      %5785 = vst [vmem:[#allocation5 + $0x24] sm:$0xf] %v5781
      %5786 = vst [vmem:[#allocation5 + $0x34] sm:$0xf] %v5782
      %v5787 = vpack.c.bf16 %v5763, %v5763
      %v5788 = vpack.c.bf16 %v5764, %v5764
      %v5789 = vpack.c.bf16 %v5765, %v5765
      %v5790 = vpack.c.bf16 %v5766, %v5766
      %5791 = vst [vmem:[#allocation5 + $0x8] sm:$0xf] %v5787
      %5792 = vst [vmem:[#allocation5 + $0x18] sm:$0xf] %v5788
      %5793 = vst [vmem:[#allocation5 + $0x28] sm:$0xf] %v5789
      %5794 = vst [vmem:[#allocation5 + $0x38] sm:$0xf] %v5790
      %v5795 = vpack.c.bf16 %v5767, %v5767
      %v5796 = vpack.c.bf16 %v5768, %v5768
      %v5797 = vpack.c.bf16 %v5769, %v5769
      %v5798 = vpack.c.bf16 %v5770, %v5770
      %5799 = vst [vmem:[#allocation5 + $0xc] sm:$0xf] %v5795
      %5800 = vst [vmem:[#allocation5 + $0x1c] sm:$0xf] %v5796
      %5801 = vst [vmem:[#allocation5 + $0x2c] sm:$0xf] %v5797
      %5802 = vst [vmem:[#allocation5 + $0x3c] sm:$0xf] %v5798
      %v5803 = vld [vmem:[#allocation5] sm:$0xff]
      %v5804 = vld [vmem:[#allocation5 + $0x8] sm:$0xff]
      %v5805 = vld [vmem:[#allocation5 + $0x10] sm:$0xff]
      %v5806 = vld [vmem:[#allocation5 + $0x18] sm:$0xff]
      %v5807 = vld [vmem:[#allocation5 + $0x20] sm:$0xff]
      %v5808 = vld [vmem:[#allocation5 + $0x28] sm:$0xff]
      %v5809 = vld [vmem:[#allocation5 + $0x30] sm:$0xff]
      %v5810 = vld [vmem:[#allocation5 + $0x38] sm:$0xff]
      %v5811 = vld [vmem:[%s5] sm:$0xf]
      %v5812 = vld [vmem:[%s5 + $0x4] sm:$0xf]
      %v5813 = vld [vmem:[%s5 + $0x8] sm:$0xf]
      %v5814 = vld [vmem:[%s5 + $0xc] sm:$0xf]
      %v5815 = vld [vmem:[%s5 + $0x10] sm:$0xf]
      %v5816 = vld [vmem:[%s5 + $0x14] sm:$0xf]
      %v5817 = vld [vmem:[%s5 + $0x18] sm:$0xf]
      %v5818 = vld [vmem:[%s5 + $0x1c] sm:$0xf]
      %v5819 = vld [vmem:[%s5 + $0x20] sm:$0xf]
      %v5820 = vld [vmem:[%s5 + $0x24] sm:$0xf]
      %v5821 = vld [vmem:[%s5 + $0x28] sm:$0xf]
      %v5822 = vld [vmem:[%s5 + $0x2c] sm:$0xf]
      %v5823 = vld [vmem:[%s5 + $0x30] sm:$0xf]
      %v5824 = vld [vmem:[%s5 + $0x34] sm:$0xf]
      %v5825 = vld [vmem:[%s5 + $0x38] sm:$0xf]
      %v5826 = vld [vmem:[%s5 + $0x3c] sm:$0xf]
      %v5827 = vld [vmem:[%s5 + $0x40] sm:$0xf]
      %v5828 = vld [vmem:[%s5 + $0x44] sm:$0xf]
      %v5829 = vld [vmem:[%s5 + $0x48] sm:$0xf]
      %v5830 = vld [vmem:[%s5 + $0x4c] sm:$0xf]
      %v5831 = vld [vmem:[%s5 + $0x50] sm:$0xf]
      %v5832 = vld [vmem:[%s5 + $0x54] sm:$0xf]
      %v5833 = vld [vmem:[%s5 + $0x58] sm:$0xf]
      %v5834 = vld [vmem:[%s5 + $0x5c] sm:$0xf]
      %v5835 = vld [vmem:[%s5 + $0x60] sm:$0xf]
      %v5836 = vld [vmem:[%s5 + $0x64] sm:$0xf]
      %v5837 = vld [vmem:[%s5 + $0x68] sm:$0xf]
      %v5838 = vld [vmem:[%s5 + $0x6c] sm:$0xf]
      %v5839 = vld [vmem:[%s5 + $0x70] sm:$0xf]
      %v5840 = vld [vmem:[%s5 + $0x74] sm:$0xf]
      %v5841 = vld [vmem:[%s5 + $0x78] sm:$0xf]
      %v5842 = vld [vmem:[%s5 + $0x7c] sm:$0xf]
      %v5843 = vld [vmem:[%s5 + $0x80] sm:$0xf]
      %v5844 = vld [vmem:[%s5 + $0x84] sm:$0xf]
      %v5845 = vld [vmem:[%s5 + $0x88] sm:$0xf]
      %v5846 = vld [vmem:[%s5 + $0x8c] sm:$0xf]
      %v5847 = vld [vmem:[%s5 + $0x90] sm:$0xf]
      %v5848 = vld [vmem:[%s5 + $0x94] sm:$0xf]
      %v5849 = vld [vmem:[%s5 + $0x98] sm:$0xf]
      %v5850 = vld [vmem:[%s5 + $0x9c] sm:$0xf]
      %v5851 = vld [vmem:[%s5 + $0xa0] sm:$0xf]
      %v5852 = vld [vmem:[%s5 + $0xa4] sm:$0xf]
      %v5853 = vld [vmem:[%s5 + $0xa8] sm:$0xf]
      %v5854 = vld [vmem:[%s5 + $0xac] sm:$0xf]
      %v5855 = vld [vmem:[%s5 + $0xb0] sm:$0xf]
      %v5856 = vld [vmem:[%s5 + $0xb4] sm:$0xf]
      %v5857 = vld [vmem:[%s5 + $0xb8] sm:$0xf]
      %v5858 = vld [vmem:[%s5 + $0xbc] sm:$0xf]
      %v5859 = vld [vmem:[%s5 + $0xc0] sm:$0xf]
      %v5860 = vld [vmem:[%s5 + $0xc4] sm:$0xf]
      %v5861 = vld [vmem:[%s5 + $0xc8] sm:$0xf]
      %v5862 = vld [vmem:[%s5 + $0xcc] sm:$0xf]
      %v5863 = vld [vmem:[%s5 + $0xd0] sm:$0xf]
      %v5864 = vld [vmem:[%s5 + $0xd4] sm:$0xf]
      %v5865 = vld [vmem:[%s5 + $0xd8] sm:$0xf]
      %v5866 = vld [vmem:[%s5 + $0xdc] sm:$0xf]
      %v5867 = vld [vmem:[%s5 + $0xe0] sm:$0xf]
      %v5868 = vld [vmem:[%s5 + $0xe4] sm:$0xf]
      %v5869 = vld [vmem:[%s5 + $0xe8] sm:$0xf]
      %v5870 = vld [vmem:[%s5 + $0xec] sm:$0xf]
      %v5871 = vld [vmem:[%s5 + $0xf0] sm:$0xf]
      %v5872 = vld [vmem:[%s5 + $0xf4] sm:$0xf]
      %v5873 = vld [vmem:[%s5 + $0xf8] sm:$0xf]
      %v5874 = vld [vmem:[%s5 + $0xfc] sm:$0xf]
      %v5875 = vld [vmem:[%s6] sm:$0x1]
      %v5877 = vperm.slane %v5875, 0
      %v5887 = vunpack.c.l.b16 %v5803
      %v5888 = vunpack.c.h.b16 %v5803
      %v5889 = vunpack.c.l.b16 %v5804
      %v5890 = vunpack.c.h.b16 %v5804
      %v5891 = vunpack.c.l.b16 %v5805
      %v5892 = vunpack.c.h.b16 %v5805
      %v5893 = vunpack.c.l.b16 %v5806
      %v5894 = vunpack.c.h.b16 %v5806
      %v5895 = vunpack.c.l.b16 %v5807
      %v5896 = vunpack.c.h.b16 %v5807
      %v5897 = vunpack.c.l.b16 %v5808
      %v5898 = vunpack.c.h.b16 %v5808
      %v5899 = vunpack.c.l.b16 %v5809
      %v5900 = vunpack.c.h.b16 %v5809
      %v5901 = vunpack.c.l.b16 %v5810
      %v5902 = vunpack.c.h.b16 %v5810
      %v5903 = vpack.c.b16 %v5891, %v5887
      %v5904 = vpack.c.b16 %v5892, %v5888
      %v5905 = vpack.c.b16 %v5893, %v5889
      %v5906 = vpack.c.b16 %v5894, %v5890
      %v5907 = vpack.c.b16 %v5899, %v5895
      %v5908 = vpack.c.b16 %v5900, %v5896
      %v5909 = vpack.c.b16 %v5901, %v5897
      %v5910 = vpack.c.b16 %v5902, %v5898
      %v5983 = vunpack.c.l.b16 %v5811
      %v5984 = vunpack.c.l.b16 %v5812
      %v5985 = vunpack.c.l.b16 %v5813
      %v5986 = vunpack.c.l.b16 %v5814
      %v5987 = vunpack.c.l.b16 %v5815
      %v5988 = vunpack.c.l.b16 %v5816
      %v5989 = vunpack.c.l.b16 %v5817
      %v5990 = vunpack.c.l.b16 %v5818
      %v5991 = vunpack.c.l.b16 %v5819
      %v5992 = vunpack.c.l.b16 %v5820
      %v5993 = vunpack.c.l.b16 %v5821
      %v5994 = vunpack.c.l.b16 %v5822
      %v5995 = vunpack.c.l.b16 %v5823
      %v5996 = vunpack.c.l.b16 %v5824
      %v5997 = vunpack.c.l.b16 %v5825
      %v5998 = vunpack.c.l.b16 %v5826
      %v5999 = vunpack.c.l.b16 %v5827
      %v6000 = vunpack.c.l.b16 %v5828
      %v6001 = vunpack.c.l.b16 %v5829
      %v6002 = vunpack.c.l.b16 %v5830
      %v6003 = vunpack.c.l.b16 %v5831
      %v6004 = vunpack.c.l.b16 %v5832
      %v6005 = vunpack.c.l.b16 %v5833
      %v6006 = vunpack.c.l.b16 %v5834
      %v6007 = vunpack.c.l.b16 %v5835
      %v6008 = vunpack.c.l.b16 %v5836
      %v6009 = vunpack.c.l.b16 %v5837
      %v6010 = vunpack.c.l.b16 %v5838
      %v6011 = vunpack.c.l.b16 %v5839
      %v6012 = vunpack.c.l.b16 %v5840
      %v6013 = vunpack.c.l.b16 %v5841
      %v6014 = vunpack.c.l.b16 %v5842
      %v6015 = vunpack.c.l.b16 %v5843
      %v6016 = vunpack.c.l.b16 %v5844
      %v6017 = vunpack.c.l.b16 %v5845
      %v6018 = vunpack.c.l.b16 %v5846
      %v6019 = vunpack.c.l.b16 %v5847
      %v6020 = vunpack.c.l.b16 %v5848
      %v6021 = vunpack.c.l.b16 %v5849
      %v6022 = vunpack.c.l.b16 %v5850
      %v6023 = vunpack.c.l.b16 %v5851
      %v6024 = vunpack.c.l.b16 %v5852
      %v6025 = vunpack.c.l.b16 %v5853
      %v6026 = vunpack.c.l.b16 %v5854
      %v6027 = vunpack.c.l.b16 %v5855
      %v6028 = vunpack.c.l.b16 %v5856
      %v6029 = vunpack.c.l.b16 %v5857
      %v6030 = vunpack.c.l.b16 %v5858
      %v6031 = vunpack.c.l.b16 %v5859
      %v6032 = vunpack.c.l.b16 %v5860
      %v6033 = vunpack.c.l.b16 %v5861
      %v6034 = vunpack.c.l.b16 %v5862
      %v6035 = vunpack.c.l.b16 %v5863
      %v6036 = vunpack.c.l.b16 %v5864
      %v6037 = vunpack.c.l.b16 %v5865
      %v6038 = vunpack.c.l.b16 %v5866
      %v6039 = vunpack.c.l.b16 %v5867
      %v6040 = vunpack.c.l.b16 %v5868
      %v6041 = vunpack.c.l.b16 %v5869
      %v6042 = vunpack.c.l.b16 %v5870
      %v6043 = vunpack.c.l.b16 %v5871
      %v6044 = vunpack.c.l.b16 %v5872
      %v6045 = vunpack.c.l.b16 %v5873
      %v6046 = vunpack.c.l.b16 %v5874
      %v6047 = vpack.c.b16 %v5984, %v5983
      %v6048 = vpack.c.b16 %v5986, %v5985
      %v6049 = vpack.c.b16 %v5988, %v5987
      %v6050 = vpack.c.b16 %v5990, %v5989
      %v6051 = vpack.c.b16 %v5992, %v5991
      %v6052 = vpack.c.b16 %v5994, %v5993
      %v6053 = vpack.c.b16 %v5996, %v5995
      %v6054 = vpack.c.b16 %v5998, %v5997
      %v6055 = vpack.c.b16 %v6000, %v5999
      %v6056 = vpack.c.b16 %v6002, %v6001
      %v6057 = vpack.c.b16 %v6004, %v6003
      %v6058 = vpack.c.b16 %v6006, %v6005
      %v6059 = vpack.c.b16 %v6008, %v6007
      %v6060 = vpack.c.b16 %v6010, %v6009
      %v6061 = vpack.c.b16 %v6012, %v6011
      %v6062 = vpack.c.b16 %v6014, %v6013
      %v6063 = vpack.c.b16 %v6016, %v6015
      %v6064 = vpack.c.b16 %v6018, %v6017
      %v6065 = vpack.c.b16 %v6020, %v6019
      %v6066 = vpack.c.b16 %v6022, %v6021
      %v6067 = vpack.c.b16 %v6024, %v6023
      %v6068 = vpack.c.b16 %v6026, %v6025
      %v6069 = vpack.c.b16 %v6028, %v6027
      %v6070 = vpack.c.b16 %v6030, %v6029
      %v6071 = vpack.c.b16 %v6032, %v6031
      %v6072 = vpack.c.b16 %v6034, %v6033
      %v6073 = vpack.c.b16 %v6036, %v6035
      %v6074 = vpack.c.b16 %v6038, %v6037
      %v6075 = vpack.c.b16 %v6040, %v6039
      %v6076 = vpack.c.b16 %v6042, %v6041
      %v6077 = vpack.c.b16 %v6044, %v6043
      %v6078 = vpack.c.b16 %v6046, %v6045
      %6111 = vmatpush.bf16.msra.mxu0 %v6054
      %6112 = vmatpush.bf16.msra.mxu0 %v6053
      %6113 = vmatpush.bf16.msra.mxu0 %v6052
      %6114 = vmatpush.bf16.msra.mxu0 %v6051
      %6115 = vmatpush.bf16.msra.mxu0 %v6050
      %6116 = vmatpush.bf16.msra.mxu0 %v6049
      %6117 = vmatpush.bf16.msra.mxu0 %v6048
      %6118 = vmatpush.bf16.msra.mxu0 %v6047
      %6119 = vmatmul.bf16.gmra.mxu0 %v5903
      %v6120 = vpop.f32.mrf.mxu0
      %v6121 = vadd.f32 %v5877, %v6120
      %v6122 = vpop.f32.mrf.mxu0
      %v6123 = vadd.f32 %v5877, %v6122
      %6124 = vmatmul.bf16.gmra.mxu0 %v5907
      %v6125 = vpop.f32.mrf.mxu0
      %v6126 = vadd.f32 %v5877, %v6125
      %v6127 = vpop.f32.mrf.mxu0
      %v6128 = vadd.f32 %v5877, %v6127
      %6129 = vdwg.mxu0
      %6130 = vmatpush.bf16.msra.mxu0 %v6062
      %6131 = vmatpush.bf16.msra.mxu0 %v6061
      %6132 = vmatpush.bf16.msra.mxu0 %v6060
      %6133 = vmatpush.bf16.msra.mxu0 %v6059
      %6134 = vmatpush.bf16.msra.mxu0 %v6058
      %6135 = vmatpush.bf16.msra.mxu0 %v6057
      %6136 = vmatpush.bf16.msra.mxu0 %v6056
      %6137 = vmatpush.bf16.msra.mxu0 %v6055
      %6138 = vmatmul.bf16.gmra.mxu0 %v5904
      %v6139 = vpop.f32.mrf.mxu0
      %v6140 = vadd.f32 %v6121, %v6139
      %v6141 = vpop.f32.mrf.mxu0
      %v6142 = vadd.f32 %v6123, %v6141
      %6143 = vmatmul.bf16.gmra.mxu0 %v5908
      %v6144 = vpop.f32.mrf.mxu0
      %v6145 = vadd.f32 %v6126, %v6144
      %v6146 = vpop.f32.mrf.mxu0
      %v6147 = vadd.f32 %v6128, %v6146
      %6148 = vdwg.mxu0
      %6149 = vmatpush.bf16.msra.mxu0 %v6070
      %6150 = vmatpush.bf16.msra.mxu0 %v6069
      %6151 = vmatpush.bf16.msra.mxu0 %v6068
      %6152 = vmatpush.bf16.msra.mxu0 %v6067
      %6153 = vmatpush.bf16.msra.mxu0 %v6066
      %6154 = vmatpush.bf16.msra.mxu0 %v6065
      %6155 = vmatpush.bf16.msra.mxu0 %v6064
      %6156 = vmatpush.bf16.msra.mxu0 %v6063
      %6157 = vmatmul.bf16.gmra.mxu0 %v5905
      %v6158 = vpop.f32.mrf.mxu0
      %v6159 = vadd.f32 %v6140, %v6158
      %v6160 = vpop.f32.mrf.mxu0
      %v6161 = vadd.f32 %v6142, %v6160
      %6162 = vmatmul.bf16.gmra.mxu0 %v5909
      %v6163 = vpop.f32.mrf.mxu0
      %v6164 = vadd.f32 %v6145, %v6163
      %v6165 = vpop.f32.mrf.mxu0
      %v6166 = vadd.f32 %v6147, %v6165
      %6167 = vdwg.mxu0
      %6168 = vmatpush.bf16.msra.mxu0 %v6078
      %6169 = vmatpush.bf16.msra.mxu0 %v6077
      %6170 = vmatpush.bf16.msra.mxu0 %v6076
      %6171 = vmatpush.bf16.msra.mxu0 %v6075
      %6172 = vmatpush.bf16.msra.mxu0 %v6074
      %6173 = vmatpush.bf16.msra.mxu0 %v6073
      %6174 = vmatpush.bf16.msra.mxu0 %v6072
      %6175 = vmatpush.bf16.msra.mxu0 %v6071
      %6176 = vmatmul.bf16.gmra.mxu0 %v5906
      %v6177 = vpop.f32.mrf.mxu0
      %v6178 = vadd.f32 %v6159, %v6177
      %v6179 = vpop.f32.mrf.mxu0
      %v6180 = vadd.f32 %v6161, %v6179
      %6181 = vmatmul.bf16.gmra.mxu0 %v5910
      %v6182 = vpop.f32.mrf.mxu0
      %v6183 = vadd.f32 %v6164, %v6182
      %v6184 = vpop.f32.mrf.mxu0
      %v6185 = vadd.f32 %v6166, %v6184
      %6186 = vdwg.mxu0
      %v6187 = vmax.f32 %v6178, 0.0
      %v6188 = vmax.f32 %v6180, 0.0
      %v6189 = vmax.f32 %v6183, 0.0
      %v6190 = vmax.f32 %v6185, 0.0
      %v6191 = vpack.c.bf16 %v6188, %v6187
      %v6192 = vpack.c.bf16 %v6190, %v6189
      %v6193 = vld [vmem:[%s7] sm:$0xf]
      %v6194 = vld [vmem:[%s7 + $0x4] sm:$0xf]
      %v6195 = vld [vmem:[%s7 + $0x8] sm:$0xf]
      %v6196 = vld [vmem:[%s7 + $0xc] sm:$0xf]
      %v6197 = vld [vmem:[%s7 + $0x10] sm:$0xf]
      %v6198 = vld [vmem:[%s7 + $0x14] sm:$0xf]
      %v6199 = vld [vmem:[%s7 + $0x18] sm:$0x1]
      %v6200 = vld [vmem:[%s8] sm:$0x1]
      %v6202 = vperm.slane %v6200, 0
      %v6211 = vunpack.c.l.b16 %v6193
      %v6212 = vunpack.c.l.b16 %v6194
      %v6213 = vunpack.c.l.b16 %v6195
      %v6214 = vunpack.c.l.b16 %v6196
      %v6215 = vunpack.c.l.b16 %v6197
      %v6216 = vunpack.c.l.b16 %v6198
      %v6217 = vunpack.c.l.b16 %v6199
      %v6218 = vpack.c.b16 %v6212, %v6211
      %v6219 = vpack.c.b16 %v6214, %v6213
      %v6220 = vpack.c.b16 %v6216, %v6215
      %v6221 = vpack.c.b16 %v6217, %v6217
      %vm6225 = vcmask 408576
      %v6227 = vsel %vm6225, %v6191, 0
      %v6230 = vsel %vm6225, %v6192, 0
      %vm6232 = vcmask 1040384
      %v6234 = vsel %vm6232, %v6221, 0
      %6236 = vmatpush.bf16.msra.mxu0 0
      %6237 = vmatpush.bf16.msra.mxu0 0
      %6238 = vmatpush.bf16.msra.mxu0 0
      %6239 = vmatpush.bf16.msra.mxu0 0
      %6240 = vmatpush.bf16.msra.mxu0 %v6234
      %6241 = vmatpush.bf16.msra.mxu0 %v6220
      %6242 = vmatpush.bf16.msra.mxu0 %v6219
      %6243 = vmatpush.bf16.msra.mxu0 %v6218
      %6244 = vmatmul.bf16.gmra.mxu0 %v6227
      %v6245 = vpop.f32.mrf.mxu0
      %v6246 = vadd.f32 %v6202, %v6245
      %v6247 = vpop.f32.mrf.mxu0
      %v6248 = vadd.f32 %v6202, %v6247
      %6249 = vmatmul.bf16.gmra.mxu0 %v6230
      %v6250 = vpop.f32.mrf.mxu0
      %v6251 = vadd.f32 %v6202, %v6250
      %v6252 = vpop.f32.mrf.mxu0
      %v6253 = vadd.f32 %v6202, %v6252
      %6254 = vdwg.mxu0
      %vm6255 = vcmask 80896
      %6256 = vst.msk [vmem:[%s337] sm:$0xff] %vm6255, %v6246
      %6257 = vst.msk [vmem:[%s337 + $0x8] sm:$0xff] %vm6255, %v6248
      %6258 = vst.msk [vmem:[%s337 + $0x10] sm:$0xff] %vm6255, %v6251
      %6259 = vst.msk [vmem:[%s337 + $0x18] sm:$0xff] %vm6255, %v6253
      %s6260 = smul.u32 4, %s20
      %p6261 = scmp.lt.s32.totalorder %s6260, 7
      %s6262 = scalar_select %p6261, %s6260, 7
      %s6263 = smul.addr %s6262, 8
      %s6264 = scalar_lea.vmem %s9, %s6263
      // Predicated region
      $region57: #{net_forward.1} parent=55 // pred_check
        %p6265 = pneg %p232
      $region58: #{net_forward.1} parent=55 // pred_check_branch
        %6267 = sbr.rel (%p6265) target = $region60
      $region59: #{net_forward.1} parent=55 // pred_region
        %s6268 = smul.u32 4, %s20
      $region60: #{net_forward.1} parent=55 // pred_fallthru
        _
    $region56: #{net_forward.1} parent=5 // pred_fallthru
      _
    %p6269 = scmp.le.s32.totalorder 2, %s15
    // Predicated region
    $region61: #{net_forward.1} parent=5 // pred_check
      %p6270 = pneg %p6269
    $region62: #{net_forward.1} parent=5 // pred_check_branch
      %6272 = sbr.rel (%p6270) target = $region64
    $region63: #{net_forward.1} parent=5 // pred_region
      %s6273 = ssub.s32 %s15, 2
      // Predicated region
      $region65: #{net_forward.1} parent=63 // pred_check
        %p6274 = pneg %p238
      $region66: #{net_forward.1} parent=63 // pred_check_branch
        %6276 = sbr.rel (%p6274) target = $region68
      $region67: #{net_forward.1} parent=63 // pred_region
        %s6277 = smul.u32 4, %s21
        %p6278 = scmp.lt.s32.totalorder %s6277, 7
        %s6279 = scalar_select %p6278, %s6277, 7
        %s6280 = smul.addr %s6279, 8
        %s6281 = scalar_lea.vmem %s9, %s6280
      $region68: #{net_forward.1} parent=63 // pred_fallthru
        _
    $region64: #{net_forward.1} parent=5 // pred_fallthru
      _
  $region6: #{net_forward.1} parent=0 // loop_footer
    %s19 = sadd.s32 1, %s15
  $region7: #{net_forward.1} parent=0 // loop_footer_branch
    %14 = sbr.rel target = $region3
  $region8: #{net_forward.1} parent=0 // loop_exit
    _

</llo_original>
